<compile_context>
chip_gen: v7x
topology: tpu7x:2x2x1
jax: 0.10.0
libtpu: 0.0.40
codegen_flags: <defaults>
</compile_context>

<pallas_src>
import functools

import numpy as np
import jax
import jax.numpy as jnp
from jax import lax
from jax.experimental import pallas as pl
from jax.experimental.pallas import tpu as pltpu


def _encode_layers_kernel(x_ref, w1_ref, b1_ref, s1_ref, t1_ref,
                          w2_ref, b2_ref, s2_ref, t2_ref,
                          o_ref, patch1_ref, patch2_ref,
                          *, TD, Hp, Wp, K, Cin, Cout):
  p = K // 2
  HpWp = Hp * Wp
  TDe = TD + 2                 # h1 planes incl. the +-1 D-halo needed by conv2
  Lh = TDe * HpWp              # h1 frame length (lanes)
  Lout = TD * HpWp             # output frame length (lanes)

  # ---- conv1 (K,K,K) 'same': im2col-lite -> one fused MXU matmul ----------
  # Every tap is a static lane-offset slice of the zero-padded block; the
  # boundary zeros come from the wrapper's spatial padding (no masks/selects).
  t = 0
  for kd in range(K):
    for kh in range(K):
      for kw in range(K):
        off = kd * HpWp + kh * Wp + kw
        patch1_ref[t * Cin:(t + 1) * Cin, :] = x_ref[0, 0, :, off:off + Lh]
        t += 1
  h1 = jnp.dot(w1_ref[...], patch1_ref[...],
               preferred_element_type=jnp.float32)           # (Cout, Lh)
  h1 = jnp.maximum(h1 + b1_ref[...], 0.0)                    # bias + ReLU
  h1 = h1 * s1_ref[...] + t1_ref[...]                        # folded BatchNorm3d
  # TODO(synk): Dropout(p=0.5) is stochastic in training; eval-mode identity here.

  # Zero the D-halo planes of h1 that fall outside the volume so conv2 sees
  # true zero padding along D (conv1 applied to zero input is NOT zero).
  b = pl.program_id(1)
  nb = pl.num_programs(1)
  lane = lax.broadcasted_iota(jnp.int32, (1, Lh), 1)
  drop = jnp.logical_or(
      jnp.logical_and(lane < HpWp, b == 0),
      jnp.logical_and(lane >= (TDe - 1) * HpWp, b == nb - 1))
  h1 = jnp.where(drop, 0.0, h1)

  # ---- conv2 (3,1,1) 'same': 3 plane-offset slices -> one fused matmul ----
  for kd in range(3):
    patch2_ref[kd * Cout:(kd + 1) * Cout, :] = h1[:, kd * HpWp:kd * HpWp + Lout]
  h2 = jnp.dot(w2_ref[...], patch2_ref[...],
               preferred_element_type=jnp.float32)           # (Cout, Lout)
  h2 = jnp.maximum(h2 + b2_ref[...], 0.0)
  h2 = h2 * s2_ref[...] + t2_ref[...]

  # Residual: center planes of h1 + h2 ; lane-dense (Cout, TD*Hp*Wp) store.
  o_ref[0, 0] = h1[:, HpWp:HpWp + Lout] + h2


def _pick_d_tile(D, Hp, Wp, Cin, Cout, K, vmem_budget_bytes=12 << 20):
  """Largest divisor of D (capped at 8) whose per-step buffers fit the budget."""
  HpWp = Hp * Wp
  best = 1
  for td in range(1, min(D, 8) + 1):
    if D % td:
      continue
    patches1 = K * K * K * Cin * (td + 2) * HpWp * 4
    patches2 = 3 * Cout * td * HpWp * 4
    acts = (2 * Cin * (td + 2 * (K // 2 + 1)) + 4 * Cout * (td + 2)) * HpWp * 4
    if patches1 + patches2 + acts <= vmem_budget_bytes:
      best = td
  return best


def encode_layers_forward(x_ncdhw, params, *, kernel_size=3, d_tile=None):
  """x_ncdhw: (N, Cin, D, H, W) float32 (PyTorch layout). Returns NCDHW output."""
  N, Cin, D, H, W = x_ncdhw.shape
  K = kernel_size
  p = K // 2
  PD = p + 1                       # D halo: conv1 pad (p) + 1 plane for conv2
  Cout = params["w1"].shape[0]
  Hp, Wp = H + 2 * p, W + 2 * p
  HpWp = Hp * Wp
  eps = 1e-5

  TD = d_tile if d_tile is not None else _pick_d_tile(D, Hp, Wp, Cin, Cout, K)
  assert D % TD == 0
  DB = D // TD
  TDc = TD + 2 * PD                # input planes per block (with halo)
  Ls = TDc * HpWp
  tail = 2 * p * (Wp + 1)          # slack read only by padded-frame garbage lanes
  Ls_pad = Ls + tail
  # TODO(synk): very large H*W would additionally need in-plane tiling; only the
  # batch and D dimensions are tiled here.

  # ---- wrapper-side layout glue (pure XLA) --------------------------------
  xp = jnp.pad(x_ncdhw.astype(jnp.float32),
               ((0, 0), (0, 0), (PD, PD), (p, p), (p, p)))    # (N,Cin,D+2PD,Hp,Wp)
  chunks = [xp[:, :, b * TD: b * TD + TDc] for b in range(DB)]
  xb = jnp.stack(chunks, axis=1)                              # (N,DB,Cin,TDc,Hp,Wp)
  xb = xb.reshape(N, DB, Cin, Ls)
  xb = jnp.pad(xb, ((0, 0), (0, 0), (0, 0), (0, tail)))       # (N,DB,Cin,Ls_pad)

  # weights: tap-major / channel-minor rows matching the im2col patch order
  w1 = jnp.transpose(params["w1"], (0, 2, 3, 4, 1)).reshape(
      Cout, K * K * K * Cin).astype(jnp.float32)
  w2 = jnp.transpose(params["w2"], (0, 2, 3, 4, 1)).reshape(
      Cout, 3 * Cout).astype(jnp.float32)

  s1 = params["bn1_gamma"] / jnp.sqrt(params["bn1_var"] + eps)
  t1 = params["bn1_beta"] - params["bn1_mean"] * s1
  s2 = params["bn2_gamma"] / jnp.sqrt(params["bn2_var"] + eps)
  t2 = params["bn2_beta"] - params["bn2_mean"] * s2
  col = lambda v: v.reshape(Cout, 1).astype(jnp.float32)
  b1, s1, t1 = col(params["b1"]), col(s1), col(t1)
  b2, s2, t2 = col(params["b2"]), col(s2), col(t2)

  kernel = functools.partial(_encode_layers_kernel, TD=TD, Hp=Hp, Wp=Wp, K=K,
                             Cin=Cin, Cout=Cout)

  def const(shape):  # weights / vectors: DMA'd once, VMEM-resident across grid
    return pl.BlockSpec(shape, lambda n, b: (0,) * len(shape))

  grid_spec = pltpu.PrefetchScalarGridSpec(
      num_scalar_prefetch=0,
      grid=(N, DB),
      in_specs=[
          pl.BlockSpec((1, 1, Cin, Ls_pad), lambda n, b: (n, b, 0, 0)),
          const((Cout, K * K * K * Cin)),                       # w1
          const((Cout, 1)), const((Cout, 1)), const((Cout, 1)),  # b1, s1, t1
          const((Cout, 3 * Cout)),                              # w2
          const((Cout, 1)), const((Cout, 1)), const((Cout, 1)),  # b2, s2, t2
      ],
      out_specs=pl.BlockSpec((1, 1, Cout, TD * HpWp), lambda n, b: (n, b, 0, 0)),
      scratch_shapes=[
          pltpu.VMEM((K * K * K * Cin, (TD + 2) * HpWp), jnp.float32),  # im2col conv1
          pltpu.VMEM((3 * Cout, TD * HpWp), jnp.float32),               # im2col conv2
      ],
  )
  out = pl.pallas_call(
      kernel,
      out_shape=jax.ShapeDtypeStruct((N, DB, Cout, TD * HpWp), jnp.float32),
      grid_spec=grid_spec,
      compiler_params=pltpu.CompilerParams(
          dimension_semantics=("parallel", "parallel")),
  )(xb, w1, b1, s1, t1, w2, b2, s2, t2)

  # drop padded-frame garbage lanes and restore NCDHW
  out = out.reshape(N, DB, Cout, TD, Hp, Wp)[:, :, :, :, :H, :W]
  out = jnp.transpose(out, (0, 2, 1, 3, 4, 5)).reshape(N, Cout, D, H, W)
  return out


def reference_forward(x, params):
  """Pure-JAX reference (eval-mode semantics), NCDHW layout."""
  eps = 1e-5
  dn = ("NCDHW", "OIDHW", "NCDHW")

  def bn(v, g, b, m, var):
    bc = lambda a: a[None, :, None, None, None]
    return (v - bc(m)) / jnp.sqrt(bc(var) + eps) * bc(g) + bc(b)

  c1 = lax.conv_general_dilated(x, params["w1"], (1, 1, 1), "SAME",
                                dimension_numbers=dn,
                                precision=lax.Precision.HIGHEST)
  c1 = jnp.maximum(c1 + params["b1"][None, :, None, None, None], 0.0)
  c1 = bn(c1, params["bn1_gamma"], params["bn1_beta"],
          params["bn1_mean"], params["bn1_var"])
  c2 = lax.conv_general_dilated(c1, params["w2"], (1, 1, 1), "SAME",
                                dimension_numbers=dn,
                                precision=lax.Precision.HIGHEST)
  c2 = jnp.maximum(c2 + params["b2"][None, :, None, None, None], 0.0)
  c2 = bn(c2, params["bn2_gamma"], params["bn2_beta"],
          params["bn2_mean"], params["bn2_var"])
  return c1 + c2


if __name__ == "__main__":
  N, Cin, Cout, D, H, W, K = 2, 4, 8, 16, 16, 16, 3

  keys = jax.random.split(jax.random.PRNGKey(0), 13)
  params = {
      "w1": jax.random.normal(keys[0], (Cout, Cin, K, K, K), jnp.float32)
            / np.sqrt(Cin * K * K * K),
      "b1": 0.1 * jax.random.normal(keys[1], (Cout,), jnp.float32),
      "w2": jax.random.normal(keys[2], (Cout, Cout, 3, 1, 1), jnp.float32)
            / np.sqrt(Cout * 3),
      "b2": 0.1 * jax.random.normal(keys[3], (Cout,), jnp.float32),
      "bn1_gamma": 1.0 + 0.1 * jax.random.normal(keys[4], (Cout,), jnp.float32),
      "bn1_beta": 0.1 * jax.random.normal(keys[5], (Cout,), jnp.float32),
      "bn1_mean": 0.1 * jax.random.normal(keys[6], (Cout,), jnp.float32),
      "bn1_var": jax.random.uniform(keys[7], (Cout,), jnp.float32, 0.5, 1.5),
      "bn2_gamma": 1.0 + 0.1 * jax.random.normal(keys[8], (Cout,), jnp.float32),
      "bn2_beta": 0.1 * jax.random.normal(keys[9], (Cout,), jnp.float32),
      "bn2_mean": 0.1 * jax.random.normal(keys[10], (Cout,), jnp.float32),
      "bn2_var": jax.random.uniform(keys[11], (Cout,), jnp.float32, 0.5, 1.5),
  }
  x = jax.random.normal(keys[12], (N, Cin, D, H, W), jnp.float32)

  fwd = jax.jit(functools.partial(encode_layers_forward, kernel_size=K))
  out = jax.block_until_ready(fwd(x, params))
  ref = jax.block_until_ready(reference_forward(x, params))
  np.testing.assert_allclose(np.asarray(out), np.asarray(ref), rtol=2e-2, atol=2e-2)
  print("KERNEL_OK")
</pallas_src>

<mosaic_0001>
module attributes {stable_mosaic.version = 11 : i64} {
  func.func @_encode_layers_kernel(%arg0: i32, %arg1: i32, %arg2: memref<1x1x4x3926xf32, #tpu.memory_space<vmem>>, %arg3: memref<8x108xf32, #tpu.memory_space<vmem>>, %arg4: memref<8x1xf32, #tpu.memory_space<vmem>>, %arg5: memref<8x1xf32, #tpu.memory_space<vmem>>, %arg6: memref<8x1xf32, #tpu.memory_space<vmem>>, %arg7: memref<8x24xf32, #tpu.memory_space<vmem>>, %arg8: memref<8x1xf32, #tpu.memory_space<vmem>>, %arg9: memref<8x1xf32, #tpu.memory_space<vmem>>, %arg10: memref<8x1xf32, #tpu.memory_space<vmem>>, %arg11: memref<1x1x8x2592xf32, #tpu.memory_space<vmem>>, %arg12: memref<108x3240xf32, #tpu.memory_space<vmem>>, %arg13: memref<24x2592xf32, #tpu.memory_space<vmem>>) attributes {dimension_semantics = [#tpu.dimension_semantics<parallel>, #tpu.dimension_semantics<parallel>], iteration_bounds = array<i64: 2, 2>, scalar_prefetch = 0 : i64, scratch_operands = 2 : i64, tpu.core_type = #tpu.core_type<tc>, window_params = [{transform_indices = @transform_0, window_bounds = array<i64: 1, 1, 4, 3926>}, {pipeline_mode = #tpu.pipeline_mode<synchronous>, transform_indices = @transform_1, window_bounds = array<i64: 8, 108>}, {pipeline_mode = #tpu.pipeline_mode<synchronous>, transform_indices = @transform_2, window_bounds = array<i64: 8, 1>}, {pipeline_mode = #tpu.pipeline_mode<synchronous>, transform_indices = @transform_3, window_bounds = array<i64: 8, 1>}, {pipeline_mode = #tpu.pipeline_mode<synchronous>, transform_indices = @transform_4, window_bounds = array<i64: 8, 1>}, {pipeline_mode = #tpu.pipeline_mode<synchronous>, transform_indices = @transform_5, window_bounds = array<i64: 8, 24>}, {pipeline_mode = #tpu.pipeline_mode<synchronous>, transform_indices = @transform_6, window_bounds = array<i64: 8, 1>}, {pipeline_mode = #tpu.pipeline_mode<synchronous>, transform_indices = @transform_7, window_bounds = array<i64: 8, 1>}, {pipeline_mode = #tpu.pipeline_mode<synchronous>, transform_indices = @transform_8, window_bounds = array<i64: 8, 1>}, {transform_indices = @transform_9, window_bounds = array<i64: 1, 1, 8, 2592>}]} {
    %c0 = arith.constant 0 : index
    %c0_0 = arith.constant 0 : index
    %c0_1 = arith.constant 0 : index
    %c0_2 = arith.constant 0 : index
    %0 = vector.load %arg2[%c0, %c0_0, %c0_1, %c0_2] : memref<1x1x4x3926xf32, #tpu.memory_space<vmem>>, vector<1x1x4x3240xf32>
    %1 = vector.shape_cast %0 : vector<1x1x4x3240xf32> to vector<4x3240xf32>
    %c0_3 = arith.constant 0 : index
    %c0_4 = arith.constant 0 : index
    %2 = vector.load %arg12[%c0_3, %c0_4] : memref<108x3240xf32, #tpu.memory_space<vmem>>, vector<4x3240xf32>
    tpu.vector_store %arg12[%c0_3, %c0_4], %1 {strides = array<i32>} : memref<108x3240xf32, #tpu.memory_space<vmem>>, vector<4x3240xf32>,
    %c0_5 = arith.constant 0 : index
    %c0_6 = arith.constant 0 : index
    %c0_7 = arith.constant 0 : index
    %c1 = arith.constant 1 : index
    %3 = vector.load %arg2[%c0_5, %c0_6, %c0_7, %c1] : memref<1x1x4x3926xf32, #tpu.memory_space<vmem>>, vector<1x1x4x3240xf32>
    %4 = vector.shape_cast %3 : vector<1x1x4x3240xf32> to vector<4x3240xf32>
    %c4 = arith.constant 4 : index
    %c0_8 = arith.constant 0 : index
    %5 = vector.load %arg12[%c4, %c0_8] : memref<108x3240xf32, #tpu.memory_space<vmem>>, vector<4x3240xf32>
    tpu.vector_store %arg12[%c4, %c0_8], %4 {strides = array<i32>} : memref<108x3240xf32, #tpu.memory_space<vmem>>, vector<4x3240xf32>,
    %c0_9 = arith.constant 0 : index
    %c0_10 = arith.constant 0 : index
    %c0_11 = arith.constant 0 : index
    %c2 = arith.constant 2 : index
    %6 = vector.load %arg2[%c0_9, %c0_10, %c0_11, %c2] : memref<1x1x4x3926xf32, #tpu.memory_space<vmem>>, vector<1x1x4x3240xf32>
    %7 = vector.shape_cast %6 : vector<1x1x4x3240xf32> to vector<4x3240xf32>
    %c8 = arith.constant 8 : index
    %c0_12 = arith.constant 0 : index
    %8 = vector.load %arg12[%c8, %c0_12] : memref<108x3240xf32, #tpu.memory_space<vmem>>, vector<4x3240xf32>
    tpu.vector_store %arg12[%c8, %c0_12], %7 {strides = array<i32>} : memref<108x3240xf32, #tpu.memory_space<vmem>>, vector<4x3240xf32>,
    %c0_13 = arith.constant 0 : index
    %c0_14 = arith.constant 0 : index
    %c0_15 = arith.constant 0 : index
    %c18 = arith.constant 18 : index
    %9 = vector.load %arg2[%c0_13, %c0_14, %c0_15, %c18] : memref<1x1x4x3926xf32, #tpu.memory_space<vmem>>, vector<1x1x4x3240xf32>
    %10 = vector.shape_cast %9 : vector<1x1x4x3240xf32> to vector<4x3240xf32>
    %c12 = arith.constant 12 : index
    %c0_16 = arith.constant 0 : index
    %11 = vector.load %arg12[%c12, %c0_16] : memref<108x3240xf32, #tpu.memory_space<vmem>>, vector<4x3240xf32>
    tpu.vector_store %arg12[%c12, %c0_16], %10 {strides = array<i32>} : memref<108x3240xf32, #tpu.memory_space<vmem>>, vector<4x3240xf32>,
    %c0_17 = arith.constant 0 : index
    %c0_18 = arith.constant 0 : index
    %c0_19 = arith.constant 0 : index
    %c19 = arith.constant 19 : index
    %12 = vector.load %arg2[%c0_17, %c0_18, %c0_19, %c19] : memref<1x1x4x3926xf32, #tpu.memory_space<vmem>>, vector<1x1x4x3240xf32>
    %13 = vector.shape_cast %12 : vector<1x1x4x3240xf32> to vector<4x3240xf32>
    %c16 = arith.constant 16 : index
    %c0_20 = arith.constant 0 : index
    %14 = vector.load %arg12[%c16, %c0_20] : memref<108x3240xf32, #tpu.memory_space<vmem>>, vector<4x3240xf32>
    tpu.vector_store %arg12[%c16, %c0_20], %13 {strides = array<i32>} : memref<108x3240xf32, #tpu.memory_space<vmem>>, vector<4x3240xf32>,
    %c0_21 = arith.constant 0 : index
    %c0_22 = arith.constant 0 : index
    %c0_23 = arith.constant 0 : index
    %c20 = arith.constant 20 : index
    %15 = vector.load %arg2[%c0_21, %c0_22, %c0_23, %c20] : memref<1x1x4x3926xf32, #tpu.memory_space<vmem>>, vector<1x1x4x3240xf32>
    %16 = vector.shape_cast %15 : vector<1x1x4x3240xf32> to vector<4x3240xf32>
    %c20_24 = arith.constant 20 : index
    %c0_25 = arith.constant 0 : index
    %17 = vector.load %arg12[%c20_24, %c0_25] : memref<108x3240xf32, #tpu.memory_space<vmem>>, vector<4x3240xf32>
    tpu.vector_store %arg12[%c20_24, %c0_25], %16 {strides = array<i32>} : memref<108x3240xf32, #tpu.memory_space<vmem>>, vector<4x3240xf32>,
    %c0_26 = arith.constant 0 : index
    %c0_27 = arith.constant 0 : index
    %c0_28 = arith.constant 0 : index
    %c36 = arith.constant 36 : index
    %18 = vector.load %arg2[%c0_26, %c0_27, %c0_28, %c36] : memref<1x1x4x3926xf32, #tpu.memory_space<vmem>>, vector<1x1x4x3240xf32>
    %19 = vector.shape_cast %18 : vector<1x1x4x3240xf32> to vector<4x3240xf32>
    %c24 = arith.constant 24 : index
    %c0_29 = arith.constant 0 : index
    %20 = vector.load %arg12[%c24, %c0_29] : memref<108x3240xf32, #tpu.memory_space<vmem>>, vector<4x3240xf32>
    tpu.vector_store %arg12[%c24, %c0_29], %19 {strides = array<i32>} : memref<108x3240xf32, #tpu.memory_space<vmem>>, vector<4x3240xf32>,
    %c0_30 = arith.constant 0 : index
    %c0_31 = arith.constant 0 : index
    %c0_32 = arith.constant 0 : index
    %c37 = arith.constant 37 : index
    %21 = vector.load %arg2[%c0_30, %c0_31, %c0_32, %c37] : memref<1x1x4x3926xf32, #tpu.memory_space<vmem>>, vector<1x1x4x3240xf32>
    %22 = vector.shape_cast %21 : vector<1x1x4x3240xf32> to vector<4x3240xf32>
    %c28 = arith.constant 28 : index
    %c0_33 = arith.constant 0 : index
    %23 = vector.load %arg12[%c28, %c0_33] : memref<108x3240xf32, #tpu.memory_space<vmem>>, vector<4x3240xf32>
    tpu.vector_store %arg12[%c28, %c0_33], %22 {strides = array<i32>} : memref<108x3240xf32, #tpu.memory_space<vmem>>, vector<4x3240xf32>,
    %c0_34 = arith.constant 0 : index
    %c0_35 = arith.constant 0 : index
    %c0_36 = arith.constant 0 : index
    %c38 = arith.constant 38 : index
    %24 = vector.load %arg2[%c0_34, %c0_35, %c0_36, %c38] : memref<1x1x4x3926xf32, #tpu.memory_space<vmem>>, vector<1x1x4x3240xf32>
    %25 = vector.shape_cast %24 : vector<1x1x4x3240xf32> to vector<4x3240xf32>
    %c32 = arith.constant 32 : index
    %c0_37 = arith.constant 0 : index
    %26 = vector.load %arg12[%c32, %c0_37] : memref<108x3240xf32, #tpu.memory_space<vmem>>, vector<4x3240xf32>
    tpu.vector_store %arg12[%c32, %c0_37], %25 {strides = array<i32>} : memref<108x3240xf32, #tpu.memory_space<vmem>>, vector<4x3240xf32>,
    %c0_38 = arith.constant 0 : index
    %c0_39 = arith.constant 0 : index
    %c0_40 = arith.constant 0 : index
    %c324 = arith.constant 324 : index
    %27 = vector.load %arg2[%c0_38, %c0_39, %c0_40, %c324] : memref<1x1x4x3926xf32, #tpu.memory_space<vmem>>, vector<1x1x4x3240xf32>
    %28 = vector.shape_cast %27 : vector<1x1x4x3240xf32> to vector<4x3240xf32>
    %c36_41 = arith.constant 36 : index
    %c0_42 = arith.constant 0 : index
    %29 = vector.load %arg12[%c36_41, %c0_42] : memref<108x3240xf32, #tpu.memory_space<vmem>>, vector<4x3240xf32>
    tpu.vector_store %arg12[%c36_41, %c0_42], %28 {strides = array<i32>} : memref<108x3240xf32, #tpu.memory_space<vmem>>, vector<4x3240xf32>,
    %c0_43 = arith.constant 0 : index
    %c0_44 = arith.constant 0 : index
    %c0_45 = arith.constant 0 : index
    %c325 = arith.constant 325 : index
    %30 = vector.load %arg2[%c0_43, %c0_44, %c0_45, %c325] : memref<1x1x4x3926xf32, #tpu.memory_space<vmem>>, vector<1x1x4x3240xf32>
    %31 = vector.shape_cast %30 : vector<1x1x4x3240xf32> to vector<4x3240xf32>
    %c40 = arith.constant 40 : index
    %c0_46 = arith.constant 0 : index
    %32 = vector.load %arg12[%c40, %c0_46] : memref<108x3240xf32, #tpu.memory_space<vmem>>, vector<4x3240xf32>
    tpu.vector_store %arg12[%c40, %c0_46], %31 {strides = array<i32>} : memref<108x3240xf32, #tpu.memory_space<vmem>>, vector<4x3240xf32>,
    %c0_47 = arith.constant 0 : index
    %c0_48 = arith.constant 0 : index
    %c0_49 = arith.constant 0 : index
    %c326 = arith.constant 326 : index
    %33 = vector.load %arg2[%c0_47, %c0_48, %c0_49, %c326] : memref<1x1x4x3926xf32, #tpu.memory_space<vmem>>, vector<1x1x4x3240xf32>
    %34 = vector.shape_cast %33 : vector<1x1x4x3240xf32> to vector<4x3240xf32>
    %c44 = arith.constant 44 : index
    %c0_50 = arith.constant 0 : index
    %35 = vector.load %arg12[%c44, %c0_50] : memref<108x3240xf32, #tpu.memory_space<vmem>>, vector<4x3240xf32>
    tpu.vector_store %arg12[%c44, %c0_50], %34 {strides = array<i32>} : memref<108x3240xf32, #tpu.memory_space<vmem>>, vector<4x3240xf32>,
    %c0_51 = arith.constant 0 : index
    %c0_52 = arith.constant 0 : index
    %c0_53 = arith.constant 0 : index
    %c342 = arith.constant 342 : index
    %36 = vector.load %arg2[%c0_51, %c0_52, %c0_53, %c342] : memref<1x1x4x3926xf32, #tpu.memory_space<vmem>>, vector<1x1x4x3240xf32>
    %37 = vector.shape_cast %36 : vector<1x1x4x3240xf32> to vector<4x3240xf32>
    %c48 = arith.constant 48 : index
    %c0_54 = arith.constant 0 : index
    %38 = vector.load %arg12[%c48, %c0_54] : memref<108x3240xf32, #tpu.memory_space<vmem>>, vector<4x3240xf32>
    tpu.vector_store %arg12[%c48, %c0_54], %37 {strides = array<i32>} : memref<108x3240xf32, #tpu.memory_space<vmem>>, vector<4x3240xf32>,
    %c0_55 = arith.constant 0 : index
    %c0_56 = arith.constant 0 : index
    %c0_57 = arith.constant 0 : index
    %c343 = arith.constant 343 : index
    %39 = vector.load %arg2[%c0_55, %c0_56, %c0_57, %c343] : memref<1x1x4x3926xf32, #tpu.memory_space<vmem>>, vector<1x1x4x3240xf32>
    %40 = vector.shape_cast %39 : vector<1x1x4x3240xf32> to vector<4x3240xf32>
    %c52 = arith.constant 52 : index
    %c0_58 = arith.constant 0 : index
    %41 = vector.load %arg12[%c52, %c0_58] : memref<108x3240xf32, #tpu.memory_space<vmem>>, vector<4x3240xf32>
    tpu.vector_store %arg12[%c52, %c0_58], %40 {strides = array<i32>} : memref<108x3240xf32, #tpu.memory_space<vmem>>, vector<4x3240xf32>,
    %c0_59 = arith.constant 0 : index
    %c0_60 = arith.constant 0 : index
    %c0_61 = arith.constant 0 : index
    %c344 = arith.constant 344 : index
    %42 = vector.load %arg2[%c0_59, %c0_60, %c0_61, %c344] : memref<1x1x4x3926xf32, #tpu.memory_space<vmem>>, vector<1x1x4x3240xf32>
    %43 = vector.shape_cast %42 : vector<1x1x4x3240xf32> to vector<4x3240xf32>
    %c56 = arith.constant 56 : index
    %c0_62 = arith.constant 0 : index
    %44 = vector.load %arg12[%c56, %c0_62] : memref<108x3240xf32, #tpu.memory_space<vmem>>, vector<4x3240xf32>
    tpu.vector_store %arg12[%c56, %c0_62], %43 {strides = array<i32>} : memref<108x3240xf32, #tpu.memory_space<vmem>>, vector<4x3240xf32>,
    %c0_63 = arith.constant 0 : index
    %c0_64 = arith.constant 0 : index
    %c0_65 = arith.constant 0 : index
    %c360 = arith.constant 360 : index
    %45 = vector.load %arg2[%c0_63, %c0_64, %c0_65, %c360] : memref<1x1x4x3926xf32, #tpu.memory_space<vmem>>, vector<1x1x4x3240xf32>
    %46 = vector.shape_cast %45 : vector<1x1x4x3240xf32> to vector<4x3240xf32>
    %c60 = arith.constant 60 : index
    %c0_66 = arith.constant 0 : index
    %47 = vector.load %arg12[%c60, %c0_66] : memref<108x3240xf32, #tpu.memory_space<vmem>>, vector<4x3240xf32>
    tpu.vector_store %arg12[%c60, %c0_66], %46 {strides = array<i32>} : memref<108x3240xf32, #tpu.memory_space<vmem>>, vector<4x3240xf32>,
    %c0_67 = arith.constant 0 : index
    %c0_68 = arith.constant 0 : index
    %c0_69 = arith.constant 0 : index
    %c361 = arith.constant 361 : index
    %48 = vector.load %arg2[%c0_67, %c0_68, %c0_69, %c361] : memref<1x1x4x3926xf32, #tpu.memory_space<vmem>>, vector<1x1x4x3240xf32>
    %49 = vector.shape_cast %48 : vector<1x1x4x3240xf32> to vector<4x3240xf32>
    %c64 = arith.constant 64 : index
    %c0_70 = arith.constant 0 : index
    %50 = vector.load %arg12[%c64, %c0_70] : memref<108x3240xf32, #tpu.memory_space<vmem>>, vector<4x3240xf32>
    tpu.vector_store %arg12[%c64, %c0_70], %49 {strides = array<i32>} : memref<108x3240xf32, #tpu.memory_space<vmem>>, vector<4x3240xf32>,
    %c0_71 = arith.constant 0 : index
    %c0_72 = arith.constant 0 : index
    %c0_73 = arith.constant 0 : index
    %c362 = arith.constant 362 : index
    %51 = vector.load %arg2[%c0_71, %c0_72, %c0_73, %c362] : memref<1x1x4x3926xf32, #tpu.memory_space<vmem>>, vector<1x1x4x3240xf32>
    %52 = vector.shape_cast %51 : vector<1x1x4x3240xf32> to vector<4x3240xf32>
    %c68 = arith.constant 68 : index
    %c0_74 = arith.constant 0 : index
    %53 = vector.load %arg12[%c68, %c0_74] : memref<108x3240xf32, #tpu.memory_space<vmem>>, vector<4x3240xf32>
    tpu.vector_store %arg12[%c68, %c0_74], %52 {strides = array<i32>} : memref<108x3240xf32, #tpu.memory_space<vmem>>, vector<4x3240xf32>,
    %c0_75 = arith.constant 0 : index
    %c0_76 = arith.constant 0 : index
    %c0_77 = arith.constant 0 : index
    %c648 = arith.constant 648 : index
    %54 = vector.load %arg2[%c0_75, %c0_76, %c0_77, %c648] : memref<1x1x4x3926xf32, #tpu.memory_space<vmem>>, vector<1x1x4x3240xf32>
    %55 = vector.shape_cast %54 : vector<1x1x4x3240xf32> to vector<4x3240xf32>
    %c72 = arith.constant 72 : index
    %c0_78 = arith.constant 0 : index
    %56 = vector.load %arg12[%c72, %c0_78] : memref<108x3240xf32, #tpu.memory_space<vmem>>, vector<4x3240xf32>
    tpu.vector_store %arg12[%c72, %c0_78], %55 {strides = array<i32>} : memref<108x3240xf32, #tpu.memory_space<vmem>>, vector<4x3240xf32>,
    %c0_79 = arith.constant 0 : index
    %c0_80 = arith.constant 0 : index
    %c0_81 = arith.constant 0 : index
    %c649 = arith.constant 649 : index
    %57 = vector.load %arg2[%c0_79, %c0_80, %c0_81, %c649] : memref<1x1x4x3926xf32, #tpu.memory_space<vmem>>, vector<1x1x4x3240xf32>
    %58 = vector.shape_cast %57 : vector<1x1x4x3240xf32> to vector<4x3240xf32>
    %c76 = arith.constant 76 : index
    %c0_82 = arith.constant 0 : index
    %59 = vector.load %arg12[%c76, %c0_82] : memref<108x3240xf32, #tpu.memory_space<vmem>>, vector<4x3240xf32>
    tpu.vector_store %arg12[%c76, %c0_82], %58 {strides = array<i32>} : memref<108x3240xf32, #tpu.memory_space<vmem>>, vector<4x3240xf32>,
    %c0_83 = arith.constant 0 : index
    %c0_84 = arith.constant 0 : index
    %c0_85 = arith.constant 0 : index
    %c650 = arith.constant 650 : index
    %60 = vector.load %arg2[%c0_83, %c0_84, %c0_85, %c650] : memref<1x1x4x3926xf32, #tpu.memory_space<vmem>>, vector<1x1x4x3240xf32>
    %61 = vector.shape_cast %60 : vector<1x1x4x3240xf32> to vector<4x3240xf32>
    %c80 = arith.constant 80 : index
    %c0_86 = arith.constant 0 : index
    %62 = vector.load %arg12[%c80, %c0_86] : memref<108x3240xf32, #tpu.memory_space<vmem>>, vector<4x3240xf32>
    tpu.vector_store %arg12[%c80, %c0_86], %61 {strides = array<i32>} : memref<108x3240xf32, #tpu.memory_space<vmem>>, vector<4x3240xf32>,
    %c0_87 = arith.constant 0 : index
    %c0_88 = arith.constant 0 : index
    %c0_89 = arith.constant 0 : index
    %c666 = arith.constant 666 : index
    %63 = vector.load %arg2[%c0_87, %c0_88, %c0_89, %c666] : memref<1x1x4x3926xf32, #tpu.memory_space<vmem>>, vector<1x1x4x3240xf32>
    %64 = vector.shape_cast %63 : vector<1x1x4x3240xf32> to vector<4x3240xf32>
    %c84 = arith.constant 84 : index
    %c0_90 = arith.constant 0 : index
    %65 = vector.load %arg12[%c84, %c0_90] : memref<108x3240xf32, #tpu.memory_space<vmem>>, vector<4x3240xf32>
    tpu.vector_store %arg12[%c84, %c0_90], %64 {strides = array<i32>} : memref<108x3240xf32, #tpu.memory_space<vmem>>, vector<4x3240xf32>,
    %c0_91 = arith.constant 0 : index
    %c0_92 = arith.constant 0 : index
    %c0_93 = arith.constant 0 : index
    %c667 = arith.constant 667 : index
    %66 = vector.load %arg2[%c0_91, %c0_92, %c0_93, %c667] : memref<1x1x4x3926xf32, #tpu.memory_space<vmem>>, vector<1x1x4x3240xf32>
    %67 = vector.shape_cast %66 : vector<1x1x4x3240xf32> to vector<4x3240xf32>
    %c88 = arith.constant 88 : index
    %c0_94 = arith.constant 0 : index
    %68 = vector.load %arg12[%c88, %c0_94] : memref<108x3240xf32, #tpu.memory_space<vmem>>, vector<4x3240xf32>
    tpu.vector_store %arg12[%c88, %c0_94], %67 {strides = array<i32>} : memref<108x3240xf32, #tpu.memory_space<vmem>>, vector<4x3240xf32>,
    %c0_95 = arith.constant 0 : index
    %c0_96 = arith.constant 0 : index
    %c0_97 = arith.constant 0 : index
    %c668 = arith.constant 668 : index
    %69 = vector.load %arg2[%c0_95, %c0_96, %c0_97, %c668] : memref<1x1x4x3926xf32, #tpu.memory_space<vmem>>, vector<1x1x4x3240xf32>
    %70 = vector.shape_cast %69 : vector<1x1x4x3240xf32> to vector<4x3240xf32>
    %c92 = arith.constant 92 : index
    %c0_98 = arith.constant 0 : index
    %71 = vector.load %arg12[%c92, %c0_98] : memref<108x3240xf32, #tpu.memory_space<vmem>>, vector<4x3240xf32>
    tpu.vector_store %arg12[%c92, %c0_98], %70 {strides = array<i32>} : memref<108x3240xf32, #tpu.memory_space<vmem>>, vector<4x3240xf32>,
    %c0_99 = arith.constant 0 : index
    %c0_100 = arith.constant 0 : index
    %c0_101 = arith.constant 0 : index
    %c684 = arith.constant 684 : index
    %72 = vector.load %arg2[%c0_99, %c0_100, %c0_101, %c684] : memref<1x1x4x3926xf32, #tpu.memory_space<vmem>>, vector<1x1x4x3240xf32>
    %73 = vector.shape_cast %72 : vector<1x1x4x3240xf32> to vector<4x3240xf32>
    %c96 = arith.constant 96 : index
    %c0_102 = arith.constant 0 : index
    %74 = vector.load %arg12[%c96, %c0_102] : memref<108x3240xf32, #tpu.memory_space<vmem>>, vector<4x3240xf32>
    tpu.vector_store %arg12[%c96, %c0_102], %73 {strides = array<i32>} : memref<108x3240xf32, #tpu.memory_space<vmem>>, vector<4x3240xf32>,
    %c0_103 = arith.constant 0 : index
    %c0_104 = arith.constant 0 : index
    %c0_105 = arith.constant 0 : index
    %c685 = arith.constant 685 : index
    %75 = vector.load %arg2[%c0_103, %c0_104, %c0_105, %c685] : memref<1x1x4x3926xf32, #tpu.memory_space<vmem>>, vector<1x1x4x3240xf32>
    %76 = vector.shape_cast %75 : vector<1x1x4x3240xf32> to vector<4x3240xf32>
    %c100 = arith.constant 100 : index
    %c0_106 = arith.constant 0 : index
    %77 = vector.load %arg12[%c100, %c0_106] : memref<108x3240xf32, #tpu.memory_space<vmem>>, vector<4x3240xf32>
    tpu.vector_store %arg12[%c100, %c0_106], %76 {strides = array<i32>} : memref<108x3240xf32, #tpu.memory_space<vmem>>, vector<4x3240xf32>,
    %c0_107 = arith.constant 0 : index
    %c0_108 = arith.constant 0 : index
    %c0_109 = arith.constant 0 : index
    %c686 = arith.constant 686 : index
    %78 = vector.load %arg2[%c0_107, %c0_108, %c0_109, %c686] : memref<1x1x4x3926xf32, #tpu.memory_space<vmem>>, vector<1x1x4x3240xf32>
    %79 = vector.shape_cast %78 : vector<1x1x4x3240xf32> to vector<4x3240xf32>
    %c104 = arith.constant 104 : index
    %c0_110 = arith.constant 0 : index
    %80 = vector.load %arg12[%c104, %c0_110] : memref<108x3240xf32, #tpu.memory_space<vmem>>, vector<4x3240xf32>
    tpu.vector_store %arg12[%c104, %c0_110], %79 {strides = array<i32>} : memref<108x3240xf32, #tpu.memory_space<vmem>>, vector<4x3240xf32>,
    %c0_111 = arith.constant 0 : index
    %c0_112 = arith.constant 0 : index
    %81 = vector.load %arg3[%c0_111, %c0_112] : memref<8x108xf32, #tpu.memory_space<vmem>>, vector<8x108xf32>
    %c0_113 = arith.constant 0 : index
    %c0_114 = arith.constant 0 : index
    %82 = vector.load %arg12[%c0_113, %c0_114] : memref<108x3240xf32, #tpu.memory_space<vmem>>, vector<108x3240xf32>
    %cst = arith.constant dense<0.000000e+00> : vector<8x3240xf32>
    %83 = tpu.matmul %81, %82, %cst {dimension_numbers = #tpu.dot_dimension_numbers<[1], [0], [0], [1], [0, 0, 1, 1], [], []>} : vector<8x108xf32>, vector<108x3240xf32>, vector<8x3240xf32> -> vector<8x3240xf32>
    %c0_115 = arith.constant 0 : index
    %c0_116 = arith.constant 0 : index
    %84 = vector.load %arg4[%c0_115, %c0_116] : memref<8x1xf32, #tpu.memory_space<vmem>>, vector<8x1xf32>
    %85 = vector.broadcast %84 : vector<8x1xf32> to vector<8x3240xf32>
    %86 = arith.addf %83, %85 : vector<8x3240xf32>
    %cst_117 = arith.constant 0.000000e+00 : f32
    %87 = vector.broadcast %cst_117 : f32 to vector<8x3240xf32>
    %88 = arith.maximumf %86, %87 : vector<8x3240xf32>
    %c0_118 = arith.constant 0 : index
    %c0_119 = arith.constant 0 : index
    %89 = vector.load %arg5[%c0_118, %c0_119] : memref<8x1xf32, #tpu.memory_space<vmem>>, vector<8x1xf32>
    %90 = vector.broadcast %89 : vector<8x1xf32> to vector<8x3240xf32>
    %91 = arith.mulf %88, %90 : vector<8x3240xf32>
    %c0_120 = arith.constant 0 : index
    %c0_121 = arith.constant 0 : index
    %92 = vector.load %arg6[%c0_120, %c0_121] : memref<8x1xf32, #tpu.memory_space<vmem>>, vector<8x1xf32>
    %93 = vector.broadcast %92 : vector<8x1xf32> to vector<8x3240xf32>
    %94 = arith.addf %91, %93 : vector<8x3240xf32>
    %95 = tpu.iota {dimensions = array<i32: 1>} : vector<1x3240xi32>
    %c324_i32 = arith.constant 324 : i32
    %96 = vector.broadcast %c324_i32 : i32 to vector<1x3240xi32>
    %97 = arith.cmpi slt, %95, %96 : vector<1x3240xi32>
    %c0_i32 = arith.constant 0 : i32
    %98 = arith.cmpi eq, %arg1, %c0_i32 : i32
    %99 = vector.broadcast %98 : i1 to vector<1x3240xi1>
    %100 = arith.andi %97, %99 : vector<1x3240xi1>
    %c2916_i32 = arith.constant 2916 : i32
    %101 = vector.broadcast %c2916_i32 : i32 to vector<1x3240xi32>
    %102 = arith.cmpi sge, %95, %101 : vector<1x3240xi32>
    %c1_i32 = arith.constant 1 : i32
    %103 = arith.cmpi eq, %arg1, %c1_i32 : i32
    %104 = vector.broadcast %103 : i1 to vector<1x3240xi1>
    %105 = arith.andi %102, %104 : vector<1x3240xi1>
    %106 = arith.ori %100, %105 : vector<1x3240xi1>
    %cst_122 = arith.constant 0.000000e+00 : f32
    %107 = vector.shape_cast %106 : vector<1x3240xi1> to vector<1x3240xi1>
    %108 = vector.broadcast %107 : vector<1x3240xi1> to vector<8x3240xi1>
    %109 = vector.broadcast %cst_122 : f32 to vector<8x3240xf32>
    %110 = arith.select %108, %109, %94 : vector<8x3240xi1>, vector<8x3240xf32>
    %111 = vector.extract_strided_slice %110 {offsets = [0, 0], sizes = [8, 2592], strides = [1, 1]} : vector<8x3240xf32> to vector<8x2592xf32>
    %c0_123 = arith.constant 0 : index
    %c0_124 = arith.constant 0 : index
    %112 = vector.load %arg13[%c0_123, %c0_124] : memref<24x2592xf32, #tpu.memory_space<vmem>>, vector<8x2592xf32>
    tpu.vector_store %arg13[%c0_123, %c0_124], %111 {strides = array<i32>} : memref<24x2592xf32, #tpu.memory_space<vmem>>, vector<8x2592xf32>,
    %113 = vector.extract_strided_slice %110 {offsets = [0, 324], sizes = [8, 2592], strides = [1, 1]} : vector<8x3240xf32> to vector<8x2592xf32>
    %c8_125 = arith.constant 8 : index
    %c0_126 = arith.constant 0 : index
    %114 = vector.load %arg13[%c8_125, %c0_126] : memref<24x2592xf32, #tpu.memory_space<vmem>>, vector<8x2592xf32>
    tpu.vector_store %arg13[%c8_125, %c0_126], %113 {strides = array<i32>} : memref<24x2592xf32, #tpu.memory_space<vmem>>, vector<8x2592xf32>,
    %115 = vector.extract_strided_slice %110 {offsets = [0, 648], sizes = [8, 2592], strides = [1, 1]} : vector<8x3240xf32> to vector<8x2592xf32>
    %c16_127 = arith.constant 16 : index
    %c0_128 = arith.constant 0 : index
    %116 = vector.load %arg13[%c16_127, %c0_128] : memref<24x2592xf32, #tpu.memory_space<vmem>>, vector<8x2592xf32>
    tpu.vector_store %arg13[%c16_127, %c0_128], %115 {strides = array<i32>} : memref<24x2592xf32, #tpu.memory_space<vmem>>, vector<8x2592xf32>,
    %c0_129 = arith.constant 0 : index
    %c0_130 = arith.constant 0 : index
    %117 = vector.load %arg7[%c0_129, %c0_130] : memref<8x24xf32, #tpu.memory_space<vmem>>, vector<8x24xf32>
    %c0_131 = arith.constant 0 : index
    %c0_132 = arith.constant 0 : index
    %118 = vector.load %arg13[%c0_131, %c0_132] : memref<24x2592xf32, #tpu.memory_space<vmem>>, vector<24x2592xf32>
    %cst_133 = arith.constant dense<0.000000e+00> : vector<8x2592xf32>
    %119 = tpu.matmul %117, %118, %cst_133 {dimension_numbers = #tpu.dot_dimension_numbers<[1], [0], [0], [1], [0, 0, 1, 1], [], []>} : vector<8x24xf32>, vector<24x2592xf32>, vector<8x2592xf32> -> vector<8x2592xf32>
    %c0_134 = arith.constant 0 : index
    %c0_135 = arith.constant 0 : index
    %120 = vector.load %arg8[%c0_134, %c0_135] : memref<8x1xf32, #tpu.memory_space<vmem>>, vector<8x1xf32>
    %121 = vector.broadcast %120 : vector<8x1xf32> to vector<8x2592xf32>
    %122 = arith.addf %119, %121 : vector<8x2592xf32>
    %cst_136 = arith.constant 0.000000e+00 : f32
    %123 = vector.broadcast %cst_136 : f32 to vector<8x2592xf32>
    %124 = arith.maximumf %122, %123 : vector<8x2592xf32>
    %c0_137 = arith.constant 0 : index
    %c0_138 = arith.constant 0 : index
    %125 = vector.load %arg9[%c0_137, %c0_138] : memref<8x1xf32, #tpu.memory_space<vmem>>, vector<8x1xf32>
    %126 = vector.broadcast %125 : vector<8x1xf32> to vector<8x2592xf32>
    %127 = arith.mulf %124, %126 : vector<8x2592xf32>
    %c0_139 = arith.constant 0 : index
    %c0_140 = arith.constant 0 : index
    %128 = vector.load %arg10[%c0_139, %c0_140] : memref<8x1xf32, #tpu.memory_space<vmem>>, vector<8x1xf32>
    %129 = vector.broadcast %128 : vector<8x1xf32> to vector<8x2592xf32>
    %130 = arith.addf %127, %129 : vector<8x2592xf32>
    %131 = vector.extract_strided_slice %110 {offsets = [0, 324], sizes = [8, 2592], strides = [1, 1]} : vector<8x3240xf32> to vector<8x2592xf32>
    %132 = arith.addf %131, %130 : vector<8x2592xf32>
    %c0_141 = arith.constant 0 : index
    %c0_142 = arith.constant 0 : index
    %c0_143 = arith.constant 0 : index
    %c0_144 = arith.constant 0 : index
    %133 = vector.load %arg11[%c0_141, %c0_142, %c0_143, %c0_144] : memref<1x1x8x2592xf32, #tpu.memory_space<vmem>>, vector<1x1x8x2592xf32>
    %134 = vector.shape_cast %133 : vector<1x1x8x2592xf32> to vector<8x2592xf32>
    %135 = vector.shape_cast %132 : vector<8x2592xf32> to vector<1x1x8x2592xf32>
    tpu.vector_store %arg11[%c0_141, %c0_142, %c0_143, %c0_144], %135 {strides = array<i32>} : memref<1x1x8x2592xf32, #tpu.memory_space<vmem>>, vector<1x1x8x2592xf32>,
    return
  }
  func.func @transform_0(%arg0: i32, %arg1: i32) -> (i32, i32, i32, i32) {
    %c0_i32 = arith.constant 0 : i32
    %c0_i32_0 = arith.constant 0 : i32
    %c0_i32_1 = arith.constant 0 : i32
    return %arg0, %arg1, %c0_i32, %c0_i32_0 : i32, i32, i32, i32
  }
  func.func @transform_1(%arg0: i32, %arg1: i32) -> (i32, i32) {
    %c0_i32 = arith.constant 0 : i32
    %c0_i32_0 = arith.constant 0 : i32
    %c0_i32_1 = arith.constant 0 : i32
    return %c0_i32, %c0_i32_0 : i32, i32
  }
  func.func @transform_2(%arg0: i32, %arg1: i32) -> (i32, i32) {
    %c0_i32 = arith.constant 0 : i32
    %c0_i32_0 = arith.constant 0 : i32
    %c0_i32_1 = arith.constant 0 : i32
    return %c0_i32, %c0_i32_0 : i32, i32
  }
  func.func @transform_3(%arg0: i32, %arg1: i32) -> (i32, i32) {
    %c0_i32 = arith.constant 0 : i32
    %c0_i32_0 = arith.constant 0 : i32
    %c0_i32_1 = arith.constant 0 : i32
    return %c0_i32, %c0_i32_0 : i32, i32
  }
  func.func @transform_4(%arg0: i32, %arg1: i32) -> (i32, i32) {
    %c0_i32 = arith.constant 0 : i32
    %c0_i32_0 = arith.constant 0 : i32
    %c0_i32_1 = arith.constant 0 : i32
    return %c0_i32, %c0_i32_0 : i32, i32
  }
  func.func @transform_5(%arg0: i32, %arg1: i32) -> (i32, i32) {
    %c0_i32 = arith.constant 0 : i32
    %c0_i32_0 = arith.constant 0 : i32
    %c0_i32_1 = arith.constant 0 : i32
    return %c0_i32, %c0_i32_0 : i32, i32
  }
  func.func @transform_6(%arg0: i32, %arg1: i32) -> (i32, i32) {
    %c0_i32 = arith.constant 0 : i32
    %c0_i32_0 = arith.constant 0 : i32
    %c0_i32_1 = arith.constant 0 : i32
    return %c0_i32, %c0_i32_0 : i32, i32
  }
  func.func @transform_7(%arg0: i32, %arg1: i32) -> (i32, i32) {
    %c0_i32 = arith.constant 0 : i32
    %c0_i32_0 = arith.constant 0 : i32
    %c0_i32_1 = arith.constant 0 : i32
    return %c0_i32, %c0_i32_0 : i32, i32
  }
  func.func @transform_8(%arg0: i32, %arg1: i32) -> (i32, i32) {
    %c0_i32 = arith.constant 0 : i32
    %c0_i32_0 = arith.constant 0 : i32
    %c0_i32_1 = arith.constant 0 : i32
    return %c0_i32, %c0_i32_0 : i32, i32
  }
  func.func @transform_9(%arg0: i32, %arg1: i32) -> (i32, i32, i32, i32) {
    %c0_i32 = arith.constant 0 : i32
    %c0_i32_0 = arith.constant 0 : i32
    %c0_i32_1 = arith.constant 0 : i32
    return %arg0, %arg1, %c0_i32, %c0_i32_0 : i32, i32, i32, i32
  }
}

</mosaic_0001>

<llo_original>
// kernel: encode_layers_forward.1
$region0: #{encode_layers_forward.1}
  #allocation0 [shape = 'u32[]', space=smem, size = 0x4, offset = 0x4, fixed_abs, tag = 'smem constant byte address 0x4 - core index']
  #allocation1 [shape = 'u32[144,128]{1,0:T(1,128)}', space=vmem, size = 0x12000, scoped, tag = 'internal scratch']
  #allocation2 [shape = 'f32[108,3240]{1,0:T(8,128)}', space=vmem, size = 0x16c000, scoped, tag = 'scratch operand']
  #allocation3 [shape = 'f32[24,2592]{1,0:T(8,128)}', space=vmem, size = 0x3f000, scoped, tag = 'scratch operand']
  %s0 = inlined_call_operand.vmem [shape: f32[2,2,4,3926], index: 0, kind: input, shape index: {}]
  %s1 = inlined_call_operand.vmem [shape: f32[8,108], index: 1, kind: input, shape index: {}]
  %s2 = inlined_call_operand.vmem [shape: f32[8,1], index: 2, kind: input, shape index: {}]
  %s3 = inlined_call_operand.vmem [shape: f32[8,1], index: 3, kind: input, shape index: {}]
  %s4 = inlined_call_operand.vmem [shape: f32[8,1], index: 4, kind: input, shape index: {}]
  %s5 = inlined_call_operand.vmem [shape: f32[8,24], index: 5, kind: input, shape index: {}]
  %s6 = inlined_call_operand.vmem [shape: f32[8,1], index: 6, kind: input, shape index: {}]
  %s7 = inlined_call_operand.vmem [shape: f32[8,1], index: 7, kind: input, shape index: {}]
  %s8 = inlined_call_operand.vmem [shape: f32[8,1], index: 8, kind: input, shape index: {}]
  %s9 = inlined_call_operand.vmem [shape: f32[2,2,8,2592], index: 9, kind: output, shape index: {}]
  %s10 = sld [smem:[#allocation0]]
  $region69: #{encode_layers_forward.1} parent=0
    _
  %s12 = ssub.s32 1, %s10
  %s13 = scalar_select 0, %s12, %s10
  loop: start=0, step=1, limit=6
  $region2: #{encode_layers_forward.1} parent=0 // loop_pre_header
    _
  $region3: #{encode_layers_forward.1} parent=0 // loop_header
    %s15 = sphi 0, %s19
    %p16 = scmp.ge.s32.totalorder %s15, 6
    %s22 = sphi 0, %s34
    %s23 = sphi 0, %s30
    %s24 = sphi 0, %s22
    %s25 = sphi 0, %s23
    %s26 = sphi 0, %s24
    %s27 = sphi 0, %s25
    %s39 = sphi 0, %s41
    %s42 = sphi 0, %s39
    %s43 = sphi 0, %s42
    %s59 = sphi 0, %s43
    %s63 = sphi 0, %s63
    %s65 = sphi 0, %s63
    %s66 = sphi 0, %s65
    %s80 = sphi 0, %s66
    %s84 = sphi 0, %s84
    %s86 = sphi 0, %s84
    %s87 = sphi 0, %s86
    %s101 = sphi 0, %s87
    %s105 = sphi 0, %s105
    %s107 = sphi 0, %s105
    %s108 = sphi 0, %s107
    %s122 = sphi 0, %s108
    %s126 = sphi 0, %s126
    %s128 = sphi 0, %s126
    %s129 = sphi 0, %s128
    %s143 = sphi 0, %s129
    %s147 = sphi 0, %s147
    %s149 = sphi 0, %s147
    %s150 = sphi 0, %s149
    %s164 = sphi 0, %s150
    %s168 = sphi 0, %s168
    %s170 = sphi 0, %s168
    %s171 = sphi 0, %s170
    %s185 = sphi 0, %s171
    %s189 = sphi 0, %s189
    %s191 = sphi 0, %s189
    %s192 = sphi 0, %s191
    %s206 = sphi 0, %s192
    %s210 = sphi 0, %s210
    %s212 = sphi 0, %s210
    %s213 = sphi 0, %s212
    %s227 = sphi 0, %s213
    %s235 = sphi 0, %s237
    %s238 = sphi 0, %s235
    %s239 = sphi 0, %s238
    %s255 = sphi 0, %s239
  $region4: #{encode_layers_forward.1} parent=0 // loop_header_branch
    %18 = sbr.rel (%p16) target = $region8
  $region5: #{encode_layers_forward.1} parent=0 // loop_body
    %s20 = ssub.s32 %s15, 1
    %s21 = ssub.s32 %s15, 2
    %s28 = sadd.s32 1, %s23
    %p29 = scmp.ge.s32.totalorder %s28, 2
    %s30 = scalar_select %p29, 0, %s28
    %s31 = sadd.s32 1, %s22
    %s32 = scalar_select %p29, %s31, %s22
    %p33 = scmp.ge.s32.totalorder %s32, 2
    %s34 = scalar_select %p33, 0, %s32
    %s35 = ssub.s32 %s22, %s34
    %s36 = ssub.s32 %s23, %s30
    %s37 = sor.u32 %s35, %s36
    %p38 = scmp.eq.s32.totalorder %s37, 0
    %s40 = sadd.s32 %s39, 1
    %s41 = scalar_select %p38, %s39, %s40
    %p44 = pneg %p38
    %p45 = scmp.eq.s32.totalorder %s15, 3
    %p46 = por %p44, %p45
    %p47 = scmp.ne.s32.totalorder %s39, %s42
    %p48 = scmp.eq.s32.totalorder %s15, 0
    %p49 = por %p47, %p48
    %p50 = scmp.ne.s32.totalorder %s39, %s42
    %p51 = scmp.eq.s32.totalorder %s20, 3
    %p52 = por %p50, %p51
    %p53 = scmp.ne.s32.totalorder %s42, %s43
    %p54 = scmp.eq.s32.totalorder %s20, 0
    %p55 = por %p53, %p54
    %p56 = scmp.ne.s32.totalorder %s42, %s43
    %p57 = scmp.eq.s32.totalorder %s21, 3
    %p58 = por %p56, %p57
    %p60 = scmp.ne.s32.totalorder %s43, %s59
    %p61 = scmp.eq.s32.totalorder %s21, 0
    %p62 = por %p60, %p61
    %s64 = sadd.s32 %s63, 1
    %p67 = scmp.eq.s32.totalorder %s15, 3
    %p68 = scmp.ne.s32.totalorder %s63, %s65
    %p69 = scmp.eq.s32.totalorder %s15, 0
    %p70 = por %p68, %p69
    %p71 = scmp.ne.s32.totalorder %s63, %s65
    %p72 = scmp.eq.s32.totalorder %s20, 3
    %p73 = por %p71, %p72
    %p74 = scmp.ne.s32.totalorder %s65, %s66
    %p75 = scmp.eq.s32.totalorder %s20, 0
    %p76 = por %p74, %p75
    %p77 = scmp.ne.s32.totalorder %s65, %s66
    %p78 = scmp.eq.s32.totalorder %s21, 3
    %p79 = por %p77, %p78
    %p81 = scmp.ne.s32.totalorder %s66, %s80
    %p82 = scmp.eq.s32.totalorder %s21, 0
    %p83 = por %p81, %p82
    %s85 = sadd.s32 %s84, 1
    %p88 = scmp.eq.s32.totalorder %s15, 3
    %p89 = scmp.ne.s32.totalorder %s84, %s86
    %p90 = scmp.eq.s32.totalorder %s15, 0
    %p91 = por %p89, %p90
    %p92 = scmp.ne.s32.totalorder %s84, %s86
    %p93 = scmp.eq.s32.totalorder %s20, 3
    %p94 = por %p92, %p93
    %p95 = scmp.ne.s32.totalorder %s86, %s87
    %p96 = scmp.eq.s32.totalorder %s20, 0
    %p97 = por %p95, %p96
    %p98 = scmp.ne.s32.totalorder %s86, %s87
    %p99 = scmp.eq.s32.totalorder %s21, 3
    %p100 = por %p98, %p99
    %p102 = scmp.ne.s32.totalorder %s87, %s101
    %p103 = scmp.eq.s32.totalorder %s21, 0
    %p104 = por %p102, %p103
    %s106 = sadd.s32 %s105, 1
    %p109 = scmp.eq.s32.totalorder %s15, 3
    %p110 = scmp.ne.s32.totalorder %s105, %s107
    %p111 = scmp.eq.s32.totalorder %s15, 0
    %p112 = por %p110, %p111
    %p113 = scmp.ne.s32.totalorder %s105, %s107
    %p114 = scmp.eq.s32.totalorder %s20, 3
    %p115 = por %p113, %p114
    %p116 = scmp.ne.s32.totalorder %s107, %s108
    %p117 = scmp.eq.s32.totalorder %s20, 0
    %p118 = por %p116, %p117
    %p119 = scmp.ne.s32.totalorder %s107, %s108
    %p120 = scmp.eq.s32.totalorder %s21, 3
    %p121 = por %p119, %p120
    %p123 = scmp.ne.s32.totalorder %s108, %s122
    %p124 = scmp.eq.s32.totalorder %s21, 0
    %p125 = por %p123, %p124
    %s127 = sadd.s32 %s126, 1
    %p130 = scmp.eq.s32.totalorder %s15, 3
    %p131 = scmp.ne.s32.totalorder %s126, %s128
    %p132 = scmp.eq.s32.totalorder %s15, 0
    %p133 = por %p131, %p132
    %p134 = scmp.ne.s32.totalorder %s126, %s128
    %p135 = scmp.eq.s32.totalorder %s20, 3
    %p136 = por %p134, %p135
    %p137 = scmp.ne.s32.totalorder %s128, %s129
    %p138 = scmp.eq.s32.totalorder %s20, 0
    %p139 = por %p137, %p138
    %p140 = scmp.ne.s32.totalorder %s128, %s129
    %p141 = scmp.eq.s32.totalorder %s21, 3
    %p142 = por %p140, %p141
    %p144 = scmp.ne.s32.totalorder %s129, %s143
    %p145 = scmp.eq.s32.totalorder %s21, 0
    %p146 = por %p144, %p145
    %s148 = sadd.s32 %s147, 1
    %p151 = scmp.eq.s32.totalorder %s15, 3
    %p152 = scmp.ne.s32.totalorder %s147, %s149
    %p153 = scmp.eq.s32.totalorder %s15, 0
    %p154 = por %p152, %p153
    %p155 = scmp.ne.s32.totalorder %s147, %s149
    %p156 = scmp.eq.s32.totalorder %s20, 3
    %p157 = por %p155, %p156
    %p158 = scmp.ne.s32.totalorder %s149, %s150
    %p159 = scmp.eq.s32.totalorder %s20, 0
    %p160 = por %p158, %p159
    %p161 = scmp.ne.s32.totalorder %s149, %s150
    %p162 = scmp.eq.s32.totalorder %s21, 3
    %p163 = por %p161, %p162
    %p165 = scmp.ne.s32.totalorder %s150, %s164
    %p166 = scmp.eq.s32.totalorder %s21, 0
    %p167 = por %p165, %p166
    %s169 = sadd.s32 %s168, 1
    %p172 = scmp.eq.s32.totalorder %s15, 3
    %p173 = scmp.ne.s32.totalorder %s168, %s170
    %p174 = scmp.eq.s32.totalorder %s15, 0
    %p175 = por %p173, %p174
    %p176 = scmp.ne.s32.totalorder %s168, %s170
    %p177 = scmp.eq.s32.totalorder %s20, 3
    %p178 = por %p176, %p177
    %p179 = scmp.ne.s32.totalorder %s170, %s171
    %p180 = scmp.eq.s32.totalorder %s20, 0
    %p181 = por %p179, %p180
    %p182 = scmp.ne.s32.totalorder %s170, %s171
    %p183 = scmp.eq.s32.totalorder %s21, 3
    %p184 = por %p182, %p183
    %p186 = scmp.ne.s32.totalorder %s171, %s185
    %p187 = scmp.eq.s32.totalorder %s21, 0
    %p188 = por %p186, %p187
    %s190 = sadd.s32 %s189, 1
    %p193 = scmp.eq.s32.totalorder %s15, 3
    %p194 = scmp.ne.s32.totalorder %s189, %s191
    %p195 = scmp.eq.s32.totalorder %s15, 0
    %p196 = por %p194, %p195
    %p197 = scmp.ne.s32.totalorder %s189, %s191
    %p198 = scmp.eq.s32.totalorder %s20, 3
    %p199 = por %p197, %p198
    %p200 = scmp.ne.s32.totalorder %s191, %s192
    %p201 = scmp.eq.s32.totalorder %s20, 0
    %p202 = por %p200, %p201
    %p203 = scmp.ne.s32.totalorder %s191, %s192
    %p204 = scmp.eq.s32.totalorder %s21, 3
    %p205 = por %p203, %p204
    %p207 = scmp.ne.s32.totalorder %s192, %s206
    %p208 = scmp.eq.s32.totalorder %s21, 0
    %p209 = por %p207, %p208
    %s211 = sadd.s32 %s210, 1
    %p214 = scmp.eq.s32.totalorder %s15, 3
    %p215 = scmp.ne.s32.totalorder %s210, %s212
    %p216 = scmp.eq.s32.totalorder %s15, 0
    %p217 = por %p215, %p216
    %p218 = scmp.ne.s32.totalorder %s210, %s212
    %p219 = scmp.eq.s32.totalorder %s20, 3
    %p220 = por %p218, %p219
    %p221 = scmp.ne.s32.totalorder %s212, %s213
    %p222 = scmp.eq.s32.totalorder %s20, 0
    %p223 = por %p221, %p222
    %p224 = scmp.ne.s32.totalorder %s212, %s213
    %p225 = scmp.eq.s32.totalorder %s21, 3
    %p226 = por %p224, %p225
    %p228 = scmp.ne.s32.totalorder %s213, %s227
    %p229 = scmp.eq.s32.totalorder %s21, 0
    %p230 = por %p228, %p229
    %s231 = ssub.s32 %s22, %s34
    %s232 = ssub.s32 %s23, %s30
    %s233 = sor.u32 %s231, %s232
    %p234 = scmp.eq.s32.totalorder %s233, 0
    %s236 = sadd.s32 %s235, 1
    %s237 = scalar_select %p234, %s235, %s236
    %p240 = pneg %p234
    %p241 = scmp.eq.s32.totalorder %s15, 3
    %p242 = por %p240, %p241
    %p243 = scmp.ne.s32.totalorder %s235, %s238
    %p244 = scmp.eq.s32.totalorder %s15, 0
    %p245 = por %p243, %p244
    %p246 = scmp.ne.s32.totalorder %s235, %s238
    %p247 = scmp.eq.s32.totalorder %s20, 3
    %p248 = por %p246, %p247
    %p249 = scmp.ne.s32.totalorder %s238, %s239
    %p250 = scmp.eq.s32.totalorder %s20, 0
    %p251 = por %p249, %p250
    %p252 = scmp.ne.s32.totalorder %s238, %s239
    %p253 = scmp.eq.s32.totalorder %s21, 3
    %p254 = por %p252, %p253
    %p256 = scmp.ne.s32.totalorder %s239, %s255
    %p257 = scmp.eq.s32.totalorder %s21, 0
    %p258 = por %p256, %p257
    %p259 = scmp.le.s32.totalorder 1, %s15
    %p260 = scmp.lt.s32.totalorder %s15, 5
    %p261 = pnand %p259, %p260
    %p262 = pneg %p261
    // Predicated region
    $region9: #{encode_layers_forward.1} parent=5 // pred_check
      _
    $region10: #{encode_layers_forward.1} parent=5 // pred_check_branch
      %264 = sbr.rel (%p261) target = $region12
    $region11: #{encode_layers_forward.1} parent=5 // pred_region
      %s265 = ssub.s32 %s15, 1
      // Predicated region
      $region13: #{encode_layers_forward.1} parent=11 // pred_check
        %p266 = pneg %p76
      $region14: #{encode_layers_forward.1} parent=11 // pred_check_branch
        %268 = sbr.rel (%p266) target = $region16
      $region15: #{encode_layers_forward.1} parent=11 // pred_region
        _
      $region16: #{encode_layers_forward.1} parent=11 // pred_fallthru
        _
      // Predicated region
      $region17: #{encode_layers_forward.1} parent=11 // pred_check
        %p269 = pneg %p97
      $region18: #{encode_layers_forward.1} parent=11 // pred_check_branch
        %271 = sbr.rel (%p269) target = $region20
      $region19: #{encode_layers_forward.1} parent=11 // pred_region
        _
      $region20: #{encode_layers_forward.1} parent=11 // pred_fallthru
        _
      // Predicated region
      $region21: #{encode_layers_forward.1} parent=11 // pred_check
        %p272 = pneg %p118
      $region22: #{encode_layers_forward.1} parent=11 // pred_check_branch
        %274 = sbr.rel (%p272) target = $region24
      $region23: #{encode_layers_forward.1} parent=11 // pred_region
        _
      $region24: #{encode_layers_forward.1} parent=11 // pred_fallthru
        _
      // Predicated region
      $region25: #{encode_layers_forward.1} parent=11 // pred_check
        %p275 = pneg %p139
      $region26: #{encode_layers_forward.1} parent=11 // pred_check_branch
        %277 = sbr.rel (%p275) target = $region28
      $region27: #{encode_layers_forward.1} parent=11 // pred_region
        _
      $region28: #{encode_layers_forward.1} parent=11 // pred_fallthru
        _
      // Predicated region
      $region29: #{encode_layers_forward.1} parent=11 // pred_check
        %p278 = pneg %p160
      $region30: #{encode_layers_forward.1} parent=11 // pred_check_branch
        %280 = sbr.rel (%p278) target = $region32
      $region31: #{encode_layers_forward.1} parent=11 // pred_region
        _
      $region32: #{encode_layers_forward.1} parent=11 // pred_fallthru
        _
      // Predicated region
      $region33: #{encode_layers_forward.1} parent=11 // pred_check
        %p281 = pneg %p181
      $region34: #{encode_layers_forward.1} parent=11 // pred_check_branch
        %283 = sbr.rel (%p281) target = $region36
      $region35: #{encode_layers_forward.1} parent=11 // pred_region
        _
      $region36: #{encode_layers_forward.1} parent=11 // pred_fallthru
        _
      // Predicated region
      $region37: #{encode_layers_forward.1} parent=11 // pred_check
        %p284 = pneg %p202
      $region38: #{encode_layers_forward.1} parent=11 // pred_check_branch
        %286 = sbr.rel (%p284) target = $region40
      $region39: #{encode_layers_forward.1} parent=11 // pred_region
        _
      $region40: #{encode_layers_forward.1} parent=11 // pred_fallthru
        _
      // Predicated region
      $region41: #{encode_layers_forward.1} parent=11 // pred_check
        %p287 = pneg %p223
      $region42: #{encode_layers_forward.1} parent=11 // pred_check_branch
        %289 = sbr.rel (%p287) target = $region44
      $region43: #{encode_layers_forward.1} parent=11 // pred_region
        _
      $region44: #{encode_layers_forward.1} parent=11 // pred_fallthru
        _
    $region12: #{encode_layers_forward.1} parent=5 // pred_fallthru
      _
    %p290 = scmp.lt.s32.totalorder %s15, 4
    // Predicated region
    $region45: #{encode_layers_forward.1} parent=5 // pred_check
      %p291 = pneg %p290
    $region46: #{encode_layers_forward.1} parent=5 // pred_check_branch
      %293 = sbr.rel (%p291) target = $region48
    $region47: #{encode_layers_forward.1} parent=5 // pred_region
      // Predicated region
      $region49: #{encode_layers_forward.1} parent=47 // pred_check
        %p294 = pneg %p49
      $region50: #{encode_layers_forward.1} parent=47 // pred_check_branch
        %296 = sbr.rel (%p294) target = $region52
      $region51: #{encode_layers_forward.1} parent=47 // pred_region
        %p297 = scmp.lt.s32.totalorder %s22, 1
        %s298 = scalar_select %p297, %s22, 1
        %p299 = scmp.lt.s32.totalorder %s23, 1
        %s300 = scalar_select %p299, %s23, 1
        %s301 = smul.addr %s300, 31
        %s302 = smul.addr %s298, 62
        %s303 = sadd.s32 %s301, %s302
        %s304 = smul.addr %s303, 4
        %s305 = scalar_lea.vmem %s0, %s304
      $region52: #{encode_layers_forward.1} parent=47 // pred_fallthru
        _
    $region48: #{encode_layers_forward.1} parent=5 // pred_fallthru
      _
    %p306 = scmp.le.s32.totalorder 1, %s15
    %p307 = scmp.lt.s32.totalorder %s15, 5
    %p308 = pnand %p306, %p307
    %p309 = pneg %p308
    // Predicated region
    $region53: #{encode_layers_forward.1} parent=5 // pred_check
      _
    $region54: #{encode_layers_forward.1} parent=5 // pred_check_branch
      %311 = sbr.rel (%p308) target = $region56
    $region55: #{encode_layers_forward.1} parent=5 // pred_region
      %s312 = ssub.s32 %s15, 1
      %p313 = scmp.lt.s32.totalorder %s24, 1
      %s314 = scalar_select %p313, %s24, 1
      %p315 = scmp.lt.s32.totalorder %s25, 1
      %s316 = scalar_select %p315, %s25, 1
      %s317 = smul.addr %s316, 31
      %s318 = smul.addr %s314, 62
      %s319 = sadd.s32 %s317, %s318
      %s320 = smul.addr %s319, 4
      %s321 = scalar_lea.vmem %s0, %s320
      %p322 = pneg %p55
      %p323 = pneg %p52
      %p324 = pneg %p76
      %p325 = pneg %p73
      %p326 = pneg %p97
      %p327 = pneg %p94
      %p328 = pneg %p118
      %p329 = pneg %p115
      %p330 = pneg %p139
      %p331 = pneg %p136
      %p332 = pneg %p160
      %p333 = pneg %p157
      %p334 = pneg %p181
      %p335 = pneg %p178
      %p336 = pneg %p202
      %p337 = pneg %p199
      %p338 = pneg %p223
      %p339 = pneg %p220
      %p340 = pneg %p251
      %p341 = pneg %p248
      %p342 = scmp.lt.s32.totalorder %s24, 1
      %s343 = scalar_select %p342, %s24, 1
      %p344 = scmp.lt.s32.totalorder %s25, 1
      %s345 = scalar_select %p344, %s25, 1
      %s346 = smul.addr %s345, 21
      %s347 = smul.addr %s343, 42
      %s348 = sadd.s32 %s346, %s347
      %s349 = smul.addr %s348, 8
      %s350 = scalar_lea.vmem %s9, %s349
      %p351 = scmp.lt.s32.totalorder %s24, 1
      %s352 = scalar_select %p351, %s24, 1
      %p353 = scmp.lt.s32.totalorder %s25, 1
      %s354 = scalar_select %p353, %s25, 1
      %s355 = smul.addr %s354, 31
      %s356 = smul.addr %s352, 62
      %s357 = sadd.s32 %s355, %s356
      %s358 = smul.addr %s357, 4
      %s359 = scalar_lea.vmem %s0, %s358
      %p360 = scmp.lt.s32.totalorder %s24, 1
      %s361 = scalar_select %p360, %s24, 1
      %p362 = scmp.lt.s32.totalorder %s25, 1
      %s363 = scalar_select %p362, %s25, 1
      %s364 = smul.addr %s363, 21
      %s365 = smul.addr %s361, 42
      %s366 = sadd.s32 %s364, %s365
      %s367 = smul.addr %s366, 8
      %s368 = scalar_lea.vmem %s9, %s367
      %v369 = vld [vmem:[%s359] sm:$0xff]
      %v370 = vld [vmem:[%s359 + $0x8] sm:$0xff]
      %v371 = vld [vmem:[%s359 + $0x10] sm:$0xff]
      %v372 = vld [vmem:[%s359 + $0x18] sm:$0xff]
      %v373 = vld [vmem:[%s359 + $0x20] sm:$0xff]
      %v374 = vld [vmem:[%s359 + $0x28] sm:$0xff]
      %v375 = vld [vmem:[%s359 + $0x30] sm:$0xff]
      %v376 = vld [vmem:[%s359 + $0x38] sm:$0xff]
      %v377 = vld [vmem:[%s359 + $0x40] sm:$0xff]
      %v378 = vld [vmem:[%s359 + $0x48] sm:$0xff]
      %v379 = vld [vmem:[%s359 + $0x50] sm:$0xff]
      %v380 = vld [vmem:[%s359 + $0x58] sm:$0xff]
      %v381 = vld [vmem:[%s359 + $0x60] sm:$0xff]
      %v395 = vcombine.high %v369, %v369
      %v396 = vcombine.high %v370, %v370
      %v397 = vcombine.high %v371, %v371
      %v398 = vcombine.high %v372, %v372
      %v399 = vcombine.high %v373, %v373
      %v400 = vcombine.high %v374, %v374
      %v401 = vcombine.high %v375, %v375
      %v402 = vcombine.high %v376, %v376
      %v403 = vcombine.high %v377, %v377
      %v404 = vcombine.high %v378, %v378
      %v405 = vcombine.high %v379, %v379
      %v406 = vcombine.high %v380, %v380
      %v407 = vcombine.high %v381, %v381
      %421 = vst [vmem:[#allocation2] sm:$0xf] %v369
      %422 = vst [vmem:[#allocation2 + $0x8] sm:$0xf] %v395
      %423 = vst [vmem:[#allocation2 + $0x10] sm:$0xf] %v370
      %424 = vst [vmem:[#allocation2 + $0x18] sm:$0xf] %v396
      %425 = vst [vmem:[#allocation2 + $0x20] sm:$0xf] %v371
      %426 = vst [vmem:[#allocation2 + $0x28] sm:$0xf] %v397
      %427 = vst [vmem:[#allocation2 + $0x30] sm:$0xf] %v372
      %428 = vst [vmem:[#allocation2 + $0x38] sm:$0xf] %v398
      %429 = vst [vmem:[#allocation2 + $0x40] sm:$0xf] %v373
      %430 = vst [vmem:[#allocation2 + $0x48] sm:$0xf] %v399
      %431 = vst [vmem:[#allocation2 + $0x50] sm:$0xf] %v374
      %432 = vst [vmem:[#allocation2 + $0x58] sm:$0xf] %v400
      %433 = vst [vmem:[#allocation2 + $0x60] sm:$0xf] %v375
      %434 = vst [vmem:[#allocation2 + $0x68] sm:$0xf] %v401
      %435 = vst [vmem:[#allocation2 + $0x70] sm:$0xf] %v376
      %436 = vst [vmem:[#allocation2 + $0x78] sm:$0xf] %v402
      %437 = vst [vmem:[#allocation2 + $0x80] sm:$0xf] %v377
      %438 = vst [vmem:[#allocation2 + $0x88] sm:$0xf] %v403
      %439 = vst [vmem:[#allocation2 + $0x90] sm:$0xf] %v378
      %440 = vst [vmem:[#allocation2 + $0x98] sm:$0xf] %v404
      %441 = vst [vmem:[#allocation2 + $0xa0] sm:$0xf] %v379
      %442 = vst [vmem:[#allocation2 + $0xa8] sm:$0xf] %v405
      %443 = vst [vmem:[#allocation2 + $0xb0] sm:$0xf] %v380
      %444 = vst [vmem:[#allocation2 + $0xb8] sm:$0xf] %v406
      %445 = vst [vmem:[#allocation2 + $0xc0] sm:$0xf] %v381
      %vm446 = vcmask 322560
      %447 = vst.msk [vmem:[#allocation2 + $0xc8] sm:$0xf] %vm446, %v407
      %v448 = vld [vmem:[%s359] sm:$0xff]
      %v449 = vld [vmem:[%s359 + $0x8] sm:$0xff]
      %v450 = vld [vmem:[%s359 + $0x10] sm:$0xff]
      %v451 = vld [vmem:[%s359 + $0x18] sm:$0xff]
      %v452 = vld [vmem:[%s359 + $0x20] sm:$0xff]
      %v453 = vld [vmem:[%s359 + $0x28] sm:$0xff]
      %v454 = vld [vmem:[%s359 + $0x30] sm:$0xff]
      %v455 = vld [vmem:[%s359 + $0x38] sm:$0xff]
      %v456 = vld [vmem:[%s359 + $0x40] sm:$0xff]
      %v457 = vld [vmem:[%s359 + $0x48] sm:$0xff]
      %v458 = vld [vmem:[%s359 + $0x50] sm:$0xff]
      %v459 = vld [vmem:[%s359 + $0x58] sm:$0xff]
      %v460 = vld [vmem:[%s359 + $0x60] sm:$0xff]
      %v474 = vcombine.low %v448, %v448
      %v475 = vcombine.low %v449, %v449
      %v476 = vcombine.low %v450, %v450
      %v477 = vcombine.low %v451, %v451
      %v478 = vcombine.low %v452, %v452
      %v479 = vcombine.low %v453, %v453
      %v480 = vcombine.low %v454, %v454
      %v481 = vcombine.low %v455, %v455
      %v482 = vcombine.low %v456, %v456
      %v483 = vcombine.low %v457, %v457
      %v484 = vcombine.low %v458, %v458
      %v485 = vcombine.low %v459, %v459
      %v486 = vcombine.low %v460, %v460
      %487 = vrot.lane.b32.xlu0 %v474, 127
      %v488 = vpop.permute.xlu0 %487
      %489 = vrot.lane.b32.xlu0 %v448, 127
      %v490 = vpop.permute.xlu0 %489
      %491 = vrot.lane.b32.xlu0 %v475, 127
      %v492 = vpop.permute.xlu0 %491
      %493 = vrot.lane.b32.xlu0 %v449, 127
      %v494 = vpop.permute.xlu0 %493
      %495 = vrot.lane.b32.xlu0 %v476, 127
      %v496 = vpop.permute.xlu0 %495
      %497 = vrot.lane.b32.xlu0 %v450, 127
      %v498 = vpop.permute.xlu0 %497
      %499 = vrot.lane.b32.xlu0 %v477, 127
      %v500 = vpop.permute.xlu0 %499
      %501 = vrot.lane.b32.xlu0 %v451, 127
      %v502 = vpop.permute.xlu0 %501
      %503 = vrot.lane.b32.xlu0 %v478, 127
      %v504 = vpop.permute.xlu0 %503
      %505 = vrot.lane.b32.xlu0 %v452, 127
      %v506 = vpop.permute.xlu0 %505
      %507 = vrot.lane.b32.xlu0 %v479, 127
      %v508 = vpop.permute.xlu0 %507
      %509 = vrot.lane.b32.xlu0 %v453, 127
      %v510 = vpop.permute.xlu0 %509
      %511 = vrot.lane.b32.xlu0 %v480, 127
      %v512 = vpop.permute.xlu0 %511
      %513 = vrot.lane.b32.xlu0 %v454, 127
      %v514 = vpop.permute.xlu0 %513
      %515 = vrot.lane.b32.xlu0 %v481, 127
      %v516 = vpop.permute.xlu0 %515
      %517 = vrot.lane.b32.xlu0 %v455, 127
      %v518 = vpop.permute.xlu0 %517
      %519 = vrot.lane.b32.xlu0 %v482, 127
      %v520 = vpop.permute.xlu0 %519
      %521 = vrot.lane.b32.xlu0 %v456, 127
      %v522 = vpop.permute.xlu0 %521
      %523 = vrot.lane.b32.xlu0 %v483, 127
      %v524 = vpop.permute.xlu0 %523
      %525 = vrot.lane.b32.xlu0 %v457, 127
      %v526 = vpop.permute.xlu0 %525
      %527 = vrot.lane.b32.xlu0 %v484, 127
      %v528 = vpop.permute.xlu0 %527
      %529 = vrot.lane.b32.xlu0 %v458, 127
      %v530 = vpop.permute.xlu0 %529
      %531 = vrot.lane.b32.xlu0 %v485, 127
      %v532 = vpop.permute.xlu0 %531
      %533 = vrot.lane.b32.xlu0 %v459, 127
      %v534 = vpop.permute.xlu0 %533
      %535 = vrot.lane.b32.xlu0 %v486, 127
      %v536 = vpop.permute.xlu0 %535
      %537 = vrot.lane.b32.xlu0 %v460, 127
      %v538 = vpop.permute.xlu0 %537
      %vm539 = vcmask 1039360
      %v540 = vsel %vm539, %v488, %v490
      %v541 = vsel %vm539, %v490, %v492
      %v542 = vsel %vm539, %v492, %v494
      %v543 = vsel %vm539, %v494, %v496
      %v544 = vsel %vm539, %v496, %v498
      %v545 = vsel %vm539, %v498, %v500
      %v546 = vsel %vm539, %v500, %v502
      %v547 = vsel %vm539, %v502, %v504
      %v548 = vsel %vm539, %v504, %v506
      %v549 = vsel %vm539, %v506, %v508
      %v550 = vsel %vm539, %v508, %v510
      %v551 = vsel %vm539, %v510, %v512
      %v552 = vsel %vm539, %v512, %v514
      %v553 = vsel %vm539, %v514, %v516
      %v554 = vsel %vm539, %v516, %v518
      %v555 = vsel %vm539, %v518, %v520
      %v556 = vsel %vm539, %v520, %v522
      %v557 = vsel %vm539, %v522, %v524
      %v558 = vsel %vm539, %v524, %v526
      %v559 = vsel %vm539, %v526, %v528
      %v560 = vsel %vm539, %v528, %v530
      %v561 = vsel %vm539, %v530, %v532
      %v562 = vsel %vm539, %v532, %v534
      %v563 = vsel %vm539, %v534, %v536
      %v564 = vsel %vm539, %v536, %v538
      %591 = vst [vmem:[#allocation2] sm:$0xf0] %v540
      %592 = vst [vmem:[#allocation2 + $0x8] sm:$0xf0] %v541
      %593 = vst [vmem:[#allocation2 + $0x10] sm:$0xf0] %v542
      %594 = vst [vmem:[#allocation2 + $0x18] sm:$0xf0] %v543
      %595 = vst [vmem:[#allocation2 + $0x20] sm:$0xf0] %v544
      %596 = vst [vmem:[#allocation2 + $0x28] sm:$0xf0] %v545
      %597 = vst [vmem:[#allocation2 + $0x30] sm:$0xf0] %v546
      %598 = vst [vmem:[#allocation2 + $0x38] sm:$0xf0] %v547
      %599 = vst [vmem:[#allocation2 + $0x40] sm:$0xf0] %v548
      %600 = vst [vmem:[#allocation2 + $0x48] sm:$0xf0] %v549
      %601 = vst [vmem:[#allocation2 + $0x50] sm:$0xf0] %v550
      %602 = vst [vmem:[#allocation2 + $0x58] sm:$0xf0] %v551
      %603 = vst [vmem:[#allocation2 + $0x60] sm:$0xf0] %v552
      %604 = vst [vmem:[#allocation2 + $0x68] sm:$0xf0] %v553
      %605 = vst [vmem:[#allocation2 + $0x70] sm:$0xf0] %v554
      %606 = vst [vmem:[#allocation2 + $0x78] sm:$0xf0] %v555
      %607 = vst [vmem:[#allocation2 + $0x80] sm:$0xf0] %v556
      %608 = vst [vmem:[#allocation2 + $0x88] sm:$0xf0] %v557
      %609 = vst [vmem:[#allocation2 + $0x90] sm:$0xf0] %v558
      %610 = vst [vmem:[#allocation2 + $0x98] sm:$0xf0] %v559
      %611 = vst [vmem:[#allocation2 + $0xa0] sm:$0xf0] %v560
      %612 = vst [vmem:[#allocation2 + $0xa8] sm:$0xf0] %v561
      %613 = vst [vmem:[#allocation2 + $0xb0] sm:$0xf0] %v562
      %614 = vst [vmem:[#allocation2 + $0xb8] sm:$0xf0] %v563
      %615 = vst [vmem:[#allocation2 + $0xc0] sm:$0xf0] %v564
      %vm616 = vcmask 326660
      %617 = vst.msk [vmem:[#allocation2 + $0xc8] sm:$0xf0] %vm616, %v538
      %v618 = vld [vmem:[%s359] sm:$0xff]
      %v619 = vld [vmem:[%s359 + $0x8] sm:$0xff]
      %v620 = vld [vmem:[%s359 + $0x10] sm:$0xff]
      %v621 = vld [vmem:[%s359 + $0x18] sm:$0xff]
      %v622 = vld [vmem:[%s359 + $0x20] sm:$0xff]
      %v623 = vld [vmem:[%s359 + $0x28] sm:$0xff]
      %v624 = vld [vmem:[%s359 + $0x30] sm:$0xff]
      %v625 = vld [vmem:[%s359 + $0x38] sm:$0xff]
      %v626 = vld [vmem:[%s359 + $0x40] sm:$0xff]
      %v627 = vld [vmem:[%s359 + $0x48] sm:$0xff]
      %v628 = vld [vmem:[%s359 + $0x50] sm:$0xff]
      %v629 = vld [vmem:[%s359 + $0x58] sm:$0xff]
      %v630 = vld [vmem:[%s359 + $0x60] sm:$0xff]
      %v644 = vcombine.high %v618, %v618
      %v645 = vcombine.high %v619, %v619
      %v646 = vcombine.high %v620, %v620
      %v647 = vcombine.high %v621, %v621
      %v648 = vcombine.high %v622, %v622
      %v649 = vcombine.high %v623, %v623
      %v650 = vcombine.high %v624, %v624
      %v651 = vcombine.high %v625, %v625
      %v652 = vcombine.high %v626, %v626
      %v653 = vcombine.high %v627, %v627
      %v654 = vcombine.high %v628, %v628
      %v655 = vcombine.high %v629, %v629
      %v656 = vcombine.high %v630, %v630
      %657 = vrot.lane.b32.xlu0 %v618, 126
      %v658 = vpop.permute.xlu0 %657
      %659 = vrot.lane.b32.xlu0 %v644, 126
      %v660 = vpop.permute.xlu0 %659
      %661 = vrot.lane.b32.xlu0 %v619, 126
      %v662 = vpop.permute.xlu0 %661
      %663 = vrot.lane.b32.xlu0 %v645, 126
      %v664 = vpop.permute.xlu0 %663
      %665 = vrot.lane.b32.xlu0 %v620, 126
      %v666 = vpop.permute.xlu0 %665
      %667 = vrot.lane.b32.xlu0 %v646, 126
      %v668 = vpop.permute.xlu0 %667
      %669 = vrot.lane.b32.xlu0 %v621, 126
      %v670 = vpop.permute.xlu0 %669
      %671 = vrot.lane.b32.xlu0 %v647, 126
      %v672 = vpop.permute.xlu0 %671
      %673 = vrot.lane.b32.xlu0 %v622, 126
      %v674 = vpop.permute.xlu0 %673
      %675 = vrot.lane.b32.xlu0 %v648, 126
      %v676 = vpop.permute.xlu0 %675
      %677 = vrot.lane.b32.xlu0 %v623, 126
      %v678 = vpop.permute.xlu0 %677
      %679 = vrot.lane.b32.xlu0 %v649, 126
      %v680 = vpop.permute.xlu0 %679
      %681 = vrot.lane.b32.xlu0 %v624, 126
      %v682 = vpop.permute.xlu0 %681
      %683 = vrot.lane.b32.xlu0 %v650, 126
      %v684 = vpop.permute.xlu0 %683
      %685 = vrot.lane.b32.xlu0 %v625, 126
      %v686 = vpop.permute.xlu0 %685
      %687 = vrot.lane.b32.xlu0 %v651, 126
      %v688 = vpop.permute.xlu0 %687
      %689 = vrot.lane.b32.xlu0 %v626, 126
      %v690 = vpop.permute.xlu0 %689
      %691 = vrot.lane.b32.xlu0 %v652, 126
      %v692 = vpop.permute.xlu0 %691
      %693 = vrot.lane.b32.xlu0 %v627, 126
      %v694 = vpop.permute.xlu0 %693
      %695 = vrot.lane.b32.xlu0 %v653, 126
      %v696 = vpop.permute.xlu0 %695
      %697 = vrot.lane.b32.xlu0 %v628, 126
      %v698 = vpop.permute.xlu0 %697
      %699 = vrot.lane.b32.xlu0 %v654, 126
      %v700 = vpop.permute.xlu0 %699
      %701 = vrot.lane.b32.xlu0 %v629, 126
      %v702 = vpop.permute.xlu0 %701
      %703 = vrot.lane.b32.xlu0 %v655, 126
      %v704 = vpop.permute.xlu0 %703
      %705 = vrot.lane.b32.xlu0 %v630, 126
      %v706 = vpop.permute.xlu0 %705
      %707 = vrot.lane.b32.xlu0 %v656, 126
      %v708 = vpop.permute.xlu0 %707
      %vm709 = vcmask 1031168
      %v710 = vsel %vm709, %v658, %v660
      %v711 = vsel %vm709, %v660, %v662
      %v712 = vsel %vm709, %v662, %v664
      %v713 = vsel %vm709, %v664, %v666
      %v714 = vsel %vm709, %v666, %v668
      %v715 = vsel %vm709, %v668, %v670
      %v716 = vsel %vm709, %v670, %v672
      %v717 = vsel %vm709, %v672, %v674
      %v718 = vsel %vm709, %v674, %v676
      %v719 = vsel %vm709, %v676, %v678
      %v720 = vsel %vm709, %v678, %v680
      %v721 = vsel %vm709, %v680, %v682
      %v722 = vsel %vm709, %v682, %v684
      %v723 = vsel %vm709, %v684, %v686
      %v724 = vsel %vm709, %v686, %v688
      %v725 = vsel %vm709, %v688, %v690
      %v726 = vsel %vm709, %v690, %v692
      %v727 = vsel %vm709, %v692, %v694
      %v728 = vsel %vm709, %v694, %v696
      %v729 = vsel %vm709, %v696, %v698
      %v730 = vsel %vm709, %v698, %v700
      %v731 = vsel %vm709, %v700, %v702
      %v732 = vsel %vm709, %v702, %v704
      %v733 = vsel %vm709, %v704, %v706
      %v734 = vsel %vm709, %v706, %v708
      %761 = vst [vmem:[#allocation2 + $0xd0] sm:$0xf] %v710
      %762 = vst [vmem:[#allocation2 + $0xd8] sm:$0xf] %v711
      %763 = vst [vmem:[#allocation2 + $0xe0] sm:$0xf] %v712
      %764 = vst [vmem:[#allocation2 + $0xe8] sm:$0xf] %v713
      %765 = vst [vmem:[#allocation2 + $0xf0] sm:$0xf] %v714
      %766 = vst [vmem:[#allocation2 + $0xf8] sm:$0xf] %v715
      %767 = vst [vmem:[#allocation2 + $0x100] sm:$0xf] %v716
      %768 = vst [vmem:[#allocation2 + $0x108] sm:$0xf] %v717
      %769 = vst [vmem:[#allocation2 + $0x110] sm:$0xf] %v718
      %770 = vst [vmem:[#allocation2 + $0x118] sm:$0xf] %v719
      %771 = vst [vmem:[#allocation2 + $0x120] sm:$0xf] %v720
      %772 = vst [vmem:[#allocation2 + $0x128] sm:$0xf] %v721
      %773 = vst [vmem:[#allocation2 + $0x130] sm:$0xf] %v722
      %774 = vst [vmem:[#allocation2 + $0x138] sm:$0xf] %v723
      %775 = vst [vmem:[#allocation2 + $0x140] sm:$0xf] %v724
      %776 = vst [vmem:[#allocation2 + $0x148] sm:$0xf] %v725
      %777 = vst [vmem:[#allocation2 + $0x150] sm:$0xf] %v726
      %778 = vst [vmem:[#allocation2 + $0x158] sm:$0xf] %v727
      %779 = vst [vmem:[#allocation2 + $0x160] sm:$0xf] %v728
      %780 = vst [vmem:[#allocation2 + $0x168] sm:$0xf] %v729
      %781 = vst [vmem:[#allocation2 + $0x170] sm:$0xf] %v730
      %782 = vst [vmem:[#allocation2 + $0x178] sm:$0xf] %v731
      %783 = vst [vmem:[#allocation2 + $0x180] sm:$0xf] %v732
      %784 = vst [vmem:[#allocation2 + $0x188] sm:$0xf] %v733
      %785 = vst [vmem:[#allocation2 + $0x190] sm:$0xf] %v734
      %786 = vst.msk [vmem:[#allocation2 + $0x198] sm:$0xf] %vm446, %v708
      %v787 = vld [vmem:[%s359] sm:$0xff]
      %v788 = vld [vmem:[%s359 + $0x8] sm:$0xff]
      %v789 = vld [vmem:[%s359 + $0x10] sm:$0xff]
      %v790 = vld [vmem:[%s359 + $0x18] sm:$0xff]
      %v791 = vld [vmem:[%s359 + $0x20] sm:$0xff]
      %v792 = vld [vmem:[%s359 + $0x28] sm:$0xff]
      %v793 = vld [vmem:[%s359 + $0x30] sm:$0xff]
      %v794 = vld [vmem:[%s359 + $0x38] sm:$0xff]
      %v795 = vld [vmem:[%s359 + $0x40] sm:$0xff]
      %v796 = vld [vmem:[%s359 + $0x48] sm:$0xff]
      %v797 = vld [vmem:[%s359 + $0x50] sm:$0xff]
      %v798 = vld [vmem:[%s359 + $0x58] sm:$0xff]
      %v799 = vld [vmem:[%s359 + $0x60] sm:$0xff]
      %v813 = vcombine.low %v787, %v787
      %v814 = vcombine.low %v788, %v788
      %v815 = vcombine.low %v789, %v789
      %v816 = vcombine.low %v790, %v790
      %v817 = vcombine.low %v791, %v791
      %v818 = vcombine.low %v792, %v792
      %v819 = vcombine.low %v793, %v793
      %v820 = vcombine.low %v794, %v794
      %v821 = vcombine.low %v795, %v795
      %v822 = vcombine.low %v796, %v796
      %v823 = vcombine.low %v797, %v797
      %v824 = vcombine.low %v798, %v798
      %v825 = vcombine.low %v799, %v799
      %826 = vrot.lane.b32.xlu0 %v813, 110
      %v827 = vpop.permute.xlu0 %826
      %828 = vrot.lane.b32.xlu0 %v787, 110
      %v829 = vpop.permute.xlu0 %828
      %830 = vrot.lane.b32.xlu0 %v814, 110
      %v831 = vpop.permute.xlu0 %830
      %832 = vrot.lane.b32.xlu0 %v788, 110
      %v833 = vpop.permute.xlu0 %832
      %834 = vrot.lane.b32.xlu0 %v815, 110
      %v835 = vpop.permute.xlu0 %834
      %836 = vrot.lane.b32.xlu0 %v789, 110
      %v837 = vpop.permute.xlu0 %836
      %838 = vrot.lane.b32.xlu0 %v816, 110
      %v839 = vpop.permute.xlu0 %838
      %840 = vrot.lane.b32.xlu0 %v790, 110
      %v841 = vpop.permute.xlu0 %840
      %842 = vrot.lane.b32.xlu0 %v817, 110
      %v843 = vpop.permute.xlu0 %842
      %844 = vrot.lane.b32.xlu0 %v791, 110
      %v845 = vpop.permute.xlu0 %844
      %846 = vrot.lane.b32.xlu0 %v818, 110
      %v847 = vpop.permute.xlu0 %846
      %848 = vrot.lane.b32.xlu0 %v792, 110
      %v849 = vpop.permute.xlu0 %848
      %850 = vrot.lane.b32.xlu0 %v819, 110
      %v851 = vpop.permute.xlu0 %850
      %852 = vrot.lane.b32.xlu0 %v793, 110
      %v853 = vpop.permute.xlu0 %852
      %854 = vrot.lane.b32.xlu0 %v820, 110
      %v855 = vpop.permute.xlu0 %854
      %856 = vrot.lane.b32.xlu0 %v794, 110
      %v857 = vpop.permute.xlu0 %856
      %858 = vrot.lane.b32.xlu0 %v821, 110
      %v859 = vpop.permute.xlu0 %858
      %860 = vrot.lane.b32.xlu0 %v795, 110
      %v861 = vpop.permute.xlu0 %860
      %862 = vrot.lane.b32.xlu0 %v822, 110
      %v863 = vpop.permute.xlu0 %862
      %864 = vrot.lane.b32.xlu0 %v796, 110
      %v865 = vpop.permute.xlu0 %864
      %866 = vrot.lane.b32.xlu0 %v823, 110
      %v867 = vpop.permute.xlu0 %866
      %868 = vrot.lane.b32.xlu0 %v797, 110
      %v869 = vpop.permute.xlu0 %868
      %870 = vrot.lane.b32.xlu0 %v824, 110
      %v871 = vpop.permute.xlu0 %870
      %872 = vrot.lane.b32.xlu0 %v798, 110
      %v873 = vpop.permute.xlu0 %872
      %874 = vrot.lane.b32.xlu0 %v825, 110
      %v875 = vpop.permute.xlu0 %874
      %876 = vrot.lane.b32.xlu0 %v799, 110
      %v877 = vpop.permute.xlu0 %876
      %vm878 = vcmask 900096
      %v879 = vsel %vm878, %v827, %v829
      %v880 = vsel %vm878, %v829, %v831
      %v881 = vsel %vm878, %v831, %v833
      %v882 = vsel %vm878, %v833, %v835
      %v883 = vsel %vm878, %v835, %v837
      %v884 = vsel %vm878, %v837, %v839
      %v885 = vsel %vm878, %v839, %v841
      %v886 = vsel %vm878, %v841, %v843
      %v887 = vsel %vm878, %v843, %v845
      %v888 = vsel %vm878, %v845, %v847
      %v889 = vsel %vm878, %v847, %v849
      %v890 = vsel %vm878, %v849, %v851
      %v891 = vsel %vm878, %v851, %v853
      %v892 = vsel %vm878, %v853, %v855
      %v893 = vsel %vm878, %v855, %v857
      %v894 = vsel %vm878, %v857, %v859
      %v895 = vsel %vm878, %v859, %v861
      %v896 = vsel %vm878, %v861, %v863
      %v897 = vsel %vm878, %v863, %v865
      %v898 = vsel %vm878, %v865, %v867
      %v899 = vsel %vm878, %v867, %v869
      %v900 = vsel %vm878, %v869, %v871
      %v901 = vsel %vm878, %v871, %v873
      %v902 = vsel %vm878, %v873, %v875
      %v903 = vsel %vm878, %v875, %v877
      %930 = vst [vmem:[#allocation2 + $0xd0] sm:$0xf0] %v879
      %931 = vst [vmem:[#allocation2 + $0xd8] sm:$0xf0] %v880
      %932 = vst [vmem:[#allocation2 + $0xe0] sm:$0xf0] %v881
      %933 = vst [vmem:[#allocation2 + $0xe8] sm:$0xf0] %v882
      %934 = vst [vmem:[#allocation2 + $0xf0] sm:$0xf0] %v883
      %935 = vst [vmem:[#allocation2 + $0xf8] sm:$0xf0] %v884
      %936 = vst [vmem:[#allocation2 + $0x100] sm:$0xf0] %v885
      %937 = vst [vmem:[#allocation2 + $0x108] sm:$0xf0] %v886
      %938 = vst [vmem:[#allocation2 + $0x110] sm:$0xf0] %v887
      %939 = vst [vmem:[#allocation2 + $0x118] sm:$0xf0] %v888
      %940 = vst [vmem:[#allocation2 + $0x120] sm:$0xf0] %v889
      %941 = vst [vmem:[#allocation2 + $0x128] sm:$0xf0] %v890
      %942 = vst [vmem:[#allocation2 + $0x130] sm:$0xf0] %v891
      %943 = vst [vmem:[#allocation2 + $0x138] sm:$0xf0] %v892
      %944 = vst [vmem:[#allocation2 + $0x140] sm:$0xf0] %v893
      %945 = vst [vmem:[#allocation2 + $0x148] sm:$0xf0] %v894
      %946 = vst [vmem:[#allocation2 + $0x150] sm:$0xf0] %v895
      %947 = vst [vmem:[#allocation2 + $0x158] sm:$0xf0] %v896
      %948 = vst [vmem:[#allocation2 + $0x160] sm:$0xf0] %v897
      %949 = vst [vmem:[#allocation2 + $0x168] sm:$0xf0] %v898
      %950 = vst [vmem:[#allocation2 + $0x170] sm:$0xf0] %v899
      %951 = vst [vmem:[#allocation2 + $0x178] sm:$0xf0] %v900
      %952 = vst [vmem:[#allocation2 + $0x180] sm:$0xf0] %v901
      %953 = vst [vmem:[#allocation2 + $0x188] sm:$0xf0] %v902
      %954 = vst [vmem:[#allocation2 + $0x190] sm:$0xf0] %v903
      %955 = vst.msk [vmem:[#allocation2 + $0x198] sm:$0xf0] %vm616, %v877
      %v956 = vld [vmem:[%s359] sm:$0xff]
      %v957 = vld [vmem:[%s359 + $0x8] sm:$0xff]
      %v958 = vld [vmem:[%s359 + $0x10] sm:$0xff]
      %v959 = vld [vmem:[%s359 + $0x18] sm:$0xff]
      %v960 = vld [vmem:[%s359 + $0x20] sm:$0xff]
      %v961 = vld [vmem:[%s359 + $0x28] sm:$0xff]
      %v962 = vld [vmem:[%s359 + $0x30] sm:$0xff]
      %v963 = vld [vmem:[%s359 + $0x38] sm:$0xff]
      %v964 = vld [vmem:[%s359 + $0x40] sm:$0xff]
      %v965 = vld [vmem:[%s359 + $0x48] sm:$0xff]
      %v966 = vld [vmem:[%s359 + $0x50] sm:$0xff]
      %v967 = vld [vmem:[%s359 + $0x58] sm:$0xff]
      %v968 = vld [vmem:[%s359 + $0x60] sm:$0xff]
      %v982 = vcombine.high %v956, %v956
      %v983 = vcombine.high %v957, %v957
      %v984 = vcombine.high %v958, %v958
      %v985 = vcombine.high %v959, %v959
      %v986 = vcombine.high %v960, %v960
      %v987 = vcombine.high %v961, %v961
      %v988 = vcombine.high %v962, %v962
      %v989 = vcombine.high %v963, %v963
      %v990 = vcombine.high %v964, %v964
      %v991 = vcombine.high %v965, %v965
      %v992 = vcombine.high %v966, %v966
      %v993 = vcombine.high %v967, %v967
      %v994 = vcombine.high %v968, %v968
      %995 = vrot.lane.b32.xlu0 %v956, 109
      %v996 = vpop.permute.xlu0 %995
      %997 = vrot.lane.b32.xlu0 %v982, 109
      %v998 = vpop.permute.xlu0 %997
      %999 = vrot.lane.b32.xlu0 %v957, 109
      %v1000 = vpop.permute.xlu0 %999
      %1001 = vrot.lane.b32.xlu0 %v983, 109
      %v1002 = vpop.permute.xlu0 %1001
      %1003 = vrot.lane.b32.xlu0 %v958, 109
      %v1004 = vpop.permute.xlu0 %1003
      %1005 = vrot.lane.b32.xlu0 %v984, 109
      %v1006 = vpop.permute.xlu0 %1005
      %1007 = vrot.lane.b32.xlu0 %v959, 109
      %v1008 = vpop.permute.xlu0 %1007
      %1009 = vrot.lane.b32.xlu0 %v985, 109
      %v1010 = vpop.permute.xlu0 %1009
      %1011 = vrot.lane.b32.xlu0 %v960, 109
      %v1012 = vpop.permute.xlu0 %1011
      %1013 = vrot.lane.b32.xlu0 %v986, 109
      %v1014 = vpop.permute.xlu0 %1013
      %1015 = vrot.lane.b32.xlu0 %v961, 109
      %v1016 = vpop.permute.xlu0 %1015
      %1017 = vrot.lane.b32.xlu0 %v987, 109
      %v1018 = vpop.permute.xlu0 %1017
      %1019 = vrot.lane.b32.xlu0 %v962, 109
      %v1020 = vpop.permute.xlu0 %1019
      %1021 = vrot.lane.b32.xlu0 %v988, 109
      %v1022 = vpop.permute.xlu0 %1021
      %1023 = vrot.lane.b32.xlu0 %v963, 109
      %v1024 = vpop.permute.xlu0 %1023
      %1025 = vrot.lane.b32.xlu0 %v989, 109
      %v1026 = vpop.permute.xlu0 %1025
      %1027 = vrot.lane.b32.xlu0 %v964, 109
      %v1028 = vpop.permute.xlu0 %1027
      %1029 = vrot.lane.b32.xlu0 %v990, 109
      %v1030 = vpop.permute.xlu0 %1029
      %1031 = vrot.lane.b32.xlu0 %v965, 109
      %v1032 = vpop.permute.xlu0 %1031
      %1033 = vrot.lane.b32.xlu0 %v991, 109
      %v1034 = vpop.permute.xlu0 %1033
      %1035 = vrot.lane.b32.xlu0 %v966, 109
      %v1036 = vpop.permute.xlu0 %1035
      %1037 = vrot.lane.b32.xlu0 %v992, 109
      %v1038 = vpop.permute.xlu0 %1037
      %1039 = vrot.lane.b32.xlu0 %v967, 109
      %v1040 = vpop.permute.xlu0 %1039
      %1041 = vrot.lane.b32.xlu0 %v993, 109
      %v1042 = vpop.permute.xlu0 %1041
      %1043 = vrot.lane.b32.xlu0 %v968, 109
      %v1044 = vpop.permute.xlu0 %1043
      %1045 = vrot.lane.b32.xlu0 %v994, 109
      %v1046 = vpop.permute.xlu0 %1045
      %vm1047 = vcmask 891904
      %v1048 = vsel %vm1047, %v996, %v998
      %v1049 = vsel %vm1047, %v998, %v1000
      %v1050 = vsel %vm1047, %v1000, %v1002
      %v1051 = vsel %vm1047, %v1002, %v1004
      %v1052 = vsel %vm1047, %v1004, %v1006
      %v1053 = vsel %vm1047, %v1006, %v1008
      %v1054 = vsel %vm1047, %v1008, %v1010
      %v1055 = vsel %vm1047, %v1010, %v1012
      %v1056 = vsel %vm1047, %v1012, %v1014
      %v1057 = vsel %vm1047, %v1014, %v1016
      %v1058 = vsel %vm1047, %v1016, %v1018
      %v1059 = vsel %vm1047, %v1018, %v1020
      %v1060 = vsel %vm1047, %v1020, %v1022
      %v1061 = vsel %vm1047, %v1022, %v1024
      %v1062 = vsel %vm1047, %v1024, %v1026
      %v1063 = vsel %vm1047, %v1026, %v1028
      %v1064 = vsel %vm1047, %v1028, %v1030
      %v1065 = vsel %vm1047, %v1030, %v1032
      %v1066 = vsel %vm1047, %v1032, %v1034
      %v1067 = vsel %vm1047, %v1034, %v1036
      %v1068 = vsel %vm1047, %v1036, %v1038
      %v1069 = vsel %vm1047, %v1038, %v1040
      %v1070 = vsel %vm1047, %v1040, %v1042
      %v1071 = vsel %vm1047, %v1042, %v1044
      %v1072 = vsel %vm1047, %v1044, %v1046
      %1099 = vst [vmem:[#allocation2 + $0x1a0] sm:$0xf] %v1048
      %1100 = vst [vmem:[#allocation2 + $0x1a8] sm:$0xf] %v1049
      %1101 = vst [vmem:[#allocation2 + $0x1b0] sm:$0xf] %v1050
      %1102 = vst [vmem:[#allocation2 + $0x1b8] sm:$0xf] %v1051
      %1103 = vst [vmem:[#allocation2 + $0x1c0] sm:$0xf] %v1052
      %1104 = vst [vmem:[#allocation2 + $0x1c8] sm:$0xf] %v1053
      %1105 = vst [vmem:[#allocation2 + $0x1d0] sm:$0xf] %v1054
      %1106 = vst [vmem:[#allocation2 + $0x1d8] sm:$0xf] %v1055
      %1107 = vst [vmem:[#allocation2 + $0x1e0] sm:$0xf] %v1056
      %1108 = vst [vmem:[#allocation2 + $0x1e8] sm:$0xf] %v1057
      %1109 = vst [vmem:[#allocation2 + $0x1f0] sm:$0xf] %v1058
      %1110 = vst [vmem:[#allocation2 + $0x1f8] sm:$0xf] %v1059
      %1111 = vst [vmem:[#allocation2 + $0x200] sm:$0xf] %v1060
      %1112 = vst [vmem:[#allocation2 + $0x208] sm:$0xf] %v1061
      %1113 = vst [vmem:[#allocation2 + $0x210] sm:$0xf] %v1062
      %1114 = vst [vmem:[#allocation2 + $0x218] sm:$0xf] %v1063
      %1115 = vst [vmem:[#allocation2 + $0x220] sm:$0xf] %v1064
      %1116 = vst [vmem:[#allocation2 + $0x228] sm:$0xf] %v1065
      %1117 = vst [vmem:[#allocation2 + $0x230] sm:$0xf] %v1066
      %1118 = vst [vmem:[#allocation2 + $0x238] sm:$0xf] %v1067
      %1119 = vst [vmem:[#allocation2 + $0x240] sm:$0xf] %v1068
      %1120 = vst [vmem:[#allocation2 + $0x248] sm:$0xf] %v1069
      %1121 = vst [vmem:[#allocation2 + $0x250] sm:$0xf] %v1070
      %1122 = vst [vmem:[#allocation2 + $0x258] sm:$0xf] %v1071
      %1123 = vst [vmem:[#allocation2 + $0x260] sm:$0xf] %v1072
      %1124 = vst.msk [vmem:[#allocation2 + $0x268] sm:$0xf] %vm446, %v1046
      %v1125 = vld [vmem:[%s359] sm:$0xff]
      %v1126 = vld [vmem:[%s359 + $0x8] sm:$0xff]
      %v1127 = vld [vmem:[%s359 + $0x10] sm:$0xff]
      %v1128 = vld [vmem:[%s359 + $0x18] sm:$0xff]
      %v1129 = vld [vmem:[%s359 + $0x20] sm:$0xff]
      %v1130 = vld [vmem:[%s359 + $0x28] sm:$0xff]
      %v1131 = vld [vmem:[%s359 + $0x30] sm:$0xff]
      %v1132 = vld [vmem:[%s359 + $0x38] sm:$0xff]
      %v1133 = vld [vmem:[%s359 + $0x40] sm:$0xff]
      %v1134 = vld [vmem:[%s359 + $0x48] sm:$0xff]
      %v1135 = vld [vmem:[%s359 + $0x50] sm:$0xff]
      %v1136 = vld [vmem:[%s359 + $0x58] sm:$0xff]
      %v1137 = vld [vmem:[%s359 + $0x60] sm:$0xff]
      %v1151 = vcombine.low %v1125, %v1125
      %v1152 = vcombine.low %v1126, %v1126
      %v1153 = vcombine.low %v1127, %v1127
      %v1154 = vcombine.low %v1128, %v1128
      %v1155 = vcombine.low %v1129, %v1129
      %v1156 = vcombine.low %v1130, %v1130
      %v1157 = vcombine.low %v1131, %v1131
      %v1158 = vcombine.low %v1132, %v1132
      %v1159 = vcombine.low %v1133, %v1133
      %v1160 = vcombine.low %v1134, %v1134
      %v1161 = vcombine.low %v1135, %v1135
      %v1162 = vcombine.low %v1136, %v1136
      %v1163 = vcombine.low %v1137, %v1137
      %1164 = vrot.lane.b32.xlu0 %v1151, 108
      %v1165 = vpop.permute.xlu0 %1164
      %1166 = vrot.lane.b32.xlu0 %v1125, 108
      %v1167 = vpop.permute.xlu0 %1166
      %1168 = vrot.lane.b32.xlu0 %v1152, 108
      %v1169 = vpop.permute.xlu0 %1168
      %1170 = vrot.lane.b32.xlu0 %v1126, 108
      %v1171 = vpop.permute.xlu0 %1170
      %1172 = vrot.lane.b32.xlu0 %v1153, 108
      %v1173 = vpop.permute.xlu0 %1172
      %1174 = vrot.lane.b32.xlu0 %v1127, 108
      %v1175 = vpop.permute.xlu0 %1174
      %1176 = vrot.lane.b32.xlu0 %v1154, 108
      %v1177 = vpop.permute.xlu0 %1176
      %1178 = vrot.lane.b32.xlu0 %v1128, 108
      %v1179 = vpop.permute.xlu0 %1178
      %1180 = vrot.lane.b32.xlu0 %v1155, 108
      %v1181 = vpop.permute.xlu0 %1180
      %1182 = vrot.lane.b32.xlu0 %v1129, 108
      %v1183 = vpop.permute.xlu0 %1182
      %1184 = vrot.lane.b32.xlu0 %v1156, 108
      %v1185 = vpop.permute.xlu0 %1184
      %1186 = vrot.lane.b32.xlu0 %v1130, 108
      %v1187 = vpop.permute.xlu0 %1186
      %1188 = vrot.lane.b32.xlu0 %v1157, 108
      %v1189 = vpop.permute.xlu0 %1188
      %1190 = vrot.lane.b32.xlu0 %v1131, 108
      %v1191 = vpop.permute.xlu0 %1190
      %1192 = vrot.lane.b32.xlu0 %v1158, 108
      %v1193 = vpop.permute.xlu0 %1192
      %1194 = vrot.lane.b32.xlu0 %v1132, 108
      %v1195 = vpop.permute.xlu0 %1194
      %1196 = vrot.lane.b32.xlu0 %v1159, 108
      %v1197 = vpop.permute.xlu0 %1196
      %1198 = vrot.lane.b32.xlu0 %v1133, 108
      %v1199 = vpop.permute.xlu0 %1198
      %1200 = vrot.lane.b32.xlu0 %v1160, 108
      %v1201 = vpop.permute.xlu0 %1200
      %1202 = vrot.lane.b32.xlu0 %v1134, 108
      %v1203 = vpop.permute.xlu0 %1202
      %1204 = vrot.lane.b32.xlu0 %v1161, 108
      %v1205 = vpop.permute.xlu0 %1204
      %1206 = vrot.lane.b32.xlu0 %v1135, 108
      %v1207 = vpop.permute.xlu0 %1206
      %1208 = vrot.lane.b32.xlu0 %v1162, 108
      %v1209 = vpop.permute.xlu0 %1208
      %1210 = vrot.lane.b32.xlu0 %v1136, 108
      %v1211 = vpop.permute.xlu0 %1210
      %1212 = vrot.lane.b32.xlu0 %v1163, 108
      %v1213 = vpop.permute.xlu0 %1212
      %1214 = vrot.lane.b32.xlu0 %v1137, 108
      %v1215 = vpop.permute.xlu0 %1214
      %vm1216 = vcmask 883712
      %v1217 = vsel %vm1216, %v1165, %v1167
      %v1218 = vsel %vm1216, %v1167, %v1169
      %v1219 = vsel %vm1216, %v1169, %v1171
      %v1220 = vsel %vm1216, %v1171, %v1173
      %v1221 = vsel %vm1216, %v1173, %v1175
      %v1222 = vsel %vm1216, %v1175, %v1177
      %v1223 = vsel %vm1216, %v1177, %v1179
      %v1224 = vsel %vm1216, %v1179, %v1181
      %v1225 = vsel %vm1216, %v1181, %v1183
      %v1226 = vsel %vm1216, %v1183, %v1185
      %v1227 = vsel %vm1216, %v1185, %v1187
      %v1228 = vsel %vm1216, %v1187, %v1189
      %v1229 = vsel %vm1216, %v1189, %v1191
      %v1230 = vsel %vm1216, %v1191, %v1193
      %v1231 = vsel %vm1216, %v1193, %v1195
      %v1232 = vsel %vm1216, %v1195, %v1197
      %v1233 = vsel %vm1216, %v1197, %v1199
      %v1234 = vsel %vm1216, %v1199, %v1201
      %v1235 = vsel %vm1216, %v1201, %v1203
      %v1236 = vsel %vm1216, %v1203, %v1205
      %v1237 = vsel %vm1216, %v1205, %v1207
      %v1238 = vsel %vm1216, %v1207, %v1209
      %v1239 = vsel %vm1216, %v1209, %v1211
      %v1240 = vsel %vm1216, %v1211, %v1213
      %v1241 = vsel %vm1216, %v1213, %v1215
      %1268 = vst [vmem:[#allocation2 + $0x1a0] sm:$0xf0] %v1217
      %1269 = vst [vmem:[#allocation2 + $0x1a8] sm:$0xf0] %v1218
      %1270 = vst [vmem:[#allocation2 + $0x1b0] sm:$0xf0] %v1219
      %1271 = vst [vmem:[#allocation2 + $0x1b8] sm:$0xf0] %v1220
      %1272 = vst [vmem:[#allocation2 + $0x1c0] sm:$0xf0] %v1221
      %1273 = vst [vmem:[#allocation2 + $0x1c8] sm:$0xf0] %v1222
      %1274 = vst [vmem:[#allocation2 + $0x1d0] sm:$0xf0] %v1223
      %1275 = vst [vmem:[#allocation2 + $0x1d8] sm:$0xf0] %v1224
      %1276 = vst [vmem:[#allocation2 + $0x1e0] sm:$0xf0] %v1225
      %1277 = vst [vmem:[#allocation2 + $0x1e8] sm:$0xf0] %v1226
      %1278 = vst [vmem:[#allocation2 + $0x1f0] sm:$0xf0] %v1227
      %1279 = vst [vmem:[#allocation2 + $0x1f8] sm:$0xf0] %v1228
      %1280 = vst [vmem:[#allocation2 + $0x200] sm:$0xf0] %v1229
      %1281 = vst [vmem:[#allocation2 + $0x208] sm:$0xf0] %v1230
      %1282 = vst [vmem:[#allocation2 + $0x210] sm:$0xf0] %v1231
      %1283 = vst [vmem:[#allocation2 + $0x218] sm:$0xf0] %v1232
      %1284 = vst [vmem:[#allocation2 + $0x220] sm:$0xf0] %v1233
      %1285 = vst [vmem:[#allocation2 + $0x228] sm:$0xf0] %v1234
      %1286 = vst [vmem:[#allocation2 + $0x230] sm:$0xf0] %v1235
      %1287 = vst [vmem:[#allocation2 + $0x238] sm:$0xf0] %v1236
      %1288 = vst [vmem:[#allocation2 + $0x240] sm:$0xf0] %v1237
      %1289 = vst [vmem:[#allocation2 + $0x248] sm:$0xf0] %v1238
      %1290 = vst [vmem:[#allocation2 + $0x250] sm:$0xf0] %v1239
      %1291 = vst [vmem:[#allocation2 + $0x258] sm:$0xf0] %v1240
      %1292 = vst [vmem:[#allocation2 + $0x260] sm:$0xf0] %v1241
      %1293 = vst.msk [vmem:[#allocation2 + $0x268] sm:$0xf0] %vm616, %v1215
      %v1294 = vld [vmem:[%s359] sm:$0xff]
      %v1295 = vld [vmem:[%s359 + $0x8] sm:$0xff]
      %v1296 = vld [vmem:[%s359 + $0x10] sm:$0xff]
      %v1297 = vld [vmem:[%s359 + $0x18] sm:$0xff]
      %v1298 = vld [vmem:[%s359 + $0x20] sm:$0xff]
      %v1299 = vld [vmem:[%s359 + $0x28] sm:$0xff]
      %v1300 = vld [vmem:[%s359 + $0x30] sm:$0xff]
      %v1301 = vld [vmem:[%s359 + $0x38] sm:$0xff]
      %v1302 = vld [vmem:[%s359 + $0x40] sm:$0xff]
      %v1303 = vld [vmem:[%s359 + $0x48] sm:$0xff]
      %v1304 = vld [vmem:[%s359 + $0x50] sm:$0xff]
      %v1305 = vld [vmem:[%s359 + $0x58] sm:$0xff]
      %v1306 = vld [vmem:[%s359 + $0x60] sm:$0xff]
      %v1320 = vcombine.high %v1294, %v1294
      %v1321 = vcombine.high %v1295, %v1295
      %v1322 = vcombine.high %v1296, %v1296
      %v1323 = vcombine.high %v1297, %v1297
      %v1324 = vcombine.high %v1298, %v1298
      %v1325 = vcombine.high %v1299, %v1299
      %v1326 = vcombine.high %v1300, %v1300
      %v1327 = vcombine.high %v1301, %v1301
      %v1328 = vcombine.high %v1302, %v1302
      %v1329 = vcombine.high %v1303, %v1303
      %v1330 = vcombine.high %v1304, %v1304
      %v1331 = vcombine.high %v1305, %v1305
      %v1332 = vcombine.high %v1306, %v1306
      %1333 = vrot.lane.b32.xlu0 %v1294, 92
      %v1334 = vpop.permute.xlu0 %1333
      %1335 = vrot.lane.b32.xlu0 %v1320, 92
      %v1336 = vpop.permute.xlu0 %1335
      %1337 = vrot.lane.b32.xlu0 %v1295, 92
      %v1338 = vpop.permute.xlu0 %1337
      %1339 = vrot.lane.b32.xlu0 %v1321, 92
      %v1340 = vpop.permute.xlu0 %1339
      %1341 = vrot.lane.b32.xlu0 %v1296, 92
      %v1342 = vpop.permute.xlu0 %1341
      %1343 = vrot.lane.b32.xlu0 %v1322, 92
      %v1344 = vpop.permute.xlu0 %1343
      %1345 = vrot.lane.b32.xlu0 %v1297, 92
      %v1346 = vpop.permute.xlu0 %1345
      %1347 = vrot.lane.b32.xlu0 %v1323, 92
      %v1348 = vpop.permute.xlu0 %1347
      %1349 = vrot.lane.b32.xlu0 %v1298, 92
      %v1350 = vpop.permute.xlu0 %1349
      %1351 = vrot.lane.b32.xlu0 %v1324, 92
      %v1352 = vpop.permute.xlu0 %1351
      %1353 = vrot.lane.b32.xlu0 %v1299, 92
      %v1354 = vpop.permute.xlu0 %1353
      %1355 = vrot.lane.b32.xlu0 %v1325, 92
      %v1356 = vpop.permute.xlu0 %1355
      %1357 = vrot.lane.b32.xlu0 %v1300, 92
      %v1358 = vpop.permute.xlu0 %1357
      %1359 = vrot.lane.b32.xlu0 %v1326, 92
      %v1360 = vpop.permute.xlu0 %1359
      %1361 = vrot.lane.b32.xlu0 %v1301, 92
      %v1362 = vpop.permute.xlu0 %1361
      %1363 = vrot.lane.b32.xlu0 %v1327, 92
      %v1364 = vpop.permute.xlu0 %1363
      %1365 = vrot.lane.b32.xlu0 %v1302, 92
      %v1366 = vpop.permute.xlu0 %1365
      %1367 = vrot.lane.b32.xlu0 %v1328, 92
      %v1368 = vpop.permute.xlu0 %1367
      %1369 = vrot.lane.b32.xlu0 %v1303, 92
      %v1370 = vpop.permute.xlu0 %1369
      %1371 = vrot.lane.b32.xlu0 %v1329, 92
      %v1372 = vpop.permute.xlu0 %1371
      %1373 = vrot.lane.b32.xlu0 %v1304, 92
      %v1374 = vpop.permute.xlu0 %1373
      %1375 = vrot.lane.b32.xlu0 %v1330, 92
      %v1376 = vpop.permute.xlu0 %1375
      %1377 = vrot.lane.b32.xlu0 %v1305, 92
      %v1378 = vpop.permute.xlu0 %1377
      %1379 = vrot.lane.b32.xlu0 %v1331, 92
      %v1380 = vpop.permute.xlu0 %1379
      %1381 = vrot.lane.b32.xlu0 %v1306, 92
      %v1382 = vpop.permute.xlu0 %1381
      %1383 = vrot.lane.b32.xlu0 %v1332, 92
      %v1384 = vpop.permute.xlu0 %1383
      %vm1385 = vcmask 752640
      %v1386 = vsel %vm1385, %v1334, %v1336
      %v1387 = vsel %vm1385, %v1336, %v1338
      %v1388 = vsel %vm1385, %v1338, %v1340
      %v1389 = vsel %vm1385, %v1340, %v1342
      %v1390 = vsel %vm1385, %v1342, %v1344
      %v1391 = vsel %vm1385, %v1344, %v1346
      %v1392 = vsel %vm1385, %v1346, %v1348
      %v1393 = vsel %vm1385, %v1348, %v1350
      %v1394 = vsel %vm1385, %v1350, %v1352
      %v1395 = vsel %vm1385, %v1352, %v1354
      %v1396 = vsel %vm1385, %v1354, %v1356
      %v1397 = vsel %vm1385, %v1356, %v1358
      %v1398 = vsel %vm1385, %v1358, %v1360
      %v1399 = vsel %vm1385, %v1360, %v1362
      %v1400 = vsel %vm1385, %v1362, %v1364
      %v1401 = vsel %vm1385, %v1364, %v1366
      %v1402 = vsel %vm1385, %v1366, %v1368
      %v1403 = vsel %vm1385, %v1368, %v1370
      %v1404 = vsel %vm1385, %v1370, %v1372
      %v1405 = vsel %vm1385, %v1372, %v1374
      %v1406 = vsel %vm1385, %v1374, %v1376
      %v1407 = vsel %vm1385, %v1376, %v1378
      %v1408 = vsel %vm1385, %v1378, %v1380
      %v1409 = vsel %vm1385, %v1380, %v1382
      %v1410 = vsel %vm1385, %v1382, %v1384
      %1437 = vst [vmem:[#allocation2 + $0x270] sm:$0xf] %v1386
      %1438 = vst [vmem:[#allocation2 + $0x278] sm:$0xf] %v1387
      %1439 = vst [vmem:[#allocation2 + $0x280] sm:$0xf] %v1388
      %1440 = vst [vmem:[#allocation2 + $0x288] sm:$0xf] %v1389
      %1441 = vst [vmem:[#allocation2 + $0x290] sm:$0xf] %v1390
      %1442 = vst [vmem:[#allocation2 + $0x298] sm:$0xf] %v1391
      %1443 = vst [vmem:[#allocation2 + $0x2a0] sm:$0xf] %v1392
      %1444 = vst [vmem:[#allocation2 + $0x2a8] sm:$0xf] %v1393
      %1445 = vst [vmem:[#allocation2 + $0x2b0] sm:$0xf] %v1394
      %1446 = vst [vmem:[#allocation2 + $0x2b8] sm:$0xf] %v1395
      %1447 = vst [vmem:[#allocation2 + $0x2c0] sm:$0xf] %v1396
      %1448 = vst [vmem:[#allocation2 + $0x2c8] sm:$0xf] %v1397
      %1449 = vst [vmem:[#allocation2 + $0x2d0] sm:$0xf] %v1398
      %1450 = vst [vmem:[#allocation2 + $0x2d8] sm:$0xf] %v1399
      %1451 = vst [vmem:[#allocation2 + $0x2e0] sm:$0xf] %v1400
      %1452 = vst [vmem:[#allocation2 + $0x2e8] sm:$0xf] %v1401
      %1453 = vst [vmem:[#allocation2 + $0x2f0] sm:$0xf] %v1402
      %1454 = vst [vmem:[#allocation2 + $0x2f8] sm:$0xf] %v1403
      %1455 = vst [vmem:[#allocation2 + $0x300] sm:$0xf] %v1404
      %1456 = vst [vmem:[#allocation2 + $0x308] sm:$0xf] %v1405
      %1457 = vst [vmem:[#allocation2 + $0x310] sm:$0xf] %v1406
      %1458 = vst [vmem:[#allocation2 + $0x318] sm:$0xf] %v1407
      %1459 = vst [vmem:[#allocation2 + $0x320] sm:$0xf] %v1408
      %1460 = vst [vmem:[#allocation2 + $0x328] sm:$0xf] %v1409
      %1461 = vst [vmem:[#allocation2 + $0x330] sm:$0xf] %v1410
      %1462 = vst.msk [vmem:[#allocation2 + $0x338] sm:$0xf] %vm446, %v1384
      %v1463 = vld [vmem:[%s359] sm:$0xff]
      %v1464 = vld [vmem:[%s359 + $0x8] sm:$0xff]
      %v1465 = vld [vmem:[%s359 + $0x10] sm:$0xff]
      %v1466 = vld [vmem:[%s359 + $0x18] sm:$0xff]
      %v1467 = vld [vmem:[%s359 + $0x20] sm:$0xff]
      %v1468 = vld [vmem:[%s359 + $0x28] sm:$0xff]
      %v1469 = vld [vmem:[%s359 + $0x30] sm:$0xff]
      %v1470 = vld [vmem:[%s359 + $0x38] sm:$0xff]
      %v1471 = vld [vmem:[%s359 + $0x40] sm:$0xff]
      %v1472 = vld [vmem:[%s359 + $0x48] sm:$0xff]
      %v1473 = vld [vmem:[%s359 + $0x50] sm:$0xff]
      %v1474 = vld [vmem:[%s359 + $0x58] sm:$0xff]
      %v1475 = vld [vmem:[%s359 + $0x60] sm:$0xff]
      %v1489 = vcombine.low %v1463, %v1463
      %v1490 = vcombine.low %v1464, %v1464
      %v1491 = vcombine.low %v1465, %v1465
      %v1492 = vcombine.low %v1466, %v1466
      %v1493 = vcombine.low %v1467, %v1467
      %v1494 = vcombine.low %v1468, %v1468
      %v1495 = vcombine.low %v1469, %v1469
      %v1496 = vcombine.low %v1470, %v1470
      %v1497 = vcombine.low %v1471, %v1471
      %v1498 = vcombine.low %v1472, %v1472
      %v1499 = vcombine.low %v1473, %v1473
      %v1500 = vcombine.low %v1474, %v1474
      %v1501 = vcombine.low %v1475, %v1475
      %1502 = vrot.lane.b32.xlu0 %v1489, 91
      %v1503 = vpop.permute.xlu0 %1502
      %1504 = vrot.lane.b32.xlu0 %v1463, 91
      %v1505 = vpop.permute.xlu0 %1504
      %1506 = vrot.lane.b32.xlu0 %v1490, 91
      %v1507 = vpop.permute.xlu0 %1506
      %1508 = vrot.lane.b32.xlu0 %v1464, 91
      %v1509 = vpop.permute.xlu0 %1508
      %1510 = vrot.lane.b32.xlu0 %v1491, 91
      %v1511 = vpop.permute.xlu0 %1510
      %1512 = vrot.lane.b32.xlu0 %v1465, 91
      %v1513 = vpop.permute.xlu0 %1512
      %1514 = vrot.lane.b32.xlu0 %v1492, 91
      %v1515 = vpop.permute.xlu0 %1514
      %1516 = vrot.lane.b32.xlu0 %v1466, 91
      %v1517 = vpop.permute.xlu0 %1516
      %1518 = vrot.lane.b32.xlu0 %v1493, 91
      %v1519 = vpop.permute.xlu0 %1518
      %1520 = vrot.lane.b32.xlu0 %v1467, 91
      %v1521 = vpop.permute.xlu0 %1520
      %1522 = vrot.lane.b32.xlu0 %v1494, 91
      %v1523 = vpop.permute.xlu0 %1522
      %1524 = vrot.lane.b32.xlu0 %v1468, 91
      %v1525 = vpop.permute.xlu0 %1524
      %1526 = vrot.lane.b32.xlu0 %v1495, 91
      %v1527 = vpop.permute.xlu0 %1526
      %1528 = vrot.lane.b32.xlu0 %v1469, 91
      %v1529 = vpop.permute.xlu0 %1528
      %1530 = vrot.lane.b32.xlu0 %v1496, 91
      %v1531 = vpop.permute.xlu0 %1530
      %1532 = vrot.lane.b32.xlu0 %v1470, 91
      %v1533 = vpop.permute.xlu0 %1532
      %1534 = vrot.lane.b32.xlu0 %v1497, 91
      %v1535 = vpop.permute.xlu0 %1534
      %1536 = vrot.lane.b32.xlu0 %v1471, 91
      %v1537 = vpop.permute.xlu0 %1536
      %1538 = vrot.lane.b32.xlu0 %v1498, 91
      %v1539 = vpop.permute.xlu0 %1538
      %1540 = vrot.lane.b32.xlu0 %v1472, 91
      %v1541 = vpop.permute.xlu0 %1540
      %1542 = vrot.lane.b32.xlu0 %v1499, 91
      %v1543 = vpop.permute.xlu0 %1542
      %1544 = vrot.lane.b32.xlu0 %v1473, 91
      %v1545 = vpop.permute.xlu0 %1544
      %1546 = vrot.lane.b32.xlu0 %v1500, 91
      %v1547 = vpop.permute.xlu0 %1546
      %1548 = vrot.lane.b32.xlu0 %v1474, 91
      %v1549 = vpop.permute.xlu0 %1548
      %1550 = vrot.lane.b32.xlu0 %v1501, 91
      %v1551 = vpop.permute.xlu0 %1550
      %1552 = vrot.lane.b32.xlu0 %v1475, 91
      %v1553 = vpop.permute.xlu0 %1552
      %vm1554 = vcmask 744448
      %v1555 = vsel %vm1554, %v1503, %v1505
      %v1556 = vsel %vm1554, %v1505, %v1507
      %v1557 = vsel %vm1554, %v1507, %v1509
      %v1558 = vsel %vm1554, %v1509, %v1511
      %v1559 = vsel %vm1554, %v1511, %v1513
      %v1560 = vsel %vm1554, %v1513, %v1515
      %v1561 = vsel %vm1554, %v1515, %v1517
      %v1562 = vsel %vm1554, %v1517, %v1519
      %v1563 = vsel %vm1554, %v1519, %v1521
      %v1564 = vsel %vm1554, %v1521, %v1523
      %v1565 = vsel %vm1554, %v1523, %v1525
      %v1566 = vsel %vm1554, %v1525, %v1527
      %v1567 = vsel %vm1554, %v1527, %v1529
      %v1568 = vsel %vm1554, %v1529, %v1531
      %v1569 = vsel %vm1554, %v1531, %v1533
      %v1570 = vsel %vm1554, %v1533, %v1535
      %v1571 = vsel %vm1554, %v1535, %v1537
      %v1572 = vsel %vm1554, %v1537, %v1539
      %v1573 = vsel %vm1554, %v1539, %v1541
      %v1574 = vsel %vm1554, %v1541, %v1543
      %v1575 = vsel %vm1554, %v1543, %v1545
      %v1576 = vsel %vm1554, %v1545, %v1547
      %v1577 = vsel %vm1554, %v1547, %v1549
      %v1578 = vsel %vm1554, %v1549, %v1551
      %v1579 = vsel %vm1554, %v1551, %v1553
      %1606 = vst [vmem:[#allocation2 + $0x270] sm:$0xf0] %v1555
      %1607 = vst [vmem:[#allocation2 + $0x278] sm:$0xf0] %v1556
      %1608 = vst [vmem:[#allocation2 + $0x280] sm:$0xf0] %v1557
      %1609 = vst [vmem:[#allocation2 + $0x288] sm:$0xf0] %v1558
      %1610 = vst [vmem:[#allocation2 + $0x290] sm:$0xf0] %v1559
      %1611 = vst [vmem:[#allocation2 + $0x298] sm:$0xf0] %v1560
      %1612 = vst [vmem:[#allocation2 + $0x2a0] sm:$0xf0] %v1561
      %1613 = vst [vmem:[#allocation2 + $0x2a8] sm:$0xf0] %v1562
      %1614 = vst [vmem:[#allocation2 + $0x2b0] sm:$0xf0] %v1563
      %1615 = vst [vmem:[#allocation2 + $0x2b8] sm:$0xf0] %v1564
      %1616 = vst [vmem:[#allocation2 + $0x2c0] sm:$0xf0] %v1565
      %1617 = vst [vmem:[#allocation2 + $0x2c8] sm:$0xf0] %v1566
      %1618 = vst [vmem:[#allocation2 + $0x2d0] sm:$0xf0] %v1567
      %1619 = vst [vmem:[#allocation2 + $0x2d8] sm:$0xf0] %v1568
      %1620 = vst [vmem:[#allocation2 + $0x2e0] sm:$0xf0] %v1569
      %1621 = vst [vmem:[#allocation2 + $0x2e8] sm:$0xf0] %v1570
      %1622 = vst [vmem:[#allocation2 + $0x2f0] sm:$0xf0] %v1571
      %1623 = vst [vmem:[#allocation2 + $0x2f8] sm:$0xf0] %v1572
      %1624 = vst [vmem:[#allocation2 + $0x300] sm:$0xf0] %v1573
      %1625 = vst [vmem:[#allocation2 + $0x308] sm:$0xf0] %v1574
      %1626 = vst [vmem:[#allocation2 + $0x310] sm:$0xf0] %v1575
      %1627 = vst [vmem:[#allocation2 + $0x318] sm:$0xf0] %v1576
      %1628 = vst [vmem:[#allocation2 + $0x320] sm:$0xf0] %v1577
      %1629 = vst [vmem:[#allocation2 + $0x328] sm:$0xf0] %v1578
      %1630 = vst [vmem:[#allocation2 + $0x330] sm:$0xf0] %v1579
      %1631 = vst.msk [vmem:[#allocation2 + $0x338] sm:$0xf0] %vm616, %v1553
      %v1632 = vld [vmem:[%s359] sm:$0xff]
      %v1633 = vld [vmem:[%s359 + $0x8] sm:$0xff]
      %v1634 = vld [vmem:[%s359 + $0x10] sm:$0xff]
      %v1635 = vld [vmem:[%s359 + $0x18] sm:$0xff]
      %v1636 = vld [vmem:[%s359 + $0x20] sm:$0xff]
      %v1637 = vld [vmem:[%s359 + $0x28] sm:$0xff]
      %v1638 = vld [vmem:[%s359 + $0x30] sm:$0xff]
      %v1639 = vld [vmem:[%s359 + $0x38] sm:$0xff]
      %v1640 = vld [vmem:[%s359 + $0x40] sm:$0xff]
      %v1641 = vld [vmem:[%s359 + $0x48] sm:$0xff]
      %v1642 = vld [vmem:[%s359 + $0x50] sm:$0xff]
      %v1643 = vld [vmem:[%s359 + $0x58] sm:$0xff]
      %v1644 = vld [vmem:[%s359 + $0x60] sm:$0xff]
      %v1658 = vcombine.high %v1632, %v1632
      %v1659 = vcombine.high %v1633, %v1633
      %v1660 = vcombine.high %v1634, %v1634
      %v1661 = vcombine.high %v1635, %v1635
      %v1662 = vcombine.high %v1636, %v1636
      %v1663 = vcombine.high %v1637, %v1637
      %v1664 = vcombine.high %v1638, %v1638
      %v1665 = vcombine.high %v1639, %v1639
      %v1666 = vcombine.high %v1640, %v1640
      %v1667 = vcombine.high %v1641, %v1641
      %v1668 = vcombine.high %v1642, %v1642
      %v1669 = vcombine.high %v1643, %v1643
      %v1670 = vcombine.high %v1644, %v1644
      %1671 = vrot.lane.b32.xlu0 %v1632, 90
      %v1672 = vpop.permute.xlu0 %1671
      %1673 = vrot.lane.b32.xlu0 %v1658, 90
      %v1674 = vpop.permute.xlu0 %1673
      %1675 = vrot.lane.b32.xlu0 %v1633, 90
      %v1676 = vpop.permute.xlu0 %1675
      %1677 = vrot.lane.b32.xlu0 %v1659, 90
      %v1678 = vpop.permute.xlu0 %1677
      %1679 = vrot.lane.b32.xlu0 %v1634, 90
      %v1680 = vpop.permute.xlu0 %1679
      %1681 = vrot.lane.b32.xlu0 %v1660, 90
      %v1682 = vpop.permute.xlu0 %1681
      %1683 = vrot.lane.b32.xlu0 %v1635, 90
      %v1684 = vpop.permute.xlu0 %1683
      %1685 = vrot.lane.b32.xlu0 %v1661, 90
      %v1686 = vpop.permute.xlu0 %1685
      %1687 = vrot.lane.b32.xlu0 %v1636, 90
      %v1688 = vpop.permute.xlu0 %1687
      %1689 = vrot.lane.b32.xlu0 %v1662, 90
      %v1690 = vpop.permute.xlu0 %1689
      %1691 = vrot.lane.b32.xlu0 %v1637, 90
      %v1692 = vpop.permute.xlu0 %1691
      %1693 = vrot.lane.b32.xlu0 %v1663, 90
      %v1694 = vpop.permute.xlu0 %1693
      %1695 = vrot.lane.b32.xlu0 %v1638, 90
      %v1696 = vpop.permute.xlu0 %1695
      %1697 = vrot.lane.b32.xlu0 %v1664, 90
      %v1698 = vpop.permute.xlu0 %1697
      %1699 = vrot.lane.b32.xlu0 %v1639, 90
      %v1700 = vpop.permute.xlu0 %1699
      %1701 = vrot.lane.b32.xlu0 %v1665, 90
      %v1702 = vpop.permute.xlu0 %1701
      %1703 = vrot.lane.b32.xlu0 %v1640, 90
      %v1704 = vpop.permute.xlu0 %1703
      %1705 = vrot.lane.b32.xlu0 %v1666, 90
      %v1706 = vpop.permute.xlu0 %1705
      %1707 = vrot.lane.b32.xlu0 %v1641, 90
      %v1708 = vpop.permute.xlu0 %1707
      %1709 = vrot.lane.b32.xlu0 %v1667, 90
      %v1710 = vpop.permute.xlu0 %1709
      %1711 = vrot.lane.b32.xlu0 %v1642, 90
      %v1712 = vpop.permute.xlu0 %1711
      %1713 = vrot.lane.b32.xlu0 %v1668, 90
      %v1714 = vpop.permute.xlu0 %1713
      %1715 = vrot.lane.b32.xlu0 %v1643, 90
      %v1716 = vpop.permute.xlu0 %1715
      %1717 = vrot.lane.b32.xlu0 %v1669, 90
      %v1718 = vpop.permute.xlu0 %1717
      %1719 = vrot.lane.b32.xlu0 %v1644, 90
      %v1720 = vpop.permute.xlu0 %1719
      %1721 = vrot.lane.b32.xlu0 %v1670, 90
      %v1722 = vpop.permute.xlu0 %1721
      %vm1723 = vcmask 736256
      %v1724 = vsel %vm1723, %v1672, %v1674
      %v1725 = vsel %vm1723, %v1674, %v1676
      %v1726 = vsel %vm1723, %v1676, %v1678
      %v1727 = vsel %vm1723, %v1678, %v1680
      %v1728 = vsel %vm1723, %v1680, %v1682
      %v1729 = vsel %vm1723, %v1682, %v1684
      %v1730 = vsel %vm1723, %v1684, %v1686
      %v1731 = vsel %vm1723, %v1686, %v1688
      %v1732 = vsel %vm1723, %v1688, %v1690
      %v1733 = vsel %vm1723, %v1690, %v1692
      %v1734 = vsel %vm1723, %v1692, %v1694
      %v1735 = vsel %vm1723, %v1694, %v1696
      %v1736 = vsel %vm1723, %v1696, %v1698
      %v1737 = vsel %vm1723, %v1698, %v1700
      %v1738 = vsel %vm1723, %v1700, %v1702
      %v1739 = vsel %vm1723, %v1702, %v1704
      %v1740 = vsel %vm1723, %v1704, %v1706
      %v1741 = vsel %vm1723, %v1706, %v1708
      %v1742 = vsel %vm1723, %v1708, %v1710
      %v1743 = vsel %vm1723, %v1710, %v1712
      %v1744 = vsel %vm1723, %v1712, %v1714
      %v1745 = vsel %vm1723, %v1714, %v1716
      %v1746 = vsel %vm1723, %v1716, %v1718
      %v1747 = vsel %vm1723, %v1718, %v1720
      %v1748 = vsel %vm1723, %v1720, %v1722
      %1775 = vst [vmem:[#allocation2 + $0x340] sm:$0xf] %v1724
      %1776 = vst [vmem:[#allocation2 + $0x348] sm:$0xf] %v1725
      %1777 = vst [vmem:[#allocation2 + $0x350] sm:$0xf] %v1726
      %1778 = vst [vmem:[#allocation2 + $0x358] sm:$0xf] %v1727
      %1779 = vst [vmem:[#allocation2 + $0x360] sm:$0xf] %v1728
      %1780 = vst [vmem:[#allocation2 + $0x368] sm:$0xf] %v1729
      %1781 = vst [vmem:[#allocation2 + $0x370] sm:$0xf] %v1730
      %1782 = vst [vmem:[#allocation2 + $0x378] sm:$0xf] %v1731
      %1783 = vst [vmem:[#allocation2 + $0x380] sm:$0xf] %v1732
      %1784 = vst [vmem:[#allocation2 + $0x388] sm:$0xf] %v1733
      %1785 = vst [vmem:[#allocation2 + $0x390] sm:$0xf] %v1734
      %1786 = vst [vmem:[#allocation2 + $0x398] sm:$0xf] %v1735
      %1787 = vst [vmem:[#allocation2 + $0x3a0] sm:$0xf] %v1736
      %1788 = vst [vmem:[#allocation2 + $0x3a8] sm:$0xf] %v1737
      %1789 = vst [vmem:[#allocation2 + $0x3b0] sm:$0xf] %v1738
      %1790 = vst [vmem:[#allocation2 + $0x3b8] sm:$0xf] %v1739
      %1791 = vst [vmem:[#allocation2 + $0x3c0] sm:$0xf] %v1740
      %1792 = vst [vmem:[#allocation2 + $0x3c8] sm:$0xf] %v1741
      %1793 = vst [vmem:[#allocation2 + $0x3d0] sm:$0xf] %v1742
      %1794 = vst [vmem:[#allocation2 + $0x3d8] sm:$0xf] %v1743
      %1795 = vst [vmem:[#allocation2 + $0x3e0] sm:$0xf] %v1744
      %1796 = vst [vmem:[#allocation2 + $0x3e8] sm:$0xf] %v1745
      %1797 = vst [vmem:[#allocation2 + $0x3f0] sm:$0xf] %v1746
      %1798 = vst [vmem:[#allocation2 + $0x3f8] sm:$0xf] %v1747
      %1799 = vst [vmem:[#allocation2 + $0x400] sm:$0xf] %v1748
      %1800 = vst.msk [vmem:[#allocation2 + $0x408] sm:$0xf] %vm446, %v1722
      %v1801 = vld [vmem:[%s359 + $0x8] sm:$0xff]
      %v1802 = vld [vmem:[%s359 + $0x10] sm:$0xff]
      %v1803 = vld [vmem:[%s359 + $0x18] sm:$0xff]
      %v1804 = vld [vmem:[%s359 + $0x20] sm:$0xff]
      %v1805 = vld [vmem:[%s359 + $0x28] sm:$0xff]
      %v1806 = vld [vmem:[%s359 + $0x30] sm:$0xff]
      %v1807 = vld [vmem:[%s359 + $0x38] sm:$0xff]
      %v1808 = vld [vmem:[%s359 + $0x40] sm:$0xff]
      %v1809 = vld [vmem:[%s359 + $0x48] sm:$0xff]
      %v1810 = vld [vmem:[%s359 + $0x50] sm:$0xff]
      %v1811 = vld [vmem:[%s359 + $0x58] sm:$0xff]
      %v1812 = vld [vmem:[%s359 + $0x60] sm:$0xff]
      %v1813 = vld [vmem:[%s359 + $0x68] sm:$0xff]
      %v1827 = vcombine.low %v1801, %v1801
      %v1828 = vcombine.low %v1802, %v1802
      %v1829 = vcombine.low %v1803, %v1803
      %v1830 = vcombine.low %v1804, %v1804
      %v1831 = vcombine.low %v1805, %v1805
      %v1832 = vcombine.low %v1806, %v1806
      %v1833 = vcombine.low %v1807, %v1807
      %v1834 = vcombine.low %v1808, %v1808
      %v1835 = vcombine.low %v1809, %v1809
      %v1836 = vcombine.low %v1810, %v1810
      %v1837 = vcombine.low %v1811, %v1811
      %v1838 = vcombine.low %v1812, %v1812
      %v1839 = vcombine.low %v1813, %v1813
      %1840 = vrot.lane.b32.xlu0 %v1827, 60
      %v1841 = vpop.permute.xlu0 %1840
      %1842 = vrot.lane.b32.xlu0 %v1801, 60
      %v1843 = vpop.permute.xlu0 %1842
      %1844 = vrot.lane.b32.xlu0 %v1828, 60
      %v1845 = vpop.permute.xlu0 %1844
      %1846 = vrot.lane.b32.xlu0 %v1802, 60
      %v1847 = vpop.permute.xlu0 %1846
      %1848 = vrot.lane.b32.xlu0 %v1829, 60
      %v1849 = vpop.permute.xlu0 %1848
      %1850 = vrot.lane.b32.xlu0 %v1803, 60
      %v1851 = vpop.permute.xlu0 %1850
      %1852 = vrot.lane.b32.xlu0 %v1830, 60
      %v1853 = vpop.permute.xlu0 %1852
      %1854 = vrot.lane.b32.xlu0 %v1804, 60
      %v1855 = vpop.permute.xlu0 %1854
      %1856 = vrot.lane.b32.xlu0 %v1831, 60
      %v1857 = vpop.permute.xlu0 %1856
      %1858 = vrot.lane.b32.xlu0 %v1805, 60
      %v1859 = vpop.permute.xlu0 %1858
      %1860 = vrot.lane.b32.xlu0 %v1832, 60
      %v1861 = vpop.permute.xlu0 %1860
      %1862 = vrot.lane.b32.xlu0 %v1806, 60
      %v1863 = vpop.permute.xlu0 %1862
      %1864 = vrot.lane.b32.xlu0 %v1833, 60
      %v1865 = vpop.permute.xlu0 %1864
      %1866 = vrot.lane.b32.xlu0 %v1807, 60
      %v1867 = vpop.permute.xlu0 %1866
      %1868 = vrot.lane.b32.xlu0 %v1834, 60
      %v1869 = vpop.permute.xlu0 %1868
      %1870 = vrot.lane.b32.xlu0 %v1808, 60
      %v1871 = vpop.permute.xlu0 %1870
      %1872 = vrot.lane.b32.xlu0 %v1835, 60
      %v1873 = vpop.permute.xlu0 %1872
      %1874 = vrot.lane.b32.xlu0 %v1809, 60
      %v1875 = vpop.permute.xlu0 %1874
      %1876 = vrot.lane.b32.xlu0 %v1836, 60
      %v1877 = vpop.permute.xlu0 %1876
      %1878 = vrot.lane.b32.xlu0 %v1810, 60
      %v1879 = vpop.permute.xlu0 %1878
      %1880 = vrot.lane.b32.xlu0 %v1837, 60
      %v1881 = vpop.permute.xlu0 %1880
      %1882 = vrot.lane.b32.xlu0 %v1811, 60
      %v1883 = vpop.permute.xlu0 %1882
      %1884 = vrot.lane.b32.xlu0 %v1838, 60
      %v1885 = vpop.permute.xlu0 %1884
      %1886 = vrot.lane.b32.xlu0 %v1812, 60
      %v1887 = vpop.permute.xlu0 %1886
      %1888 = vrot.lane.b32.xlu0 %v1839, 60
      %v1889 = vpop.permute.xlu0 %1888
      %1890 = vrot.lane.b32.xlu0 %v1813, 60
      %v1891 = vpop.permute.xlu0 %1890
      %vm1892 = vcmask 490496
      %v1893 = vsel %vm1892, %v1841, %v1843
      %v1894 = vsel %vm1892, %v1843, %v1845
      %v1895 = vsel %vm1892, %v1845, %v1847
      %v1896 = vsel %vm1892, %v1847, %v1849
      %v1897 = vsel %vm1892, %v1849, %v1851
      %v1898 = vsel %vm1892, %v1851, %v1853
      %v1899 = vsel %vm1892, %v1853, %v1855
      %v1900 = vsel %vm1892, %v1855, %v1857
      %v1901 = vsel %vm1892, %v1857, %v1859
      %v1902 = vsel %vm1892, %v1859, %v1861
      %v1903 = vsel %vm1892, %v1861, %v1863
      %v1904 = vsel %vm1892, %v1863, %v1865
      %v1905 = vsel %vm1892, %v1865, %v1867
      %v1906 = vsel %vm1892, %v1867, %v1869
      %v1907 = vsel %vm1892, %v1869, %v1871
      %v1908 = vsel %vm1892, %v1871, %v1873
      %v1909 = vsel %vm1892, %v1873, %v1875
      %v1910 = vsel %vm1892, %v1875, %v1877
      %v1911 = vsel %vm1892, %v1877, %v1879
      %v1912 = vsel %vm1892, %v1879, %v1881
      %v1913 = vsel %vm1892, %v1881, %v1883
      %v1914 = vsel %vm1892, %v1883, %v1885
      %v1915 = vsel %vm1892, %v1885, %v1887
      %v1916 = vsel %vm1892, %v1887, %v1889
      %v1917 = vsel %vm1892, %v1889, %v1891
      %1944 = vst [vmem:[#allocation2 + $0x340] sm:$0xf0] %v1893
      %1945 = vst [vmem:[#allocation2 + $0x348] sm:$0xf0] %v1894
      %1946 = vst [vmem:[#allocation2 + $0x350] sm:$0xf0] %v1895
      %1947 = vst [vmem:[#allocation2 + $0x358] sm:$0xf0] %v1896
      %1948 = vst [vmem:[#allocation2 + $0x360] sm:$0xf0] %v1897
      %1949 = vst [vmem:[#allocation2 + $0x368] sm:$0xf0] %v1898
      %1950 = vst [vmem:[#allocation2 + $0x370] sm:$0xf0] %v1899
      %1951 = vst [vmem:[#allocation2 + $0x378] sm:$0xf0] %v1900
      %1952 = vst [vmem:[#allocation2 + $0x380] sm:$0xf0] %v1901
      %1953 = vst [vmem:[#allocation2 + $0x388] sm:$0xf0] %v1902
      %1954 = vst [vmem:[#allocation2 + $0x390] sm:$0xf0] %v1903
      %1955 = vst [vmem:[#allocation2 + $0x398] sm:$0xf0] %v1904
      %1956 = vst [vmem:[#allocation2 + $0x3a0] sm:$0xf0] %v1905
      %1957 = vst [vmem:[#allocation2 + $0x3a8] sm:$0xf0] %v1906
      %1958 = vst [vmem:[#allocation2 + $0x3b0] sm:$0xf0] %v1907
      %1959 = vst [vmem:[#allocation2 + $0x3b8] sm:$0xf0] %v1908
      %1960 = vst [vmem:[#allocation2 + $0x3c0] sm:$0xf0] %v1909
      %1961 = vst [vmem:[#allocation2 + $0x3c8] sm:$0xf0] %v1910
      %1962 = vst [vmem:[#allocation2 + $0x3d0] sm:$0xf0] %v1911
      %1963 = vst [vmem:[#allocation2 + $0x3d8] sm:$0xf0] %v1912
      %1964 = vst [vmem:[#allocation2 + $0x3e0] sm:$0xf0] %v1913
      %1965 = vst [vmem:[#allocation2 + $0x3e8] sm:$0xf0] %v1914
      %1966 = vst [vmem:[#allocation2 + $0x3f0] sm:$0xf0] %v1915
      %1967 = vst [vmem:[#allocation2 + $0x3f8] sm:$0xf0] %v1916
      %1968 = vst [vmem:[#allocation2 + $0x400] sm:$0xf0] %v1917
      %1969 = vst.msk [vmem:[#allocation2 + $0x408] sm:$0xf0] %vm616, %v1891
      %v1970 = vld [vmem:[%s359 + $0x8] sm:$0xff]
      %v1971 = vld [vmem:[%s359 + $0x10] sm:$0xff]
      %v1972 = vld [vmem:[%s359 + $0x18] sm:$0xff]
      %v1973 = vld [vmem:[%s359 + $0x20] sm:$0xff]
      %v1974 = vld [vmem:[%s359 + $0x28] sm:$0xff]
      %v1975 = vld [vmem:[%s359 + $0x30] sm:$0xff]
      %v1976 = vld [vmem:[%s359 + $0x38] sm:$0xff]
      %v1977 = vld [vmem:[%s359 + $0x40] sm:$0xff]
      %v1978 = vld [vmem:[%s359 + $0x48] sm:$0xff]
      %v1979 = vld [vmem:[%s359 + $0x50] sm:$0xff]
      %v1980 = vld [vmem:[%s359 + $0x58] sm:$0xff]
      %v1981 = vld [vmem:[%s359 + $0x60] sm:$0xff]
      %v1982 = vld [vmem:[%s359 + $0x68] sm:$0xff]
      %v1996 = vcombine.high %v1970, %v1970
      %v1997 = vcombine.high %v1971, %v1971
      %v1998 = vcombine.high %v1972, %v1972
      %v1999 = vcombine.high %v1973, %v1973
      %v2000 = vcombine.high %v1974, %v1974
      %v2001 = vcombine.high %v1975, %v1975
      %v2002 = vcombine.high %v1976, %v1976
      %v2003 = vcombine.high %v1977, %v1977
      %v2004 = vcombine.high %v1978, %v1978
      %v2005 = vcombine.high %v1979, %v1979
      %v2006 = vcombine.high %v1980, %v1980
      %v2007 = vcombine.high %v1981, %v1981
      %v2008 = vcombine.high %v1982, %v1982
      %2009 = vrot.lane.b32.xlu0 %v1970, 59
      %v2010 = vpop.permute.xlu0 %2009
      %2011 = vrot.lane.b32.xlu0 %v1996, 59
      %v2012 = vpop.permute.xlu0 %2011
      %2013 = vrot.lane.b32.xlu0 %v1971, 59
      %v2014 = vpop.permute.xlu0 %2013
      %2015 = vrot.lane.b32.xlu0 %v1997, 59
      %v2016 = vpop.permute.xlu0 %2015
      %2017 = vrot.lane.b32.xlu0 %v1972, 59
      %v2018 = vpop.permute.xlu0 %2017
      %2019 = vrot.lane.b32.xlu0 %v1998, 59
      %v2020 = vpop.permute.xlu0 %2019
      %2021 = vrot.lane.b32.xlu0 %v1973, 59
      %v2022 = vpop.permute.xlu0 %2021
      %2023 = vrot.lane.b32.xlu0 %v1999, 59
      %v2024 = vpop.permute.xlu0 %2023
      %2025 = vrot.lane.b32.xlu0 %v1974, 59
      %v2026 = vpop.permute.xlu0 %2025
      %2027 = vrot.lane.b32.xlu0 %v2000, 59
      %v2028 = vpop.permute.xlu0 %2027
      %2029 = vrot.lane.b32.xlu0 %v1975, 59
      %v2030 = vpop.permute.xlu0 %2029
      %2031 = vrot.lane.b32.xlu0 %v2001, 59
      %v2032 = vpop.permute.xlu0 %2031
      %2033 = vrot.lane.b32.xlu0 %v1976, 59
      %v2034 = vpop.permute.xlu0 %2033
      %2035 = vrot.lane.b32.xlu0 %v2002, 59
      %v2036 = vpop.permute.xlu0 %2035
      %2037 = vrot.lane.b32.xlu0 %v1977, 59
      %v2038 = vpop.permute.xlu0 %2037
      %2039 = vrot.lane.b32.xlu0 %v2003, 59
      %v2040 = vpop.permute.xlu0 %2039
      %2041 = vrot.lane.b32.xlu0 %v1978, 59
      %v2042 = vpop.permute.xlu0 %2041
      %2043 = vrot.lane.b32.xlu0 %v2004, 59
      %v2044 = vpop.permute.xlu0 %2043
      %2045 = vrot.lane.b32.xlu0 %v1979, 59
      %v2046 = vpop.permute.xlu0 %2045
      %2047 = vrot.lane.b32.xlu0 %v2005, 59
      %v2048 = vpop.permute.xlu0 %2047
      %2049 = vrot.lane.b32.xlu0 %v1980, 59
      %v2050 = vpop.permute.xlu0 %2049
      %2051 = vrot.lane.b32.xlu0 %v2006, 59
      %v2052 = vpop.permute.xlu0 %2051
      %2053 = vrot.lane.b32.xlu0 %v1981, 59
      %v2054 = vpop.permute.xlu0 %2053
      %2055 = vrot.lane.b32.xlu0 %v2007, 59
      %v2056 = vpop.permute.xlu0 %2055
      %2057 = vrot.lane.b32.xlu0 %v1982, 59
      %v2058 = vpop.permute.xlu0 %2057
      %2059 = vrot.lane.b32.xlu0 %v2008, 59
      %v2060 = vpop.permute.xlu0 %2059
      %vm2061 = vcmask 482304
      %v2062 = vsel %vm2061, %v2010, %v2012
      %v2063 = vsel %vm2061, %v2012, %v2014
      %v2064 = vsel %vm2061, %v2014, %v2016
      %v2065 = vsel %vm2061, %v2016, %v2018
      %v2066 = vsel %vm2061, %v2018, %v2020
      %v2067 = vsel %vm2061, %v2020, %v2022
      %v2068 = vsel %vm2061, %v2022, %v2024
      %v2069 = vsel %vm2061, %v2024, %v2026
      %v2070 = vsel %vm2061, %v2026, %v2028
      %v2071 = vsel %vm2061, %v2028, %v2030
      %v2072 = vsel %vm2061, %v2030, %v2032
      %v2073 = vsel %vm2061, %v2032, %v2034
      %v2074 = vsel %vm2061, %v2034, %v2036
      %v2075 = vsel %vm2061, %v2036, %v2038
      %v2076 = vsel %vm2061, %v2038, %v2040
      %v2077 = vsel %vm2061, %v2040, %v2042
      %v2078 = vsel %vm2061, %v2042, %v2044
      %v2079 = vsel %vm2061, %v2044, %v2046
      %v2080 = vsel %vm2061, %v2046, %v2048
      %v2081 = vsel %vm2061, %v2048, %v2050
      %v2082 = vsel %vm2061, %v2050, %v2052
      %v2083 = vsel %vm2061, %v2052, %v2054
      %v2084 = vsel %vm2061, %v2054, %v2056
      %v2085 = vsel %vm2061, %v2056, %v2058
      %v2086 = vsel %vm2061, %v2058, %v2060
      %2113 = vst [vmem:[#allocation2 + $0x410] sm:$0xf] %v2062
      %2114 = vst [vmem:[#allocation2 + $0x418] sm:$0xf] %v2063
      %2115 = vst [vmem:[#allocation2 + $0x420] sm:$0xf] %v2064
      %2116 = vst [vmem:[#allocation2 + $0x428] sm:$0xf] %v2065
      %2117 = vst [vmem:[#allocation2 + $0x430] sm:$0xf] %v2066
      %2118 = vst [vmem:[#allocation2 + $0x438] sm:$0xf] %v2067
      %2119 = vst [vmem:[#allocation2 + $0x440] sm:$0xf] %v2068
      %2120 = vst [vmem:[#allocation2 + $0x448] sm:$0xf] %v2069
      %2121 = vst [vmem:[#allocation2 + $0x450] sm:$0xf] %v2070
      %2122 = vst [vmem:[#allocation2 + $0x458] sm:$0xf] %v2071
      %2123 = vst [vmem:[#allocation2 + $0x460] sm:$0xf] %v2072
      %2124 = vst [vmem:[#allocation2 + $0x468] sm:$0xf] %v2073
      %2125 = vst [vmem:[#allocation2 + $0x470] sm:$0xf] %v2074
      %2126 = vst [vmem:[#allocation2 + $0x478] sm:$0xf] %v2075
      %2127 = vst [vmem:[#allocation2 + $0x480] sm:$0xf] %v2076
      %2128 = vst [vmem:[#allocation2 + $0x488] sm:$0xf] %v2077
      %2129 = vst [vmem:[#allocation2 + $0x490] sm:$0xf] %v2078
      %2130 = vst [vmem:[#allocation2 + $0x498] sm:$0xf] %v2079
      %2131 = vst [vmem:[#allocation2 + $0x4a0] sm:$0xf] %v2080
      %2132 = vst [vmem:[#allocation2 + $0x4a8] sm:$0xf] %v2081
      %2133 = vst [vmem:[#allocation2 + $0x4b0] sm:$0xf] %v2082
      %2134 = vst [vmem:[#allocation2 + $0x4b8] sm:$0xf] %v2083
      %2135 = vst [vmem:[#allocation2 + $0x4c0] sm:$0xf] %v2084
      %2136 = vst [vmem:[#allocation2 + $0x4c8] sm:$0xf] %v2085
      %2137 = vst [vmem:[#allocation2 + $0x4d0] sm:$0xf] %v2086
      %2138 = vst.msk [vmem:[#allocation2 + $0x4d8] sm:$0xf] %vm446, %v2060
      %v2139 = vld [vmem:[%s359 + $0x8] sm:$0xff]
      %v2140 = vld [vmem:[%s359 + $0x10] sm:$0xff]
      %v2141 = vld [vmem:[%s359 + $0x18] sm:$0xff]
      %v2142 = vld [vmem:[%s359 + $0x20] sm:$0xff]
      %v2143 = vld [vmem:[%s359 + $0x28] sm:$0xff]
      %v2144 = vld [vmem:[%s359 + $0x30] sm:$0xff]
      %v2145 = vld [vmem:[%s359 + $0x38] sm:$0xff]
      %v2146 = vld [vmem:[%s359 + $0x40] sm:$0xff]
      %v2147 = vld [vmem:[%s359 + $0x48] sm:$0xff]
      %v2148 = vld [vmem:[%s359 + $0x50] sm:$0xff]
      %v2149 = vld [vmem:[%s359 + $0x58] sm:$0xff]
      %v2150 = vld [vmem:[%s359 + $0x60] sm:$0xff]
      %v2151 = vld [vmem:[%s359 + $0x68] sm:$0xff]
      %v2165 = vcombine.low %v2139, %v2139
      %v2166 = vcombine.low %v2140, %v2140
      %v2167 = vcombine.low %v2141, %v2141
      %v2168 = vcombine.low %v2142, %v2142
      %v2169 = vcombine.low %v2143, %v2143
      %v2170 = vcombine.low %v2144, %v2144
      %v2171 = vcombine.low %v2145, %v2145
      %v2172 = vcombine.low %v2146, %v2146
      %v2173 = vcombine.low %v2147, %v2147
      %v2174 = vcombine.low %v2148, %v2148
      %v2175 = vcombine.low %v2149, %v2149
      %v2176 = vcombine.low %v2150, %v2150
      %v2177 = vcombine.low %v2151, %v2151
      %2178 = vrot.lane.b32.xlu0 %v2165, 58
      %v2179 = vpop.permute.xlu0 %2178
      %2180 = vrot.lane.b32.xlu0 %v2139, 58
      %v2181 = vpop.permute.xlu0 %2180
      %2182 = vrot.lane.b32.xlu0 %v2166, 58
      %v2183 = vpop.permute.xlu0 %2182
      %2184 = vrot.lane.b32.xlu0 %v2140, 58
      %v2185 = vpop.permute.xlu0 %2184
      %2186 = vrot.lane.b32.xlu0 %v2167, 58
      %v2187 = vpop.permute.xlu0 %2186
      %2188 = vrot.lane.b32.xlu0 %v2141, 58
      %v2189 = vpop.permute.xlu0 %2188
      %2190 = vrot.lane.b32.xlu0 %v2168, 58
      %v2191 = vpop.permute.xlu0 %2190
      %2192 = vrot.lane.b32.xlu0 %v2142, 58
      %v2193 = vpop.permute.xlu0 %2192
      %2194 = vrot.lane.b32.xlu0 %v2169, 58
      %v2195 = vpop.permute.xlu0 %2194
      %2196 = vrot.lane.b32.xlu0 %v2143, 58
      %v2197 = vpop.permute.xlu0 %2196
      %2198 = vrot.lane.b32.xlu0 %v2170, 58
      %v2199 = vpop.permute.xlu0 %2198
      %2200 = vrot.lane.b32.xlu0 %v2144, 58
      %v2201 = vpop.permute.xlu0 %2200
      %2202 = vrot.lane.b32.xlu0 %v2171, 58
      %v2203 = vpop.permute.xlu0 %2202
      %2204 = vrot.lane.b32.xlu0 %v2145, 58
      %v2205 = vpop.permute.xlu0 %2204
      %2206 = vrot.lane.b32.xlu0 %v2172, 58
      %v2207 = vpop.permute.xlu0 %2206
      %2208 = vrot.lane.b32.xlu0 %v2146, 58
      %v2209 = vpop.permute.xlu0 %2208
      %2210 = vrot.lane.b32.xlu0 %v2173, 58
      %v2211 = vpop.permute.xlu0 %2210
      %2212 = vrot.lane.b32.xlu0 %v2147, 58
      %v2213 = vpop.permute.xlu0 %2212
      %2214 = vrot.lane.b32.xlu0 %v2174, 58
      %v2215 = vpop.permute.xlu0 %2214
      %2216 = vrot.lane.b32.xlu0 %v2148, 58
      %v2217 = vpop.permute.xlu0 %2216
      %2218 = vrot.lane.b32.xlu0 %v2175, 58
      %v2219 = vpop.permute.xlu0 %2218
      %2220 = vrot.lane.b32.xlu0 %v2149, 58
      %v2221 = vpop.permute.xlu0 %2220
      %2222 = vrot.lane.b32.xlu0 %v2176, 58
      %v2223 = vpop.permute.xlu0 %2222
      %2224 = vrot.lane.b32.xlu0 %v2150, 58
      %v2225 = vpop.permute.xlu0 %2224
      %2226 = vrot.lane.b32.xlu0 %v2177, 58
      %v2227 = vpop.permute.xlu0 %2226
      %2228 = vrot.lane.b32.xlu0 %v2151, 58
      %v2229 = vpop.permute.xlu0 %2228
      %vm2230 = vcmask 474112
      %v2231 = vsel %vm2230, %v2179, %v2181
      %v2232 = vsel %vm2230, %v2181, %v2183
      %v2233 = vsel %vm2230, %v2183, %v2185
      %v2234 = vsel %vm2230, %v2185, %v2187
      %v2235 = vsel %vm2230, %v2187, %v2189
      %v2236 = vsel %vm2230, %v2189, %v2191
      %v2237 = vsel %vm2230, %v2191, %v2193
      %v2238 = vsel %vm2230, %v2193, %v2195
      %v2239 = vsel %vm2230, %v2195, %v2197
      %v2240 = vsel %vm2230, %v2197, %v2199
      %v2241 = vsel %vm2230, %v2199, %v2201
      %v2242 = vsel %vm2230, %v2201, %v2203
      %v2243 = vsel %vm2230, %v2203, %v2205
      %v2244 = vsel %vm2230, %v2205, %v2207
      %v2245 = vsel %vm2230, %v2207, %v2209
      %v2246 = vsel %vm2230, %v2209, %v2211
      %v2247 = vsel %vm2230, %v2211, %v2213
      %v2248 = vsel %vm2230, %v2213, %v2215
      %v2249 = vsel %vm2230, %v2215, %v2217
      %v2250 = vsel %vm2230, %v2217, %v2219
      %v2251 = vsel %vm2230, %v2219, %v2221
      %v2252 = vsel %vm2230, %v2221, %v2223
      %v2253 = vsel %vm2230, %v2223, %v2225
      %v2254 = vsel %vm2230, %v2225, %v2227
      %v2255 = vsel %vm2230, %v2227, %v2229
      %2282 = vst [vmem:[#allocation2 + $0x410] sm:$0xf0] %v2231
      %2283 = vst [vmem:[#allocation2 + $0x418] sm:$0xf0] %v2232
      %2284 = vst [vmem:[#allocation2 + $0x420] sm:$0xf0] %v2233
      %2285 = vst [vmem:[#allocation2 + $0x428] sm:$0xf0] %v2234
      %2286 = vst [vmem:[#allocation2 + $0x430] sm:$0xf0] %v2235
      %2287 = vst [vmem:[#allocation2 + $0x438] sm:$0xf0] %v2236
      %2288 = vst [vmem:[#allocation2 + $0x440] sm:$0xf0] %v2237
      %2289 = vst [vmem:[#allocation2 + $0x448] sm:$0xf0] %v2238
      %2290 = vst [vmem:[#allocation2 + $0x450] sm:$0xf0] %v2239
      %2291 = vst [vmem:[#allocation2 + $0x458] sm:$0xf0] %v2240
      %2292 = vst [vmem:[#allocation2 + $0x460] sm:$0xf0] %v2241
      %2293 = vst [vmem:[#allocation2 + $0x468] sm:$0xf0] %v2242
      %2294 = vst [vmem:[#allocation2 + $0x470] sm:$0xf0] %v2243
      %2295 = vst [vmem:[#allocation2 + $0x478] sm:$0xf0] %v2244
      %2296 = vst [vmem:[#allocation2 + $0x480] sm:$0xf0] %v2245
      %2297 = vst [vmem:[#allocation2 + $0x488] sm:$0xf0] %v2246
      %2298 = vst [vmem:[#allocation2 + $0x490] sm:$0xf0] %v2247
      %2299 = vst [vmem:[#allocation2 + $0x498] sm:$0xf0] %v2248
      %2300 = vst [vmem:[#allocation2 + $0x4a0] sm:$0xf0] %v2249
      %2301 = vst [vmem:[#allocation2 + $0x4a8] sm:$0xf0] %v2250
      %2302 = vst [vmem:[#allocation2 + $0x4b0] sm:$0xf0] %v2251
      %2303 = vst [vmem:[#allocation2 + $0x4b8] sm:$0xf0] %v2252
      %2304 = vst [vmem:[#allocation2 + $0x4c0] sm:$0xf0] %v2253
      %2305 = vst [vmem:[#allocation2 + $0x4c8] sm:$0xf0] %v2254
      %2306 = vst [vmem:[#allocation2 + $0x4d0] sm:$0xf0] %v2255
      %2307 = vst.msk [vmem:[#allocation2 + $0x4d8] sm:$0xf0] %vm616, %v2229
      %v2308 = vld [vmem:[%s359 + $0x8] sm:$0xff]
      %v2309 = vld [vmem:[%s359 + $0x10] sm:$0xff]
      %v2310 = vld [vmem:[%s359 + $0x18] sm:$0xff]
      %v2311 = vld [vmem:[%s359 + $0x20] sm:$0xff]
      %v2312 = vld [vmem:[%s359 + $0x28] sm:$0xff]
      %v2313 = vld [vmem:[%s359 + $0x30] sm:$0xff]
      %v2314 = vld [vmem:[%s359 + $0x38] sm:$0xff]
      %v2315 = vld [vmem:[%s359 + $0x40] sm:$0xff]
      %v2316 = vld [vmem:[%s359 + $0x48] sm:$0xff]
      %v2317 = vld [vmem:[%s359 + $0x50] sm:$0xff]
      %v2318 = vld [vmem:[%s359 + $0x58] sm:$0xff]
      %v2319 = vld [vmem:[%s359 + $0x60] sm:$0xff]
      %v2320 = vld [vmem:[%s359 + $0x68] sm:$0xff]
      %v2334 = vcombine.high %v2308, %v2308
      %v2335 = vcombine.high %v2309, %v2309
      %v2336 = vcombine.high %v2310, %v2310
      %v2337 = vcombine.high %v2311, %v2311
      %v2338 = vcombine.high %v2312, %v2312
      %v2339 = vcombine.high %v2313, %v2313
      %v2340 = vcombine.high %v2314, %v2314
      %v2341 = vcombine.high %v2315, %v2315
      %v2342 = vcombine.high %v2316, %v2316
      %v2343 = vcombine.high %v2317, %v2317
      %v2344 = vcombine.high %v2318, %v2318
      %v2345 = vcombine.high %v2319, %v2319
      %v2346 = vcombine.high %v2320, %v2320
      %2347 = vrot.lane.b32.xlu0 %v2308, 42
      %v2348 = vpop.permute.xlu0 %2347
      %2349 = vrot.lane.b32.xlu0 %v2334, 42
      %v2350 = vpop.permute.xlu0 %2349
      %2351 = vrot.lane.b32.xlu0 %v2309, 42
      %v2352 = vpop.permute.xlu0 %2351
      %2353 = vrot.lane.b32.xlu0 %v2335, 42
      %v2354 = vpop.permute.xlu0 %2353
      %2355 = vrot.lane.b32.xlu0 %v2310, 42
      %v2356 = vpop.permute.xlu0 %2355
      %2357 = vrot.lane.b32.xlu0 %v2336, 42
      %v2358 = vpop.permute.xlu0 %2357
      %2359 = vrot.lane.b32.xlu0 %v2311, 42
      %v2360 = vpop.permute.xlu0 %2359
      %2361 = vrot.lane.b32.xlu0 %v2337, 42
      %v2362 = vpop.permute.xlu0 %2361
      %2363 = vrot.lane.b32.xlu0 %v2312, 42
      %v2364 = vpop.permute.xlu0 %2363
      %2365 = vrot.lane.b32.xlu0 %v2338, 42
      %v2366 = vpop.permute.xlu0 %2365
      %2367 = vrot.lane.b32.xlu0 %v2313, 42
      %v2368 = vpop.permute.xlu0 %2367
      %2369 = vrot.lane.b32.xlu0 %v2339, 42
      %v2370 = vpop.permute.xlu0 %2369
      %2371 = vrot.lane.b32.xlu0 %v2314, 42
      %v2372 = vpop.permute.xlu0 %2371
      %2373 = vrot.lane.b32.xlu0 %v2340, 42
      %v2374 = vpop.permute.xlu0 %2373
      %2375 = vrot.lane.b32.xlu0 %v2315, 42
      %v2376 = vpop.permute.xlu0 %2375
      %2377 = vrot.lane.b32.xlu0 %v2341, 42
      %v2378 = vpop.permute.xlu0 %2377
      %2379 = vrot.lane.b32.xlu0 %v2316, 42
      %v2380 = vpop.permute.xlu0 %2379
      %2381 = vrot.lane.b32.xlu0 %v2342, 42
      %v2382 = vpop.permute.xlu0 %2381
      %2383 = vrot.lane.b32.xlu0 %v2317, 42
      %v2384 = vpop.permute.xlu0 %2383
      %2385 = vrot.lane.b32.xlu0 %v2343, 42
      %v2386 = vpop.permute.xlu0 %2385
      %2387 = vrot.lane.b32.xlu0 %v2318, 42
      %v2388 = vpop.permute.xlu0 %2387
      %2389 = vrot.lane.b32.xlu0 %v2344, 42
      %v2390 = vpop.permute.xlu0 %2389
      %2391 = vrot.lane.b32.xlu0 %v2319, 42
      %v2392 = vpop.permute.xlu0 %2391
      %2393 = vrot.lane.b32.xlu0 %v2345, 42
      %v2394 = vpop.permute.xlu0 %2393
      %2395 = vrot.lane.b32.xlu0 %v2320, 42
      %v2396 = vpop.permute.xlu0 %2395
      %2397 = vrot.lane.b32.xlu0 %v2346, 42
      %v2398 = vpop.permute.xlu0 %2397
      %vm2399 = vcmask 343040
      %v2400 = vsel %vm2399, %v2348, %v2350
      %v2401 = vsel %vm2399, %v2350, %v2352
      %v2402 = vsel %vm2399, %v2352, %v2354
      %v2403 = vsel %vm2399, %v2354, %v2356
      %v2404 = vsel %vm2399, %v2356, %v2358
      %v2405 = vsel %vm2399, %v2358, %v2360
      %v2406 = vsel %vm2399, %v2360, %v2362
      %v2407 = vsel %vm2399, %v2362, %v2364
      %v2408 = vsel %vm2399, %v2364, %v2366
      %v2409 = vsel %vm2399, %v2366, %v2368
      %v2410 = vsel %vm2399, %v2368, %v2370
      %v2411 = vsel %vm2399, %v2370, %v2372
      %v2412 = vsel %vm2399, %v2372, %v2374
      %v2413 = vsel %vm2399, %v2374, %v2376
      %v2414 = vsel %vm2399, %v2376, %v2378
      %v2415 = vsel %vm2399, %v2378, %v2380
      %v2416 = vsel %vm2399, %v2380, %v2382
      %v2417 = vsel %vm2399, %v2382, %v2384
      %v2418 = vsel %vm2399, %v2384, %v2386
      %v2419 = vsel %vm2399, %v2386, %v2388
      %v2420 = vsel %vm2399, %v2388, %v2390
      %v2421 = vsel %vm2399, %v2390, %v2392
      %v2422 = vsel %vm2399, %v2392, %v2394
      %v2423 = vsel %vm2399, %v2394, %v2396
      %v2424 = vsel %vm2399, %v2396, %v2398
      %2451 = vst [vmem:[#allocation2 + $0x4e0] sm:$0xf] %v2400
      %2452 = vst [vmem:[#allocation2 + $0x4e8] sm:$0xf] %v2401
      %2453 = vst [vmem:[#allocation2 + $0x4f0] sm:$0xf] %v2402
      %2454 = vst [vmem:[#allocation2 + $0x4f8] sm:$0xf] %v2403
      %2455 = vst [vmem:[#allocation2 + $0x500] sm:$0xf] %v2404
      %2456 = vst [vmem:[#allocation2 + $0x508] sm:$0xf] %v2405
      %2457 = vst [vmem:[#allocation2 + $0x510] sm:$0xf] %v2406
      %2458 = vst [vmem:[#allocation2 + $0x518] sm:$0xf] %v2407
      %2459 = vst [vmem:[#allocation2 + $0x520] sm:$0xf] %v2408
      %2460 = vst [vmem:[#allocation2 + $0x528] sm:$0xf] %v2409
      %2461 = vst [vmem:[#allocation2 + $0x530] sm:$0xf] %v2410
      %2462 = vst [vmem:[#allocation2 + $0x538] sm:$0xf] %v2411
      %2463 = vst [vmem:[#allocation2 + $0x540] sm:$0xf] %v2412
      %2464 = vst [vmem:[#allocation2 + $0x548] sm:$0xf] %v2413
      %2465 = vst [vmem:[#allocation2 + $0x550] sm:$0xf] %v2414
      %2466 = vst [vmem:[#allocation2 + $0x558] sm:$0xf] %v2415
      %2467 = vst [vmem:[#allocation2 + $0x560] sm:$0xf] %v2416
      %2468 = vst [vmem:[#allocation2 + $0x568] sm:$0xf] %v2417
      %2469 = vst [vmem:[#allocation2 + $0x570] sm:$0xf] %v2418
      %2470 = vst [vmem:[#allocation2 + $0x578] sm:$0xf] %v2419
      %2471 = vst [vmem:[#allocation2 + $0x580] sm:$0xf] %v2420
      %2472 = vst [vmem:[#allocation2 + $0x588] sm:$0xf] %v2421
      %2473 = vst [vmem:[#allocation2 + $0x590] sm:$0xf] %v2422
      %2474 = vst [vmem:[#allocation2 + $0x598] sm:$0xf] %v2423
      %2475 = vst [vmem:[#allocation2 + $0x5a0] sm:$0xf] %v2424
      %2476 = vst.msk [vmem:[#allocation2 + $0x5a8] sm:$0xf] %vm446, %v2398
      %v2477 = vld [vmem:[%s359 + $0x8] sm:$0xff]
      %v2478 = vld [vmem:[%s359 + $0x10] sm:$0xff]
      %v2479 = vld [vmem:[%s359 + $0x18] sm:$0xff]
      %v2480 = vld [vmem:[%s359 + $0x20] sm:$0xff]
      %v2481 = vld [vmem:[%s359 + $0x28] sm:$0xff]
      %v2482 = vld [vmem:[%s359 + $0x30] sm:$0xff]
      %v2483 = vld [vmem:[%s359 + $0x38] sm:$0xff]
      %v2484 = vld [vmem:[%s359 + $0x40] sm:$0xff]
      %v2485 = vld [vmem:[%s359 + $0x48] sm:$0xff]
      %v2486 = vld [vmem:[%s359 + $0x50] sm:$0xff]
      %v2487 = vld [vmem:[%s359 + $0x58] sm:$0xff]
      %v2488 = vld [vmem:[%s359 + $0x60] sm:$0xff]
      %v2489 = vld [vmem:[%s359 + $0x68] sm:$0xff]
      %v2503 = vcombine.low %v2477, %v2477
      %v2504 = vcombine.low %v2478, %v2478
      %v2505 = vcombine.low %v2479, %v2479
      %v2506 = vcombine.low %v2480, %v2480
      %v2507 = vcombine.low %v2481, %v2481
      %v2508 = vcombine.low %v2482, %v2482
      %v2509 = vcombine.low %v2483, %v2483
      %v2510 = vcombine.low %v2484, %v2484
      %v2511 = vcombine.low %v2485, %v2485
      %v2512 = vcombine.low %v2486, %v2486
      %v2513 = vcombine.low %v2487, %v2487
      %v2514 = vcombine.low %v2488, %v2488
      %v2515 = vcombine.low %v2489, %v2489
      %2516 = vrot.lane.b32.xlu0 %v2503, 41
      %v2517 = vpop.permute.xlu0 %2516
      %2518 = vrot.lane.b32.xlu0 %v2477, 41
      %v2519 = vpop.permute.xlu0 %2518
      %2520 = vrot.lane.b32.xlu0 %v2504, 41
      %v2521 = vpop.permute.xlu0 %2520
      %2522 = vrot.lane.b32.xlu0 %v2478, 41
      %v2523 = vpop.permute.xlu0 %2522
      %2524 = vrot.lane.b32.xlu0 %v2505, 41
      %v2525 = vpop.permute.xlu0 %2524
      %2526 = vrot.lane.b32.xlu0 %v2479, 41
      %v2527 = vpop.permute.xlu0 %2526
      %2528 = vrot.lane.b32.xlu0 %v2506, 41
      %v2529 = vpop.permute.xlu0 %2528
      %2530 = vrot.lane.b32.xlu0 %v2480, 41
      %v2531 = vpop.permute.xlu0 %2530
      %2532 = vrot.lane.b32.xlu0 %v2507, 41
      %v2533 = vpop.permute.xlu0 %2532
      %2534 = vrot.lane.b32.xlu0 %v2481, 41
      %v2535 = vpop.permute.xlu0 %2534
      %2536 = vrot.lane.b32.xlu0 %v2508, 41
      %v2537 = vpop.permute.xlu0 %2536
      %2538 = vrot.lane.b32.xlu0 %v2482, 41
      %v2539 = vpop.permute.xlu0 %2538
      %2540 = vrot.lane.b32.xlu0 %v2509, 41
      %v2541 = vpop.permute.xlu0 %2540
      %2542 = vrot.lane.b32.xlu0 %v2483, 41
      %v2543 = vpop.permute.xlu0 %2542
      %2544 = vrot.lane.b32.xlu0 %v2510, 41
      %v2545 = vpop.permute.xlu0 %2544
      %2546 = vrot.lane.b32.xlu0 %v2484, 41
      %v2547 = vpop.permute.xlu0 %2546
      %2548 = vrot.lane.b32.xlu0 %v2511, 41
      %v2549 = vpop.permute.xlu0 %2548
      %2550 = vrot.lane.b32.xlu0 %v2485, 41
      %v2551 = vpop.permute.xlu0 %2550
      %2552 = vrot.lane.b32.xlu0 %v2512, 41
      %v2553 = vpop.permute.xlu0 %2552
      %2554 = vrot.lane.b32.xlu0 %v2486, 41
      %v2555 = vpop.permute.xlu0 %2554
      %2556 = vrot.lane.b32.xlu0 %v2513, 41
      %v2557 = vpop.permute.xlu0 %2556
      %2558 = vrot.lane.b32.xlu0 %v2487, 41
      %v2559 = vpop.permute.xlu0 %2558
      %2560 = vrot.lane.b32.xlu0 %v2514, 41
      %v2561 = vpop.permute.xlu0 %2560
      %2562 = vrot.lane.b32.xlu0 %v2488, 41
      %v2563 = vpop.permute.xlu0 %2562
      %2564 = vrot.lane.b32.xlu0 %v2515, 41
      %v2565 = vpop.permute.xlu0 %2564
      %2566 = vrot.lane.b32.xlu0 %v2489, 41
      %v2567 = vpop.permute.xlu0 %2566
      %vm2568 = vcmask 334848
      %v2569 = vsel %vm2568, %v2517, %v2519
      %v2570 = vsel %vm2568, %v2519, %v2521
      %v2571 = vsel %vm2568, %v2521, %v2523
      %v2572 = vsel %vm2568, %v2523, %v2525
      %v2573 = vsel %vm2568, %v2525, %v2527
      %v2574 = vsel %vm2568, %v2527, %v2529
      %v2575 = vsel %vm2568, %v2529, %v2531
      %v2576 = vsel %vm2568, %v2531, %v2533
      %v2577 = vsel %vm2568, %v2533, %v2535
      %v2578 = vsel %vm2568, %v2535, %v2537
      %v2579 = vsel %vm2568, %v2537, %v2539
      %v2580 = vsel %vm2568, %v2539, %v2541
      %v2581 = vsel %vm2568, %v2541, %v2543
      %v2582 = vsel %vm2568, %v2543, %v2545
      %v2583 = vsel %vm2568, %v2545, %v2547
      %v2584 = vsel %vm2568, %v2547, %v2549
      %v2585 = vsel %vm2568, %v2549, %v2551
      %v2586 = vsel %vm2568, %v2551, %v2553
      %v2587 = vsel %vm2568, %v2553, %v2555
      %v2588 = vsel %vm2568, %v2555, %v2557
      %v2589 = vsel %vm2568, %v2557, %v2559
      %v2590 = vsel %vm2568, %v2559, %v2561
      %v2591 = vsel %vm2568, %v2561, %v2563
      %v2592 = vsel %vm2568, %v2563, %v2565
      %v2593 = vsel %vm2568, %v2565, %v2567
      %2620 = vst [vmem:[#allocation2 + $0x4e0] sm:$0xf0] %v2569
      %2621 = vst [vmem:[#allocation2 + $0x4e8] sm:$0xf0] %v2570
      %2622 = vst [vmem:[#allocation2 + $0x4f0] sm:$0xf0] %v2571
      %2623 = vst [vmem:[#allocation2 + $0x4f8] sm:$0xf0] %v2572
      %2624 = vst [vmem:[#allocation2 + $0x500] sm:$0xf0] %v2573
      %2625 = vst [vmem:[#allocation2 + $0x508] sm:$0xf0] %v2574
      %2626 = vst [vmem:[#allocation2 + $0x510] sm:$0xf0] %v2575
      %2627 = vst [vmem:[#allocation2 + $0x518] sm:$0xf0] %v2576
      %2628 = vst [vmem:[#allocation2 + $0x520] sm:$0xf0] %v2577
      %2629 = vst [vmem:[#allocation2 + $0x528] sm:$0xf0] %v2578
      %2630 = vst [vmem:[#allocation2 + $0x530] sm:$0xf0] %v2579
      %2631 = vst [vmem:[#allocation2 + $0x538] sm:$0xf0] %v2580
      %2632 = vst [vmem:[#allocation2 + $0x540] sm:$0xf0] %v2581
      %2633 = vst [vmem:[#allocation2 + $0x548] sm:$0xf0] %v2582
      %2634 = vst [vmem:[#allocation2 + $0x550] sm:$0xf0] %v2583
      %2635 = vst [vmem:[#allocation2 + $0x558] sm:$0xf0] %v2584
      %2636 = vst [vmem:[#allocation2 + $0x560] sm:$0xf0] %v2585
      %2637 = vst [vmem:[#allocation2 + $0x568] sm:$0xf0] %v2586
      %2638 = vst [vmem:[#allocation2 + $0x570] sm:$0xf0] %v2587
      %2639 = vst [vmem:[#allocation2 + $0x578] sm:$0xf0] %v2588
      %2640 = vst [vmem:[#allocation2 + $0x580] sm:$0xf0] %v2589
      %2641 = vst [vmem:[#allocation2 + $0x588] sm:$0xf0] %v2590
      %2642 = vst [vmem:[#allocation2 + $0x590] sm:$0xf0] %v2591
      %2643 = vst [vmem:[#allocation2 + $0x598] sm:$0xf0] %v2592
      %2644 = vst [vmem:[#allocation2 + $0x5a0] sm:$0xf0] %v2593
      %2645 = vst.msk [vmem:[#allocation2 + $0x5a8] sm:$0xf0] %vm616, %v2567
      %v2646 = vld [vmem:[%s359 + $0x8] sm:$0xff]
      %v2647 = vld [vmem:[%s359 + $0x10] sm:$0xff]
      %v2648 = vld [vmem:[%s359 + $0x18] sm:$0xff]
      %v2649 = vld [vmem:[%s359 + $0x20] sm:$0xff]
      %v2650 = vld [vmem:[%s359 + $0x28] sm:$0xff]
      %v2651 = vld [vmem:[%s359 + $0x30] sm:$0xff]
      %v2652 = vld [vmem:[%s359 + $0x38] sm:$0xff]
      %v2653 = vld [vmem:[%s359 + $0x40] sm:$0xff]
      %v2654 = vld [vmem:[%s359 + $0x48] sm:$0xff]
      %v2655 = vld [vmem:[%s359 + $0x50] sm:$0xff]
      %v2656 = vld [vmem:[%s359 + $0x58] sm:$0xff]
      %v2657 = vld [vmem:[%s359 + $0x60] sm:$0xff]
      %v2658 = vld [vmem:[%s359 + $0x68] sm:$0xff]
      %v2672 = vcombine.high %v2646, %v2646
      %v2673 = vcombine.high %v2647, %v2647
      %v2674 = vcombine.high %v2648, %v2648
      %v2675 = vcombine.high %v2649, %v2649
      %v2676 = vcombine.high %v2650, %v2650
      %v2677 = vcombine.high %v2651, %v2651
      %v2678 = vcombine.high %v2652, %v2652
      %v2679 = vcombine.high %v2653, %v2653
      %v2680 = vcombine.high %v2654, %v2654
      %v2681 = vcombine.high %v2655, %v2655
      %v2682 = vcombine.high %v2656, %v2656
      %v2683 = vcombine.high %v2657, %v2657
      %v2684 = vcombine.high %v2658, %v2658
      %2685 = vrot.lane.b32.xlu0 %v2646, 40
      %v2686 = vpop.permute.xlu0 %2685
      %2687 = vrot.lane.b32.xlu0 %v2672, 40
      %v2688 = vpop.permute.xlu0 %2687
      %2689 = vrot.lane.b32.xlu0 %v2647, 40
      %v2690 = vpop.permute.xlu0 %2689
      %2691 = vrot.lane.b32.xlu0 %v2673, 40
      %v2692 = vpop.permute.xlu0 %2691
      %2693 = vrot.lane.b32.xlu0 %v2648, 40
      %v2694 = vpop.permute.xlu0 %2693
      %2695 = vrot.lane.b32.xlu0 %v2674, 40
      %v2696 = vpop.permute.xlu0 %2695
      %2697 = vrot.lane.b32.xlu0 %v2649, 40
      %v2698 = vpop.permute.xlu0 %2697
      %2699 = vrot.lane.b32.xlu0 %v2675, 40
      %v2700 = vpop.permute.xlu0 %2699
      %2701 = vrot.lane.b32.xlu0 %v2650, 40
      %v2702 = vpop.permute.xlu0 %2701
      %2703 = vrot.lane.b32.xlu0 %v2676, 40
      %v2704 = vpop.permute.xlu0 %2703
      %2705 = vrot.lane.b32.xlu0 %v2651, 40
      %v2706 = vpop.permute.xlu0 %2705
      %2707 = vrot.lane.b32.xlu0 %v2677, 40
      %v2708 = vpop.permute.xlu0 %2707
      %2709 = vrot.lane.b32.xlu0 %v2652, 40
      %v2710 = vpop.permute.xlu0 %2709
      %2711 = vrot.lane.b32.xlu0 %v2678, 40
      %v2712 = vpop.permute.xlu0 %2711
      %2713 = vrot.lane.b32.xlu0 %v2653, 40
      %v2714 = vpop.permute.xlu0 %2713
      %2715 = vrot.lane.b32.xlu0 %v2679, 40
      %v2716 = vpop.permute.xlu0 %2715
      %2717 = vrot.lane.b32.xlu0 %v2654, 40
      %v2718 = vpop.permute.xlu0 %2717
      %2719 = vrot.lane.b32.xlu0 %v2680, 40
      %v2720 = vpop.permute.xlu0 %2719
      %2721 = vrot.lane.b32.xlu0 %v2655, 40
      %v2722 = vpop.permute.xlu0 %2721
      %2723 = vrot.lane.b32.xlu0 %v2681, 40
      %v2724 = vpop.permute.xlu0 %2723
      %2725 = vrot.lane.b32.xlu0 %v2656, 40
      %v2726 = vpop.permute.xlu0 %2725
      %2727 = vrot.lane.b32.xlu0 %v2682, 40
      %v2728 = vpop.permute.xlu0 %2727
      %2729 = vrot.lane.b32.xlu0 %v2657, 40
      %v2730 = vpop.permute.xlu0 %2729
      %2731 = vrot.lane.b32.xlu0 %v2683, 40
      %v2732 = vpop.permute.xlu0 %2731
      %2733 = vrot.lane.b32.xlu0 %v2658, 40
      %v2734 = vpop.permute.xlu0 %2733
      %2735 = vrot.lane.b32.xlu0 %v2684, 40
      %v2736 = vpop.permute.xlu0 %2735
      %vm2737 = vcmask 326656
      %v2738 = vsel %vm2737, %v2686, %v2688
      %v2739 = vsel %vm2737, %v2688, %v2690
      %v2740 = vsel %vm2737, %v2690, %v2692
      %v2741 = vsel %vm2737, %v2692, %v2694
      %v2742 = vsel %vm2737, %v2694, %v2696
      %v2743 = vsel %vm2737, %v2696, %v2698
      %v2744 = vsel %vm2737, %v2698, %v2700
      %v2745 = vsel %vm2737, %v2700, %v2702
      %v2746 = vsel %vm2737, %v2702, %v2704
      %v2747 = vsel %vm2737, %v2704, %v2706
      %v2748 = vsel %vm2737, %v2706, %v2708
      %v2749 = vsel %vm2737, %v2708, %v2710
      %v2750 = vsel %vm2737, %v2710, %v2712
      %v2751 = vsel %vm2737, %v2712, %v2714
      %v2752 = vsel %vm2737, %v2714, %v2716
      %v2753 = vsel %vm2737, %v2716, %v2718
      %v2754 = vsel %vm2737, %v2718, %v2720
      %v2755 = vsel %vm2737, %v2720, %v2722
      %v2756 = vsel %vm2737, %v2722, %v2724
      %v2757 = vsel %vm2737, %v2724, %v2726
      %v2758 = vsel %vm2737, %v2726, %v2728
      %v2759 = vsel %vm2737, %v2728, %v2730
      %v2760 = vsel %vm2737, %v2730, %v2732
      %v2761 = vsel %vm2737, %v2732, %v2734
      %v2762 = vsel %vm2737, %v2734, %v2736
      %2789 = vst [vmem:[#allocation2 + $0x5b0] sm:$0xf] %v2738
      %2790 = vst [vmem:[#allocation2 + $0x5b8] sm:$0xf] %v2739
      %2791 = vst [vmem:[#allocation2 + $0x5c0] sm:$0xf] %v2740
      %2792 = vst [vmem:[#allocation2 + $0x5c8] sm:$0xf] %v2741
      %2793 = vst [vmem:[#allocation2 + $0x5d0] sm:$0xf] %v2742
      %2794 = vst [vmem:[#allocation2 + $0x5d8] sm:$0xf] %v2743
      %2795 = vst [vmem:[#allocation2 + $0x5e0] sm:$0xf] %v2744
      %2796 = vst [vmem:[#allocation2 + $0x5e8] sm:$0xf] %v2745
      %2797 = vst [vmem:[#allocation2 + $0x5f0] sm:$0xf] %v2746
      %2798 = vst [vmem:[#allocation2 + $0x5f8] sm:$0xf] %v2747
      %2799 = vst [vmem:[#allocation2 + $0x600] sm:$0xf] %v2748
      %2800 = vst [vmem:[#allocation2 + $0x608] sm:$0xf] %v2749
      %2801 = vst [vmem:[#allocation2 + $0x610] sm:$0xf] %v2750
      %2802 = vst [vmem:[#allocation2 + $0x618] sm:$0xf] %v2751
      %2803 = vst [vmem:[#allocation2 + $0x620] sm:$0xf] %v2752
      %2804 = vst [vmem:[#allocation2 + $0x628] sm:$0xf] %v2753
      %2805 = vst [vmem:[#allocation2 + $0x630] sm:$0xf] %v2754
      %2806 = vst [vmem:[#allocation2 + $0x638] sm:$0xf] %v2755
      %2807 = vst [vmem:[#allocation2 + $0x640] sm:$0xf] %v2756
      %2808 = vst [vmem:[#allocation2 + $0x648] sm:$0xf] %v2757
      %2809 = vst [vmem:[#allocation2 + $0x650] sm:$0xf] %v2758
      %2810 = vst [vmem:[#allocation2 + $0x658] sm:$0xf] %v2759
      %2811 = vst [vmem:[#allocation2 + $0x660] sm:$0xf] %v2760
      %2812 = vst [vmem:[#allocation2 + $0x668] sm:$0xf] %v2761
      %2813 = vst [vmem:[#allocation2 + $0x670] sm:$0xf] %v2762
      %2814 = vst.msk [vmem:[#allocation2 + $0x678] sm:$0xf] %vm446, %v2736
      %v2815 = vld [vmem:[%s359 + $0x8] sm:$0xff]
      %v2816 = vld [vmem:[%s359 + $0x10] sm:$0xff]
      %v2817 = vld [vmem:[%s359 + $0x18] sm:$0xff]
      %v2818 = vld [vmem:[%s359 + $0x20] sm:$0xff]
      %v2819 = vld [vmem:[%s359 + $0x28] sm:$0xff]
      %v2820 = vld [vmem:[%s359 + $0x30] sm:$0xff]
      %v2821 = vld [vmem:[%s359 + $0x38] sm:$0xff]
      %v2822 = vld [vmem:[%s359 + $0x40] sm:$0xff]
      %v2823 = vld [vmem:[%s359 + $0x48] sm:$0xff]
      %v2824 = vld [vmem:[%s359 + $0x50] sm:$0xff]
      %v2825 = vld [vmem:[%s359 + $0x58] sm:$0xff]
      %v2826 = vld [vmem:[%s359 + $0x60] sm:$0xff]
      %v2827 = vld [vmem:[%s359 + $0x68] sm:$0xff]
      %v2828 = vld [vmem:[%s359 + $0x70] sm:$0xf]
      %v2843 = vcombine.low %v2815, %v2815
      %v2844 = vcombine.low %v2816, %v2816
      %v2845 = vcombine.low %v2817, %v2817
      %v2846 = vcombine.low %v2818, %v2818
      %v2847 = vcombine.low %v2819, %v2819
      %v2848 = vcombine.low %v2820, %v2820
      %v2849 = vcombine.low %v2821, %v2821
      %v2850 = vcombine.low %v2822, %v2822
      %v2851 = vcombine.low %v2823, %v2823
      %v2852 = vcombine.low %v2824, %v2824
      %v2853 = vcombine.low %v2825, %v2825
      %v2854 = vcombine.low %v2826, %v2826
      %v2855 = vcombine.low %v2827, %v2827
      %v2856 = vcombine.low %v2828, %v2828
      %2857 = vrot.lane.b32.xlu0 %v2843, 24
      %v2858 = vpop.permute.xlu0 %2857
      %2859 = vrot.lane.b32.xlu0 %v2815, 24
      %v2860 = vpop.permute.xlu0 %2859
      %2861 = vrot.lane.b32.xlu0 %v2844, 24
      %v2862 = vpop.permute.xlu0 %2861
      %2863 = vrot.lane.b32.xlu0 %v2816, 24
      %v2864 = vpop.permute.xlu0 %2863
      %2865 = vrot.lane.b32.xlu0 %v2845, 24
      %v2866 = vpop.permute.xlu0 %2865
      %2867 = vrot.lane.b32.xlu0 %v2817, 24
      %v2868 = vpop.permute.xlu0 %2867
      %2869 = vrot.lane.b32.xlu0 %v2846, 24
      %v2870 = vpop.permute.xlu0 %2869
      %2871 = vrot.lane.b32.xlu0 %v2818, 24
      %v2872 = vpop.permute.xlu0 %2871
      %2873 = vrot.lane.b32.xlu0 %v2847, 24
      %v2874 = vpop.permute.xlu0 %2873
      %2875 = vrot.lane.b32.xlu0 %v2819, 24
      %v2876 = vpop.permute.xlu0 %2875
      %2877 = vrot.lane.b32.xlu0 %v2848, 24
      %v2878 = vpop.permute.xlu0 %2877
      %2879 = vrot.lane.b32.xlu0 %v2820, 24
      %v2880 = vpop.permute.xlu0 %2879
      %2881 = vrot.lane.b32.xlu0 %v2849, 24
      %v2882 = vpop.permute.xlu0 %2881
      %2883 = vrot.lane.b32.xlu0 %v2821, 24
      %v2884 = vpop.permute.xlu0 %2883
      %2885 = vrot.lane.b32.xlu0 %v2850, 24
      %v2886 = vpop.permute.xlu0 %2885
      %2887 = vrot.lane.b32.xlu0 %v2822, 24
      %v2888 = vpop.permute.xlu0 %2887
      %2889 = vrot.lane.b32.xlu0 %v2851, 24
      %v2890 = vpop.permute.xlu0 %2889
      %2891 = vrot.lane.b32.xlu0 %v2823, 24
      %v2892 = vpop.permute.xlu0 %2891
      %2893 = vrot.lane.b32.xlu0 %v2852, 24
      %v2894 = vpop.permute.xlu0 %2893
      %2895 = vrot.lane.b32.xlu0 %v2824, 24
      %v2896 = vpop.permute.xlu0 %2895
      %2897 = vrot.lane.b32.xlu0 %v2853, 24
      %v2898 = vpop.permute.xlu0 %2897
      %2899 = vrot.lane.b32.xlu0 %v2825, 24
      %v2900 = vpop.permute.xlu0 %2899
      %2901 = vrot.lane.b32.xlu0 %v2854, 24
      %v2902 = vpop.permute.xlu0 %2901
      %2903 = vrot.lane.b32.xlu0 %v2826, 24
      %v2904 = vpop.permute.xlu0 %2903
      %2905 = vrot.lane.b32.xlu0 %v2855, 24
      %v2906 = vpop.permute.xlu0 %2905
      %2907 = vrot.lane.b32.xlu0 %v2827, 24
      %v2908 = vpop.permute.xlu0 %2907
      %2909 = vrot.lane.b32.xlu0 %v2856, 24
      %v2910 = vpop.permute.xlu0 %2909
      %vm2911 = vcmask 195584
      %v2912 = vsel %vm2911, %v2858, %v2860
      %v2913 = vsel %vm2911, %v2860, %v2862
      %v2914 = vsel %vm2911, %v2862, %v2864
      %v2915 = vsel %vm2911, %v2864, %v2866
      %v2916 = vsel %vm2911, %v2866, %v2868
      %v2917 = vsel %vm2911, %v2868, %v2870
      %v2918 = vsel %vm2911, %v2870, %v2872
      %v2919 = vsel %vm2911, %v2872, %v2874
      %v2920 = vsel %vm2911, %v2874, %v2876
      %v2921 = vsel %vm2911, %v2876, %v2878
      %v2922 = vsel %vm2911, %v2878, %v2880
      %v2923 = vsel %vm2911, %v2880, %v2882
      %v2924 = vsel %vm2911, %v2882, %v2884
      %v2925 = vsel %vm2911, %v2884, %v2886
      %v2926 = vsel %vm2911, %v2886, %v2888
      %v2927 = vsel %vm2911, %v2888, %v2890
      %v2928 = vsel %vm2911, %v2890, %v2892
      %v2929 = vsel %vm2911, %v2892, %v2894
      %v2930 = vsel %vm2911, %v2894, %v2896
      %v2931 = vsel %vm2911, %v2896, %v2898
      %v2932 = vsel %vm2911, %v2898, %v2900
      %v2933 = vsel %vm2911, %v2900, %v2902
      %v2934 = vsel %vm2911, %v2902, %v2904
      %v2935 = vsel %vm2911, %v2904, %v2906
      %v2936 = vsel %vm2911, %v2906, %v2908
      %v2937 = vsel %vm2911, %v2908, %v2910
      %2964 = vst [vmem:[#allocation2 + $0x5b0] sm:$0xf0] %v2912
      %2965 = vst [vmem:[#allocation2 + $0x5b8] sm:$0xf0] %v2913
      %2966 = vst [vmem:[#allocation2 + $0x5c0] sm:$0xf0] %v2914
      %2967 = vst [vmem:[#allocation2 + $0x5c8] sm:$0xf0] %v2915
      %2968 = vst [vmem:[#allocation2 + $0x5d0] sm:$0xf0] %v2916
      %2969 = vst [vmem:[#allocation2 + $0x5d8] sm:$0xf0] %v2917
      %2970 = vst [vmem:[#allocation2 + $0x5e0] sm:$0xf0] %v2918
      %2971 = vst [vmem:[#allocation2 + $0x5e8] sm:$0xf0] %v2919
      %2972 = vst [vmem:[#allocation2 + $0x5f0] sm:$0xf0] %v2920
      %2973 = vst [vmem:[#allocation2 + $0x5f8] sm:$0xf0] %v2921
      %2974 = vst [vmem:[#allocation2 + $0x600] sm:$0xf0] %v2922
      %2975 = vst [vmem:[#allocation2 + $0x608] sm:$0xf0] %v2923
      %2976 = vst [vmem:[#allocation2 + $0x610] sm:$0xf0] %v2924
      %2977 = vst [vmem:[#allocation2 + $0x618] sm:$0xf0] %v2925
      %2978 = vst [vmem:[#allocation2 + $0x620] sm:$0xf0] %v2926
      %2979 = vst [vmem:[#allocation2 + $0x628] sm:$0xf0] %v2927
      %2980 = vst [vmem:[#allocation2 + $0x630] sm:$0xf0] %v2928
      %2981 = vst [vmem:[#allocation2 + $0x638] sm:$0xf0] %v2929
      %2982 = vst [vmem:[#allocation2 + $0x640] sm:$0xf0] %v2930
      %2983 = vst [vmem:[#allocation2 + $0x648] sm:$0xf0] %v2931
      %2984 = vst [vmem:[#allocation2 + $0x650] sm:$0xf0] %v2932
      %2985 = vst [vmem:[#allocation2 + $0x658] sm:$0xf0] %v2933
      %2986 = vst [vmem:[#allocation2 + $0x660] sm:$0xf0] %v2934
      %2987 = vst [vmem:[#allocation2 + $0x668] sm:$0xf0] %v2935
      %2988 = vst [vmem:[#allocation2 + $0x670] sm:$0xf0] %v2936
      %2989 = vst.msk [vmem:[#allocation2 + $0x678] sm:$0xf0] %vm616, %v2937
      %v2990 = vld [vmem:[%s359 + $0x8] sm:$0xff]
      %v2991 = vld [vmem:[%s359 + $0x10] sm:$0xff]
      %v2992 = vld [vmem:[%s359 + $0x18] sm:$0xff]
      %v2993 = vld [vmem:[%s359 + $0x20] sm:$0xff]
      %v2994 = vld [vmem:[%s359 + $0x28] sm:$0xff]
      %v2995 = vld [vmem:[%s359 + $0x30] sm:$0xff]
      %v2996 = vld [vmem:[%s359 + $0x38] sm:$0xff]
      %v2997 = vld [vmem:[%s359 + $0x40] sm:$0xff]
      %v2998 = vld [vmem:[%s359 + $0x48] sm:$0xff]
      %v2999 = vld [vmem:[%s359 + $0x50] sm:$0xff]
      %v3000 = vld [vmem:[%s359 + $0x58] sm:$0xff]
      %v3001 = vld [vmem:[%s359 + $0x60] sm:$0xff]
      %v3002 = vld [vmem:[%s359 + $0x68] sm:$0xff]
      %v3003 = vld [vmem:[%s359 + $0x70] sm:$0xf]
      %v3018 = vcombine.high %v2990, %v2990
      %v3019 = vcombine.high %v2991, %v2991
      %v3020 = vcombine.high %v2992, %v2992
      %v3021 = vcombine.high %v2993, %v2993
      %v3022 = vcombine.high %v2994, %v2994
      %v3023 = vcombine.high %v2995, %v2995
      %v3024 = vcombine.high %v2996, %v2996
      %v3025 = vcombine.high %v2997, %v2997
      %v3026 = vcombine.high %v2998, %v2998
      %v3027 = vcombine.high %v2999, %v2999
      %v3028 = vcombine.high %v3000, %v3000
      %v3029 = vcombine.high %v3001, %v3001
      %v3030 = vcombine.high %v3002, %v3002
      %3031 = vrot.lane.b32.xlu0 %v2990, 23
      %v3032 = vpop.permute.xlu0 %3031
      %3033 = vrot.lane.b32.xlu0 %v3018, 23
      %v3034 = vpop.permute.xlu0 %3033
      %3035 = vrot.lane.b32.xlu0 %v2991, 23
      %v3036 = vpop.permute.xlu0 %3035
      %3037 = vrot.lane.b32.xlu0 %v3019, 23
      %v3038 = vpop.permute.xlu0 %3037
      %3039 = vrot.lane.b32.xlu0 %v2992, 23
      %v3040 = vpop.permute.xlu0 %3039
      %3041 = vrot.lane.b32.xlu0 %v3020, 23
      %v3042 = vpop.permute.xlu0 %3041
      %3043 = vrot.lane.b32.xlu0 %v2993, 23
      %v3044 = vpop.permute.xlu0 %3043
      %3045 = vrot.lane.b32.xlu0 %v3021, 23
      %v3046 = vpop.permute.xlu0 %3045
      %3047 = vrot.lane.b32.xlu0 %v2994, 23
      %v3048 = vpop.permute.xlu0 %3047
      %3049 = vrot.lane.b32.xlu0 %v3022, 23
      %v3050 = vpop.permute.xlu0 %3049
      %3051 = vrot.lane.b32.xlu0 %v2995, 23
      %v3052 = vpop.permute.xlu0 %3051
      %3053 = vrot.lane.b32.xlu0 %v3023, 23
      %v3054 = vpop.permute.xlu0 %3053
      %3055 = vrot.lane.b32.xlu0 %v2996, 23
      %v3056 = vpop.permute.xlu0 %3055
      %3057 = vrot.lane.b32.xlu0 %v3024, 23
      %v3058 = vpop.permute.xlu0 %3057
      %3059 = vrot.lane.b32.xlu0 %v2997, 23
      %v3060 = vpop.permute.xlu0 %3059
      %3061 = vrot.lane.b32.xlu0 %v3025, 23
      %v3062 = vpop.permute.xlu0 %3061
      %3063 = vrot.lane.b32.xlu0 %v2998, 23
      %v3064 = vpop.permute.xlu0 %3063
      %3065 = vrot.lane.b32.xlu0 %v3026, 23
      %v3066 = vpop.permute.xlu0 %3065
      %3067 = vrot.lane.b32.xlu0 %v2999, 23
      %v3068 = vpop.permute.xlu0 %3067
      %3069 = vrot.lane.b32.xlu0 %v3027, 23
      %v3070 = vpop.permute.xlu0 %3069
      %3071 = vrot.lane.b32.xlu0 %v3000, 23
      %v3072 = vpop.permute.xlu0 %3071
      %3073 = vrot.lane.b32.xlu0 %v3028, 23
      %v3074 = vpop.permute.xlu0 %3073
      %3075 = vrot.lane.b32.xlu0 %v3001, 23
      %v3076 = vpop.permute.xlu0 %3075
      %3077 = vrot.lane.b32.xlu0 %v3029, 23
      %v3078 = vpop.permute.xlu0 %3077
      %3079 = vrot.lane.b32.xlu0 %v3002, 23
      %v3080 = vpop.permute.xlu0 %3079
      %3081 = vrot.lane.b32.xlu0 %v3030, 23
      %v3082 = vpop.permute.xlu0 %3081
      %3083 = vrot.lane.b32.xlu0 %v3003, 23
      %v3084 = vpop.permute.xlu0 %3083
      %vm3085 = vcmask 187392
      %v3086 = vsel %vm3085, %v3032, %v3034
      %v3087 = vsel %vm3085, %v3034, %v3036
      %v3088 = vsel %vm3085, %v3036, %v3038
      %v3089 = vsel %vm3085, %v3038, %v3040
      %v3090 = vsel %vm3085, %v3040, %v3042
      %v3091 = vsel %vm3085, %v3042, %v3044
      %v3092 = vsel %vm3085, %v3044, %v3046
      %v3093 = vsel %vm3085, %v3046, %v3048
      %v3094 = vsel %vm3085, %v3048, %v3050
      %v3095 = vsel %vm3085, %v3050, %v3052
      %v3096 = vsel %vm3085, %v3052, %v3054
      %v3097 = vsel %vm3085, %v3054, %v3056
      %v3098 = vsel %vm3085, %v3056, %v3058
      %v3099 = vsel %vm3085, %v3058, %v3060
      %v3100 = vsel %vm3085, %v3060, %v3062
      %v3101 = vsel %vm3085, %v3062, %v3064
      %v3102 = vsel %vm3085, %v3064, %v3066
      %v3103 = vsel %vm3085, %v3066, %v3068
      %v3104 = vsel %vm3085, %v3068, %v3070
      %v3105 = vsel %vm3085, %v3070, %v3072
      %v3106 = vsel %vm3085, %v3072, %v3074
      %v3107 = vsel %vm3085, %v3074, %v3076
      %v3108 = vsel %vm3085, %v3076, %v3078
      %v3109 = vsel %vm3085, %v3078, %v3080
      %v3110 = vsel %vm3085, %v3080, %v3082
      %v3111 = vsel %vm3085, %v3082, %v3084
      %3138 = vst [vmem:[#allocation2 + $0x680] sm:$0xf] %v3086
      %3139 = vst [vmem:[#allocation2 + $0x688] sm:$0xf] %v3087
      %3140 = vst [vmem:[#allocation2 + $0x690] sm:$0xf] %v3088
      %3141 = vst [vmem:[#allocation2 + $0x698] sm:$0xf] %v3089
      %3142 = vst [vmem:[#allocation2 + $0x6a0] sm:$0xf] %v3090
      %3143 = vst [vmem:[#allocation2 + $0x6a8] sm:$0xf] %v3091
      %3144 = vst [vmem:[#allocation2 + $0x6b0] sm:$0xf] %v3092
      %3145 = vst [vmem:[#allocation2 + $0x6b8] sm:$0xf] %v3093
      %3146 = vst [vmem:[#allocation2 + $0x6c0] sm:$0xf] %v3094
      %3147 = vst [vmem:[#allocation2 + $0x6c8] sm:$0xf] %v3095
      %3148 = vst [vmem:[#allocation2 + $0x6d0] sm:$0xf] %v3096
      %3149 = vst [vmem:[#allocation2 + $0x6d8] sm:$0xf] %v3097
      %3150 = vst [vmem:[#allocation2 + $0x6e0] sm:$0xf] %v3098
      %3151 = vst [vmem:[#allocation2 + $0x6e8] sm:$0xf] %v3099
      %3152 = vst [vmem:[#allocation2 + $0x6f0] sm:$0xf] %v3100
      %3153 = vst [vmem:[#allocation2 + $0x6f8] sm:$0xf] %v3101
      %3154 = vst [vmem:[#allocation2 + $0x700] sm:$0xf] %v3102
      %3155 = vst [vmem:[#allocation2 + $0x708] sm:$0xf] %v3103
      %3156 = vst [vmem:[#allocation2 + $0x710] sm:$0xf] %v3104
      %3157 = vst [vmem:[#allocation2 + $0x718] sm:$0xf] %v3105
      %3158 = vst [vmem:[#allocation2 + $0x720] sm:$0xf] %v3106
      %3159 = vst [vmem:[#allocation2 + $0x728] sm:$0xf] %v3107
      %3160 = vst [vmem:[#allocation2 + $0x730] sm:$0xf] %v3108
      %3161 = vst [vmem:[#allocation2 + $0x738] sm:$0xf] %v3109
      %3162 = vst [vmem:[#allocation2 + $0x740] sm:$0xf] %v3110
      %3163 = vst.msk [vmem:[#allocation2 + $0x748] sm:$0xf] %vm446, %v3111
      %v3164 = vld [vmem:[%s359 + $0x8] sm:$0xff]
      %v3165 = vld [vmem:[%s359 + $0x10] sm:$0xff]
      %v3166 = vld [vmem:[%s359 + $0x18] sm:$0xff]
      %v3167 = vld [vmem:[%s359 + $0x20] sm:$0xff]
      %v3168 = vld [vmem:[%s359 + $0x28] sm:$0xff]
      %v3169 = vld [vmem:[%s359 + $0x30] sm:$0xff]
      %v3170 = vld [vmem:[%s359 + $0x38] sm:$0xff]
      %v3171 = vld [vmem:[%s359 + $0x40] sm:$0xff]
      %v3172 = vld [vmem:[%s359 + $0x48] sm:$0xff]
      %v3173 = vld [vmem:[%s359 + $0x50] sm:$0xff]
      %v3174 = vld [vmem:[%s359 + $0x58] sm:$0xff]
      %v3175 = vld [vmem:[%s359 + $0x60] sm:$0xff]
      %v3176 = vld [vmem:[%s359 + $0x68] sm:$0xff]
      %v3177 = vld [vmem:[%s359 + $0x70] sm:$0xf]
      %v3192 = vcombine.low %v3164, %v3164
      %v3193 = vcombine.low %v3165, %v3165
      %v3194 = vcombine.low %v3166, %v3166
      %v3195 = vcombine.low %v3167, %v3167
      %v3196 = vcombine.low %v3168, %v3168
      %v3197 = vcombine.low %v3169, %v3169
      %v3198 = vcombine.low %v3170, %v3170
      %v3199 = vcombine.low %v3171, %v3171
      %v3200 = vcombine.low %v3172, %v3172
      %v3201 = vcombine.low %v3173, %v3173
      %v3202 = vcombine.low %v3174, %v3174
      %v3203 = vcombine.low %v3175, %v3175
      %v3204 = vcombine.low %v3176, %v3176
      %v3205 = vcombine.low %v3177, %v3177
      %3206 = vrot.lane.b32.xlu0 %v3192, 22
      %v3207 = vpop.permute.xlu0 %3206
      %3208 = vrot.lane.b32.xlu0 %v3164, 22
      %v3209 = vpop.permute.xlu0 %3208
      %3210 = vrot.lane.b32.xlu0 %v3193, 22
      %v3211 = vpop.permute.xlu0 %3210
      %3212 = vrot.lane.b32.xlu0 %v3165, 22
      %v3213 = vpop.permute.xlu0 %3212
      %3214 = vrot.lane.b32.xlu0 %v3194, 22
      %v3215 = vpop.permute.xlu0 %3214
      %3216 = vrot.lane.b32.xlu0 %v3166, 22
      %v3217 = vpop.permute.xlu0 %3216
      %3218 = vrot.lane.b32.xlu0 %v3195, 22
      %v3219 = vpop.permute.xlu0 %3218
      %3220 = vrot.lane.b32.xlu0 %v3167, 22
      %v3221 = vpop.permute.xlu0 %3220
      %3222 = vrot.lane.b32.xlu0 %v3196, 22
      %v3223 = vpop.permute.xlu0 %3222
      %3224 = vrot.lane.b32.xlu0 %v3168, 22
      %v3225 = vpop.permute.xlu0 %3224
      %3226 = vrot.lane.b32.xlu0 %v3197, 22
      %v3227 = vpop.permute.xlu0 %3226
      %3228 = vrot.lane.b32.xlu0 %v3169, 22
      %v3229 = vpop.permute.xlu0 %3228
      %3230 = vrot.lane.b32.xlu0 %v3198, 22
      %v3231 = vpop.permute.xlu0 %3230
      %3232 = vrot.lane.b32.xlu0 %v3170, 22
      %v3233 = vpop.permute.xlu0 %3232
      %3234 = vrot.lane.b32.xlu0 %v3199, 22
      %v3235 = vpop.permute.xlu0 %3234
      %3236 = vrot.lane.b32.xlu0 %v3171, 22
      %v3237 = vpop.permute.xlu0 %3236
      %3238 = vrot.lane.b32.xlu0 %v3200, 22
      %v3239 = vpop.permute.xlu0 %3238
      %3240 = vrot.lane.b32.xlu0 %v3172, 22
      %v3241 = vpop.permute.xlu0 %3240
      %3242 = vrot.lane.b32.xlu0 %v3201, 22
      %v3243 = vpop.permute.xlu0 %3242
      %3244 = vrot.lane.b32.xlu0 %v3173, 22
      %v3245 = vpop.permute.xlu0 %3244
      %3246 = vrot.lane.b32.xlu0 %v3202, 22
      %v3247 = vpop.permute.xlu0 %3246
      %3248 = vrot.lane.b32.xlu0 %v3174, 22
      %v3249 = vpop.permute.xlu0 %3248
      %3250 = vrot.lane.b32.xlu0 %v3203, 22
      %v3251 = vpop.permute.xlu0 %3250
      %3252 = vrot.lane.b32.xlu0 %v3175, 22
      %v3253 = vpop.permute.xlu0 %3252
      %3254 = vrot.lane.b32.xlu0 %v3204, 22
      %v3255 = vpop.permute.xlu0 %3254
      %3256 = vrot.lane.b32.xlu0 %v3176, 22
      %v3257 = vpop.permute.xlu0 %3256
      %3258 = vrot.lane.b32.xlu0 %v3205, 22
      %v3259 = vpop.permute.xlu0 %3258
      %vm3260 = vcmask 179200
      %v3261 = vsel %vm3260, %v3207, %v3209
      %v3262 = vsel %vm3260, %v3209, %v3211
      %v3263 = vsel %vm3260, %v3211, %v3213
      %v3264 = vsel %vm3260, %v3213, %v3215
      %v3265 = vsel %vm3260, %v3215, %v3217
      %v3266 = vsel %vm3260, %v3217, %v3219
      %v3267 = vsel %vm3260, %v3219, %v3221
      %v3268 = vsel %vm3260, %v3221, %v3223
      %v3269 = vsel %vm3260, %v3223, %v3225
      %v3270 = vsel %vm3260, %v3225, %v3227
      %v3271 = vsel %vm3260, %v3227, %v3229
      %v3272 = vsel %vm3260, %v3229, %v3231
      %v3273 = vsel %vm3260, %v3231, %v3233
      %v3274 = vsel %vm3260, %v3233, %v3235
      %v3275 = vsel %vm3260, %v3235, %v3237
      %v3276 = vsel %vm3260, %v3237, %v3239
      %v3277 = vsel %vm3260, %v3239, %v3241
      %v3278 = vsel %vm3260, %v3241, %v3243
      %v3279 = vsel %vm3260, %v3243, %v3245
      %v3280 = vsel %vm3260, %v3245, %v3247
      %v3281 = vsel %vm3260, %v3247, %v3249
      %v3282 = vsel %vm3260, %v3249, %v3251
      %v3283 = vsel %vm3260, %v3251, %v3253
      %v3284 = vsel %vm3260, %v3253, %v3255
      %v3285 = vsel %vm3260, %v3255, %v3257
      %v3286 = vsel %vm3260, %v3257, %v3259
      %3313 = vst [vmem:[#allocation2 + $0x680] sm:$0xf0] %v3261
      %3314 = vst [vmem:[#allocation2 + $0x688] sm:$0xf0] %v3262
      %3315 = vst [vmem:[#allocation2 + $0x690] sm:$0xf0] %v3263
      %3316 = vst [vmem:[#allocation2 + $0x698] sm:$0xf0] %v3264
      %3317 = vst [vmem:[#allocation2 + $0x6a0] sm:$0xf0] %v3265
      %3318 = vst [vmem:[#allocation2 + $0x6a8] sm:$0xf0] %v3266
      %3319 = vst [vmem:[#allocation2 + $0x6b0] sm:$0xf0] %v3267
      %3320 = vst [vmem:[#allocation2 + $0x6b8] sm:$0xf0] %v3268
      %3321 = vst [vmem:[#allocation2 + $0x6c0] sm:$0xf0] %v3269
      %3322 = vst [vmem:[#allocation2 + $0x6c8] sm:$0xf0] %v3270
      %3323 = vst [vmem:[#allocation2 + $0x6d0] sm:$0xf0] %v3271
      %3324 = vst [vmem:[#allocation2 + $0x6d8] sm:$0xf0] %v3272
      %3325 = vst [vmem:[#allocation2 + $0x6e0] sm:$0xf0] %v3273
      %3326 = vst [vmem:[#allocation2 + $0x6e8] sm:$0xf0] %v3274
      %3327 = vst [vmem:[#allocation2 + $0x6f0] sm:$0xf0] %v3275
      %3328 = vst [vmem:[#allocation2 + $0x6f8] sm:$0xf0] %v3276
      %3329 = vst [vmem:[#allocation2 + $0x700] sm:$0xf0] %v3277
      %3330 = vst [vmem:[#allocation2 + $0x708] sm:$0xf0] %v3278
      %3331 = vst [vmem:[#allocation2 + $0x710] sm:$0xf0] %v3279
      %3332 = vst [vmem:[#allocation2 + $0x718] sm:$0xf0] %v3280
      %3333 = vst [vmem:[#allocation2 + $0x720] sm:$0xf0] %v3281
      %3334 = vst [vmem:[#allocation2 + $0x728] sm:$0xf0] %v3282
      %3335 = vst [vmem:[#allocation2 + $0x730] sm:$0xf0] %v3283
      %3336 = vst [vmem:[#allocation2 + $0x738] sm:$0xf0] %v3284
      %3337 = vst [vmem:[#allocation2 + $0x740] sm:$0xf0] %v3285
      %3338 = vst.msk [vmem:[#allocation2 + $0x748] sm:$0xf0] %vm616, %v3286
      %v3339 = vld [vmem:[%s359 + $0x14] sm:$0xff]
      %v3340 = vld [vmem:[%s359 + $0x1c] sm:$0xff]
      %v3341 = vld [vmem:[%s359 + $0x24] sm:$0xff]
      %v3342 = vld [vmem:[%s359 + $0x2c] sm:$0xff]
      %v3343 = vld [vmem:[%s359 + $0x34] sm:$0xff]
      %v3344 = vld [vmem:[%s359 + $0x3c] sm:$0xff]
      %v3345 = vld [vmem:[%s359 + $0x44] sm:$0xff]
      %v3346 = vld [vmem:[%s359 + $0x4c] sm:$0xff]
      %v3347 = vld [vmem:[%s359 + $0x54] sm:$0xff]
      %v3348 = vld [vmem:[%s359 + $0x5c] sm:$0xff]
      %v3349 = vld [vmem:[%s359 + $0x64] sm:$0xff]
      %v3350 = vld [vmem:[%s359 + $0x6c] sm:$0xff]
      %v3351 = vld [vmem:[%s359 + $0x74] sm:$0xff]
      %v3365 = vcombine.high %v3339, %v3339
      %v3366 = vcombine.high %v3340, %v3340
      %v3367 = vcombine.high %v3341, %v3341
      %v3368 = vcombine.high %v3342, %v3342
      %v3369 = vcombine.high %v3343, %v3343
      %v3370 = vcombine.high %v3344, %v3344
      %v3371 = vcombine.high %v3345, %v3345
      %v3372 = vcombine.high %v3346, %v3346
      %v3373 = vcombine.high %v3347, %v3347
      %v3374 = vcombine.high %v3348, %v3348
      %v3375 = vcombine.high %v3349, %v3349
      %v3376 = vcombine.high %v3350, %v3350
      %v3377 = vcombine.high %v3351, %v3351
      %3378 = vrot.lane.b32.xlu0 %v3339, 120
      %v3379 = vpop.permute.xlu0 %3378
      %3380 = vrot.lane.b32.xlu0 %v3365, 120
      %v3381 = vpop.permute.xlu0 %3380
      %3382 = vrot.lane.b32.xlu0 %v3340, 120
      %v3383 = vpop.permute.xlu0 %3382
      %3384 = vrot.lane.b32.xlu0 %v3366, 120
      %v3385 = vpop.permute.xlu0 %3384
      %3386 = vrot.lane.b32.xlu0 %v3341, 120
      %v3387 = vpop.permute.xlu0 %3386
      %3388 = vrot.lane.b32.xlu0 %v3367, 120
      %v3389 = vpop.permute.xlu0 %3388
      %3390 = vrot.lane.b32.xlu0 %v3342, 120
      %v3391 = vpop.permute.xlu0 %3390
      %3392 = vrot.lane.b32.xlu0 %v3368, 120
      %v3393 = vpop.permute.xlu0 %3392
      %3394 = vrot.lane.b32.xlu0 %v3343, 120
      %v3395 = vpop.permute.xlu0 %3394
      %3396 = vrot.lane.b32.xlu0 %v3369, 120
      %v3397 = vpop.permute.xlu0 %3396
      %3398 = vrot.lane.b32.xlu0 %v3344, 120
      %v3399 = vpop.permute.xlu0 %3398
      %3400 = vrot.lane.b32.xlu0 %v3370, 120
      %v3401 = vpop.permute.xlu0 %3400
      %3402 = vrot.lane.b32.xlu0 %v3345, 120
      %v3403 = vpop.permute.xlu0 %3402
      %3404 = vrot.lane.b32.xlu0 %v3371, 120
      %v3405 = vpop.permute.xlu0 %3404
      %3406 = vrot.lane.b32.xlu0 %v3346, 120
      %v3407 = vpop.permute.xlu0 %3406
      %3408 = vrot.lane.b32.xlu0 %v3372, 120
      %v3409 = vpop.permute.xlu0 %3408
      %3410 = vrot.lane.b32.xlu0 %v3347, 120
      %v3411 = vpop.permute.xlu0 %3410
      %3412 = vrot.lane.b32.xlu0 %v3373, 120
      %v3413 = vpop.permute.xlu0 %3412
      %3414 = vrot.lane.b32.xlu0 %v3348, 120
      %v3415 = vpop.permute.xlu0 %3414
      %3416 = vrot.lane.b32.xlu0 %v3374, 120
      %v3417 = vpop.permute.xlu0 %3416
      %3418 = vrot.lane.b32.xlu0 %v3349, 120
      %v3419 = vpop.permute.xlu0 %3418
      %3420 = vrot.lane.b32.xlu0 %v3375, 120
      %v3421 = vpop.permute.xlu0 %3420
      %3422 = vrot.lane.b32.xlu0 %v3350, 120
      %v3423 = vpop.permute.xlu0 %3422
      %3424 = vrot.lane.b32.xlu0 %v3376, 120
      %v3425 = vpop.permute.xlu0 %3424
      %3426 = vrot.lane.b32.xlu0 %v3351, 120
      %v3427 = vpop.permute.xlu0 %3426
      %3428 = vrot.lane.b32.xlu0 %v3377, 120
      %v3429 = vpop.permute.xlu0 %3428
      %vm3430 = vcmask 982016
      %v3431 = vsel %vm3430, %v3379, %v3381
      %v3432 = vsel %vm3430, %v3381, %v3383
      %v3433 = vsel %vm3430, %v3383, %v3385
      %v3434 = vsel %vm3430, %v3385, %v3387
      %v3435 = vsel %vm3430, %v3387, %v3389
      %v3436 = vsel %vm3430, %v3389, %v3391
      %v3437 = vsel %vm3430, %v3391, %v3393
      %v3438 = vsel %vm3430, %v3393, %v3395
      %v3439 = vsel %vm3430, %v3395, %v3397
      %v3440 = vsel %vm3430, %v3397, %v3399
      %v3441 = vsel %vm3430, %v3399, %v3401
      %v3442 = vsel %vm3430, %v3401, %v3403
      %v3443 = vsel %vm3430, %v3403, %v3405
      %v3444 = vsel %vm3430, %v3405, %v3407
      %v3445 = vsel %vm3430, %v3407, %v3409
      %v3446 = vsel %vm3430, %v3409, %v3411
      %v3447 = vsel %vm3430, %v3411, %v3413
      %v3448 = vsel %vm3430, %v3413, %v3415
      %v3449 = vsel %vm3430, %v3415, %v3417
      %v3450 = vsel %vm3430, %v3417, %v3419
      %v3451 = vsel %vm3430, %v3419, %v3421
      %v3452 = vsel %vm3430, %v3421, %v3423
      %v3453 = vsel %vm3430, %v3423, %v3425
      %v3454 = vsel %vm3430, %v3425, %v3427
      %v3455 = vsel %vm3430, %v3427, %v3429
      %3482 = vst [vmem:[#allocation2 + $0x750] sm:$0xf] %v3431
      %3483 = vst [vmem:[#allocation2 + $0x758] sm:$0xf] %v3432
      %3484 = vst [vmem:[#allocation2 + $0x760] sm:$0xf] %v3433
      %3485 = vst [vmem:[#allocation2 + $0x768] sm:$0xf] %v3434
      %3486 = vst [vmem:[#allocation2 + $0x770] sm:$0xf] %v3435
      %3487 = vst [vmem:[#allocation2 + $0x778] sm:$0xf] %v3436
      %3488 = vst [vmem:[#allocation2 + $0x780] sm:$0xf] %v3437
      %3489 = vst [vmem:[#allocation2 + $0x788] sm:$0xf] %v3438
      %3490 = vst [vmem:[#allocation2 + $0x790] sm:$0xf] %v3439
      %3491 = vst [vmem:[#allocation2 + $0x798] sm:$0xf] %v3440
      %3492 = vst [vmem:[#allocation2 + $0x7a0] sm:$0xf] %v3441
      %3493 = vst [vmem:[#allocation2 + $0x7a8] sm:$0xf] %v3442
      %3494 = vst [vmem:[#allocation2 + $0x7b0] sm:$0xf] %v3443
      %3495 = vst [vmem:[#allocation2 + $0x7b8] sm:$0xf] %v3444
      %3496 = vst [vmem:[#allocation2 + $0x7c0] sm:$0xf] %v3445
      %3497 = vst [vmem:[#allocation2 + $0x7c8] sm:$0xf] %v3446
      %3498 = vst [vmem:[#allocation2 + $0x7d0] sm:$0xf] %v3447
      %3499 = vst [vmem:[#allocation2 + $0x7d8] sm:$0xf] %v3448
      %3500 = vst [vmem:[#allocation2 + $0x7e0] sm:$0xf] %v3449
      %3501 = vst [vmem:[#allocation2 + $0x7e8] sm:$0xf] %v3450
      %3502 = vst [vmem:[#allocation2 + $0x7f0] sm:$0xf] %v3451
      %3503 = vst [vmem:[#allocation2 + $0x7f8] sm:$0xf] %v3452
      %3504 = vst [vmem:[#allocation2 + $0x800] sm:$0xf] %v3453
      %3505 = vst [vmem:[#allocation2 + $0x808] sm:$0xf] %v3454
      %3506 = vst [vmem:[#allocation2 + $0x810] sm:$0xf] %v3455
      %3507 = vst.msk [vmem:[#allocation2 + $0x818] sm:$0xf] %vm446, %v3429
      %v3508 = vld [vmem:[%s359 + $0x14] sm:$0xff]
      %v3509 = vld [vmem:[%s359 + $0x1c] sm:$0xff]
      %v3510 = vld [vmem:[%s359 + $0x24] sm:$0xff]
      %v3511 = vld [vmem:[%s359 + $0x2c] sm:$0xff]
      %v3512 = vld [vmem:[%s359 + $0x34] sm:$0xff]
      %v3513 = vld [vmem:[%s359 + $0x3c] sm:$0xff]
      %v3514 = vld [vmem:[%s359 + $0x44] sm:$0xff]
      %v3515 = vld [vmem:[%s359 + $0x4c] sm:$0xff]
      %v3516 = vld [vmem:[%s359 + $0x54] sm:$0xff]
      %v3517 = vld [vmem:[%s359 + $0x5c] sm:$0xff]
      %v3518 = vld [vmem:[%s359 + $0x64] sm:$0xff]
      %v3519 = vld [vmem:[%s359 + $0x6c] sm:$0xff]
      %v3520 = vld [vmem:[%s359 + $0x74] sm:$0xff]
      %v3534 = vcombine.low %v3508, %v3508
      %v3535 = vcombine.low %v3509, %v3509
      %v3536 = vcombine.low %v3510, %v3510
      %v3537 = vcombine.low %v3511, %v3511
      %v3538 = vcombine.low %v3512, %v3512
      %v3539 = vcombine.low %v3513, %v3513
      %v3540 = vcombine.low %v3514, %v3514
      %v3541 = vcombine.low %v3515, %v3515
      %v3542 = vcombine.low %v3516, %v3516
      %v3543 = vcombine.low %v3517, %v3517
      %v3544 = vcombine.low %v3518, %v3518
      %v3545 = vcombine.low %v3519, %v3519
      %v3546 = vcombine.low %v3520, %v3520
      %3547 = vrot.lane.b32.xlu0 %v3534, 119
      %v3548 = vpop.permute.xlu0 %3547
      %3549 = vrot.lane.b32.xlu0 %v3508, 119
      %v3550 = vpop.permute.xlu0 %3549
      %3551 = vrot.lane.b32.xlu0 %v3535, 119
      %v3552 = vpop.permute.xlu0 %3551
      %3553 = vrot.lane.b32.xlu0 %v3509, 119
      %v3554 = vpop.permute.xlu0 %3553
      %3555 = vrot.lane.b32.xlu0 %v3536, 119
      %v3556 = vpop.permute.xlu0 %3555
      %3557 = vrot.lane.b32.xlu0 %v3510, 119
      %v3558 = vpop.permute.xlu0 %3557
      %3559 = vrot.lane.b32.xlu0 %v3537, 119
      %v3560 = vpop.permute.xlu0 %3559
      %3561 = vrot.lane.b32.xlu0 %v3511, 119
      %v3562 = vpop.permute.xlu0 %3561
      %3563 = vrot.lane.b32.xlu0 %v3538, 119
      %v3564 = vpop.permute.xlu0 %3563
      %3565 = vrot.lane.b32.xlu0 %v3512, 119
      %v3566 = vpop.permute.xlu0 %3565
      %3567 = vrot.lane.b32.xlu0 %v3539, 119
      %v3568 = vpop.permute.xlu0 %3567
      %3569 = vrot.lane.b32.xlu0 %v3513, 119
      %v3570 = vpop.permute.xlu0 %3569
      %3571 = vrot.lane.b32.xlu0 %v3540, 119
      %v3572 = vpop.permute.xlu0 %3571
      %3573 = vrot.lane.b32.xlu0 %v3514, 119
      %v3574 = vpop.permute.xlu0 %3573
      %3575 = vrot.lane.b32.xlu0 %v3541, 119
      %v3576 = vpop.permute.xlu0 %3575
      %3577 = vrot.lane.b32.xlu0 %v3515, 119
      %v3578 = vpop.permute.xlu0 %3577
      %3579 = vrot.lane.b32.xlu0 %v3542, 119
      %v3580 = vpop.permute.xlu0 %3579
      %3581 = vrot.lane.b32.xlu0 %v3516, 119
      %v3582 = vpop.permute.xlu0 %3581
      %3583 = vrot.lane.b32.xlu0 %v3543, 119
      %v3584 = vpop.permute.xlu0 %3583
      %3585 = vrot.lane.b32.xlu0 %v3517, 119
      %v3586 = vpop.permute.xlu0 %3585
      %3587 = vrot.lane.b32.xlu0 %v3544, 119
      %v3588 = vpop.permute.xlu0 %3587
      %3589 = vrot.lane.b32.xlu0 %v3518, 119
      %v3590 = vpop.permute.xlu0 %3589
      %3591 = vrot.lane.b32.xlu0 %v3545, 119
      %v3592 = vpop.permute.xlu0 %3591
      %3593 = vrot.lane.b32.xlu0 %v3519, 119
      %v3594 = vpop.permute.xlu0 %3593
      %3595 = vrot.lane.b32.xlu0 %v3546, 119
      %v3596 = vpop.permute.xlu0 %3595
      %3597 = vrot.lane.b32.xlu0 %v3520, 119
      %v3598 = vpop.permute.xlu0 %3597
      %vm3599 = vcmask 973824
      %v3600 = vsel %vm3599, %v3548, %v3550
      %v3601 = vsel %vm3599, %v3550, %v3552
      %v3602 = vsel %vm3599, %v3552, %v3554
      %v3603 = vsel %vm3599, %v3554, %v3556
      %v3604 = vsel %vm3599, %v3556, %v3558
      %v3605 = vsel %vm3599, %v3558, %v3560
      %v3606 = vsel %vm3599, %v3560, %v3562
      %v3607 = vsel %vm3599, %v3562, %v3564
      %v3608 = vsel %vm3599, %v3564, %v3566
      %v3609 = vsel %vm3599, %v3566, %v3568
      %v3610 = vsel %vm3599, %v3568, %v3570
      %v3611 = vsel %vm3599, %v3570, %v3572
      %v3612 = vsel %vm3599, %v3572, %v3574
      %v3613 = vsel %vm3599, %v3574, %v3576
      %v3614 = vsel %vm3599, %v3576, %v3578
      %v3615 = vsel %vm3599, %v3578, %v3580
      %v3616 = vsel %vm3599, %v3580, %v3582
      %v3617 = vsel %vm3599, %v3582, %v3584
      %v3618 = vsel %vm3599, %v3584, %v3586
      %v3619 = vsel %vm3599, %v3586, %v3588
      %v3620 = vsel %vm3599, %v3588, %v3590
      %v3621 = vsel %vm3599, %v3590, %v3592
      %v3622 = vsel %vm3599, %v3592, %v3594
      %v3623 = vsel %vm3599, %v3594, %v3596
      %v3624 = vsel %vm3599, %v3596, %v3598
      %3651 = vst [vmem:[#allocation2 + $0x750] sm:$0xf0] %v3600
      %3652 = vst [vmem:[#allocation2 + $0x758] sm:$0xf0] %v3601
      %3653 = vst [vmem:[#allocation2 + $0x760] sm:$0xf0] %v3602
      %3654 = vst [vmem:[#allocation2 + $0x768] sm:$0xf0] %v3603
      %3655 = vst [vmem:[#allocation2 + $0x770] sm:$0xf0] %v3604
      %3656 = vst [vmem:[#allocation2 + $0x778] sm:$0xf0] %v3605
      %3657 = vst [vmem:[#allocation2 + $0x780] sm:$0xf0] %v3606
      %3658 = vst [vmem:[#allocation2 + $0x788] sm:$0xf0] %v3607
      %3659 = vst [vmem:[#allocation2 + $0x790] sm:$0xf0] %v3608
      %3660 = vst [vmem:[#allocation2 + $0x798] sm:$0xf0] %v3609
      %3661 = vst [vmem:[#allocation2 + $0x7a0] sm:$0xf0] %v3610
      %3662 = vst [vmem:[#allocation2 + $0x7a8] sm:$0xf0] %v3611
      %3663 = vst [vmem:[#allocation2 + $0x7b0] sm:$0xf0] %v3612
      %3664 = vst [vmem:[#allocation2 + $0x7b8] sm:$0xf0] %v3613
      %3665 = vst [vmem:[#allocation2 + $0x7c0] sm:$0xf0] %v3614
      %3666 = vst [vmem:[#allocation2 + $0x7c8] sm:$0xf0] %v3615
      %3667 = vst [vmem:[#allocation2 + $0x7d0] sm:$0xf0] %v3616
      %3668 = vst [vmem:[#allocation2 + $0x7d8] sm:$0xf0] %v3617
      %3669 = vst [vmem:[#allocation2 + $0x7e0] sm:$0xf0] %v3618
      %3670 = vst [vmem:[#allocation2 + $0x7e8] sm:$0xf0] %v3619
      %3671 = vst [vmem:[#allocation2 + $0x7f0] sm:$0xf0] %v3620
      %3672 = vst [vmem:[#allocation2 + $0x7f8] sm:$0xf0] %v3621
      %3673 = vst [vmem:[#allocation2 + $0x800] sm:$0xf0] %v3622
      %3674 = vst [vmem:[#allocation2 + $0x808] sm:$0xf0] %v3623
      %3675 = vst [vmem:[#allocation2 + $0x810] sm:$0xf0] %v3624
      %3676 = vst.msk [vmem:[#allocation2 + $0x818] sm:$0xf0] %vm616, %v3598
      %v3677 = vld [vmem:[%s359 + $0x14] sm:$0xff]
      %v3678 = vld [vmem:[%s359 + $0x1c] sm:$0xff]
      %v3679 = vld [vmem:[%s359 + $0x24] sm:$0xff]
      %v3680 = vld [vmem:[%s359 + $0x2c] sm:$0xff]
      %v3681 = vld [vmem:[%s359 + $0x34] sm:$0xff]
      %v3682 = vld [vmem:[%s359 + $0x3c] sm:$0xff]
      %v3683 = vld [vmem:[%s359 + $0x44] sm:$0xff]
      %v3684 = vld [vmem:[%s359 + $0x4c] sm:$0xff]
      %v3685 = vld [vmem:[%s359 + $0x54] sm:$0xff]
      %v3686 = vld [vmem:[%s359 + $0x5c] sm:$0xff]
      %v3687 = vld [vmem:[%s359 + $0x64] sm:$0xff]
      %v3688 = vld [vmem:[%s359 + $0x6c] sm:$0xff]
      %v3689 = vld [vmem:[%s359 + $0x74] sm:$0xff]
      %v3703 = vcombine.high %v3677, %v3677
      %v3704 = vcombine.high %v3678, %v3678
      %v3705 = vcombine.high %v3679, %v3679
      %v3706 = vcombine.high %v3680, %v3680
      %v3707 = vcombine.high %v3681, %v3681
      %v3708 = vcombine.high %v3682, %v3682
      %v3709 = vcombine.high %v3683, %v3683
      %v3710 = vcombine.high %v3684, %v3684
      %v3711 = vcombine.high %v3685, %v3685
      %v3712 = vcombine.high %v3686, %v3686
      %v3713 = vcombine.high %v3687, %v3687
      %v3714 = vcombine.high %v3688, %v3688
      %v3715 = vcombine.high %v3689, %v3689
      %3716 = vrot.lane.b32.xlu0 %v3677, 118
      %v3717 = vpop.permute.xlu0 %3716
      %3718 = vrot.lane.b32.xlu0 %v3703, 118
      %v3719 = vpop.permute.xlu0 %3718
      %3720 = vrot.lane.b32.xlu0 %v3678, 118
      %v3721 = vpop.permute.xlu0 %3720
      %3722 = vrot.lane.b32.xlu0 %v3704, 118
      %v3723 = vpop.permute.xlu0 %3722
      %3724 = vrot.lane.b32.xlu0 %v3679, 118
      %v3725 = vpop.permute.xlu0 %3724
      %3726 = vrot.lane.b32.xlu0 %v3705, 118
      %v3727 = vpop.permute.xlu0 %3726
      %3728 = vrot.lane.b32.xlu0 %v3680, 118
      %v3729 = vpop.permute.xlu0 %3728
      %3730 = vrot.lane.b32.xlu0 %v3706, 118
      %v3731 = vpop.permute.xlu0 %3730
      %3732 = vrot.lane.b32.xlu0 %v3681, 118
      %v3733 = vpop.permute.xlu0 %3732
      %3734 = vrot.lane.b32.xlu0 %v3707, 118
      %v3735 = vpop.permute.xlu0 %3734
      %3736 = vrot.lane.b32.xlu0 %v3682, 118
      %v3737 = vpop.permute.xlu0 %3736
      %3738 = vrot.lane.b32.xlu0 %v3708, 118
      %v3739 = vpop.permute.xlu0 %3738
      %3740 = vrot.lane.b32.xlu0 %v3683, 118
      %v3741 = vpop.permute.xlu0 %3740
      %3742 = vrot.lane.b32.xlu0 %v3709, 118
      %v3743 = vpop.permute.xlu0 %3742
      %3744 = vrot.lane.b32.xlu0 %v3684, 118
      %v3745 = vpop.permute.xlu0 %3744
      %3746 = vrot.lane.b32.xlu0 %v3710, 118
      %v3747 = vpop.permute.xlu0 %3746
      %3748 = vrot.lane.b32.xlu0 %v3685, 118
      %v3749 = vpop.permute.xlu0 %3748
      %3750 = vrot.lane.b32.xlu0 %v3711, 118
      %v3751 = vpop.permute.xlu0 %3750
      %3752 = vrot.lane.b32.xlu0 %v3686, 118
      %v3753 = vpop.permute.xlu0 %3752
      %3754 = vrot.lane.b32.xlu0 %v3712, 118
      %v3755 = vpop.permute.xlu0 %3754
      %3756 = vrot.lane.b32.xlu0 %v3687, 118
      %v3757 = vpop.permute.xlu0 %3756
      %3758 = vrot.lane.b32.xlu0 %v3713, 118
      %v3759 = vpop.permute.xlu0 %3758
      %3760 = vrot.lane.b32.xlu0 %v3688, 118
      %v3761 = vpop.permute.xlu0 %3760
      %3762 = vrot.lane.b32.xlu0 %v3714, 118
      %v3763 = vpop.permute.xlu0 %3762
      %3764 = vrot.lane.b32.xlu0 %v3689, 118
      %v3765 = vpop.permute.xlu0 %3764
      %3766 = vrot.lane.b32.xlu0 %v3715, 118
      %v3767 = vpop.permute.xlu0 %3766
      %vm3768 = vcmask 965632
      %v3769 = vsel %vm3768, %v3717, %v3719
      %v3770 = vsel %vm3768, %v3719, %v3721
      %v3771 = vsel %vm3768, %v3721, %v3723
      %v3772 = vsel %vm3768, %v3723, %v3725
      %v3773 = vsel %vm3768, %v3725, %v3727
      %v3774 = vsel %vm3768, %v3727, %v3729
      %v3775 = vsel %vm3768, %v3729, %v3731
      %v3776 = vsel %vm3768, %v3731, %v3733
      %v3777 = vsel %vm3768, %v3733, %v3735
      %v3778 = vsel %vm3768, %v3735, %v3737
      %v3779 = vsel %vm3768, %v3737, %v3739
      %v3780 = vsel %vm3768, %v3739, %v3741
      %v3781 = vsel %vm3768, %v3741, %v3743
      %v3782 = vsel %vm3768, %v3743, %v3745
      %v3783 = vsel %vm3768, %v3745, %v3747
      %v3784 = vsel %vm3768, %v3747, %v3749
      %v3785 = vsel %vm3768, %v3749, %v3751
      %v3786 = vsel %vm3768, %v3751, %v3753
      %v3787 = vsel %vm3768, %v3753, %v3755
      %v3788 = vsel %vm3768, %v3755, %v3757
      %v3789 = vsel %vm3768, %v3757, %v3759
      %v3790 = vsel %vm3768, %v3759, %v3761
      %v3791 = vsel %vm3768, %v3761, %v3763
      %v3792 = vsel %vm3768, %v3763, %v3765
      %v3793 = vsel %vm3768, %v3765, %v3767
      %3820 = vst [vmem:[#allocation2 + $0x820] sm:$0xf] %v3769
      %3821 = vst [vmem:[#allocation2 + $0x828] sm:$0xf] %v3770
      %3822 = vst [vmem:[#allocation2 + $0x830] sm:$0xf] %v3771
      %3823 = vst [vmem:[#allocation2 + $0x838] sm:$0xf] %v3772
      %3824 = vst [vmem:[#allocation2 + $0x840] sm:$0xf] %v3773
      %3825 = vst [vmem:[#allocation2 + $0x848] sm:$0xf] %v3774
      %3826 = vst [vmem:[#allocation2 + $0x850] sm:$0xf] %v3775
      %3827 = vst [vmem:[#allocation2 + $0x858] sm:$0xf] %v3776
      %3828 = vst [vmem:[#allocation2 + $0x860] sm:$0xf] %v3777
      %3829 = vst [vmem:[#allocation2 + $0x868] sm:$0xf] %v3778
      %3830 = vst [vmem:[#allocation2 + $0x870] sm:$0xf] %v3779
      %3831 = vst [vmem:[#allocation2 + $0x878] sm:$0xf] %v3780
      %3832 = vst [vmem:[#allocation2 + $0x880] sm:$0xf] %v3781
      %3833 = vst [vmem:[#allocation2 + $0x888] sm:$0xf] %v3782
      %3834 = vst [vmem:[#allocation2 + $0x890] sm:$0xf] %v3783
      %3835 = vst [vmem:[#allocation2 + $0x898] sm:$0xf] %v3784
      %3836 = vst [vmem:[#allocation2 + $0x8a0] sm:$0xf] %v3785
      %3837 = vst [vmem:[#allocation2 + $0x8a8] sm:$0xf] %v3786
      %3838 = vst [vmem:[#allocation2 + $0x8b0] sm:$0xf] %v3787
      %3839 = vst [vmem:[#allocation2 + $0x8b8] sm:$0xf] %v3788
      %3840 = vst [vmem:[#allocation2 + $0x8c0] sm:$0xf] %v3789
      %3841 = vst [vmem:[#allocation2 + $0x8c8] sm:$0xf] %v3790
      %3842 = vst [vmem:[#allocation2 + $0x8d0] sm:$0xf] %v3791
      %3843 = vst [vmem:[#allocation2 + $0x8d8] sm:$0xf] %v3792
      %3844 = vst [vmem:[#allocation2 + $0x8e0] sm:$0xf] %v3793
      %3845 = vst.msk [vmem:[#allocation2 + $0x8e8] sm:$0xf] %vm446, %v3767
      %v3846 = vld [vmem:[%s359 + $0x14] sm:$0xff]
      %v3847 = vld [vmem:[%s359 + $0x1c] sm:$0xff]
      %v3848 = vld [vmem:[%s359 + $0x24] sm:$0xff]
      %v3849 = vld [vmem:[%s359 + $0x2c] sm:$0xff]
      %v3850 = vld [vmem:[%s359 + $0x34] sm:$0xff]
      %v3851 = vld [vmem:[%s359 + $0x3c] sm:$0xff]
      %v3852 = vld [vmem:[%s359 + $0x44] sm:$0xff]
      %v3853 = vld [vmem:[%s359 + $0x4c] sm:$0xff]
      %v3854 = vld [vmem:[%s359 + $0x54] sm:$0xff]
      %v3855 = vld [vmem:[%s359 + $0x5c] sm:$0xff]
      %v3856 = vld [vmem:[%s359 + $0x64] sm:$0xff]
      %v3857 = vld [vmem:[%s359 + $0x6c] sm:$0xff]
      %v3858 = vld [vmem:[%s359 + $0x74] sm:$0xff]
      %v3872 = vcombine.low %v3846, %v3846
      %v3873 = vcombine.low %v3847, %v3847
      %v3874 = vcombine.low %v3848, %v3848
      %v3875 = vcombine.low %v3849, %v3849
      %v3876 = vcombine.low %v3850, %v3850
      %v3877 = vcombine.low %v3851, %v3851
      %v3878 = vcombine.low %v3852, %v3852
      %v3879 = vcombine.low %v3853, %v3853
      %v3880 = vcombine.low %v3854, %v3854
      %v3881 = vcombine.low %v3855, %v3855
      %v3882 = vcombine.low %v3856, %v3856
      %v3883 = vcombine.low %v3857, %v3857
      %v3884 = vcombine.low %v3858, %v3858
      %3885 = vrot.lane.b32.xlu0 %v3872, 102
      %v3886 = vpop.permute.xlu0 %3885
      %3887 = vrot.lane.b32.xlu0 %v3846, 102
      %v3888 = vpop.permute.xlu0 %3887
      %3889 = vrot.lane.b32.xlu0 %v3873, 102
      %v3890 = vpop.permute.xlu0 %3889
      %3891 = vrot.lane.b32.xlu0 %v3847, 102
      %v3892 = vpop.permute.xlu0 %3891
      %3893 = vrot.lane.b32.xlu0 %v3874, 102
      %v3894 = vpop.permute.xlu0 %3893
      %3895 = vrot.lane.b32.xlu0 %v3848, 102
      %v3896 = vpop.permute.xlu0 %3895
      %3897 = vrot.lane.b32.xlu0 %v3875, 102
      %v3898 = vpop.permute.xlu0 %3897
      %3899 = vrot.lane.b32.xlu0 %v3849, 102
      %v3900 = vpop.permute.xlu0 %3899
      %3901 = vrot.lane.b32.xlu0 %v3876, 102
      %v3902 = vpop.permute.xlu0 %3901
      %3903 = vrot.lane.b32.xlu0 %v3850, 102
      %v3904 = vpop.permute.xlu0 %3903
      %3905 = vrot.lane.b32.xlu0 %v3877, 102
      %v3906 = vpop.permute.xlu0 %3905
      %3907 = vrot.lane.b32.xlu0 %v3851, 102
      %v3908 = vpop.permute.xlu0 %3907
      %3909 = vrot.lane.b32.xlu0 %v3878, 102
      %v3910 = vpop.permute.xlu0 %3909
      %3911 = vrot.lane.b32.xlu0 %v3852, 102
      %v3912 = vpop.permute.xlu0 %3911
      %3913 = vrot.lane.b32.xlu0 %v3879, 102
      %v3914 = vpop.permute.xlu0 %3913
      %3915 = vrot.lane.b32.xlu0 %v3853, 102
      %v3916 = vpop.permute.xlu0 %3915
      %3917 = vrot.lane.b32.xlu0 %v3880, 102
      %v3918 = vpop.permute.xlu0 %3917
      %3919 = vrot.lane.b32.xlu0 %v3854, 102
      %v3920 = vpop.permute.xlu0 %3919
      %3921 = vrot.lane.b32.xlu0 %v3881, 102
      %v3922 = vpop.permute.xlu0 %3921
      %3923 = vrot.lane.b32.xlu0 %v3855, 102
      %v3924 = vpop.permute.xlu0 %3923
      %3925 = vrot.lane.b32.xlu0 %v3882, 102
      %v3926 = vpop.permute.xlu0 %3925
      %3927 = vrot.lane.b32.xlu0 %v3856, 102
      %v3928 = vpop.permute.xlu0 %3927
      %3929 = vrot.lane.b32.xlu0 %v3883, 102
      %v3930 = vpop.permute.xlu0 %3929
      %3931 = vrot.lane.b32.xlu0 %v3857, 102
      %v3932 = vpop.permute.xlu0 %3931
      %3933 = vrot.lane.b32.xlu0 %v3884, 102
      %v3934 = vpop.permute.xlu0 %3933
      %3935 = vrot.lane.b32.xlu0 %v3858, 102
      %v3936 = vpop.permute.xlu0 %3935
      %vm3937 = vcmask 834560
      %v3938 = vsel %vm3937, %v3886, %v3888
      %v3939 = vsel %vm3937, %v3888, %v3890
      %v3940 = vsel %vm3937, %v3890, %v3892
      %v3941 = vsel %vm3937, %v3892, %v3894
      %v3942 = vsel %vm3937, %v3894, %v3896
      %v3943 = vsel %vm3937, %v3896, %v3898
      %v3944 = vsel %vm3937, %v3898, %v3900
      %v3945 = vsel %vm3937, %v3900, %v3902
      %v3946 = vsel %vm3937, %v3902, %v3904
      %v3947 = vsel %vm3937, %v3904, %v3906
      %v3948 = vsel %vm3937, %v3906, %v3908
      %v3949 = vsel %vm3937, %v3908, %v3910
      %v3950 = vsel %vm3937, %v3910, %v3912
      %v3951 = vsel %vm3937, %v3912, %v3914
      %v3952 = vsel %vm3937, %v3914, %v3916
      %v3953 = vsel %vm3937, %v3916, %v3918
      %v3954 = vsel %vm3937, %v3918, %v3920
      %v3955 = vsel %vm3937, %v3920, %v3922
      %v3956 = vsel %vm3937, %v3922, %v3924
      %v3957 = vsel %vm3937, %v3924, %v3926
      %v3958 = vsel %vm3937, %v3926, %v3928
      %v3959 = vsel %vm3937, %v3928, %v3930
      %v3960 = vsel %vm3937, %v3930, %v3932
      %v3961 = vsel %vm3937, %v3932, %v3934
      %v3962 = vsel %vm3937, %v3934, %v3936
      %3989 = vst [vmem:[#allocation2 + $0x820] sm:$0xf0] %v3938
      %3990 = vst [vmem:[#allocation2 + $0x828] sm:$0xf0] %v3939
      %3991 = vst [vmem:[#allocation2 + $0x830] sm:$0xf0] %v3940
      %3992 = vst [vmem:[#allocation2 + $0x838] sm:$0xf0] %v3941
      %3993 = vst [vmem:[#allocation2 + $0x840] sm:$0xf0] %v3942
      %3994 = vst [vmem:[#allocation2 + $0x848] sm:$0xf0] %v3943
      %3995 = vst [vmem:[#allocation2 + $0x850] sm:$0xf0] %v3944
      %3996 = vst [vmem:[#allocation2 + $0x858] sm:$0xf0] %v3945
      %3997 = vst [vmem:[#allocation2 + $0x860] sm:$0xf0] %v3946
      %3998 = vst [vmem:[#allocation2 + $0x868] sm:$0xf0] %v3947
      %3999 = vst [vmem:[#allocation2 + $0x870] sm:$0xf0] %v3948
      %4000 = vst [vmem:[#allocation2 + $0x878] sm:$0xf0] %v3949
      %4001 = vst [vmem:[#allocation2 + $0x880] sm:$0xf0] %v3950
      %4002 = vst [vmem:[#allocation2 + $0x888] sm:$0xf0] %v3951
      %4003 = vst [vmem:[#allocation2 + $0x890] sm:$0xf0] %v3952
      %4004 = vst [vmem:[#allocation2 + $0x898] sm:$0xf0] %v3953
      %4005 = vst [vmem:[#allocation2 + $0x8a0] sm:$0xf0] %v3954
      %4006 = vst [vmem:[#allocation2 + $0x8a8] sm:$0xf0] %v3955
      %4007 = vst [vmem:[#allocation2 + $0x8b0] sm:$0xf0] %v3956
      %4008 = vst [vmem:[#allocation2 + $0x8b8] sm:$0xf0] %v3957
      %4009 = vst [vmem:[#allocation2 + $0x8c0] sm:$0xf0] %v3958
      %4010 = vst [vmem:[#allocation2 + $0x8c8] sm:$0xf0] %v3959
      %4011 = vst [vmem:[#allocation2 + $0x8d0] sm:$0xf0] %v3960
      %4012 = vst [vmem:[#allocation2 + $0x8d8] sm:$0xf0] %v3961
      %4013 = vst [vmem:[#allocation2 + $0x8e0] sm:$0xf0] %v3962
      %4014 = vst.msk [vmem:[#allocation2 + $0x8e8] sm:$0xf0] %vm616, %v3936
      %v4015 = vld [vmem:[%s359 + $0x14] sm:$0xff]
      %v4016 = vld [vmem:[%s359 + $0x1c] sm:$0xff]
      %v4017 = vld [vmem:[%s359 + $0x24] sm:$0xff]
      %v4018 = vld [vmem:[%s359 + $0x2c] sm:$0xff]
      %v4019 = vld [vmem:[%s359 + $0x34] sm:$0xff]
      %v4020 = vld [vmem:[%s359 + $0x3c] sm:$0xff]
      %v4021 = vld [vmem:[%s359 + $0x44] sm:$0xff]
      %v4022 = vld [vmem:[%s359 + $0x4c] sm:$0xff]
      %v4023 = vld [vmem:[%s359 + $0x54] sm:$0xff]
      %v4024 = vld [vmem:[%s359 + $0x5c] sm:$0xff]
      %v4025 = vld [vmem:[%s359 + $0x64] sm:$0xff]
      %v4026 = vld [vmem:[%s359 + $0x6c] sm:$0xff]
      %v4027 = vld [vmem:[%s359 + $0x74] sm:$0xff]
      %v4041 = vcombine.high %v4015, %v4015
      %v4042 = vcombine.high %v4016, %v4016
      %v4043 = vcombine.high %v4017, %v4017
      %v4044 = vcombine.high %v4018, %v4018
      %v4045 = vcombine.high %v4019, %v4019
      %v4046 = vcombine.high %v4020, %v4020
      %v4047 = vcombine.high %v4021, %v4021
      %v4048 = vcombine.high %v4022, %v4022
      %v4049 = vcombine.high %v4023, %v4023
      %v4050 = vcombine.high %v4024, %v4024
      %v4051 = vcombine.high %v4025, %v4025
      %v4052 = vcombine.high %v4026, %v4026
      %v4053 = vcombine.high %v4027, %v4027
      %4054 = vrot.lane.b32.xlu0 %v4015, 101
      %v4055 = vpop.permute.xlu0 %4054
      %4056 = vrot.lane.b32.xlu0 %v4041, 101
      %v4057 = vpop.permute.xlu0 %4056
      %4058 = vrot.lane.b32.xlu0 %v4016, 101
      %v4059 = vpop.permute.xlu0 %4058
      %4060 = vrot.lane.b32.xlu0 %v4042, 101
      %v4061 = vpop.permute.xlu0 %4060
      %4062 = vrot.lane.b32.xlu0 %v4017, 101
      %v4063 = vpop.permute.xlu0 %4062
      %4064 = vrot.lane.b32.xlu0 %v4043, 101
      %v4065 = vpop.permute.xlu0 %4064
      %4066 = vrot.lane.b32.xlu0 %v4018, 101
      %v4067 = vpop.permute.xlu0 %4066
      %4068 = vrot.lane.b32.xlu0 %v4044, 101
      %v4069 = vpop.permute.xlu0 %4068
      %4070 = vrot.lane.b32.xlu0 %v4019, 101
      %v4071 = vpop.permute.xlu0 %4070
      %4072 = vrot.lane.b32.xlu0 %v4045, 101
      %v4073 = vpop.permute.xlu0 %4072
      %4074 = vrot.lane.b32.xlu0 %v4020, 101
      %v4075 = vpop.permute.xlu0 %4074
      %4076 = vrot.lane.b32.xlu0 %v4046, 101
      %v4077 = vpop.permute.xlu0 %4076
      %4078 = vrot.lane.b32.xlu0 %v4021, 101
      %v4079 = vpop.permute.xlu0 %4078
      %4080 = vrot.lane.b32.xlu0 %v4047, 101
      %v4081 = vpop.permute.xlu0 %4080
      %4082 = vrot.lane.b32.xlu0 %v4022, 101
      %v4083 = vpop.permute.xlu0 %4082
      %4084 = vrot.lane.b32.xlu0 %v4048, 101
      %v4085 = vpop.permute.xlu0 %4084
      %4086 = vrot.lane.b32.xlu0 %v4023, 101
      %v4087 = vpop.permute.xlu0 %4086
      %4088 = vrot.lane.b32.xlu0 %v4049, 101
      %v4089 = vpop.permute.xlu0 %4088
      %4090 = vrot.lane.b32.xlu0 %v4024, 101
      %v4091 = vpop.permute.xlu0 %4090
      %4092 = vrot.lane.b32.xlu0 %v4050, 101
      %v4093 = vpop.permute.xlu0 %4092
      %4094 = vrot.lane.b32.xlu0 %v4025, 101
      %v4095 = vpop.permute.xlu0 %4094
      %4096 = vrot.lane.b32.xlu0 %v4051, 101
      %v4097 = vpop.permute.xlu0 %4096
      %4098 = vrot.lane.b32.xlu0 %v4026, 101
      %v4099 = vpop.permute.xlu0 %4098
      %4100 = vrot.lane.b32.xlu0 %v4052, 101
      %v4101 = vpop.permute.xlu0 %4100
      %4102 = vrot.lane.b32.xlu0 %v4027, 101
      %v4103 = vpop.permute.xlu0 %4102
      %4104 = vrot.lane.b32.xlu0 %v4053, 101
      %v4105 = vpop.permute.xlu0 %4104
      %vm4106 = vcmask 826368
      %v4107 = vsel %vm4106, %v4055, %v4057
      %v4108 = vsel %vm4106, %v4057, %v4059
      %v4109 = vsel %vm4106, %v4059, %v4061
      %v4110 = vsel %vm4106, %v4061, %v4063
      %v4111 = vsel %vm4106, %v4063, %v4065
      %v4112 = vsel %vm4106, %v4065, %v4067
      %v4113 = vsel %vm4106, %v4067, %v4069
      %v4114 = vsel %vm4106, %v4069, %v4071
      %v4115 = vsel %vm4106, %v4071, %v4073
      %v4116 = vsel %vm4106, %v4073, %v4075
      %v4117 = vsel %vm4106, %v4075, %v4077
      %v4118 = vsel %vm4106, %v4077, %v4079
      %v4119 = vsel %vm4106, %v4079, %v4081
      %v4120 = vsel %vm4106, %v4081, %v4083
      %v4121 = vsel %vm4106, %v4083, %v4085
      %v4122 = vsel %vm4106, %v4085, %v4087
      %v4123 = vsel %vm4106, %v4087, %v4089
      %v4124 = vsel %vm4106, %v4089, %v4091
      %v4125 = vsel %vm4106, %v4091, %v4093
      %v4126 = vsel %vm4106, %v4093, %v4095
      %v4127 = vsel %vm4106, %v4095, %v4097
      %v4128 = vsel %vm4106, %v4097, %v4099
      %v4129 = vsel %vm4106, %v4099, %v4101
      %v4130 = vsel %vm4106, %v4101, %v4103
      %v4131 = vsel %vm4106, %v4103, %v4105
      %4158 = vst [vmem:[#allocation2 + $0x8f0] sm:$0xf] %v4107
      %4159 = vst [vmem:[#allocation2 + $0x8f8] sm:$0xf] %v4108
      %4160 = vst [vmem:[#allocation2 + $0x900] sm:$0xf] %v4109
      %4161 = vst [vmem:[#allocation2 + $0x908] sm:$0xf] %v4110
      %4162 = vst [vmem:[#allocation2 + $0x910] sm:$0xf] %v4111
      %4163 = vst [vmem:[#allocation2 + $0x918] sm:$0xf] %v4112
      %4164 = vst [vmem:[#allocation2 + $0x920] sm:$0xf] %v4113
      %4165 = vst [vmem:[#allocation2 + $0x928] sm:$0xf] %v4114
      %4166 = vst [vmem:[#allocation2 + $0x930] sm:$0xf] %v4115
      %4167 = vst [vmem:[#allocation2 + $0x938] sm:$0xf] %v4116
      %4168 = vst [vmem:[#allocation2 + $0x940] sm:$0xf] %v4117
      %4169 = vst [vmem:[#allocation2 + $0x948] sm:$0xf] %v4118
      %4170 = vst [vmem:[#allocation2 + $0x950] sm:$0xf] %v4119
      %4171 = vst [vmem:[#allocation2 + $0x958] sm:$0xf] %v4120
      %4172 = vst [vmem:[#allocation2 + $0x960] sm:$0xf] %v4121
      %4173 = vst [vmem:[#allocation2 + $0x968] sm:$0xf] %v4122
      %4174 = vst [vmem:[#allocation2 + $0x970] sm:$0xf] %v4123
      %4175 = vst [vmem:[#allocation2 + $0x978] sm:$0xf] %v4124
      %4176 = vst [vmem:[#allocation2 + $0x980] sm:$0xf] %v4125
      %4177 = vst [vmem:[#allocation2 + $0x988] sm:$0xf] %v4126
      %4178 = vst [vmem:[#allocation2 + $0x990] sm:$0xf] %v4127
      %4179 = vst [vmem:[#allocation2 + $0x998] sm:$0xf] %v4128
      %4180 = vst [vmem:[#allocation2 + $0x9a0] sm:$0xf] %v4129
      %4181 = vst [vmem:[#allocation2 + $0x9a8] sm:$0xf] %v4130
      %4182 = vst [vmem:[#allocation2 + $0x9b0] sm:$0xf] %v4131
      %4183 = vst.msk [vmem:[#allocation2 + $0x9b8] sm:$0xf] %vm446, %v4105
      %v4184 = vld [vmem:[%s359 + $0x14] sm:$0xff]
      %v4185 = vld [vmem:[%s359 + $0x1c] sm:$0xff]
      %v4186 = vld [vmem:[%s359 + $0x24] sm:$0xff]
      %v4187 = vld [vmem:[%s359 + $0x2c] sm:$0xff]
      %v4188 = vld [vmem:[%s359 + $0x34] sm:$0xff]
      %v4189 = vld [vmem:[%s359 + $0x3c] sm:$0xff]
      %v4190 = vld [vmem:[%s359 + $0x44] sm:$0xff]
      %v4191 = vld [vmem:[%s359 + $0x4c] sm:$0xff]
      %v4192 = vld [vmem:[%s359 + $0x54] sm:$0xff]
      %v4193 = vld [vmem:[%s359 + $0x5c] sm:$0xff]
      %v4194 = vld [vmem:[%s359 + $0x64] sm:$0xff]
      %v4195 = vld [vmem:[%s359 + $0x6c] sm:$0xff]
      %v4196 = vld [vmem:[%s359 + $0x74] sm:$0xff]
      %v4210 = vcombine.low %v4184, %v4184
      %v4211 = vcombine.low %v4185, %v4185
      %v4212 = vcombine.low %v4186, %v4186
      %v4213 = vcombine.low %v4187, %v4187
      %v4214 = vcombine.low %v4188, %v4188
      %v4215 = vcombine.low %v4189, %v4189
      %v4216 = vcombine.low %v4190, %v4190
      %v4217 = vcombine.low %v4191, %v4191
      %v4218 = vcombine.low %v4192, %v4192
      %v4219 = vcombine.low %v4193, %v4193
      %v4220 = vcombine.low %v4194, %v4194
      %v4221 = vcombine.low %v4195, %v4195
      %v4222 = vcombine.low %v4196, %v4196
      %4223 = vrot.lane.b32.xlu0 %v4210, 100
      %v4224 = vpop.permute.xlu0 %4223
      %4225 = vrot.lane.b32.xlu0 %v4184, 100
      %v4226 = vpop.permute.xlu0 %4225
      %4227 = vrot.lane.b32.xlu0 %v4211, 100
      %v4228 = vpop.permute.xlu0 %4227
      %4229 = vrot.lane.b32.xlu0 %v4185, 100
      %v4230 = vpop.permute.xlu0 %4229
      %4231 = vrot.lane.b32.xlu0 %v4212, 100
      %v4232 = vpop.permute.xlu0 %4231
      %4233 = vrot.lane.b32.xlu0 %v4186, 100
      %v4234 = vpop.permute.xlu0 %4233
      %4235 = vrot.lane.b32.xlu0 %v4213, 100
      %v4236 = vpop.permute.xlu0 %4235
      %4237 = vrot.lane.b32.xlu0 %v4187, 100
      %v4238 = vpop.permute.xlu0 %4237
      %4239 = vrot.lane.b32.xlu0 %v4214, 100
      %v4240 = vpop.permute.xlu0 %4239
      %4241 = vrot.lane.b32.xlu0 %v4188, 100
      %v4242 = vpop.permute.xlu0 %4241
      %4243 = vrot.lane.b32.xlu0 %v4215, 100
      %v4244 = vpop.permute.xlu0 %4243
      %4245 = vrot.lane.b32.xlu0 %v4189, 100
      %v4246 = vpop.permute.xlu0 %4245
      %4247 = vrot.lane.b32.xlu0 %v4216, 100
      %v4248 = vpop.permute.xlu0 %4247
      %4249 = vrot.lane.b32.xlu0 %v4190, 100
      %v4250 = vpop.permute.xlu0 %4249
      %4251 = vrot.lane.b32.xlu0 %v4217, 100
      %v4252 = vpop.permute.xlu0 %4251
      %4253 = vrot.lane.b32.xlu0 %v4191, 100
      %v4254 = vpop.permute.xlu0 %4253
      %4255 = vrot.lane.b32.xlu0 %v4218, 100
      %v4256 = vpop.permute.xlu0 %4255
      %4257 = vrot.lane.b32.xlu0 %v4192, 100
      %v4258 = vpop.permute.xlu0 %4257
      %4259 = vrot.lane.b32.xlu0 %v4219, 100
      %v4260 = vpop.permute.xlu0 %4259
      %4261 = vrot.lane.b32.xlu0 %v4193, 100
      %v4262 = vpop.permute.xlu0 %4261
      %4263 = vrot.lane.b32.xlu0 %v4220, 100
      %v4264 = vpop.permute.xlu0 %4263
      %4265 = vrot.lane.b32.xlu0 %v4194, 100
      %v4266 = vpop.permute.xlu0 %4265
      %4267 = vrot.lane.b32.xlu0 %v4221, 100
      %v4268 = vpop.permute.xlu0 %4267
      %4269 = vrot.lane.b32.xlu0 %v4195, 100
      %v4270 = vpop.permute.xlu0 %4269
      %4271 = vrot.lane.b32.xlu0 %v4222, 100
      %v4272 = vpop.permute.xlu0 %4271
      %4273 = vrot.lane.b32.xlu0 %v4196, 100
      %v4274 = vpop.permute.xlu0 %4273
      %vm4275 = vcmask 818176
      %v4276 = vsel %vm4275, %v4224, %v4226
      %v4277 = vsel %vm4275, %v4226, %v4228
      %v4278 = vsel %vm4275, %v4228, %v4230
      %v4279 = vsel %vm4275, %v4230, %v4232
      %v4280 = vsel %vm4275, %v4232, %v4234
      %v4281 = vsel %vm4275, %v4234, %v4236
      %v4282 = vsel %vm4275, %v4236, %v4238
      %v4283 = vsel %vm4275, %v4238, %v4240
      %v4284 = vsel %vm4275, %v4240, %v4242
      %v4285 = vsel %vm4275, %v4242, %v4244
      %v4286 = vsel %vm4275, %v4244, %v4246
      %v4287 = vsel %vm4275, %v4246, %v4248
      %v4288 = vsel %vm4275, %v4248, %v4250
      %v4289 = vsel %vm4275, %v4250, %v4252
      %v4290 = vsel %vm4275, %v4252, %v4254
      %v4291 = vsel %vm4275, %v4254, %v4256
      %v4292 = vsel %vm4275, %v4256, %v4258
      %v4293 = vsel %vm4275, %v4258, %v4260
      %v4294 = vsel %vm4275, %v4260, %v4262
      %v4295 = vsel %vm4275, %v4262, %v4264
      %v4296 = vsel %vm4275, %v4264, %v4266
      %v4297 = vsel %vm4275, %v4266, %v4268
      %v4298 = vsel %vm4275, %v4268, %v4270
      %v4299 = vsel %vm4275, %v4270, %v4272
      %v4300 = vsel %vm4275, %v4272, %v4274
      %4327 = vst [vmem:[#allocation2 + $0x8f0] sm:$0xf0] %v4276
      %4328 = vst [vmem:[#allocation2 + $0x8f8] sm:$0xf0] %v4277
      %4329 = vst [vmem:[#allocation2 + $0x900] sm:$0xf0] %v4278
      %4330 = vst [vmem:[#allocation2 + $0x908] sm:$0xf0] %v4279
      %4331 = vst [vmem:[#allocation2 + $0x910] sm:$0xf0] %v4280
      %4332 = vst [vmem:[#allocation2 + $0x918] sm:$0xf0] %v4281
      %4333 = vst [vmem:[#allocation2 + $0x920] sm:$0xf0] %v4282
      %4334 = vst [vmem:[#allocation2 + $0x928] sm:$0xf0] %v4283
      %4335 = vst [vmem:[#allocation2 + $0x930] sm:$0xf0] %v4284
      %4336 = vst [vmem:[#allocation2 + $0x938] sm:$0xf0] %v4285
      %4337 = vst [vmem:[#allocation2 + $0x940] sm:$0xf0] %v4286
      %4338 = vst [vmem:[#allocation2 + $0x948] sm:$0xf0] %v4287
      %4339 = vst [vmem:[#allocation2 + $0x950] sm:$0xf0] %v4288
      %4340 = vst [vmem:[#allocation2 + $0x958] sm:$0xf0] %v4289
      %4341 = vst [vmem:[#allocation2 + $0x960] sm:$0xf0] %v4290
      %4342 = vst [vmem:[#allocation2 + $0x968] sm:$0xf0] %v4291
      %4343 = vst [vmem:[#allocation2 + $0x970] sm:$0xf0] %v4292
      %4344 = vst [vmem:[#allocation2 + $0x978] sm:$0xf0] %v4293
      %4345 = vst [vmem:[#allocation2 + $0x980] sm:$0xf0] %v4294
      %4346 = vst [vmem:[#allocation2 + $0x988] sm:$0xf0] %v4295
      %4347 = vst [vmem:[#allocation2 + $0x990] sm:$0xf0] %v4296
      %4348 = vst [vmem:[#allocation2 + $0x998] sm:$0xf0] %v4297
      %4349 = vst [vmem:[#allocation2 + $0x9a0] sm:$0xf0] %v4298
      %4350 = vst [vmem:[#allocation2 + $0x9a8] sm:$0xf0] %v4299
      %4351 = vst [vmem:[#allocation2 + $0x9b0] sm:$0xf0] %v4300
      %4352 = vst.msk [vmem:[#allocation2 + $0x9b8] sm:$0xf0] %vm616, %v4274
      %v4353 = vld [vmem:[%s359 + $0x14] sm:$0xff]
      %v4354 = vld [vmem:[%s359 + $0x1c] sm:$0xff]
      %v4355 = vld [vmem:[%s359 + $0x24] sm:$0xff]
      %v4356 = vld [vmem:[%s359 + $0x2c] sm:$0xff]
      %v4357 = vld [vmem:[%s359 + $0x34] sm:$0xff]
      %v4358 = vld [vmem:[%s359 + $0x3c] sm:$0xff]
      %v4359 = vld [vmem:[%s359 + $0x44] sm:$0xff]
      %v4360 = vld [vmem:[%s359 + $0x4c] sm:$0xff]
      %v4361 = vld [vmem:[%s359 + $0x54] sm:$0xff]
      %v4362 = vld [vmem:[%s359 + $0x5c] sm:$0xff]
      %v4363 = vld [vmem:[%s359 + $0x64] sm:$0xff]
      %v4364 = vld [vmem:[%s359 + $0x6c] sm:$0xff]
      %v4365 = vld [vmem:[%s359 + $0x74] sm:$0xff]
      %v4379 = vcombine.high %v4353, %v4353
      %v4380 = vcombine.high %v4354, %v4354
      %v4381 = vcombine.high %v4355, %v4355
      %v4382 = vcombine.high %v4356, %v4356
      %v4383 = vcombine.high %v4357, %v4357
      %v4384 = vcombine.high %v4358, %v4358
      %v4385 = vcombine.high %v4359, %v4359
      %v4386 = vcombine.high %v4360, %v4360
      %v4387 = vcombine.high %v4361, %v4361
      %v4388 = vcombine.high %v4362, %v4362
      %v4389 = vcombine.high %v4363, %v4363
      %v4390 = vcombine.high %v4364, %v4364
      %v4391 = vcombine.high %v4365, %v4365
      %4392 = vrot.lane.b32.xlu0 %v4353, 84
      %v4393 = vpop.permute.xlu0 %4392
      %4394 = vrot.lane.b32.xlu0 %v4379, 84
      %v4395 = vpop.permute.xlu0 %4394
      %4396 = vrot.lane.b32.xlu0 %v4354, 84
      %v4397 = vpop.permute.xlu0 %4396
      %4398 = vrot.lane.b32.xlu0 %v4380, 84
      %v4399 = vpop.permute.xlu0 %4398
      %4400 = vrot.lane.b32.xlu0 %v4355, 84
      %v4401 = vpop.permute.xlu0 %4400
      %4402 = vrot.lane.b32.xlu0 %v4381, 84
      %v4403 = vpop.permute.xlu0 %4402
      %4404 = vrot.lane.b32.xlu0 %v4356, 84
      %v4405 = vpop.permute.xlu0 %4404
      %4406 = vrot.lane.b32.xlu0 %v4382, 84
      %v4407 = vpop.permute.xlu0 %4406
      %4408 = vrot.lane.b32.xlu0 %v4357, 84
      %v4409 = vpop.permute.xlu0 %4408
      %4410 = vrot.lane.b32.xlu0 %v4383, 84
      %v4411 = vpop.permute.xlu0 %4410
      %4412 = vrot.lane.b32.xlu0 %v4358, 84
      %v4413 = vpop.permute.xlu0 %4412
      %4414 = vrot.lane.b32.xlu0 %v4384, 84
      %v4415 = vpop.permute.xlu0 %4414
      %4416 = vrot.lane.b32.xlu0 %v4359, 84
      %v4417 = vpop.permute.xlu0 %4416
      %4418 = vrot.lane.b32.xlu0 %v4385, 84
      %v4419 = vpop.permute.xlu0 %4418
      %4420 = vrot.lane.b32.xlu0 %v4360, 84
      %v4421 = vpop.permute.xlu0 %4420
      %4422 = vrot.lane.b32.xlu0 %v4386, 84
      %v4423 = vpop.permute.xlu0 %4422
      %4424 = vrot.lane.b32.xlu0 %v4361, 84
      %v4425 = vpop.permute.xlu0 %4424
      %4426 = vrot.lane.b32.xlu0 %v4387, 84
      %v4427 = vpop.permute.xlu0 %4426
      %4428 = vrot.lane.b32.xlu0 %v4362, 84
      %v4429 = vpop.permute.xlu0 %4428
      %4430 = vrot.lane.b32.xlu0 %v4388, 84
      %v4431 = vpop.permute.xlu0 %4430
      %4432 = vrot.lane.b32.xlu0 %v4363, 84
      %v4433 = vpop.permute.xlu0 %4432
      %4434 = vrot.lane.b32.xlu0 %v4389, 84
      %v4435 = vpop.permute.xlu0 %4434
      %4436 = vrot.lane.b32.xlu0 %v4364, 84
      %v4437 = vpop.permute.xlu0 %4436
      %4438 = vrot.lane.b32.xlu0 %v4390, 84
      %v4439 = vpop.permute.xlu0 %4438
      %4440 = vrot.lane.b32.xlu0 %v4365, 84
      %v4441 = vpop.permute.xlu0 %4440
      %4442 = vrot.lane.b32.xlu0 %v4391, 84
      %v4443 = vpop.permute.xlu0 %4442
      %vm4444 = vcmask 687104
      %v4445 = vsel %vm4444, %v4393, %v4395
      %v4446 = vsel %vm4444, %v4395, %v4397
      %v4447 = vsel %vm4444, %v4397, %v4399
      %v4448 = vsel %vm4444, %v4399, %v4401
      %v4449 = vsel %vm4444, %v4401, %v4403
      %v4450 = vsel %vm4444, %v4403, %v4405
      %v4451 = vsel %vm4444, %v4405, %v4407
      %v4452 = vsel %vm4444, %v4407, %v4409
      %v4453 = vsel %vm4444, %v4409, %v4411
      %v4454 = vsel %vm4444, %v4411, %v4413
      %v4455 = vsel %vm4444, %v4413, %v4415
      %v4456 = vsel %vm4444, %v4415, %v4417
      %v4457 = vsel %vm4444, %v4417, %v4419
      %v4458 = vsel %vm4444, %v4419, %v4421
      %v4459 = vsel %vm4444, %v4421, %v4423
      %v4460 = vsel %vm4444, %v4423, %v4425
      %v4461 = vsel %vm4444, %v4425, %v4427
      %v4462 = vsel %vm4444, %v4427, %v4429
      %v4463 = vsel %vm4444, %v4429, %v4431
      %v4464 = vsel %vm4444, %v4431, %v4433
      %v4465 = vsel %vm4444, %v4433, %v4435
      %v4466 = vsel %vm4444, %v4435, %v4437
      %v4467 = vsel %vm4444, %v4437, %v4439
      %v4468 = vsel %vm4444, %v4439, %v4441
      %v4469 = vsel %vm4444, %v4441, %v4443
      %4496 = vst [vmem:[#allocation2 + $0x9c0] sm:$0xf] %v4445
      %4497 = vst [vmem:[#allocation2 + $0x9c8] sm:$0xf] %v4446
      %4498 = vst [vmem:[#allocation2 + $0x9d0] sm:$0xf] %v4447
      %4499 = vst [vmem:[#allocation2 + $0x9d8] sm:$0xf] %v4448
      %4500 = vst [vmem:[#allocation2 + $0x9e0] sm:$0xf] %v4449
      %4501 = vst [vmem:[#allocation2 + $0x9e8] sm:$0xf] %v4450
      %4502 = vst [vmem:[#allocation2 + $0x9f0] sm:$0xf] %v4451
      %4503 = vst [vmem:[#allocation2 + $0x9f8] sm:$0xf] %v4452
      %4504 = vst [vmem:[#allocation2 + $0xa00] sm:$0xf] %v4453
      %4505 = vst [vmem:[#allocation2 + $0xa08] sm:$0xf] %v4454
      %4506 = vst [vmem:[#allocation2 + $0xa10] sm:$0xf] %v4455
      %4507 = vst [vmem:[#allocation2 + $0xa18] sm:$0xf] %v4456
      %4508 = vst [vmem:[#allocation2 + $0xa20] sm:$0xf] %v4457
      %4509 = vst [vmem:[#allocation2 + $0xa28] sm:$0xf] %v4458
      %4510 = vst [vmem:[#allocation2 + $0xa30] sm:$0xf] %v4459
      %4511 = vst [vmem:[#allocation2 + $0xa38] sm:$0xf] %v4460
      %4512 = vst [vmem:[#allocation2 + $0xa40] sm:$0xf] %v4461
      %4513 = vst [vmem:[#allocation2 + $0xa48] sm:$0xf] %v4462
      %4514 = vst [vmem:[#allocation2 + $0xa50] sm:$0xf] %v4463
      %4515 = vst [vmem:[#allocation2 + $0xa58] sm:$0xf] %v4464
      %4516 = vst [vmem:[#allocation2 + $0xa60] sm:$0xf] %v4465
      %4517 = vst [vmem:[#allocation2 + $0xa68] sm:$0xf] %v4466
      %4518 = vst [vmem:[#allocation2 + $0xa70] sm:$0xf] %v4467
      %4519 = vst [vmem:[#allocation2 + $0xa78] sm:$0xf] %v4468
      %4520 = vst [vmem:[#allocation2 + $0xa80] sm:$0xf] %v4469
      %4521 = vst.msk [vmem:[#allocation2 + $0xa88] sm:$0xf] %vm446, %v4443
      %v4522 = vld [vmem:[%s359 + $0x14] sm:$0xff]
      %v4523 = vld [vmem:[%s359 + $0x1c] sm:$0xff]
      %v4524 = vld [vmem:[%s359 + $0x24] sm:$0xff]
      %v4525 = vld [vmem:[%s359 + $0x2c] sm:$0xff]
      %v4526 = vld [vmem:[%s359 + $0x34] sm:$0xff]
      %v4527 = vld [vmem:[%s359 + $0x3c] sm:$0xff]
      %v4528 = vld [vmem:[%s359 + $0x44] sm:$0xff]
      %v4529 = vld [vmem:[%s359 + $0x4c] sm:$0xff]
      %v4530 = vld [vmem:[%s359 + $0x54] sm:$0xff]
      %v4531 = vld [vmem:[%s359 + $0x5c] sm:$0xff]
      %v4532 = vld [vmem:[%s359 + $0x64] sm:$0xff]
      %v4533 = vld [vmem:[%s359 + $0x6c] sm:$0xff]
      %v4534 = vld [vmem:[%s359 + $0x74] sm:$0xff]
      %v4548 = vcombine.low %v4522, %v4522
      %v4549 = vcombine.low %v4523, %v4523
      %v4550 = vcombine.low %v4524, %v4524
      %v4551 = vcombine.low %v4525, %v4525
      %v4552 = vcombine.low %v4526, %v4526
      %v4553 = vcombine.low %v4527, %v4527
      %v4554 = vcombine.low %v4528, %v4528
      %v4555 = vcombine.low %v4529, %v4529
      %v4556 = vcombine.low %v4530, %v4530
      %v4557 = vcombine.low %v4531, %v4531
      %v4558 = vcombine.low %v4532, %v4532
      %v4559 = vcombine.low %v4533, %v4533
      %v4560 = vcombine.low %v4534, %v4534
      %4561 = vrot.lane.b32.xlu0 %v4548, 83
      %v4562 = vpop.permute.xlu0 %4561
      %4563 = vrot.lane.b32.xlu0 %v4522, 83
      %v4564 = vpop.permute.xlu0 %4563
      %4565 = vrot.lane.b32.xlu0 %v4549, 83
      %v4566 = vpop.permute.xlu0 %4565
      %4567 = vrot.lane.b32.xlu0 %v4523, 83
      %v4568 = vpop.permute.xlu0 %4567
      %4569 = vrot.lane.b32.xlu0 %v4550, 83
      %v4570 = vpop.permute.xlu0 %4569
      %4571 = vrot.lane.b32.xlu0 %v4524, 83
      %v4572 = vpop.permute.xlu0 %4571
      %4573 = vrot.lane.b32.xlu0 %v4551, 83
      %v4574 = vpop.permute.xlu0 %4573
      %4575 = vrot.lane.b32.xlu0 %v4525, 83
      %v4576 = vpop.permute.xlu0 %4575
      %4577 = vrot.lane.b32.xlu0 %v4552, 83
      %v4578 = vpop.permute.xlu0 %4577
      %4579 = vrot.lane.b32.xlu0 %v4526, 83
      %v4580 = vpop.permute.xlu0 %4579
      %4581 = vrot.lane.b32.xlu0 %v4553, 83
      %v4582 = vpop.permute.xlu0 %4581
      %4583 = vrot.lane.b32.xlu0 %v4527, 83
      %v4584 = vpop.permute.xlu0 %4583
      %4585 = vrot.lane.b32.xlu0 %v4554, 83
      %v4586 = vpop.permute.xlu0 %4585
      %4587 = vrot.lane.b32.xlu0 %v4528, 83
      %v4588 = vpop.permute.xlu0 %4587
      %4589 = vrot.lane.b32.xlu0 %v4555, 83
      %v4590 = vpop.permute.xlu0 %4589
      %4591 = vrot.lane.b32.xlu0 %v4529, 83
      %v4592 = vpop.permute.xlu0 %4591
      %4593 = vrot.lane.b32.xlu0 %v4556, 83
      %v4594 = vpop.permute.xlu0 %4593
      %4595 = vrot.lane.b32.xlu0 %v4530, 83
      %v4596 = vpop.permute.xlu0 %4595
      %4597 = vrot.lane.b32.xlu0 %v4557, 83
      %v4598 = vpop.permute.xlu0 %4597
      %4599 = vrot.lane.b32.xlu0 %v4531, 83
      %v4600 = vpop.permute.xlu0 %4599
      %4601 = vrot.lane.b32.xlu0 %v4558, 83
      %v4602 = vpop.permute.xlu0 %4601
      %4603 = vrot.lane.b32.xlu0 %v4532, 83
      %v4604 = vpop.permute.xlu0 %4603
      %4605 = vrot.lane.b32.xlu0 %v4559, 83
      %v4606 = vpop.permute.xlu0 %4605
      %4607 = vrot.lane.b32.xlu0 %v4533, 83
      %v4608 = vpop.permute.xlu0 %4607
      %4609 = vrot.lane.b32.xlu0 %v4560, 83
      %v4610 = vpop.permute.xlu0 %4609
      %4611 = vrot.lane.b32.xlu0 %v4534, 83
      %v4612 = vpop.permute.xlu0 %4611
      %vm4613 = vcmask 678912
      %v4614 = vsel %vm4613, %v4562, %v4564
      %v4615 = vsel %vm4613, %v4564, %v4566
      %v4616 = vsel %vm4613, %v4566, %v4568
      %v4617 = vsel %vm4613, %v4568, %v4570
      %v4618 = vsel %vm4613, %v4570, %v4572
      %v4619 = vsel %vm4613, %v4572, %v4574
      %v4620 = vsel %vm4613, %v4574, %v4576
      %v4621 = vsel %vm4613, %v4576, %v4578
      %v4622 = vsel %vm4613, %v4578, %v4580
      %v4623 = vsel %vm4613, %v4580, %v4582
      %v4624 = vsel %vm4613, %v4582, %v4584
      %v4625 = vsel %vm4613, %v4584, %v4586
      %v4626 = vsel %vm4613, %v4586, %v4588
      %v4627 = vsel %vm4613, %v4588, %v4590
      %v4628 = vsel %vm4613, %v4590, %v4592
      %v4629 = vsel %vm4613, %v4592, %v4594
      %v4630 = vsel %vm4613, %v4594, %v4596
      %v4631 = vsel %vm4613, %v4596, %v4598
      %v4632 = vsel %vm4613, %v4598, %v4600
      %v4633 = vsel %vm4613, %v4600, %v4602
      %v4634 = vsel %vm4613, %v4602, %v4604
      %v4635 = vsel %vm4613, %v4604, %v4606
      %v4636 = vsel %vm4613, %v4606, %v4608
      %v4637 = vsel %vm4613, %v4608, %v4610
      %v4638 = vsel %vm4613, %v4610, %v4612
      %4665 = vst [vmem:[#allocation2 + $0x9c0] sm:$0xf0] %v4614
      %4666 = vst [vmem:[#allocation2 + $0x9c8] sm:$0xf0] %v4615
      %4667 = vst [vmem:[#allocation2 + $0x9d0] sm:$0xf0] %v4616
      %4668 = vst [vmem:[#allocation2 + $0x9d8] sm:$0xf0] %v4617
      %4669 = vst [vmem:[#allocation2 + $0x9e0] sm:$0xf0] %v4618
      %4670 = vst [vmem:[#allocation2 + $0x9e8] sm:$0xf0] %v4619
      %4671 = vst [vmem:[#allocation2 + $0x9f0] sm:$0xf0] %v4620
      %4672 = vst [vmem:[#allocation2 + $0x9f8] sm:$0xf0] %v4621
      %4673 = vst [vmem:[#allocation2 + $0xa00] sm:$0xf0] %v4622
      %4674 = vst [vmem:[#allocation2 + $0xa08] sm:$0xf0] %v4623
      %4675 = vst [vmem:[#allocation2 + $0xa10] sm:$0xf0] %v4624
      %4676 = vst [vmem:[#allocation2 + $0xa18] sm:$0xf0] %v4625
      %4677 = vst [vmem:[#allocation2 + $0xa20] sm:$0xf0] %v4626
      %4678 = vst [vmem:[#allocation2 + $0xa28] sm:$0xf0] %v4627
      %4679 = vst [vmem:[#allocation2 + $0xa30] sm:$0xf0] %v4628
      %4680 = vst [vmem:[#allocation2 + $0xa38] sm:$0xf0] %v4629
      %4681 = vst [vmem:[#allocation2 + $0xa40] sm:$0xf0] %v4630
      %4682 = vst [vmem:[#allocation2 + $0xa48] sm:$0xf0] %v4631
      %4683 = vst [vmem:[#allocation2 + $0xa50] sm:$0xf0] %v4632
      %4684 = vst [vmem:[#allocation2 + $0xa58] sm:$0xf0] %v4633
      %4685 = vst [vmem:[#allocation2 + $0xa60] sm:$0xf0] %v4634
      %4686 = vst [vmem:[#allocation2 + $0xa68] sm:$0xf0] %v4635
      %4687 = vst [vmem:[#allocation2 + $0xa70] sm:$0xf0] %v4636
      %4688 = vst [vmem:[#allocation2 + $0xa78] sm:$0xf0] %v4637
      %4689 = vst [vmem:[#allocation2 + $0xa80] sm:$0xf0] %v4638
      %4690 = vst.msk [vmem:[#allocation2 + $0xa88] sm:$0xf0] %vm616, %v4612
      %v4691 = vld [vmem:[%s359 + $0x14] sm:$0xff]
      %v4692 = vld [vmem:[%s359 + $0x1c] sm:$0xff]
      %v4693 = vld [vmem:[%s359 + $0x24] sm:$0xff]
      %v4694 = vld [vmem:[%s359 + $0x2c] sm:$0xff]
      %v4695 = vld [vmem:[%s359 + $0x34] sm:$0xff]
      %v4696 = vld [vmem:[%s359 + $0x3c] sm:$0xff]
      %v4697 = vld [vmem:[%s359 + $0x44] sm:$0xff]
      %v4698 = vld [vmem:[%s359 + $0x4c] sm:$0xff]
      %v4699 = vld [vmem:[%s359 + $0x54] sm:$0xff]
      %v4700 = vld [vmem:[%s359 + $0x5c] sm:$0xff]
      %v4701 = vld [vmem:[%s359 + $0x64] sm:$0xff]
      %v4702 = vld [vmem:[%s359 + $0x6c] sm:$0xff]
      %v4703 = vld [vmem:[%s359 + $0x74] sm:$0xff]
      %v4717 = vcombine.high %v4691, %v4691
      %v4718 = vcombine.high %v4692, %v4692
      %v4719 = vcombine.high %v4693, %v4693
      %v4720 = vcombine.high %v4694, %v4694
      %v4721 = vcombine.high %v4695, %v4695
      %v4722 = vcombine.high %v4696, %v4696
      %v4723 = vcombine.high %v4697, %v4697
      %v4724 = vcombine.high %v4698, %v4698
      %v4725 = vcombine.high %v4699, %v4699
      %v4726 = vcombine.high %v4700, %v4700
      %v4727 = vcombine.high %v4701, %v4701
      %v4728 = vcombine.high %v4702, %v4702
      %v4729 = vcombine.high %v4703, %v4703
      %4730 = vrot.lane.b32.xlu0 %v4691, 82
      %v4731 = vpop.permute.xlu0 %4730
      %4732 = vrot.lane.b32.xlu0 %v4717, 82
      %v4733 = vpop.permute.xlu0 %4732
      %4734 = vrot.lane.b32.xlu0 %v4692, 82
      %v4735 = vpop.permute.xlu0 %4734
      %4736 = vrot.lane.b32.xlu0 %v4718, 82
      %v4737 = vpop.permute.xlu0 %4736
      %4738 = vrot.lane.b32.xlu0 %v4693, 82
      %v4739 = vpop.permute.xlu0 %4738
      %4740 = vrot.lane.b32.xlu0 %v4719, 82
      %v4741 = vpop.permute.xlu0 %4740
      %4742 = vrot.lane.b32.xlu0 %v4694, 82
      %v4743 = vpop.permute.xlu0 %4742
      %4744 = vrot.lane.b32.xlu0 %v4720, 82
      %v4745 = vpop.permute.xlu0 %4744
      %4746 = vrot.lane.b32.xlu0 %v4695, 82
      %v4747 = vpop.permute.xlu0 %4746
      %4748 = vrot.lane.b32.xlu0 %v4721, 82
      %v4749 = vpop.permute.xlu0 %4748
      %4750 = vrot.lane.b32.xlu0 %v4696, 82
      %v4751 = vpop.permute.xlu0 %4750
      %4752 = vrot.lane.b32.xlu0 %v4722, 82
      %v4753 = vpop.permute.xlu0 %4752
      %4754 = vrot.lane.b32.xlu0 %v4697, 82
      %v4755 = vpop.permute.xlu0 %4754
      %4756 = vrot.lane.b32.xlu0 %v4723, 82
      %v4757 = vpop.permute.xlu0 %4756
      %4758 = vrot.lane.b32.xlu0 %v4698, 82
      %v4759 = vpop.permute.xlu0 %4758
      %4760 = vrot.lane.b32.xlu0 %v4724, 82
      %v4761 = vpop.permute.xlu0 %4760
      %4762 = vrot.lane.b32.xlu0 %v4699, 82
      %v4763 = vpop.permute.xlu0 %4762
      %4764 = vrot.lane.b32.xlu0 %v4725, 82
      %v4765 = vpop.permute.xlu0 %4764
      %4766 = vrot.lane.b32.xlu0 %v4700, 82
      %v4767 = vpop.permute.xlu0 %4766
      %4768 = vrot.lane.b32.xlu0 %v4726, 82
      %v4769 = vpop.permute.xlu0 %4768
      %4770 = vrot.lane.b32.xlu0 %v4701, 82
      %v4771 = vpop.permute.xlu0 %4770
      %4772 = vrot.lane.b32.xlu0 %v4727, 82
      %v4773 = vpop.permute.xlu0 %4772
      %4774 = vrot.lane.b32.xlu0 %v4702, 82
      %v4775 = vpop.permute.xlu0 %4774
      %4776 = vrot.lane.b32.xlu0 %v4728, 82
      %v4777 = vpop.permute.xlu0 %4776
      %4778 = vrot.lane.b32.xlu0 %v4703, 82
      %v4779 = vpop.permute.xlu0 %4778
      %4780 = vrot.lane.b32.xlu0 %v4729, 82
      %v4781 = vpop.permute.xlu0 %4780
      %vm4782 = vcmask 670720
      %v4783 = vsel %vm4782, %v4731, %v4733
      %v4784 = vsel %vm4782, %v4733, %v4735
      %v4785 = vsel %vm4782, %v4735, %v4737
      %v4786 = vsel %vm4782, %v4737, %v4739
      %v4787 = vsel %vm4782, %v4739, %v4741
      %v4788 = vsel %vm4782, %v4741, %v4743
      %v4789 = vsel %vm4782, %v4743, %v4745
      %v4790 = vsel %vm4782, %v4745, %v4747
      %v4791 = vsel %vm4782, %v4747, %v4749
      %v4792 = vsel %vm4782, %v4749, %v4751
      %v4793 = vsel %vm4782, %v4751, %v4753
      %v4794 = vsel %vm4782, %v4753, %v4755
      %v4795 = vsel %vm4782, %v4755, %v4757
      %v4796 = vsel %vm4782, %v4757, %v4759
      %v4797 = vsel %vm4782, %v4759, %v4761
      %v4798 = vsel %vm4782, %v4761, %v4763
      %v4799 = vsel %vm4782, %v4763, %v4765
      %v4800 = vsel %vm4782, %v4765, %v4767
      %v4801 = vsel %vm4782, %v4767, %v4769
      %v4802 = vsel %vm4782, %v4769, %v4771
      %v4803 = vsel %vm4782, %v4771, %v4773
      %v4804 = vsel %vm4782, %v4773, %v4775
      %v4805 = vsel %vm4782, %v4775, %v4777
      %v4806 = vsel %vm4782, %v4777, %v4779
      %v4807 = vsel %vm4782, %v4779, %v4781
      %4834 = vst [vmem:[#allocation2 + $0xa90] sm:$0xf] %v4783
      %4835 = vst [vmem:[#allocation2 + $0xa98] sm:$0xf] %v4784
      %4836 = vst [vmem:[#allocation2 + $0xaa0] sm:$0xf] %v4785
      %4837 = vst [vmem:[#allocation2 + $0xaa8] sm:$0xf] %v4786
      %4838 = vst [vmem:[#allocation2 + $0xab0] sm:$0xf] %v4787
      %4839 = vst [vmem:[#allocation2 + $0xab8] sm:$0xf] %v4788
      %4840 = vst [vmem:[#allocation2 + $0xac0] sm:$0xf] %v4789
      %4841 = vst [vmem:[#allocation2 + $0xac8] sm:$0xf] %v4790
      %4842 = vst [vmem:[#allocation2 + $0xad0] sm:$0xf] %v4791
      %4843 = vst [vmem:[#allocation2 + $0xad8] sm:$0xf] %v4792
      %4844 = vst [vmem:[#allocation2 + $0xae0] sm:$0xf] %v4793
      %4845 = vst [vmem:[#allocation2 + $0xae8] sm:$0xf] %v4794
      %4846 = vst [vmem:[#allocation2 + $0xaf0] sm:$0xf] %v4795
      %4847 = vst [vmem:[#allocation2 + $0xaf8] sm:$0xf] %v4796
      %4848 = vst [vmem:[#allocation2 + $0xb00] sm:$0xf] %v4797
      %4849 = vst [vmem:[#allocation2 + $0xb08] sm:$0xf] %v4798
      %4850 = vst [vmem:[#allocation2 + $0xb10] sm:$0xf] %v4799
      %4851 = vst [vmem:[#allocation2 + $0xb18] sm:$0xf] %v4800
      %4852 = vst [vmem:[#allocation2 + $0xb20] sm:$0xf] %v4801
      %4853 = vst [vmem:[#allocation2 + $0xb28] sm:$0xf] %v4802
      %4854 = vst [vmem:[#allocation2 + $0xb30] sm:$0xf] %v4803
      %4855 = vst [vmem:[#allocation2 + $0xb38] sm:$0xf] %v4804
      %4856 = vst [vmem:[#allocation2 + $0xb40] sm:$0xf] %v4805
      %4857 = vst [vmem:[#allocation2 + $0xb48] sm:$0xf] %v4806
      %4858 = vst [vmem:[#allocation2 + $0xb50] sm:$0xf] %v4807
      %4859 = vst.msk [vmem:[#allocation2 + $0xb58] sm:$0xf] %vm446, %v4781
      %v4860 = vld [vmem:[%s1] sm:$0xff]
      %v4861 = vld [vmem:[#allocation2] sm:$0xff]
      %v4862 = vld [vmem:[#allocation2 + $0x8] sm:$0xff]
      %v4863 = vld [vmem:[#allocation2 + $0x10] sm:$0xff]
      %v4864 = vld [vmem:[#allocation2 + $0x18] sm:$0xff]
      %v4865 = vld [vmem:[#allocation2 + $0x20] sm:$0xff]
      %v4866 = vld [vmem:[#allocation2 + $0x28] sm:$0xff]
      %v4867 = vld [vmem:[#allocation2 + $0x30] sm:$0xff]
      %v4868 = vld [vmem:[#allocation2 + $0x38] sm:$0xff]
      %v4869 = vld [vmem:[#allocation2 + $0x40] sm:$0xff]
      %v4870 = vld [vmem:[#allocation2 + $0x48] sm:$0xff]
      %v4871 = vld [vmem:[#allocation2 + $0x50] sm:$0xff]
      %v4872 = vld [vmem:[#allocation2 + $0x58] sm:$0xff]
      %v4873 = vld [vmem:[#allocation2 + $0x60] sm:$0xff]
      %v4874 = vld [vmem:[#allocation2 + $0x68] sm:$0xff]
      %v4875 = vld [vmem:[#allocation2 + $0x70] sm:$0xff]
      %v4876 = vld [vmem:[#allocation2 + $0x78] sm:$0xff]
      %v4877 = vld [vmem:[#allocation2 + $0x80] sm:$0xff]
      %v4878 = vld [vmem:[#allocation2 + $0x88] sm:$0xff]
      %v4879 = vld [vmem:[#allocation2 + $0x90] sm:$0xff]
      %v4880 = vld [vmem:[#allocation2 + $0x98] sm:$0xff]
      %v4881 = vld [vmem:[#allocation2 + $0xa0] sm:$0xff]
      %v4882 = vld [vmem:[#allocation2 + $0xa8] sm:$0xff]
      %v4883 = vld [vmem:[#allocation2 + $0xb0] sm:$0xff]
      %v4884 = vld [vmem:[#allocation2 + $0xb8] sm:$0xff]
      %v4885 = vld [vmem:[#allocation2 + $0xc0] sm:$0xff]
      %v4886 = vld [vmem:[#allocation2 + $0xc8] sm:$0xff]
      %v4887 = vld [vmem:[#allocation2 + $0xd0] sm:$0xff]
      %v4888 = vld [vmem:[#allocation2 + $0xd8] sm:$0xff]
      %v4889 = vld [vmem:[#allocation2 + $0xe0] sm:$0xff]
      %v4890 = vld [vmem:[#allocation2 + $0xe8] sm:$0xff]
      %v4891 = vld [vmem:[#allocation2 + $0xf0] sm:$0xff]
      %v4892 = vld [vmem:[#allocation2 + $0xf8] sm:$0xff]
      %v4893 = vld [vmem:[#allocation2 + $0x100] sm:$0xff]
      %v4894 = vld [vmem:[#allocation2 + $0x108] sm:$0xff]
      %v4895 = vld [vmem:[#allocation2 + $0x110] sm:$0xff]
      %v4896 = vld [vmem:[#allocation2 + $0x118] sm:$0xff]
      %v4897 = vld [vmem:[#allocation2 + $0x120] sm:$0xff]
      %v4898 = vld [vmem:[#allocation2 + $0x128] sm:$0xff]
      %v4899 = vld [vmem:[#allocation2 + $0x130] sm:$0xff]
      %v4900 = vld [vmem:[#allocation2 + $0x138] sm:$0xff]
      %v4901 = vld [vmem:[#allocation2 + $0x140] sm:$0xff]
      %v4902 = vld [vmem:[#allocation2 + $0x148] sm:$0xff]
      %v4903 = vld [vmem:[#allocation2 + $0x150] sm:$0xff]
      %v4904 = vld [vmem:[#allocation2 + $0x158] sm:$0xff]
      %v4905 = vld [vmem:[#allocation2 + $0x160] sm:$0xff]
      %v4906 = vld [vmem:[#allocation2 + $0x168] sm:$0xff]
      %v4907 = vld [vmem:[#allocation2 + $0x170] sm:$0xff]
      %v4908 = vld [vmem:[#allocation2 + $0x178] sm:$0xff]
      %v4909 = vld [vmem:[#allocation2 + $0x180] sm:$0xff]
      %v4910 = vld [vmem:[#allocation2 + $0x188] sm:$0xff]
      %v4911 = vld [vmem:[#allocation2 + $0x190] sm:$0xff]
      %v4912 = vld [vmem:[#allocation2 + $0x198] sm:$0xff]
      %v4913 = vld [vmem:[#allocation2 + $0x1a0] sm:$0xff]
      %v4914 = vld [vmem:[#allocation2 + $0x1a8] sm:$0xff]
      %v4915 = vld [vmem:[#allocation2 + $0x1b0] sm:$0xff]
      %v4916 = vld [vmem:[#allocation2 + $0x1b8] sm:$0xff]
      %v4917 = vld [vmem:[#allocation2 + $0x1c0] sm:$0xff]
      %v4918 = vld [vmem:[#allocation2 + $0x1c8] sm:$0xff]
      %v4919 = vld [vmem:[#allocation2 + $0x1d0] sm:$0xff]
      %v4920 = vld [vmem:[#allocation2 + $0x1d8] sm:$0xff]
      %v4921 = vld [vmem:[#allocation2 + $0x1e0] sm:$0xff]
      %v4922 = vld [vmem:[#allocation2 + $0x1e8] sm:$0xff]
      %v4923 = vld [vmem:[#allocation2 + $0x1f0] sm:$0xff]
      %v4924 = vld [vmem:[#allocation2 + $0x1f8] sm:$0xff]
      %v4925 = vld [vmem:[#allocation2 + $0x200] sm:$0xff]
      %v4926 = vld [vmem:[#allocation2 + $0x208] sm:$0xff]
      %v4927 = vld [vmem:[#allocation2 + $0x210] sm:$0xff]
      %v4928 = vld [vmem:[#allocation2 + $0x218] sm:$0xff]
      %v4929 = vld [vmem:[#allocation2 + $0x220] sm:$0xff]
      %v4930 = vld [vmem:[#allocation2 + $0x228] sm:$0xff]
      %v4931 = vld [vmem:[#allocation2 + $0x230] sm:$0xff]
      %v4932 = vld [vmem:[#allocation2 + $0x238] sm:$0xff]
      %v4933 = vld [vmem:[#allocation2 + $0x240] sm:$0xff]
      %v4934 = vld [vmem:[#allocation2 + $0x248] sm:$0xff]
      %v4935 = vld [vmem:[#allocation2 + $0x250] sm:$0xff]
      %v4936 = vld [vmem:[#allocation2 + $0x258] sm:$0xff]
      %v4937 = vld [vmem:[#allocation2 + $0x260] sm:$0xff]
      %v4938 = vld [vmem:[#allocation2 + $0x268] sm:$0xff]
      %v4939 = vld [vmem:[#allocation2 + $0x270] sm:$0xff]
      %v4940 = vld [vmem:[#allocation2 + $0x278] sm:$0xff]
      %v4941 = vld [vmem:[#allocation2 + $0x280] sm:$0xff]
      %v4942 = vld [vmem:[#allocation2 + $0x288] sm:$0xff]
      %v4943 = vld [vmem:[#allocation2 + $0x290] sm:$0xff]
      %v4944 = vld [vmem:[#allocation2 + $0x298] sm:$0xff]
      %v4945 = vld [vmem:[#allocation2 + $0x2a0] sm:$0xff]
      %v4946 = vld [vmem:[#allocation2 + $0x2a8] sm:$0xff]
      %v4947 = vld [vmem:[#allocation2 + $0x2b0] sm:$0xff]
      %v4948 = vld [vmem:[#allocation2 + $0x2b8] sm:$0xff]
      %v4949 = vld [vmem:[#allocation2 + $0x2c0] sm:$0xff]
      %v4950 = vld [vmem:[#allocation2 + $0x2c8] sm:$0xff]
      %v4951 = vld [vmem:[#allocation2 + $0x2d0] sm:$0xff]
      %v4952 = vld [vmem:[#allocation2 + $0x2d8] sm:$0xff]
      %v4953 = vld [vmem:[#allocation2 + $0x2e0] sm:$0xff]
      %v4954 = vld [vmem:[#allocation2 + $0x2e8] sm:$0xff]
      %v4955 = vld [vmem:[#allocation2 + $0x2f0] sm:$0xff]
      %v4956 = vld [vmem:[#allocation2 + $0x2f8] sm:$0xff]
      %v4957 = vld [vmem:[#allocation2 + $0x300] sm:$0xff]
      %v4958 = vld [vmem:[#allocation2 + $0x308] sm:$0xff]
      %v4959 = vld [vmem:[#allocation2 + $0x310] sm:$0xff]
      %v4960 = vld [vmem:[#allocation2 + $0x318] sm:$0xff]
      %v4961 = vld [vmem:[#allocation2 + $0x320] sm:$0xff]
      %v4962 = vld [vmem:[#allocation2 + $0x328] sm:$0xff]
      %v4963 = vld [vmem:[#allocation2 + $0x330] sm:$0xff]
      %v4964 = vld [vmem:[#allocation2 + $0x338] sm:$0xff]
      %v4965 = vld [vmem:[#allocation2 + $0x340] sm:$0xff]
      %v4966 = vld [vmem:[#allocation2 + $0x348] sm:$0xff]
      %v4967 = vld [vmem:[#allocation2 + $0x350] sm:$0xff]
      %v4968 = vld [vmem:[#allocation2 + $0x358] sm:$0xff]
      %v4969 = vld [vmem:[#allocation2 + $0x360] sm:$0xff]
      %v4970 = vld [vmem:[#allocation2 + $0x368] sm:$0xff]
      %v4971 = vld [vmem:[#allocation2 + $0x370] sm:$0xff]
      %v4972 = vld [vmem:[#allocation2 + $0x378] sm:$0xff]
      %v4973 = vld [vmem:[#allocation2 + $0x380] sm:$0xff]
      %v4974 = vld [vmem:[#allocation2 + $0x388] sm:$0xff]
      %v4975 = vld [vmem:[#allocation2 + $0x390] sm:$0xff]
      %v4976 = vld [vmem:[#allocation2 + $0x398] sm:$0xff]
      %v4977 = vld [vmem:[#allocation2 + $0x3a0] sm:$0xff]
      %v4978 = vld [vmem:[#allocation2 + $0x3a8] sm:$0xff]
      %v4979 = vld [vmem:[#allocation2 + $0x3b0] sm:$0xff]
      %v4980 = vld [vmem:[#allocation2 + $0x3b8] sm:$0xff]
      %v4981 = vld [vmem:[#allocation2 + $0x3c0] sm:$0xff]
      %v4982 = vld [vmem:[#allocation2 + $0x3c8] sm:$0xff]
      %v4983 = vld [vmem:[#allocation2 + $0x3d0] sm:$0xff]
      %v4984 = vld [vmem:[#allocation2 + $0x3d8] sm:$0xff]
      %v4985 = vld [vmem:[#allocation2 + $0x3e0] sm:$0xff]
      %v4986 = vld [vmem:[#allocation2 + $0x3e8] sm:$0xff]
      %v4987 = vld [vmem:[#allocation2 + $0x3f0] sm:$0xff]
      %v4988 = vld [vmem:[#allocation2 + $0x3f8] sm:$0xff]
      %v4989 = vld [vmem:[#allocation2 + $0x400] sm:$0xff]
      %v4990 = vld [vmem:[#allocation2 + $0x408] sm:$0xff]
      %v4991 = vld [vmem:[#allocation2 + $0x410] sm:$0xff]
      %v4992 = vld [vmem:[#allocation2 + $0x418] sm:$0xff]
      %v4993 = vld [vmem:[#allocation2 + $0x420] sm:$0xff]
      %v4994 = vld [vmem:[#allocation2 + $0x428] sm:$0xff]
      %v4995 = vld [vmem:[#allocation2 + $0x430] sm:$0xff]
      %v4996 = vld [vmem:[#allocation2 + $0x438] sm:$0xff]
      %v4997 = vld [vmem:[#allocation2 + $0x440] sm:$0xff]
      %v4998 = vld [vmem:[#allocation2 + $0x448] sm:$0xff]
      %v4999 = vld [vmem:[#allocation2 + $0x450] sm:$0xff]
      %v5000 = vld [vmem:[#allocation2 + $0x458] sm:$0xff]
      %v5001 = vld [vmem:[#allocation2 + $0x460] sm:$0xff]
      %v5002 = vld [vmem:[#allocation2 + $0x468] sm:$0xff]
      %v5003 = vld [vmem:[#allocation2 + $0x470] sm:$0xff]
      %v5004 = vld [vmem:[#allocation2 + $0x478] sm:$0xff]
      %v5005 = vld [vmem:[#allocation2 + $0x480] sm:$0xff]
      %v5006 = vld [vmem:[#allocation2 + $0x488] sm:$0xff]
      %v5007 = vld [vmem:[#allocation2 + $0x490] sm:$0xff]
      %v5008 = vld [vmem:[#allocation2 + $0x498] sm:$0xff]
      %v5009 = vld [vmem:[#allocation2 + $0x4a0] sm:$0xff]
      %v5010 = vld [vmem:[#allocation2 + $0x4a8] sm:$0xff]
      %v5011 = vld [vmem:[#allocation2 + $0x4b0] sm:$0xff]
      %v5012 = vld [vmem:[#allocation2 + $0x4b8] sm:$0xff]
      %v5013 = vld [vmem:[#allocation2 + $0x4c0] sm:$0xff]
      %v5014 = vld [vmem:[#allocation2 + $0x4c8] sm:$0xff]
      %v5015 = vld [vmem:[#allocation2 + $0x4d0] sm:$0xff]
      %v5016 = vld [vmem:[#allocation2 + $0x4d8] sm:$0xff]
      %v5017 = vld [vmem:[#allocation2 + $0x4e0] sm:$0xff]
      %v5018 = vld [vmem:[#allocation2 + $0x4e8] sm:$0xff]
      %v5019 = vld [vmem:[#allocation2 + $0x4f0] sm:$0xff]
      %v5020 = vld [vmem:[#allocation2 + $0x4f8] sm:$0xff]
      %v5021 = vld [vmem:[#allocation2 + $0x500] sm:$0xff]
      %v5022 = vld [vmem:[#allocation2 + $0x508] sm:$0xff]
      %v5023 = vld [vmem:[#allocation2 + $0x510] sm:$0xff]
      %v5024 = vld [vmem:[#allocation2 + $0x518] sm:$0xff]
      %v5025 = vld [vmem:[#allocation2 + $0x520] sm:$0xff]
      %v5026 = vld [vmem:[#allocation2 + $0x528] sm:$0xff]
      %v5027 = vld [vmem:[#allocation2 + $0x530] sm:$0xff]
      %v5028 = vld [vmem:[#allocation2 + $0x538] sm:$0xff]
      %v5029 = vld [vmem:[#allocation2 + $0x540] sm:$0xff]
      %v5030 = vld [vmem:[#allocation2 + $0x548] sm:$0xff]
      %v5031 = vld [vmem:[#allocation2 + $0x550] sm:$0xff]
      %v5032 = vld [vmem:[#allocation2 + $0x558] sm:$0xff]
      %v5033 = vld [vmem:[#allocation2 + $0x560] sm:$0xff]
      %v5034 = vld [vmem:[#allocation2 + $0x568] sm:$0xff]
      %v5035 = vld [vmem:[#allocation2 + $0x570] sm:$0xff]
      %v5036 = vld [vmem:[#allocation2 + $0x578] sm:$0xff]
      %v5037 = vld [vmem:[#allocation2 + $0x580] sm:$0xff]
      %v5038 = vld [vmem:[#allocation2 + $0x588] sm:$0xff]
      %v5039 = vld [vmem:[#allocation2 + $0x590] sm:$0xff]
      %v5040 = vld [vmem:[#allocation2 + $0x598] sm:$0xff]
      %v5041 = vld [vmem:[#allocation2 + $0x5a0] sm:$0xff]
      %v5042 = vld [vmem:[#allocation2 + $0x5a8] sm:$0xff]
      %v5043 = vld [vmem:[#allocation2 + $0x5b0] sm:$0xff]
      %v5044 = vld [vmem:[#allocation2 + $0x5b8] sm:$0xff]
      %v5045 = vld [vmem:[#allocation2 + $0x5c0] sm:$0xff]
      %v5046 = vld [vmem:[#allocation2 + $0x5c8] sm:$0xff]
      %v5047 = vld [vmem:[#allocation2 + $0x5d0] sm:$0xff]
      %v5048 = vld [vmem:[#allocation2 + $0x5d8] sm:$0xff]
      %v5049 = vld [vmem:[#allocation2 + $0x5e0] sm:$0xff]
      %v5050 = vld [vmem:[#allocation2 + $0x5e8] sm:$0xff]
      %v5051 = vld [vmem:[#allocation2 + $0x5f0] sm:$0xff]
      %v5052 = vld [vmem:[#allocation2 + $0x5f8] sm:$0xff]
      %v5053 = vld [vmem:[#allocation2 + $0x600] sm:$0xff]
      %v5054 = vld [vmem:[#allocation2 + $0x608] sm:$0xff]
      %v5055 = vld [vmem:[#allocation2 + $0x610] sm:$0xff]
      %v5056 = vld [vmem:[#allocation2 + $0x618] sm:$0xff]
      %v5057 = vld [vmem:[#allocation2 + $0x620] sm:$0xff]
      %v5058 = vld [vmem:[#allocation2 + $0x628] sm:$0xff]
      %v5059 = vld [vmem:[#allocation2 + $0x630] sm:$0xff]
      %v5060 = vld [vmem:[#allocation2 + $0x638] sm:$0xff]
      %v5061 = vld [vmem:[#allocation2 + $0x640] sm:$0xff]
      %v5062 = vld [vmem:[#allocation2 + $0x648] sm:$0xff]
      %v5063 = vld [vmem:[#allocation2 + $0x650] sm:$0xff]
      %v5064 = vld [vmem:[#allocation2 + $0x658] sm:$0xff]
      %v5065 = vld [vmem:[#allocation2 + $0x660] sm:$0xff]
      %v5066 = vld [vmem:[#allocation2 + $0x668] sm:$0xff]
      %v5067 = vld [vmem:[#allocation2 + $0x670] sm:$0xff]
      %v5068 = vld [vmem:[#allocation2 + $0x678] sm:$0xff]
      %v5069 = vld [vmem:[#allocation2 + $0x680] sm:$0xff]
      %v5070 = vld [vmem:[#allocation2 + $0x688] sm:$0xff]
      %v5071 = vld [vmem:[#allocation2 + $0x690] sm:$0xff]
      %v5072 = vld [vmem:[#allocation2 + $0x698] sm:$0xff]
      %v5073 = vld [vmem:[#allocation2 + $0x6a0] sm:$0xff]
      %v5074 = vld [vmem:[#allocation2 + $0x6a8] sm:$0xff]
      %v5075 = vld [vmem:[#allocation2 + $0x6b0] sm:$0xff]
      %v5076 = vld [vmem:[#allocation2 + $0x6b8] sm:$0xff]
      %v5077 = vld [vmem:[#allocation2 + $0x6c0] sm:$0xff]
      %v5078 = vld [vmem:[#allocation2 + $0x6c8] sm:$0xff]
      %v5079 = vld [vmem:[#allocation2 + $0x6d0] sm:$0xff]
      %v5080 = vld [vmem:[#allocation2 + $0x6d8] sm:$0xff]
      %v5081 = vld [vmem:[#allocation2 + $0x6e0] sm:$0xff]
      %v5082 = vld [vmem:[#allocation2 + $0x6e8] sm:$0xff]
      %v5083 = vld [vmem:[#allocation2 + $0x6f0] sm:$0xff]
      %v5084 = vld [vmem:[#allocation2 + $0x6f8] sm:$0xff]
      %v5085 = vld [vmem:[#allocation2 + $0x700] sm:$0xff]
      %v5086 = vld [vmem:[#allocation2 + $0x708] sm:$0xff]
      %v5087 = vld [vmem:[#allocation2 + $0x710] sm:$0xff]
      %v5088 = vld [vmem:[#allocation2 + $0x718] sm:$0xff]
      %v5089 = vld [vmem:[#allocation2 + $0x720] sm:$0xff]
      %v5090 = vld [vmem:[#allocation2 + $0x728] sm:$0xff]
      %v5091 = vld [vmem:[#allocation2 + $0x730] sm:$0xff]
      %v5092 = vld [vmem:[#allocation2 + $0x738] sm:$0xff]
      %v5093 = vld [vmem:[#allocation2 + $0x740] sm:$0xff]
      %v5094 = vld [vmem:[#allocation2 + $0x748] sm:$0xff]
      %v5095 = vld [vmem:[#allocation2 + $0x750] sm:$0xff]
      %v5096 = vld [vmem:[#allocation2 + $0x758] sm:$0xff]
      %v5097 = vld [vmem:[#allocation2 + $0x760] sm:$0xff]
      %v5098 = vld [vmem:[#allocation2 + $0x768] sm:$0xff]
      %v5099 = vld [vmem:[#allocation2 + $0x770] sm:$0xff]
      %v5100 = vld [vmem:[#allocation2 + $0x778] sm:$0xff]
      %v5101 = vld [vmem:[#allocation2 + $0x780] sm:$0xff]
      %v5102 = vld [vmem:[#allocation2 + $0x788] sm:$0xff]
      %v5103 = vld [vmem:[#allocation2 + $0x790] sm:$0xff]
      %v5104 = vld [vmem:[#allocation2 + $0x798] sm:$0xff]
      %v5105 = vld [vmem:[#allocation2 + $0x7a0] sm:$0xff]
      %v5106 = vld [vmem:[#allocation2 + $0x7a8] sm:$0xff]
      %v5107 = vld [vmem:[#allocation2 + $0x7b0] sm:$0xff]
      %v5108 = vld [vmem:[#allocation2 + $0x7b8] sm:$0xff]
      %v5109 = vld [vmem:[#allocation2 + $0x7c0] sm:$0xff]
      %v5110 = vld [vmem:[#allocation2 + $0x7c8] sm:$0xff]
      %v5111 = vld [vmem:[#allocation2 + $0x7d0] sm:$0xff]
      %v5112 = vld [vmem:[#allocation2 + $0x7d8] sm:$0xff]
      %v5113 = vld [vmem:[#allocation2 + $0x7e0] sm:$0xff]
      %v5114 = vld [vmem:[#allocation2 + $0x7e8] sm:$0xff]
      %v5115 = vld [vmem:[#allocation2 + $0x7f0] sm:$0xff]
      %v5116 = vld [vmem:[#allocation2 + $0x7f8] sm:$0xff]
      %v5117 = vld [vmem:[#allocation2 + $0x800] sm:$0xff]
      %v5118 = vld [vmem:[#allocation2 + $0x808] sm:$0xff]
      %v5119 = vld [vmem:[#allocation2 + $0x810] sm:$0xff]
      %v5120 = vld [vmem:[#allocation2 + $0x818] sm:$0xff]
      %v5121 = vld [vmem:[#allocation2 + $0x820] sm:$0xff]
      %v5122 = vld [vmem:[#allocation2 + $0x828] sm:$0xff]
      %v5123 = vld [vmem:[#allocation2 + $0x830] sm:$0xff]
      %v5124 = vld [vmem:[#allocation2 + $0x838] sm:$0xff]
      %v5125 = vld [vmem:[#allocation2 + $0x840] sm:$0xff]
      %v5126 = vld [vmem:[#allocation2 + $0x848] sm:$0xff]
      %v5127 = vld [vmem:[#allocation2 + $0x850] sm:$0xff]
      %v5128 = vld [vmem:[#allocation2 + $0x858] sm:$0xff]
      %v5129 = vld [vmem:[#allocation2 + $0x860] sm:$0xff]
      %v5130 = vld [vmem:[#allocation2 + $0x868] sm:$0xff]
      %v5131 = vld [vmem:[#allocation2 + $0x870] sm:$0xff]
      %v5132 = vld [vmem:[#allocation2 + $0x878] sm:$0xff]
      %v5133 = vld [vmem:[#allocation2 + $0x880] sm:$0xff]
      %v5134 = vld [vmem:[#allocation2 + $0x888] sm:$0xff]
      %v5135 = vld [vmem:[#allocation2 + $0x890] sm:$0xff]
      %v5136 = vld [vmem:[#allocation2 + $0x898] sm:$0xff]
      %v5137 = vld [vmem:[#allocation2 + $0x8a0] sm:$0xff]
      %v5138 = vld [vmem:[#allocation2 + $0x8a8] sm:$0xff]
      %v5139 = vld [vmem:[#allocation2 + $0x8b0] sm:$0xff]
      %v5140 = vld [vmem:[#allocation2 + $0x8b8] sm:$0xff]
      %v5141 = vld [vmem:[#allocation2 + $0x8c0] sm:$0xff]
      %v5142 = vld [vmem:[#allocation2 + $0x8c8] sm:$0xff]
      %v5143 = vld [vmem:[#allocation2 + $0x8d0] sm:$0xff]
      %v5144 = vld [vmem:[#allocation2 + $0x8d8] sm:$0xff]
      %v5145 = vld [vmem:[#allocation2 + $0x8e0] sm:$0xff]
      %v5146 = vld [vmem:[#allocation2 + $0x8e8] sm:$0xff]
      %v5147 = vld [vmem:[#allocation2 + $0x8f0] sm:$0xff]
      %v5148 = vld [vmem:[#allocation2 + $0x8f8] sm:$0xff]
      %v5149 = vld [vmem:[#allocation2 + $0x900] sm:$0xff]
      %v5150 = vld [vmem:[#allocation2 + $0x908] sm:$0xff]
      %v5151 = vld [vmem:[#allocation2 + $0x910] sm:$0xff]
      %v5152 = vld [vmem:[#allocation2 + $0x918] sm:$0xff]
      %v5153 = vld [vmem:[#allocation2 + $0x920] sm:$0xff]
      %v5154 = vld [vmem:[#allocation2 + $0x928] sm:$0xff]
      %v5155 = vld [vmem:[#allocation2 + $0x930] sm:$0xff]
      %v5156 = vld [vmem:[#allocation2 + $0x938] sm:$0xff]
      %v5157 = vld [vmem:[#allocation2 + $0x940] sm:$0xff]
      %v5158 = vld [vmem:[#allocation2 + $0x948] sm:$0xff]
      %v5159 = vld [vmem:[#allocation2 + $0x950] sm:$0xff]
      %v5160 = vld [vmem:[#allocation2 + $0x958] sm:$0xff]
      %v5161 = vld [vmem:[#allocation2 + $0x960] sm:$0xff]
      %v5162 = vld [vmem:[#allocation2 + $0x968] sm:$0xff]
      %v5163 = vld [vmem:[#allocation2 + $0x970] sm:$0xff]
      %v5164 = vld [vmem:[#allocation2 + $0x978] sm:$0xff]
      %v5165 = vld [vmem:[#allocation2 + $0x980] sm:$0xff]
      %v5166 = vld [vmem:[#allocation2 + $0x988] sm:$0xff]
      %v5167 = vld [vmem:[#allocation2 + $0x990] sm:$0xff]
      %v5168 = vld [vmem:[#allocation2 + $0x998] sm:$0xff]
      %v5169 = vld [vmem:[#allocation2 + $0x9a0] sm:$0xff]
      %v5170 = vld [vmem:[#allocation2 + $0x9a8] sm:$0xff]
      %v5171 = vld [vmem:[#allocation2 + $0x9b0] sm:$0xff]
      %v5172 = vld [vmem:[#allocation2 + $0x9b8] sm:$0xff]
      %v5173 = vld [vmem:[#allocation2 + $0x9c0] sm:$0xff]
      %v5174 = vld [vmem:[#allocation2 + $0x9c8] sm:$0xff]
      %v5175 = vld [vmem:[#allocation2 + $0x9d0] sm:$0xff]
      %v5176 = vld [vmem:[#allocation2 + $0x9d8] sm:$0xff]
      %v5177 = vld [vmem:[#allocation2 + $0x9e0] sm:$0xff]
      %v5178 = vld [vmem:[#allocation2 + $0x9e8] sm:$0xff]
      %v5179 = vld [vmem:[#allocation2 + $0x9f0] sm:$0xff]
      %v5180 = vld [vmem:[#allocation2 + $0x9f8] sm:$0xff]
      %v5181 = vld [vmem:[#allocation2 + $0xa00] sm:$0xff]
      %v5182 = vld [vmem:[#allocation2 + $0xa08] sm:$0xff]
      %v5183 = vld [vmem:[#allocation2 + $0xa10] sm:$0xff]
      %v5184 = vld [vmem:[#allocation2 + $0xa18] sm:$0xff]
      %v5185 = vld [vmem:[#allocation2 + $0xa20] sm:$0xff]
      %v5186 = vld [vmem:[#allocation2 + $0xa28] sm:$0xff]
      %v5187 = vld [vmem:[#allocation2 + $0xa30] sm:$0xff]
      %v5188 = vld [vmem:[#allocation2 + $0xa38] sm:$0xff]
      %v5189 = vld [vmem:[#allocation2 + $0xa40] sm:$0xff]
      %v5190 = vld [vmem:[#allocation2 + $0xa48] sm:$0xff]
      %v5191 = vld [vmem:[#allocation2 + $0xa50] sm:$0xff]
      %v5192 = vld [vmem:[#allocation2 + $0xa58] sm:$0xff]
      %v5193 = vld [vmem:[#allocation2 + $0xa60] sm:$0xff]
      %v5194 = vld [vmem:[#allocation2 + $0xa68] sm:$0xff]
      %v5195 = vld [vmem:[#allocation2 + $0xa70] sm:$0xff]
      %v5196 = vld [vmem:[#allocation2 + $0xa78] sm:$0xff]
      %v5197 = vld [vmem:[#allocation2 + $0xa80] sm:$0xff]
      %v5198 = vld [vmem:[#allocation2 + $0xa88] sm:$0xff]
      %v5199 = vld [vmem:[#allocation2 + $0xa90] sm:$0xf]
      %v5200 = vld [vmem:[#allocation2 + $0xa98] sm:$0xf]
      %v5201 = vld [vmem:[#allocation2 + $0xaa0] sm:$0xf]
      %v5202 = vld [vmem:[#allocation2 + $0xaa8] sm:$0xf]
      %v5203 = vld [vmem:[#allocation2 + $0xab0] sm:$0xf]
      %v5204 = vld [vmem:[#allocation2 + $0xab8] sm:$0xf]
      %v5205 = vld [vmem:[#allocation2 + $0xac0] sm:$0xf]
      %v5206 = vld [vmem:[#allocation2 + $0xac8] sm:$0xf]
      %v5207 = vld [vmem:[#allocation2 + $0xad0] sm:$0xf]
      %v5208 = vld [vmem:[#allocation2 + $0xad8] sm:$0xf]
      %v5209 = vld [vmem:[#allocation2 + $0xae0] sm:$0xf]
      %v5210 = vld [vmem:[#allocation2 + $0xae8] sm:$0xf]
      %v5211 = vld [vmem:[#allocation2 + $0xaf0] sm:$0xf]
      %v5212 = vld [vmem:[#allocation2 + $0xaf8] sm:$0xf]
      %v5213 = vld [vmem:[#allocation2 + $0xb00] sm:$0xf]
      %v5214 = vld [vmem:[#allocation2 + $0xb08] sm:$0xf]
      %v5215 = vld [vmem:[#allocation2 + $0xb10] sm:$0xf]
      %v5216 = vld [vmem:[#allocation2 + $0xb18] sm:$0xf]
      %v5217 = vld [vmem:[#allocation2 + $0xb20] sm:$0xf]
      %v5218 = vld [vmem:[#allocation2 + $0xb28] sm:$0xf]
      %v5219 = vld [vmem:[#allocation2 + $0xb30] sm:$0xf]
      %v5220 = vld [vmem:[#allocation2 + $0xb38] sm:$0xf]
      %v5221 = vld [vmem:[#allocation2 + $0xb40] sm:$0xf]
      %v5222 = vld [vmem:[#allocation2 + $0xb48] sm:$0xf]
      %v5223 = vld [vmem:[#allocation2 + $0xb50] sm:$0xf]
      %v5224 = vld [vmem:[#allocation2 + $0xb58] sm:$0xf]
      %v5225 = vld [vmem:[%s2] sm:$0xff]
      %5227 = vset.pattern.permute.xlu0 0
      %5228 = vperm.xlu0 %5227, %v5225
      %v5229 = vpop.permute.xlu0 %5228
      %v5232 = vsel %vm1216, %v4860, 0
      %vm5234 = vcmask 1043456
      %v5236 = vsel %vm5234, %v5199, 0
      %v5239 = vsel %vm5234, %v5200, 0
      %v5242 = vsel %vm5234, %v5201, 0
      %v5245 = vsel %vm5234, %v5202, 0
      %v5248 = vsel %vm5234, %v5203, 0
      %v5251 = vsel %vm5234, %v5204, 0
      %v5254 = vsel %vm5234, %v5205, 0
      %v5257 = vsel %vm5234, %v5206, 0
      %v5260 = vsel %vm5234, %v5207, 0
      %v5263 = vsel %vm5234, %v5208, 0
      %v5266 = vsel %vm5234, %v5209, 0
      %v5269 = vsel %vm5234, %v5210, 0
      %v5272 = vsel %vm5234, %v5211, 0
      %v5275 = vsel %vm5234, %v5212, 0
      %v5278 = vsel %vm5234, %v5213, 0
      %v5281 = vsel %vm5234, %v5214, 0
      %v5284 = vsel %vm5234, %v5215, 0
      %v5287 = vsel %vm5234, %v5216, 0
      %v5290 = vsel %vm5234, %v5217, 0
      %v5293 = vsel %vm5234, %v5218, 0
      %v5296 = vsel %vm5234, %v5219, 0
      %v5299 = vsel %vm5234, %v5220, 0
      %v5302 = vsel %vm5234, %v5221, 0
      %v5305 = vsel %vm5234, %v5222, 0
      %v5308 = vsel %vm5234, %v5223, 0
      %v5311 = vsel %vm5234, %v5224, 0
      %5313 = vmatprep.subr.mxu0 %v4862
      %5314 = vmatpush1.msra.mxu0 %v4861
      %5315 = vmatprep.subr.mxu0 %v4888
      %5316 = vmatpush1.msra.mxu0 %v4887
      %5317 = vmatprep.subr.mxu0 %v4914
      %5318 = vmatpush1.msra.mxu0 %v4913
      %5319 = vmatprep.subr.mxu0 %v4940
      %5320 = vmatpush1.msra.mxu0 %v4939
      %5321 = vmatprep.subr.mxu0 %v4966
      %5322 = vmatpush1.msra.mxu0 %v4965
      %5323 = vmatprep.subr.mxu0 %v4992
      %5324 = vmatpush1.msra.mxu0 %v4991
      %5325 = vmatprep.subr.mxu0 %v5018
      %5326 = vmatpush1.msra.mxu0 %v5017
      %5327 = vmatprep.subr.mxu0 %v5044
      %5328 = vmatpush1.msra.mxu0 %v5043
      %5329 = vmatprep.subr.mxu0 %v5070
      %5330 = vmatpush1.msra.mxu0 %v5069
      %5331 = vmatprep.subr.mxu0 %v5096
      %5332 = vmatpush1.msra.mxu0 %v5095
      %5333 = vmatprep.subr.mxu0 %v5122
      %5334 = vmatpush1.msra.mxu0 %v5121
      %5335 = vmatprep.subr.mxu0 %v5148
      %5336 = vmatpush1.msra.mxu0 %v5147
      %5337 = vmatprep.subr.mxu0 %v5174
      %5338 = vmatpush1.msra.mxu0 %v5173
      %5339 = vmatprep.subr.mxu0 %v5239
      %5340 = vmatpush1.msra.mxu0 %v5236
      %5341 = vmatprep.subr.mxu0 0.0
      %5342 = vmatpush1.msra.mxu0 0.0
      %5343 = vmatprep.subr.mxu0 0.0
      %5344 = vmatpush1.msra.mxu0 0.0
      %5345 = vmatprep.subr.mxu0 0.0
      %5346 = vmatpush1.msra.mxu0 0.0
      %5347 = vmatprep.subr.mxu0 0.0
      %5348 = vmatpush1.msra.mxu0 0.0
      %5349 = vmatprep.subr.mxu0 0.0
      %5350 = vmatpush1.msra.mxu0 0.0
      %5351 = vmatprep.subr.mxu0 0.0
      %5352 = vmatpush1.msra.mxu0 0.0
      %5353 = vmatprep.subr.mxu0 0.0
      %5354 = vmatpush1.msra.mxu0 0.0
      %5355 = vmatprep.subr.mxu0 0.0
      %5356 = vmatpush1.msra.mxu0 0.0
      %5357 = vmatprep.subr.mxu0 0.0
      %5358 = vmatpush1.msra.mxu0 0.0
      %5359 = vmatprep.subr.mxu0 0.0
      %5360 = vmatpush1.msra.mxu0 0.0
      %5361 = vmatprep.subr.mxu0 0.0
      %5362 = vmatpush1.msra.mxu0 0.0
      %5363 = vmatprep.subr.mxu0 0.0
      %5364 = vmatpush1.msra.mxu0 0.0
      %5365 = vmatprep.subr.mxu0 0.0
      %5366 = vmatpush1.msra.mxu0 0.0
      %5367 = vmatprep.subr.mxu0 0.0
      %5368 = vmatpush1.msra.mxu0 0.0
      %5369 = vmatprep.subr.mxu0 0.0
      %5370 = vmatpush1.msra.mxu0 0.0
      %5371 = vmatprep.subr.mxu0 0.0
      %5372 = vmatpush1.msra.mxu0 0.0
      %5373 = vmatprep.subr.mxu0 0.0
      %5374 = vmatpush1.msra.mxu0 0.0
      %5375 = vmatprep.subr.mxu0 0.0
      %5376 = vmatpush1.msra.mxu0 0.0
      %5377 = vmatprep.mubr.f32.mxu0 0.0
      %5378 = vmatmul.mubr.f32.gmra.mrb[0].mxu0 %v5232
      %v5379 = vpop.f32.mrb[0].mxu0
      %v5380 = vadd.f32 %v5229, %v5379
      %v5381 = vpop.f32.mrb[0].mxu0
      %v5382 = vadd.f32 %v5229, %v5381
      %5383 = vdwg.mxu0
      %5384 = vmatprep.subr.mxu0 %v4864
      %5385 = vmatpush1.msra.mxu0 %v4863
      %5386 = vmatprep.subr.mxu0 %v4890
      %5387 = vmatpush1.msra.mxu0 %v4889
      %5388 = vmatprep.subr.mxu0 %v4916
      %5389 = vmatpush1.msra.mxu0 %v4915
      %5390 = vmatprep.subr.mxu0 %v4942
      %5391 = vmatpush1.msra.mxu0 %v4941
      %5392 = vmatprep.subr.mxu0 %v4968
      %5393 = vmatpush1.msra.mxu0 %v4967
      %5394 = vmatprep.subr.mxu0 %v4994
      %5395 = vmatpush1.msra.mxu0 %v4993
      %5396 = vmatprep.subr.mxu0 %v5020
      %5397 = vmatpush1.msra.mxu0 %v5019
      %5398 = vmatprep.subr.mxu0 %v5046
      %5399 = vmatpush1.msra.mxu0 %v5045
      %5400 = vmatprep.subr.mxu0 %v5072
      %5401 = vmatpush1.msra.mxu0 %v5071
      %5402 = vmatprep.subr.mxu0 %v5098
      %5403 = vmatpush1.msra.mxu0 %v5097
      %5404 = vmatprep.subr.mxu0 %v5124
      %5405 = vmatpush1.msra.mxu0 %v5123
      %5406 = vmatprep.subr.mxu0 %v5150
      %5407 = vmatpush1.msra.mxu0 %v5149
      %5408 = vmatprep.subr.mxu0 %v5176
      %5409 = vmatpush1.msra.mxu0 %v5175
      %5410 = vmatprep.subr.mxu0 %v5245
      %5411 = vmatpush1.msra.mxu0 %v5242
      %5412 = vmatprep.subr.mxu0 0.0
      %5413 = vmatpush1.msra.mxu0 0.0
      %5414 = vmatprep.subr.mxu0 0.0
      %5415 = vmatpush1.msra.mxu0 0.0
      %5416 = vmatprep.subr.mxu0 0.0
      %5417 = vmatpush1.msra.mxu0 0.0
      %5418 = vmatprep.subr.mxu0 0.0
      %5419 = vmatpush1.msra.mxu0 0.0
      %5420 = vmatprep.subr.mxu0 0.0
      %5421 = vmatpush1.msra.mxu0 0.0
      %5422 = vmatprep.subr.mxu0 0.0
      %5423 = vmatpush1.msra.mxu0 0.0
      %5424 = vmatprep.subr.mxu0 0.0
      %5425 = vmatpush1.msra.mxu0 0.0
      %5426 = vmatprep.subr.mxu0 0.0
      %5427 = vmatpush1.msra.mxu0 0.0
      %5428 = vmatprep.subr.mxu0 0.0
      %5429 = vmatpush1.msra.mxu0 0.0
      %5430 = vmatprep.subr.mxu0 0.0
      %5431 = vmatpush1.msra.mxu0 0.0
      %5432 = vmatprep.subr.mxu0 0.0
      %5433 = vmatpush1.msra.mxu0 0.0
      %5434 = vmatprep.subr.mxu0 0.0
      %5435 = vmatpush1.msra.mxu0 0.0
      %5436 = vmatprep.subr.mxu0 0.0
      %5437 = vmatpush1.msra.mxu0 0.0
      %5438 = vmatprep.subr.mxu0 0.0
      %5439 = vmatpush1.msra.mxu0 0.0
      %5440 = vmatprep.subr.mxu0 0.0
      %5441 = vmatpush1.msra.mxu0 0.0
      %5442 = vmatprep.subr.mxu0 0.0
      %5443 = vmatpush1.msra.mxu0 0.0
      %5444 = vmatprep.subr.mxu0 0.0
      %5445 = vmatpush1.msra.mxu0 0.0
      %5446 = vmatprep.subr.mxu0 0.0
      %5447 = vmatpush1.msra.mxu0 0.0
      %5448 = vmatprep.mubr.f32.mxu0 0.0
      %5449 = vmatmul.mubr.f32.gmra.mrb[0].mxu0 %v5232
      %v5450 = vpop.f32.mrb[0].mxu0
      %v5451 = vadd.f32 %v5229, %v5450
      %v5452 = vpop.f32.mrb[0].mxu0
      %v5453 = vadd.f32 %v5229, %v5452
      %5454 = vdwg.mxu0
      %5455 = vmatprep.subr.mxu0 %v4866
      %5456 = vmatpush1.msra.mxu0 %v4865
      %5457 = vmatprep.subr.mxu0 %v4892
      %5458 = vmatpush1.msra.mxu0 %v4891
      %5459 = vmatprep.subr.mxu0 %v4918
      %5460 = vmatpush1.msra.mxu0 %v4917
      %5461 = vmatprep.subr.mxu0 %v4944
      %5462 = vmatpush1.msra.mxu0 %v4943
      %5463 = vmatprep.subr.mxu0 %v4970
      %5464 = vmatpush1.msra.mxu0 %v4969
      %5465 = vmatprep.subr.mxu0 %v4996
      %5466 = vmatpush1.msra.mxu0 %v4995
      %5467 = vmatprep.subr.mxu0 %v5022
      %5468 = vmatpush1.msra.mxu0 %v5021
      %5469 = vmatprep.subr.mxu0 %v5048
      %5470 = vmatpush1.msra.mxu0 %v5047
      %5471 = vmatprep.subr.mxu0 %v5074
      %5472 = vmatpush1.msra.mxu0 %v5073
      %5473 = vmatprep.subr.mxu0 %v5100
      %5474 = vmatpush1.msra.mxu0 %v5099
      %5475 = vmatprep.subr.mxu0 %v5126
      %5476 = vmatpush1.msra.mxu0 %v5125
      %5477 = vmatprep.subr.mxu0 %v5152
      %5478 = vmatpush1.msra.mxu0 %v5151
      %5479 = vmatprep.subr.mxu0 %v5178
      %5480 = vmatpush1.msra.mxu0 %v5177
      %5481 = vmatprep.subr.mxu0 %v5251
      %5482 = vmatpush1.msra.mxu0 %v5248
      %5483 = vmatprep.subr.mxu0 0.0
      %5484 = vmatpush1.msra.mxu0 0.0
      %5485 = vmatprep.subr.mxu0 0.0
      %5486 = vmatpush1.msra.mxu0 0.0
      %5487 = vmatprep.subr.mxu0 0.0
      %5488 = vmatpush1.msra.mxu0 0.0
      %5489 = vmatprep.subr.mxu0 0.0
      %5490 = vmatpush1.msra.mxu0 0.0
      %5491 = vmatprep.subr.mxu0 0.0
      %5492 = vmatpush1.msra.mxu0 0.0
      %5493 = vmatprep.subr.mxu0 0.0
      %5494 = vmatpush1.msra.mxu0 0.0
      %5495 = vmatprep.subr.mxu0 0.0
      %5496 = vmatpush1.msra.mxu0 0.0
      %5497 = vmatprep.subr.mxu0 0.0
      %5498 = vmatpush1.msra.mxu0 0.0
      %5499 = vmatprep.subr.mxu0 0.0
      %5500 = vmatpush1.msra.mxu0 0.0
      %5501 = vmatprep.subr.mxu0 0.0
      %5502 = vmatpush1.msra.mxu0 0.0
      %5503 = vmatprep.subr.mxu0 0.0
      %5504 = vmatpush1.msra.mxu0 0.0
      %5505 = vmatprep.subr.mxu0 0.0
      %5506 = vmatpush1.msra.mxu0 0.0
      %5507 = vmatprep.subr.mxu0 0.0
      %5508 = vmatpush1.msra.mxu0 0.0
      %5509 = vmatprep.subr.mxu0 0.0
      %5510 = vmatpush1.msra.mxu0 0.0
      %5511 = vmatprep.subr.mxu0 0.0
      %5512 = vmatpush1.msra.mxu0 0.0
      %5513 = vmatprep.subr.mxu0 0.0
      %5514 = vmatpush1.msra.mxu0 0.0
      %5515 = vmatprep.subr.mxu0 0.0
      %5516 = vmatpush1.msra.mxu0 0.0
      %5517 = vmatprep.subr.mxu0 0.0
      %5518 = vmatpush1.msra.mxu0 0.0
      %5519 = vmatprep.mubr.f32.mxu0 0.0
      %5520 = vmatmul.mubr.f32.gmra.mrb[0].mxu0 %v5232
      %v5521 = vpop.f32.mrb[0].mxu0
      %v5522 = vadd.f32 %v5229, %v5521
      %v5523 = vpop.f32.mrb[0].mxu0
      %v5524 = vadd.f32 %v5229, %v5523
      %5525 = vdwg.mxu0
      %5526 = vmatprep.subr.mxu0 %v4868
      %5527 = vmatpush1.msra.mxu0 %v4867
      %5528 = vmatprep.subr.mxu0 %v4894
      %5529 = vmatpush1.msra.mxu0 %v4893
      %5530 = vmatprep.subr.mxu0 %v4920
      %5531 = vmatpush1.msra.mxu0 %v4919
      %5532 = vmatprep.subr.mxu0 %v4946
      %5533 = vmatpush1.msra.mxu0 %v4945
      %5534 = vmatprep.subr.mxu0 %v4972
      %5535 = vmatpush1.msra.mxu0 %v4971
      %5536 = vmatprep.subr.mxu0 %v4998
      %5537 = vmatpush1.msra.mxu0 %v4997
      %5538 = vmatprep.subr.mxu0 %v5024
      %5539 = vmatpush1.msra.mxu0 %v5023
      %5540 = vmatprep.subr.mxu0 %v5050
      %5541 = vmatpush1.msra.mxu0 %v5049
      %5542 = vmatprep.subr.mxu0 %v5076
      %5543 = vmatpush1.msra.mxu0 %v5075
      %5544 = vmatprep.subr.mxu0 %v5102
      %5545 = vmatpush1.msra.mxu0 %v5101
      %5546 = vmatprep.subr.mxu0 %v5128
      %5547 = vmatpush1.msra.mxu0 %v5127
      %5548 = vmatprep.subr.mxu0 %v5154
      %5549 = vmatpush1.msra.mxu0 %v5153
      %5550 = vmatprep.subr.mxu0 %v5180
      %5551 = vmatpush1.msra.mxu0 %v5179
      %5552 = vmatprep.subr.mxu0 %v5257
      %5553 = vmatpush1.msra.mxu0 %v5254
      %5554 = vmatprep.subr.mxu0 0.0
      %5555 = vmatpush1.msra.mxu0 0.0
      %5556 = vmatprep.subr.mxu0 0.0
      %5557 = vmatpush1.msra.mxu0 0.0
      %5558 = vmatprep.subr.mxu0 0.0
      %5559 = vmatpush1.msra.mxu0 0.0
      %5560 = vmatprep.subr.mxu0 0.0
      %5561 = vmatpush1.msra.mxu0 0.0
      %5562 = vmatprep.subr.mxu0 0.0
      %5563 = vmatpush1.msra.mxu0 0.0
      %5564 = vmatprep.subr.mxu0 0.0
      %5565 = vmatpush1.msra.mxu0 0.0
      %5566 = vmatprep.subr.mxu0 0.0
      %5567 = vmatpush1.msra.mxu0 0.0
      %5568 = vmatprep.subr.mxu0 0.0
      %5569 = vmatpush1.msra.mxu0 0.0
      %5570 = vmatprep.subr.mxu0 0.0
      %5571 = vmatpush1.msra.mxu0 0.0
      %5572 = vmatprep.subr.mxu0 0.0
      %5573 = vmatpush1.msra.mxu0 0.0
      %5574 = vmatprep.subr.mxu0 0.0
      %5575 = vmatpush1.msra.mxu0 0.0
      %5576 = vmatprep.subr.mxu0 0.0
      %5577 = vmatpush1.msra.mxu0 0.0
      %5578 = vmatprep.subr.mxu0 0.0
      %5579 = vmatpush1.msra.mxu0 0.0
      %5580 = vmatprep.subr.mxu0 0.0
      %5581 = vmatpush1.msra.mxu0 0.0
      %5582 = vmatprep.subr.mxu0 0.0
      %5583 = vmatpush1.msra.mxu0 0.0
      %5584 = vmatprep.subr.mxu0 0.0
      %5585 = vmatpush1.msra.mxu0 0.0
      %5586 = vmatprep.subr.mxu0 0.0
      %5587 = vmatpush1.msra.mxu0 0.0
      %5588 = vmatprep.subr.mxu0 0.0
      %5589 = vmatpush1.msra.mxu0 0.0
      %5590 = vmatprep.mubr.f32.mxu0 0.0
      %5591 = vmatmul.mubr.f32.gmra.mrb[0].mxu0 %v5232
      %v5592 = vpop.f32.mrb[0].mxu0
      %v5593 = vadd.f32 %v5229, %v5592
      %v5594 = vpop.f32.mrb[0].mxu0
      %v5595 = vadd.f32 %v5229, %v5594
      %5596 = vdwg.mxu0
      %5597 = vmatprep.subr.mxu0 %v4870
      %5598 = vmatpush1.msra.mxu0 %v4869
      %5599 = vmatprep.subr.mxu0 %v4896
      %5600 = vmatpush1.msra.mxu0 %v4895
      %5601 = vmatprep.subr.mxu0 %v4922
      %5602 = vmatpush1.msra.mxu0 %v4921
      %5603 = vmatprep.subr.mxu0 %v4948
      %5604 = vmatpush1.msra.mxu0 %v4947
      %5605 = vmatprep.subr.mxu0 %v4974
      %5606 = vmatpush1.msra.mxu0 %v4973
      %5607 = vmatprep.subr.mxu0 %v5000
      %5608 = vmatpush1.msra.mxu0 %v4999
      %5609 = vmatprep.subr.mxu0 %v5026
      %5610 = vmatpush1.msra.mxu0 %v5025
      %5611 = vmatprep.subr.mxu0 %v5052
      %5612 = vmatpush1.msra.mxu0 %v5051
      %5613 = vmatprep.subr.mxu0 %v5078
      %5614 = vmatpush1.msra.mxu0 %v5077
      %5615 = vmatprep.subr.mxu0 %v5104
      %5616 = vmatpush1.msra.mxu0 %v5103
      %5617 = vmatprep.subr.mxu0 %v5130
      %5618 = vmatpush1.msra.mxu0 %v5129
      %5619 = vmatprep.subr.mxu0 %v5156
      %5620 = vmatpush1.msra.mxu0 %v5155
      %5621 = vmatprep.subr.mxu0 %v5182
      %5622 = vmatpush1.msra.mxu0 %v5181
      %5623 = vmatprep.subr.mxu0 %v5263
      %5624 = vmatpush1.msra.mxu0 %v5260
      %5625 = vmatprep.subr.mxu0 0.0
      %5626 = vmatpush1.msra.mxu0 0.0
      %5627 = vmatprep.subr.mxu0 0.0
      %5628 = vmatpush1.msra.mxu0 0.0
      %5629 = vmatprep.subr.mxu0 0.0
      %5630 = vmatpush1.msra.mxu0 0.0
      %5631 = vmatprep.subr.mxu0 0.0
      %5632 = vmatpush1.msra.mxu0 0.0
      %5633 = vmatprep.subr.mxu0 0.0
      %5634 = vmatpush1.msra.mxu0 0.0
      %5635 = vmatprep.subr.mxu0 0.0
      %5636 = vmatpush1.msra.mxu0 0.0
      %5637 = vmatprep.subr.mxu0 0.0
      %5638 = vmatpush1.msra.mxu0 0.0
      %5639 = vmatprep.subr.mxu0 0.0
      %5640 = vmatpush1.msra.mxu0 0.0
      %5641 = vmatprep.subr.mxu0 0.0
      %5642 = vmatpush1.msra.mxu0 0.0
      %5643 = vmatprep.subr.mxu0 0.0
      %5644 = vmatpush1.msra.mxu0 0.0
      %5645 = vmatprep.subr.mxu0 0.0
      %5646 = vmatpush1.msra.mxu0 0.0
      %5647 = vmatprep.subr.mxu0 0.0
      %5648 = vmatpush1.msra.mxu0 0.0
      %5649 = vmatprep.subr.mxu0 0.0
      %5650 = vmatpush1.msra.mxu0 0.0
      %5651 = vmatprep.subr.mxu0 0.0
      %5652 = vmatpush1.msra.mxu0 0.0
      %5653 = vmatprep.subr.mxu0 0.0
      %5654 = vmatpush1.msra.mxu0 0.0
      %5655 = vmatprep.subr.mxu0 0.0
      %5656 = vmatpush1.msra.mxu0 0.0
      %5657 = vmatprep.subr.mxu0 0.0
      %5658 = vmatpush1.msra.mxu0 0.0
      %5659 = vmatprep.subr.mxu0 0.0
      %5660 = vmatpush1.msra.mxu0 0.0
      %5661 = vmatprep.mubr.f32.mxu0 0.0
      %5662 = vmatmul.mubr.f32.gmra.mrb[0].mxu0 %v5232
      %v5663 = vpop.f32.mrb[0].mxu0
      %v5664 = vadd.f32 %v5229, %v5663
      %v5665 = vpop.f32.mrb[0].mxu0
      %v5666 = vadd.f32 %v5229, %v5665
      %5667 = vdwg.mxu0
      %5668 = vmatprep.subr.mxu0 %v4872
      %5669 = vmatpush1.msra.mxu0 %v4871
      %5670 = vmatprep.subr.mxu0 %v4898
      %5671 = vmatpush1.msra.mxu0 %v4897
      %5672 = vmatprep.subr.mxu0 %v4924
      %5673 = vmatpush1.msra.mxu0 %v4923
      %5674 = vmatprep.subr.mxu0 %v4950
      %5675 = vmatpush1.msra.mxu0 %v4949
      %5676 = vmatprep.subr.mxu0 %v4976
      %5677 = vmatpush1.msra.mxu0 %v4975
      %5678 = vmatprep.subr.mxu0 %v5002
      %5679 = vmatpush1.msra.mxu0 %v5001
      %5680 = vmatprep.subr.mxu0 %v5028
      %5681 = vmatpush1.msra.mxu0 %v5027
      %5682 = vmatprep.subr.mxu0 %v5054
      %5683 = vmatpush1.msra.mxu0 %v5053
      %5684 = vmatprep.subr.mxu0 %v5080
      %5685 = vmatpush1.msra.mxu0 %v5079
      %5686 = vmatprep.subr.mxu0 %v5106
      %5687 = vmatpush1.msra.mxu0 %v5105
      %5688 = vmatprep.subr.mxu0 %v5132
      %5689 = vmatpush1.msra.mxu0 %v5131
      %5690 = vmatprep.subr.mxu0 %v5158
      %5691 = vmatpush1.msra.mxu0 %v5157
      %5692 = vmatprep.subr.mxu0 %v5184
      %5693 = vmatpush1.msra.mxu0 %v5183
      %5694 = vmatprep.subr.mxu0 %v5269
      %5695 = vmatpush1.msra.mxu0 %v5266
      %5696 = vmatprep.subr.mxu0 0.0
      %5697 = vmatpush1.msra.mxu0 0.0
      %5698 = vmatprep.subr.mxu0 0.0
      %5699 = vmatpush1.msra.mxu0 0.0
      %5700 = vmatprep.subr.mxu0 0.0
      %5701 = vmatpush1.msra.mxu0 0.0
      %5702 = vmatprep.subr.mxu0 0.0
      %5703 = vmatpush1.msra.mxu0 0.0
      %5704 = vmatprep.subr.mxu0 0.0
      %5705 = vmatpush1.msra.mxu0 0.0
      %5706 = vmatprep.subr.mxu0 0.0
      %5707 = vmatpush1.msra.mxu0 0.0
      %5708 = vmatprep.subr.mxu0 0.0
      %5709 = vmatpush1.msra.mxu0 0.0
      %5710 = vmatprep.subr.mxu0 0.0
      %5711 = vmatpush1.msra.mxu0 0.0
      %5712 = vmatprep.subr.mxu0 0.0
      %5713 = vmatpush1.msra.mxu0 0.0
      %5714 = vmatprep.subr.mxu0 0.0
      %5715 = vmatpush1.msra.mxu0 0.0
      %5716 = vmatprep.subr.mxu0 0.0
      %5717 = vmatpush1.msra.mxu0 0.0
      %5718 = vmatprep.subr.mxu0 0.0
      %5719 = vmatpush1.msra.mxu0 0.0
      %5720 = vmatprep.subr.mxu0 0.0
      %5721 = vmatpush1.msra.mxu0 0.0
      %5722 = vmatprep.subr.mxu0 0.0
      %5723 = vmatpush1.msra.mxu0 0.0
      %5724 = vmatprep.subr.mxu0 0.0
      %5725 = vmatpush1.msra.mxu0 0.0
      %5726 = vmatprep.subr.mxu0 0.0
      %5727 = vmatpush1.msra.mxu0 0.0
      %5728 = vmatprep.subr.mxu0 0.0
      %5729 = vmatpush1.msra.mxu0 0.0
      %5730 = vmatprep.subr.mxu0 0.0
      %5731 = vmatpush1.msra.mxu0 0.0
      %5732 = vmatprep.mubr.f32.mxu0 0.0
      %5733 = vmatmul.mubr.f32.gmra.mrb[0].mxu0 %v5232
      %v5734 = vpop.f32.mrb[0].mxu0
      %v5735 = vadd.f32 %v5229, %v5734
      %v5736 = vpop.f32.mrb[0].mxu0
      %v5737 = vadd.f32 %v5229, %v5736
      %5738 = vdwg.mxu0
      %5739 = vmatprep.subr.mxu0 %v4874
      %5740 = vmatpush1.msra.mxu0 %v4873
      %5741 = vmatprep.subr.mxu0 %v4900
      %5742 = vmatpush1.msra.mxu0 %v4899
      %5743 = vmatprep.subr.mxu0 %v4926
      %5744 = vmatpush1.msra.mxu0 %v4925
      %5745 = vmatprep.subr.mxu0 %v4952
      %5746 = vmatpush1.msra.mxu0 %v4951
      %5747 = vmatprep.subr.mxu0 %v4978
      %5748 = vmatpush1.msra.mxu0 %v4977
      %5749 = vmatprep.subr.mxu0 %v5004
      %5750 = vmatpush1.msra.mxu0 %v5003
      %5751 = vmatprep.subr.mxu0 %v5030
      %5752 = vmatpush1.msra.mxu0 %v5029
      %5753 = vmatprep.subr.mxu0 %v5056
      %5754 = vmatpush1.msra.mxu0 %v5055
      %5755 = vmatprep.subr.mxu0 %v5082
      %5756 = vmatpush1.msra.mxu0 %v5081
      %5757 = vmatprep.subr.mxu0 %v5108
      %5758 = vmatpush1.msra.mxu0 %v5107
      %5759 = vmatprep.subr.mxu0 %v5134
      %5760 = vmatpush1.msra.mxu0 %v5133
      %5761 = vmatprep.subr.mxu0 %v5160
      %5762 = vmatpush1.msra.mxu0 %v5159
      %5763 = vmatprep.subr.mxu0 %v5186
      %5764 = vmatpush1.msra.mxu0 %v5185
      %5765 = vmatprep.subr.mxu0 %v5275
      %5766 = vmatpush1.msra.mxu0 %v5272
      %5767 = vmatprep.subr.mxu0 0.0
      %5768 = vmatpush1.msra.mxu0 0.0
      %5769 = vmatprep.subr.mxu0 0.0
      %5770 = vmatpush1.msra.mxu0 0.0
      %5771 = vmatprep.subr.mxu0 0.0
      %5772 = vmatpush1.msra.mxu0 0.0
      %5773 = vmatprep.subr.mxu0 0.0
      %5774 = vmatpush1.msra.mxu0 0.0
      %5775 = vmatprep.subr.mxu0 0.0
      %5776 = vmatpush1.msra.mxu0 0.0
      %5777 = vmatprep.subr.mxu0 0.0
      %5778 = vmatpush1.msra.mxu0 0.0
      %5779 = vmatprep.subr.mxu0 0.0
      %5780 = vmatpush1.msra.mxu0 0.0
      %5781 = vmatprep.subr.mxu0 0.0
      %5782 = vmatpush1.msra.mxu0 0.0
      %5783 = vmatprep.subr.mxu0 0.0
      %5784 = vmatpush1.msra.mxu0 0.0
      %5785 = vmatprep.subr.mxu0 0.0
      %5786 = vmatpush1.msra.mxu0 0.0
      %5787 = vmatprep.subr.mxu0 0.0
      %5788 = vmatpush1.msra.mxu0 0.0
      %5789 = vmatprep.subr.mxu0 0.0
      %5790 = vmatpush1.msra.mxu0 0.0
      %5791 = vmatprep.subr.mxu0 0.0
      %5792 = vmatpush1.msra.mxu0 0.0
      %5793 = vmatprep.subr.mxu0 0.0
      %5794 = vmatpush1.msra.mxu0 0.0
      %5795 = vmatprep.subr.mxu0 0.0
      %5796 = vmatpush1.msra.mxu0 0.0
      %5797 = vmatprep.subr.mxu0 0.0
      %5798 = vmatpush1.msra.mxu0 0.0
      %5799 = vmatprep.subr.mxu0 0.0
      %5800 = vmatpush1.msra.mxu0 0.0
      %5801 = vmatprep.subr.mxu0 0.0
      %5802 = vmatpush1.msra.mxu0 0.0
      %5803 = vmatprep.mubr.f32.mxu0 0.0
      %5804 = vmatmul.mubr.f32.gmra.mrb[0].mxu0 %v5232
      %v5805 = vpop.f32.mrb[0].mxu0
      %v5806 = vadd.f32 %v5229, %v5805
      %v5807 = vpop.f32.mrb[0].mxu0
      %v5808 = vadd.f32 %v5229, %v5807
      %5809 = vdwg.mxu0
      %5810 = vmatprep.subr.mxu0 %v4876
      %5811 = vmatpush1.msra.mxu0 %v4875
      %5812 = vmatprep.subr.mxu0 %v4902
      %5813 = vmatpush1.msra.mxu0 %v4901
      %5814 = vmatprep.subr.mxu0 %v4928
      %5815 = vmatpush1.msra.mxu0 %v4927
      %5816 = vmatprep.subr.mxu0 %v4954
      %5817 = vmatpush1.msra.mxu0 %v4953
      %5818 = vmatprep.subr.mxu0 %v4980
      %5819 = vmatpush1.msra.mxu0 %v4979
      %5820 = vmatprep.subr.mxu0 %v5006
      %5821 = vmatpush1.msra.mxu0 %v5005
      %5822 = vmatprep.subr.mxu0 %v5032
      %5823 = vmatpush1.msra.mxu0 %v5031
      %5824 = vmatprep.subr.mxu0 %v5058
      %5825 = vmatpush1.msra.mxu0 %v5057
      %5826 = vmatprep.subr.mxu0 %v5084
      %5827 = vmatpush1.msra.mxu0 %v5083
      %5828 = vmatprep.subr.mxu0 %v5110
      %5829 = vmatpush1.msra.mxu0 %v5109
      %5830 = vmatprep.subr.mxu0 %v5136
      %5831 = vmatpush1.msra.mxu0 %v5135
      %5832 = vmatprep.subr.mxu0 %v5162
      %5833 = vmatpush1.msra.mxu0 %v5161
      %5834 = vmatprep.subr.mxu0 %v5188
      %5835 = vmatpush1.msra.mxu0 %v5187
      %5836 = vmatprep.subr.mxu0 %v5281
      %5837 = vmatpush1.msra.mxu0 %v5278
      %5838 = vmatprep.subr.mxu0 0.0
      %5839 = vmatpush1.msra.mxu0 0.0
      %5840 = vmatprep.subr.mxu0 0.0
      %5841 = vmatpush1.msra.mxu0 0.0
      %5842 = vmatprep.subr.mxu0 0.0
      %5843 = vmatpush1.msra.mxu0 0.0
      %5844 = vmatprep.subr.mxu0 0.0
      %5845 = vmatpush1.msra.mxu0 0.0
      %5846 = vmatprep.subr.mxu0 0.0
      %5847 = vmatpush1.msra.mxu0 0.0
      %5848 = vmatprep.subr.mxu0 0.0
      %5849 = vmatpush1.msra.mxu0 0.0
      %5850 = vmatprep.subr.mxu0 0.0
      %5851 = vmatpush1.msra.mxu0 0.0
      %5852 = vmatprep.subr.mxu0 0.0
      %5853 = vmatpush1.msra.mxu0 0.0
      %5854 = vmatprep.subr.mxu0 0.0
      %5855 = vmatpush1.msra.mxu0 0.0
      %5856 = vmatprep.subr.mxu0 0.0
      %5857 = vmatpush1.msra.mxu0 0.0
      %5858 = vmatprep.subr.mxu0 0.0
      %5859 = vmatpush1.msra.mxu0 0.0
      %5860 = vmatprep.subr.mxu0 0.0
      %5861 = vmatpush1.msra.mxu0 0.0
      %5862 = vmatprep.subr.mxu0 0.0
      %5863 = vmatpush1.msra.mxu0 0.0
      %5864 = vmatprep.subr.mxu0 0.0
      %5865 = vmatpush1.msra.mxu0 0.0
      %5866 = vmatprep.subr.mxu0 0.0
      %5867 = vmatpush1.msra.mxu0 0.0
      %5868 = vmatprep.subr.mxu0 0.0
      %5869 = vmatpush1.msra.mxu0 0.0
      %5870 = vmatprep.subr.mxu0 0.0
      %5871 = vmatpush1.msra.mxu0 0.0
      %5872 = vmatprep.subr.mxu0 0.0
      %5873 = vmatpush1.msra.mxu0 0.0
      %5874 = vmatprep.mubr.f32.mxu0 0.0
      %5875 = vmatmul.mubr.f32.gmra.mrb[0].mxu0 %v5232
      %v5876 = vpop.f32.mrb[0].mxu0
      %v5877 = vadd.f32 %v5229, %v5876
      %v5878 = vpop.f32.mrb[0].mxu0
      %v5879 = vadd.f32 %v5229, %v5878
      %5880 = vdwg.mxu0
      %5881 = vmatprep.subr.mxu0 %v4878
      %5882 = vmatpush1.msra.mxu0 %v4877
      %5883 = vmatprep.subr.mxu0 %v4904
      %5884 = vmatpush1.msra.mxu0 %v4903
      %5885 = vmatprep.subr.mxu0 %v4930
      %5886 = vmatpush1.msra.mxu0 %v4929
      %5887 = vmatprep.subr.mxu0 %v4956
      %5888 = vmatpush1.msra.mxu0 %v4955
      %5889 = vmatprep.subr.mxu0 %v4982
      %5890 = vmatpush1.msra.mxu0 %v4981
      %5891 = vmatprep.subr.mxu0 %v5008
      %5892 = vmatpush1.msra.mxu0 %v5007
      %5893 = vmatprep.subr.mxu0 %v5034
      %5894 = vmatpush1.msra.mxu0 %v5033
      %5895 = vmatprep.subr.mxu0 %v5060
      %5896 = vmatpush1.msra.mxu0 %v5059
      %5897 = vmatprep.subr.mxu0 %v5086
      %5898 = vmatpush1.msra.mxu0 %v5085
      %5899 = vmatprep.subr.mxu0 %v5112
      %5900 = vmatpush1.msra.mxu0 %v5111
      %5901 = vmatprep.subr.mxu0 %v5138
      %5902 = vmatpush1.msra.mxu0 %v5137
      %5903 = vmatprep.subr.mxu0 %v5164
      %5904 = vmatpush1.msra.mxu0 %v5163
      %5905 = vmatprep.subr.mxu0 %v5190
      %5906 = vmatpush1.msra.mxu0 %v5189
      %5907 = vmatprep.subr.mxu0 %v5287
      %5908 = vmatpush1.msra.mxu0 %v5284
      %5909 = vmatprep.subr.mxu0 0.0
      %5910 = vmatpush1.msra.mxu0 0.0
      %5911 = vmatprep.subr.mxu0 0.0
      %5912 = vmatpush1.msra.mxu0 0.0
      %5913 = vmatprep.subr.mxu0 0.0
      %5914 = vmatpush1.msra.mxu0 0.0
      %5915 = vmatprep.subr.mxu0 0.0
      %5916 = vmatpush1.msra.mxu0 0.0
      %5917 = vmatprep.subr.mxu0 0.0
      %5918 = vmatpush1.msra.mxu0 0.0
      %5919 = vmatprep.subr.mxu0 0.0
      %5920 = vmatpush1.msra.mxu0 0.0
      %5921 = vmatprep.subr.mxu0 0.0
      %5922 = vmatpush1.msra.mxu0 0.0
      %5923 = vmatprep.subr.mxu0 0.0
      %5924 = vmatpush1.msra.mxu0 0.0
      %5925 = vmatprep.subr.mxu0 0.0
      %5926 = vmatpush1.msra.mxu0 0.0
      %5927 = vmatprep.subr.mxu0 0.0
      %5928 = vmatpush1.msra.mxu0 0.0
      %5929 = vmatprep.subr.mxu0 0.0
      %5930 = vmatpush1.msra.mxu0 0.0
      %5931 = vmatprep.subr.mxu0 0.0
      %5932 = vmatpush1.msra.mxu0 0.0
      %5933 = vmatprep.subr.mxu0 0.0
      %5934 = vmatpush1.msra.mxu0 0.0
      %5935 = vmatprep.subr.mxu0 0.0
      %5936 = vmatpush1.msra.mxu0 0.0
      %5937 = vmatprep.subr.mxu0 0.0
      %5938 = vmatpush1.msra.mxu0 0.0
      %5939 = vmatprep.subr.mxu0 0.0
      %5940 = vmatpush1.msra.mxu0 0.0
      %5941 = vmatprep.subr.mxu0 0.0
      %5942 = vmatpush1.msra.mxu0 0.0
      %5943 = vmatprep.subr.mxu0 0.0
      %5944 = vmatpush1.msra.mxu0 0.0
      %5945 = vmatprep.mubr.f32.mxu0 0.0
      %5946 = vmatmul.mubr.f32.gmra.mrb[0].mxu0 %v5232
      %v5947 = vpop.f32.mrb[0].mxu0
      %v5948 = vadd.f32 %v5229, %v5947
      %v5949 = vpop.f32.mrb[0].mxu0
      %v5950 = vadd.f32 %v5229, %v5949
      %5951 = vdwg.mxu0
      %5952 = vmatprep.subr.mxu0 %v4880
      %5953 = vmatpush1.msra.mxu0 %v4879
      %5954 = vmatprep.subr.mxu0 %v4906
      %5955 = vmatpush1.msra.mxu0 %v4905
      %5956 = vmatprep.subr.mxu0 %v4932
      %5957 = vmatpush1.msra.mxu0 %v4931
      %5958 = vmatprep.subr.mxu0 %v4958
      %5959 = vmatpush1.msra.mxu0 %v4957
      %5960 = vmatprep.subr.mxu0 %v4984
      %5961 = vmatpush1.msra.mxu0 %v4983
      %5962 = vmatprep.subr.mxu0 %v5010
      %5963 = vmatpush1.msra.mxu0 %v5009
      %5964 = vmatprep.subr.mxu0 %v5036
      %5965 = vmatpush1.msra.mxu0 %v5035
      %5966 = vmatprep.subr.mxu0 %v5062
      %5967 = vmatpush1.msra.mxu0 %v5061
      %5968 = vmatprep.subr.mxu0 %v5088
      %5969 = vmatpush1.msra.mxu0 %v5087
      %5970 = vmatprep.subr.mxu0 %v5114
      %5971 = vmatpush1.msra.mxu0 %v5113
      %5972 = vmatprep.subr.mxu0 %v5140
      %5973 = vmatpush1.msra.mxu0 %v5139
      %5974 = vmatprep.subr.mxu0 %v5166
      %5975 = vmatpush1.msra.mxu0 %v5165
      %5976 = vmatprep.subr.mxu0 %v5192
      %5977 = vmatpush1.msra.mxu0 %v5191
      %5978 = vmatprep.subr.mxu0 %v5293
      %5979 = vmatpush1.msra.mxu0 %v5290
      %5980 = vmatprep.subr.mxu0 0.0
      %5981 = vmatpush1.msra.mxu0 0.0
      %5982 = vmatprep.subr.mxu0 0.0
      %5983 = vmatpush1.msra.mxu0 0.0
      %5984 = vmatprep.subr.mxu0 0.0
      %5985 = vmatpush1.msra.mxu0 0.0
      %5986 = vmatprep.subr.mxu0 0.0
      %5987 = vmatpush1.msra.mxu0 0.0
      %5988 = vmatprep.subr.mxu0 0.0
      %5989 = vmatpush1.msra.mxu0 0.0
      %5990 = vmatprep.subr.mxu0 0.0
      %5991 = vmatpush1.msra.mxu0 0.0
      %5992 = vmatprep.subr.mxu0 0.0
      %5993 = vmatpush1.msra.mxu0 0.0
      %5994 = vmatprep.subr.mxu0 0.0
      %5995 = vmatpush1.msra.mxu0 0.0
      %5996 = vmatprep.subr.mxu0 0.0
      %5997 = vmatpush1.msra.mxu0 0.0
      %5998 = vmatprep.subr.mxu0 0.0
      %5999 = vmatpush1.msra.mxu0 0.0
      %6000 = vmatprep.subr.mxu0 0.0
      %6001 = vmatpush1.msra.mxu0 0.0
      %6002 = vmatprep.subr.mxu0 0.0
      %6003 = vmatpush1.msra.mxu0 0.0
      %6004 = vmatprep.subr.mxu0 0.0
      %6005 = vmatpush1.msra.mxu0 0.0
      %6006 = vmatprep.subr.mxu0 0.0
      %6007 = vmatpush1.msra.mxu0 0.0
      %6008 = vmatprep.subr.mxu0 0.0
      %6009 = vmatpush1.msra.mxu0 0.0
      %6010 = vmatprep.subr.mxu0 0.0
      %6011 = vmatpush1.msra.mxu0 0.0
      %6012 = vmatprep.subr.mxu0 0.0
      %6013 = vmatpush1.msra.mxu0 0.0
      %6014 = vmatprep.subr.mxu0 0.0
      %6015 = vmatpush1.msra.mxu0 0.0
      %6016 = vmatprep.mubr.f32.mxu0 0.0
      %6017 = vmatmul.mubr.f32.gmra.mrb[0].mxu0 %v5232
      %v6018 = vpop.f32.mrb[0].mxu0
      %v6019 = vadd.f32 %v5229, %v6018
      %v6020 = vpop.f32.mrb[0].mxu0
      %v6021 = vadd.f32 %v5229, %v6020
      %6022 = vdwg.mxu0
      %6023 = vmatprep.subr.mxu0 %v4882
      %6024 = vmatpush1.msra.mxu0 %v4881
      %6025 = vmatprep.subr.mxu0 %v4908
      %6026 = vmatpush1.msra.mxu0 %v4907
      %6027 = vmatprep.subr.mxu0 %v4934
      %6028 = vmatpush1.msra.mxu0 %v4933
      %6029 = vmatprep.subr.mxu0 %v4960
      %6030 = vmatpush1.msra.mxu0 %v4959
      %6031 = vmatprep.subr.mxu0 %v4986
      %6032 = vmatpush1.msra.mxu0 %v4985
      %6033 = vmatprep.subr.mxu0 %v5012
      %6034 = vmatpush1.msra.mxu0 %v5011
      %6035 = vmatprep.subr.mxu0 %v5038
      %6036 = vmatpush1.msra.mxu0 %v5037
      %6037 = vmatprep.subr.mxu0 %v5064
      %6038 = vmatpush1.msra.mxu0 %v5063
      %6039 = vmatprep.subr.mxu0 %v5090
      %6040 = vmatpush1.msra.mxu0 %v5089
      %6041 = vmatprep.subr.mxu0 %v5116
      %6042 = vmatpush1.msra.mxu0 %v5115
      %6043 = vmatprep.subr.mxu0 %v5142
      %6044 = vmatpush1.msra.mxu0 %v5141
      %6045 = vmatprep.subr.mxu0 %v5168
      %6046 = vmatpush1.msra.mxu0 %v5167
      %6047 = vmatprep.subr.mxu0 %v5194
      %6048 = vmatpush1.msra.mxu0 %v5193
      %6049 = vmatprep.subr.mxu0 %v5299
      %6050 = vmatpush1.msra.mxu0 %v5296
      %6051 = vmatprep.subr.mxu0 0.0
      %6052 = vmatpush1.msra.mxu0 0.0
      %6053 = vmatprep.subr.mxu0 0.0
      %6054 = vmatpush1.msra.mxu0 0.0
      %6055 = vmatprep.subr.mxu0 0.0
      %6056 = vmatpush1.msra.mxu0 0.0
      %6057 = vmatprep.subr.mxu0 0.0
      %6058 = vmatpush1.msra.mxu0 0.0
      %6059 = vmatprep.subr.mxu0 0.0
      %6060 = vmatpush1.msra.mxu0 0.0
      %6061 = vmatprep.subr.mxu0 0.0
      %6062 = vmatpush1.msra.mxu0 0.0
      %6063 = vmatprep.subr.mxu0 0.0
      %6064 = vmatpush1.msra.mxu0 0.0
      %6065 = vmatprep.subr.mxu0 0.0
      %6066 = vmatpush1.msra.mxu0 0.0
      %6067 = vmatprep.subr.mxu0 0.0
      %6068 = vmatpush1.msra.mxu0 0.0
      %6069 = vmatprep.subr.mxu0 0.0
      %6070 = vmatpush1.msra.mxu0 0.0
      %6071 = vmatprep.subr.mxu0 0.0
      %6072 = vmatpush1.msra.mxu0 0.0
      %6073 = vmatprep.subr.mxu0 0.0
      %6074 = vmatpush1.msra.mxu0 0.0
      %6075 = vmatprep.subr.mxu0 0.0
      %6076 = vmatpush1.msra.mxu0 0.0
      %6077 = vmatprep.subr.mxu0 0.0
      %6078 = vmatpush1.msra.mxu0 0.0
      %6079 = vmatprep.subr.mxu0 0.0
      %6080 = vmatpush1.msra.mxu0 0.0
      %6081 = vmatprep.subr.mxu0 0.0
      %6082 = vmatpush1.msra.mxu0 0.0
      %6083 = vmatprep.subr.mxu0 0.0
      %6084 = vmatpush1.msra.mxu0 0.0
      %6085 = vmatprep.subr.mxu0 0.0
      %6086 = vmatpush1.msra.mxu0 0.0
      %6087 = vmatprep.mubr.f32.mxu0 0.0
      %6088 = vmatmul.mubr.f32.gmra.mrb[0].mxu0 %v5232
      %v6089 = vpop.f32.mrb[0].mxu0
      %v6090 = vadd.f32 %v5229, %v6089
      %v6091 = vpop.f32.mrb[0].mxu0
      %v6092 = vadd.f32 %v5229, %v6091
      %6093 = vdwg.mxu0
      %6094 = vmatprep.subr.mxu0 %v4884
      %6095 = vmatpush1.msra.mxu0 %v4883
      %6096 = vmatprep.subr.mxu0 %v4910
      %6097 = vmatpush1.msra.mxu0 %v4909
      %6098 = vmatprep.subr.mxu0 %v4936
      %6099 = vmatpush1.msra.mxu0 %v4935
      %6100 = vmatprep.subr.mxu0 %v4962
      %6101 = vmatpush1.msra.mxu0 %v4961
      %6102 = vmatprep.subr.mxu0 %v4988
      %6103 = vmatpush1.msra.mxu0 %v4987
      %6104 = vmatprep.subr.mxu0 %v5014
      %6105 = vmatpush1.msra.mxu0 %v5013
      %6106 = vmatprep.subr.mxu0 %v5040
      %6107 = vmatpush1.msra.mxu0 %v5039
      %6108 = vmatprep.subr.mxu0 %v5066
      %6109 = vmatpush1.msra.mxu0 %v5065
      %6110 = vmatprep.subr.mxu0 %v5092
      %6111 = vmatpush1.msra.mxu0 %v5091
      %6112 = vmatprep.subr.mxu0 %v5118
      %6113 = vmatpush1.msra.mxu0 %v5117
      %6114 = vmatprep.subr.mxu0 %v5144
      %6115 = vmatpush1.msra.mxu0 %v5143
      %6116 = vmatprep.subr.mxu0 %v5170
      %6117 = vmatpush1.msra.mxu0 %v5169
      %6118 = vmatprep.subr.mxu0 %v5196
      %6119 = vmatpush1.msra.mxu0 %v5195
      %6120 = vmatprep.subr.mxu0 %v5305
      %6121 = vmatpush1.msra.mxu0 %v5302
      %6122 = vmatprep.subr.mxu0 0.0
      %6123 = vmatpush1.msra.mxu0 0.0
      %6124 = vmatprep.subr.mxu0 0.0
      %6125 = vmatpush1.msra.mxu0 0.0
      %6126 = vmatprep.subr.mxu0 0.0
      %6127 = vmatpush1.msra.mxu0 0.0
      %6128 = vmatprep.subr.mxu0 0.0
      %6129 = vmatpush1.msra.mxu0 0.0
      %6130 = vmatprep.subr.mxu0 0.0
      %6131 = vmatpush1.msra.mxu0 0.0
      %6132 = vmatprep.subr.mxu0 0.0
      %6133 = vmatpush1.msra.mxu0 0.0
      %6134 = vmatprep.subr.mxu0 0.0
      %6135 = vmatpush1.msra.mxu0 0.0
      %6136 = vmatprep.subr.mxu0 0.0
      %6137 = vmatpush1.msra.mxu0 0.0
      %6138 = vmatprep.subr.mxu0 0.0
      %6139 = vmatpush1.msra.mxu0 0.0
      %6140 = vmatprep.subr.mxu0 0.0
      %6141 = vmatpush1.msra.mxu0 0.0
      %6142 = vmatprep.subr.mxu0 0.0
      %6143 = vmatpush1.msra.mxu0 0.0
      %6144 = vmatprep.subr.mxu0 0.0
      %6145 = vmatpush1.msra.mxu0 0.0
      %6146 = vmatprep.subr.mxu0 0.0
      %6147 = vmatpush1.msra.mxu0 0.0
      %6148 = vmatprep.subr.mxu0 0.0
      %6149 = vmatpush1.msra.mxu0 0.0
      %6150 = vmatprep.subr.mxu0 0.0
      %6151 = vmatpush1.msra.mxu0 0.0
      %6152 = vmatprep.subr.mxu0 0.0
      %6153 = vmatpush1.msra.mxu0 0.0
      %6154 = vmatprep.subr.mxu0 0.0
      %6155 = vmatpush1.msra.mxu0 0.0
      %6156 = vmatprep.subr.mxu0 0.0
      %6157 = vmatpush1.msra.mxu0 0.0
      %6158 = vmatprep.mubr.f32.mxu0 0.0
      %6159 = vmatmul.mubr.f32.gmra.mrb[0].mxu0 %v5232
      %v6160 = vpop.f32.mrb[0].mxu0
      %v6161 = vadd.f32 %v5229, %v6160
      %v6162 = vpop.f32.mrb[0].mxu0
      %v6163 = vadd.f32 %v5229, %v6162
      %6164 = vdwg.mxu0
      %6165 = vmatprep.subr.mxu0 %v4886
      %6166 = vmatpush1.msra.mxu0 %v4885
      %6167 = vmatprep.subr.mxu0 %v4912
      %6168 = vmatpush1.msra.mxu0 %v4911
      %6169 = vmatprep.subr.mxu0 %v4938
      %6170 = vmatpush1.msra.mxu0 %v4937
      %6171 = vmatprep.subr.mxu0 %v4964
      %6172 = vmatpush1.msra.mxu0 %v4963
      %6173 = vmatprep.subr.mxu0 %v4990
      %6174 = vmatpush1.msra.mxu0 %v4989
      %6175 = vmatprep.subr.mxu0 %v5016
      %6176 = vmatpush1.msra.mxu0 %v5015
      %6177 = vmatprep.subr.mxu0 %v5042
      %6178 = vmatpush1.msra.mxu0 %v5041
      %6179 = vmatprep.subr.mxu0 %v5068
      %6180 = vmatpush1.msra.mxu0 %v5067
      %6181 = vmatprep.subr.mxu0 %v5094
      %6182 = vmatpush1.msra.mxu0 %v5093
      %6183 = vmatprep.subr.mxu0 %v5120
      %6184 = vmatpush1.msra.mxu0 %v5119
      %6185 = vmatprep.subr.mxu0 %v5146
      %6186 = vmatpush1.msra.mxu0 %v5145
      %6187 = vmatprep.subr.mxu0 %v5172
      %6188 = vmatpush1.msra.mxu0 %v5171
      %6189 = vmatprep.subr.mxu0 %v5198
      %6190 = vmatpush1.msra.mxu0 %v5197
      %6191 = vmatprep.subr.mxu0 %v5311
      %6192 = vmatpush1.msra.mxu0 %v5308
      %6193 = vmatprep.subr.mxu0 0.0
      %6194 = vmatpush1.msra.mxu0 0.0
      %6195 = vmatprep.subr.mxu0 0.0
      %6196 = vmatpush1.msra.mxu0 0.0
      %6197 = vmatprep.subr.mxu0 0.0
      %6198 = vmatpush1.msra.mxu0 0.0
      %6199 = vmatprep.subr.mxu0 0.0
      %6200 = vmatpush1.msra.mxu0 0.0
      %6201 = vmatprep.subr.mxu0 0.0
      %6202 = vmatpush1.msra.mxu0 0.0
      %6203 = vmatprep.subr.mxu0 0.0
      %6204 = vmatpush1.msra.mxu0 0.0
      %6205 = vmatprep.subr.mxu0 0.0
      %6206 = vmatpush1.msra.mxu0 0.0
      %6207 = vmatprep.subr.mxu0 0.0
      %6208 = vmatpush1.msra.mxu0 0.0
      %6209 = vmatprep.subr.mxu0 0.0
      %6210 = vmatpush1.msra.mxu0 0.0
      %6211 = vmatprep.subr.mxu0 0.0
      %6212 = vmatpush1.msra.mxu0 0.0
      %6213 = vmatprep.subr.mxu0 0.0
      %6214 = vmatpush1.msra.mxu0 0.0
      %6215 = vmatprep.subr.mxu0 0.0
      %6216 = vmatpush1.msra.mxu0 0.0
      %6217 = vmatprep.subr.mxu0 0.0
      %6218 = vmatpush1.msra.mxu0 0.0
      %6219 = vmatprep.subr.mxu0 0.0
      %6220 = vmatpush1.msra.mxu0 0.0
      %6221 = vmatprep.subr.mxu0 0.0
      %6222 = vmatpush1.msra.mxu0 0.0
      %6223 = vmatprep.subr.mxu0 0.0
      %6224 = vmatpush1.msra.mxu0 0.0
      %6225 = vmatprep.subr.mxu0 0.0
      %6226 = vmatpush1.msra.mxu0 0.0
      %6227 = vmatprep.subr.mxu0 0.0
      %6228 = vmatpush1.msra.mxu0 0.0
      %6229 = vmatprep.mubr.f32.mxu0 0.0
      %6230 = vmatmul.mubr.f32.gmra.mrb[0].mxu0 %v5232
      %v6231 = vpop.f32.mrb[0].mxu0
      %v6232 = vadd.f32 %v5229, %v6231
      %v6233 = vpop.f32.mrb[0].mxu0
      %v6234 = vadd.f32 %v5229, %v6233
      %6235 = vdwg.mxu0
      %v6236 = vmax.f32 %v5380, 0.0
      %v6237 = vmax.f32 %v5382, 0.0
      %v6238 = vmax.f32 %v5451, 0.0
      %v6239 = vmax.f32 %v5453, 0.0
      %v6240 = vmax.f32 %v5522, 0.0
      %v6241 = vmax.f32 %v5524, 0.0
      %v6242 = vmax.f32 %v5593, 0.0
      %v6243 = vmax.f32 %v5595, 0.0
      %v6244 = vmax.f32 %v5664, 0.0
      %v6245 = vmax.f32 %v5666, 0.0
      %v6246 = vmax.f32 %v5735, 0.0
      %v6247 = vmax.f32 %v5737, 0.0
      %v6248 = vmax.f32 %v5806, 0.0
      %v6249 = vmax.f32 %v5808, 0.0
      %v6250 = vmax.f32 %v5877, 0.0
      %v6251 = vmax.f32 %v5879, 0.0
      %v6252 = vmax.f32 %v5948, 0.0
      %v6253 = vmax.f32 %v5950, 0.0
      %v6254 = vmax.f32 %v6019, 0.0
      %v6255 = vmax.f32 %v6021, 0.0
      %v6256 = vmax.f32 %v6090, 0.0
      %v6257 = vmax.f32 %v6092, 0.0
      %v6258 = vmax.f32 %v6161, 0.0
      %v6259 = vmax.f32 %v6163, 0.0
      %v6260 = vmax.f32 %v6232, 0.0
      %v6261 = vmax.f32 %v6234, 0.0
      %v6262 = vld [vmem:[%s3] sm:$0xff]
      %6264 = vset.pattern.permute.xlu0 0
      %6265 = vperm.xlu0 %6264, %v6262
      %v6266 = vpop.permute.xlu0 %6265
      %v6268 = vmul.f32 %v6236, %v6266
      %v6269 = vmul.f32 %v6237, %v6266
      %v6270 = vmul.f32 %v6238, %v6266
      %v6271 = vmul.f32 %v6239, %v6266
      %v6272 = vmul.f32 %v6240, %v6266
      %v6273 = vmul.f32 %v6241, %v6266
      %v6274 = vmul.f32 %v6242, %v6266
      %v6275 = vmul.f32 %v6243, %v6266
      %v6276 = vmul.f32 %v6244, %v6266
      %v6277 = vmul.f32 %v6245, %v6266
      %v6278 = vmul.f32 %v6246, %v6266
      %v6279 = vmul.f32 %v6247, %v6266
      %v6280 = vmul.f32 %v6248, %v6266
      %v6281 = vmul.f32 %v6249, %v6266
      %v6282 = vmul.f32 %v6250, %v6266
      %v6283 = vmul.f32 %v6251, %v6266
      %v6284 = vmul.f32 %v6252, %v6266
      %v6285 = vmul.f32 %v6253, %v6266
      %v6286 = vmul.f32 %v6254, %v6266
      %v6287 = vmul.f32 %v6255, %v6266
      %v6288 = vmul.f32 %v6256, %v6266
      %v6289 = vmul.f32 %v6257, %v6266
      %v6290 = vmul.f32 %v6258, %v6266
      %v6291 = vmul.f32 %v6259, %v6266
      %v6292 = vmul.f32 %v6260, %v6266
      %v6293 = vmul.f32 %v6261, %v6266
      %v6294 = vld [vmem:[%s4] sm:$0xff]
      %6296 = vset.pattern.permute.xlu0 0
      %6297 = vperm.xlu0 %6296, %v6294
      %v6298 = vpop.permute.xlu0 %6297
      %v6300 = vadd.f32 %v6268, %v6298
      %v6301 = vadd.f32 %v6269, %v6298
      %v6302 = vadd.f32 %v6270, %v6298
      %v6303 = vadd.f32 %v6271, %v6298
      %v6304 = vadd.f32 %v6272, %v6298
      %v6305 = vadd.f32 %v6273, %v6298
      %v6306 = vadd.f32 %v6274, %v6298
      %v6307 = vadd.f32 %v6275, %v6298
      %v6308 = vadd.f32 %v6276, %v6298
      %v6309 = vadd.f32 %v6277, %v6298
      %v6310 = vadd.f32 %v6278, %v6298
      %v6311 = vadd.f32 %v6279, %v6298
      %v6312 = vadd.f32 %v6280, %v6298
      %v6313 = vadd.f32 %v6281, %v6298
      %v6314 = vadd.f32 %v6282, %v6298
      %v6315 = vadd.f32 %v6283, %v6298
      %v6316 = vadd.f32 %v6284, %v6298
      %v6317 = vadd.f32 %v6285, %v6298
      %v6318 = vadd.f32 %v6286, %v6298
      %v6319 = vadd.f32 %v6287, %v6298
      %v6320 = vadd.f32 %v6288, %v6298
      %v6321 = vadd.f32 %v6289, %v6298
      %v6322 = vadd.f32 %v6290, %v6298
      %v6323 = vadd.f32 %v6291, %v6298
      %v6324 = vadd.f32 %v6292, %v6298
      %v6325 = vadd.f32 %v6293, %v6298
      %v6326 = vlaneseq
      %v6327 = vand.u32 %v6326, 127
      %v6328 = vadd.s32 %v6327, 128
      %v6329 = vadd.s32 %v6327, 256
      %v6330 = vadd.s32 %v6327, 384
      %v6331 = vadd.s32 %v6327, 512
      %v6332 = vadd.s32 %v6327, 640
      %v6333 = vadd.s32 %v6327, 768
      %v6334 = vadd.s32 %v6327, 896
      %v6335 = vadd.s32 %v6327, 1024
      %v6336 = vadd.s32 %v6327, 1152
      %v6337 = vadd.s32 %v6327, 1280
      %v6338 = vadd.s32 %v6327, 1408
      %v6339 = vadd.s32 %v6327, 1536
      %v6340 = vadd.s32 %v6327, 1664
      %v6341 = vadd.s32 %v6327, 1792
      %v6342 = vadd.s32 %v6327, 1920
      %v6343 = vadd.s32 %v6327, 2048
      %v6344 = vadd.s32 %v6327, 2176
      %v6345 = vadd.s32 %v6327, 2304
      %v6346 = vadd.s32 %v6327, 2432
      %v6347 = vadd.s32 %v6327, 2560
      %v6348 = vadd.s32 %v6327, 2688
      %v6349 = vadd.s32 %v6327, 2816
      %v6350 = vadd.s32 %v6327, 2944
      %v6351 = vadd.s32 %v6327, 3072
      %v6352 = vadd.s32 %v6327, 3200
      %vm6353 = vcmp.lt.s32.totalorder %v6327, 324
      %vm6354 = vcmp.lt.s32.totalorder %v6328, 324
      %vm6355 = vcmp.lt.s32.totalorder %v6329, 324
      %vm6356 = vcmp.lt.s32.totalorder %v6330, 324
      %vm6357 = vcmp.lt.s32.totalorder %v6331, 324
      %vm6358 = vcmp.lt.s32.totalorder %v6332, 324
      %vm6359 = vcmp.lt.s32.totalorder %v6333, 324
      %vm6360 = vcmp.lt.s32.totalorder %v6334, 324
      %vm6361 = vcmp.lt.s32.totalorder %v6335, 324
      %vm6362 = vcmp.lt.s32.totalorder %v6336, 324
      %vm6363 = vcmp.lt.s32.totalorder %v6337, 324
      %vm6364 = vcmp.lt.s32.totalorder %v6338, 324
      %vm6365 = vcmp.lt.s32.totalorder %v6339, 324
      %vm6366 = vcmp.lt.s32.totalorder %v6340, 324
      %vm6367 = vcmp.lt.s32.totalorder %v6341, 324
      %vm6368 = vcmp.lt.s32.totalorder %v6342, 324
      %vm6369 = vcmp.lt.s32.totalorder %v6343, 324
      %vm6370 = vcmp.lt.s32.totalorder %v6344, 324
      %vm6371 = vcmp.lt.s32.totalorder %v6345, 324
      %vm6372 = vcmp.lt.s32.totalorder %v6346, 324
      %vm6373 = vcmp.lt.s32.totalorder %v6347, 324
      %vm6374 = vcmp.lt.s32.totalorder %v6348, 324
      %vm6375 = vcmp.lt.s32.totalorder %v6349, 324
      %vm6376 = vcmp.lt.s32.totalorder %v6350, 324
      %vm6377 = vcmp.lt.s32.totalorder %v6351, 324
      %vm6378 = vcmp.lt.s32.totalorder %v6352, 324
      %p6379 = scmp.eq.s32.totalorder %s25, 0
      %s6380 = scalar_select %p6379, 1, 0
      %v6381 = vstv %s6380
      %vm6382 = vcmp.eq.s32.totalorder %v6381, 1
      %vm6383 = vmand %vm6353, %vm6382
      %vm6384 = vmand %vm6354, %vm6382
      %vm6385 = vmand %vm6355, %vm6382
      %vm6386 = vmand %vm6356, %vm6382
      %vm6387 = vmand %vm6357, %vm6382
      %vm6388 = vmand %vm6358, %vm6382
      %vm6389 = vmand %vm6359, %vm6382
      %vm6390 = vmand %vm6360, %vm6382
      %vm6391 = vmand %vm6361, %vm6382
      %vm6392 = vmand %vm6362, %vm6382
      %vm6393 = vmand %vm6363, %vm6382
      %vm6394 = vmand %vm6364, %vm6382
      %vm6395 = vmand %vm6365, %vm6382
      %vm6396 = vmand %vm6366, %vm6382
      %vm6397 = vmand %vm6367, %vm6382
      %vm6398 = vmand %vm6368, %vm6382
      %vm6399 = vmand %vm6369, %vm6382
      %vm6400 = vmand %vm6370, %vm6382
      %vm6401 = vmand %vm6371, %vm6382
      %vm6402 = vmand %vm6372, %vm6382
      %vm6403 = vmand %vm6373, %vm6382
      %vm6404 = vmand %vm6374, %vm6382
      %vm6405 = vmand %vm6375, %vm6382
      %vm6406 = vmand %vm6376, %vm6382
      %vm6407 = vmand %vm6377, %vm6382
      %vm6408 = vmand %vm6378, %vm6382
      %vm6409 = vcmp.ge.s32.totalorder %v6327, 2916
      %vm6410 = vcmp.ge.s32.totalorder %v6328, 2916
      %vm6411 = vcmp.ge.s32.totalorder %v6329, 2916
      %vm6412 = vcmp.ge.s32.totalorder %v6330, 2916
      %vm6413 = vcmp.ge.s32.totalorder %v6331, 2916
      %vm6414 = vcmp.ge.s32.totalorder %v6332, 2916
      %vm6415 = vcmp.ge.s32.totalorder %v6333, 2916
      %vm6416 = vcmp.ge.s32.totalorder %v6334, 2916
      %vm6417 = vcmp.ge.s32.totalorder %v6335, 2916
      %vm6418 = vcmp.ge.s32.totalorder %v6336, 2916
      %vm6419 = vcmp.ge.s32.totalorder %v6337, 2916
      %vm6420 = vcmp.ge.s32.totalorder %v6338, 2916
      %vm6421 = vcmp.ge.s32.totalorder %v6339, 2916
      %vm6422 = vcmp.ge.s32.totalorder %v6340, 2916
      %vm6423 = vcmp.ge.s32.totalorder %v6341, 2916
      %vm6424 = vcmp.ge.s32.totalorder %v6342, 2916
      %vm6425 = vcmp.ge.s32.totalorder %v6343, 2916
      %vm6426 = vcmp.ge.s32.totalorder %v6344, 2916
      %vm6427 = vcmp.ge.s32.totalorder %v6345, 2916
      %vm6428 = vcmp.ge.s32.totalorder %v6346, 2916
      %vm6429 = vcmp.ge.s32.totalorder %v6347, 2916
      %vm6430 = vcmp.ge.s32.totalorder %v6348, 2916
      %vm6431 = vcmp.ge.s32.totalorder %v6349, 2916
      %vm6432 = vcmp.ge.s32.totalorder %v6350, 2916
      %vm6433 = vcmp.ge.s32.totalorder %v6351, 2916
      %vm6434 = vcmp.ge.s32.totalorder %v6352, 2916
      %p6435 = scmp.eq.s32.totalorder %s25, 1
      %s6436 = scalar_select %p6435, 1, 0
      %v6437 = vstv %s6436
      %vm6438 = vcmp.eq.s32.totalorder %v6437, 1
      %vm6439 = vmand %vm6409, %vm6438
      %vm6440 = vmand %vm6410, %vm6438
      %vm6441 = vmand %vm6411, %vm6438
      %vm6442 = vmand %vm6412, %vm6438
      %vm6443 = vmand %vm6413, %vm6438
      %vm6444 = vmand %vm6414, %vm6438
      %vm6445 = vmand %vm6415, %vm6438
      %vm6446 = vmand %vm6416, %vm6438
      %vm6447 = vmand %vm6417, %vm6438
      %vm6448 = vmand %vm6418, %vm6438
      %vm6449 = vmand %vm6419, %vm6438
      %vm6450 = vmand %vm6420, %vm6438
      %vm6451 = vmand %vm6421, %vm6438
      %vm6452 = vmand %vm6422, %vm6438
      %vm6453 = vmand %vm6423, %vm6438
      %vm6454 = vmand %vm6424, %vm6438
      %vm6455 = vmand %vm6425, %vm6438
      %vm6456 = vmand %vm6426, %vm6438
      %vm6457 = vmand %vm6427, %vm6438
      %vm6458 = vmand %vm6428, %vm6438
      %vm6459 = vmand %vm6429, %vm6438
      %vm6460 = vmand %vm6430, %vm6438
      %vm6461 = vmand %vm6431, %vm6438
      %vm6462 = vmand %vm6432, %vm6438
      %vm6463 = vmand %vm6433, %vm6438
      %vm6464 = vmand %vm6434, %vm6438
      %vm6465 = vmor %vm6383, %vm6439
      %vm6466 = vmor %vm6384, %vm6440
      %vm6467 = vmor %vm6385, %vm6441
      %vm6468 = vmor %vm6386, %vm6442
      %vm6469 = vmor %vm6387, %vm6443
      %vm6470 = vmor %vm6388, %vm6444
      %vm6471 = vmor %vm6389, %vm6445
      %vm6472 = vmor %vm6390, %vm6446
      %vm6473 = vmor %vm6391, %vm6447
      %vm6474 = vmor %vm6392, %vm6448
      %vm6475 = vmor %vm6393, %vm6449
      %vm6476 = vmor %vm6394, %vm6450
      %vm6477 = vmor %vm6395, %vm6451
      %vm6478 = vmor %vm6396, %vm6452
      %vm6479 = vmor %vm6397, %vm6453
      %vm6480 = vmor %vm6398, %vm6454
      %vm6481 = vmor %vm6399, %vm6455
      %vm6482 = vmor %vm6400, %vm6456
      %vm6483 = vmor %vm6401, %vm6457
      %vm6484 = vmor %vm6402, %vm6458
      %vm6485 = vmor %vm6403, %vm6459
      %vm6486 = vmor %vm6404, %vm6460
      %vm6487 = vmor %vm6405, %vm6461
      %vm6488 = vmor %vm6406, %vm6462
      %vm6489 = vmor %vm6407, %vm6463
      %vm6490 = vmor %vm6408, %vm6464
      %v6491 = vsel %vm6465, 1, 0
      %v6492 = vsel %vm6466, 1, 0
      %v6493 = vsel %vm6467, 1, 0
      %v6494 = vsel %vm6468, 1, 0
      %v6495 = vsel %vm6469, 1, 0
      %v6496 = vsel %vm6470, 1, 0
      %v6497 = vsel %vm6471, 1, 0
      %v6498 = vsel %vm6472, 1, 0
      %v6499 = vsel %vm6473, 1, 0
      %v6500 = vsel %vm6474, 1, 0
      %v6501 = vsel %vm6475, 1, 0
      %v6502 = vsel %vm6476, 1, 0
      %v6503 = vsel %vm6477, 1, 0
      %v6504 = vsel %vm6478, 1, 0
      %v6505 = vsel %vm6479, 1, 0
      %v6506 = vsel %vm6480, 1, 0
      %v6507 = vsel %vm6481, 1, 0
      %v6508 = vsel %vm6482, 1, 0
      %v6509 = vsel %vm6483, 1, 0
      %v6510 = vsel %vm6484, 1, 0
      %v6511 = vsel %vm6485, 1, 0
      %v6512 = vsel %vm6486, 1, 0
      %v6513 = vsel %vm6487, 1, 0
      %v6514 = vsel %vm6488, 1, 0
      %v6515 = vsel %vm6489, 1, 0
      %v6516 = vsel %vm6490, 1, 0
      %vm6517 = vcmp.eq.s32.totalorder %v6491, 1
      %vm6518 = vcmp.eq.s32.totalorder %v6492, 1
      %vm6519 = vcmp.eq.s32.totalorder %v6493, 1
      %vm6520 = vcmp.eq.s32.totalorder %v6494, 1
      %vm6521 = vcmp.eq.s32.totalorder %v6495, 1
      %vm6522 = vcmp.eq.s32.totalorder %v6496, 1
      %vm6523 = vcmp.eq.s32.totalorder %v6497, 1
      %vm6524 = vcmp.eq.s32.totalorder %v6498, 1
      %vm6525 = vcmp.eq.s32.totalorder %v6499, 1
      %vm6526 = vcmp.eq.s32.totalorder %v6500, 1
      %vm6527 = vcmp.eq.s32.totalorder %v6501, 1
      %vm6528 = vcmp.eq.s32.totalorder %v6502, 1
      %vm6529 = vcmp.eq.s32.totalorder %v6503, 1
      %vm6530 = vcmp.eq.s32.totalorder %v6504, 1
      %vm6531 = vcmp.eq.s32.totalorder %v6505, 1
      %vm6532 = vcmp.eq.s32.totalorder %v6506, 1
      %vm6533 = vcmp.eq.s32.totalorder %v6507, 1
      %vm6534 = vcmp.eq.s32.totalorder %v6508, 1
      %vm6535 = vcmp.eq.s32.totalorder %v6509, 1
      %vm6536 = vcmp.eq.s32.totalorder %v6510, 1
      %vm6537 = vcmp.eq.s32.totalorder %v6511, 1
      %vm6538 = vcmp.eq.s32.totalorder %v6512, 1
      %vm6539 = vcmp.eq.s32.totalorder %v6513, 1
      %vm6540 = vcmp.eq.s32.totalorder %v6514, 1
      %vm6541 = vcmp.eq.s32.totalorder %v6515, 1
      %vm6542 = vcmp.eq.s32.totalorder %v6516, 1
      %v6543 = vsel %vm6517, 0.0, %v6300
      %v6544 = vsel %vm6518, 0.0, %v6301
      %v6545 = vsel %vm6519, 0.0, %v6302
      %v6546 = vsel %vm6520, 0.0, %v6303
      %v6547 = vsel %vm6521, 0.0, %v6304
      %v6548 = vsel %vm6522, 0.0, %v6305
      %v6549 = vsel %vm6523, 0.0, %v6306
      %v6550 = vsel %vm6524, 0.0, %v6307
      %v6551 = vsel %vm6525, 0.0, %v6308
      %v6552 = vsel %vm6526, 0.0, %v6309
      %v6553 = vsel %vm6527, 0.0, %v6310
      %v6554 = vsel %vm6528, 0.0, %v6311
      %v6555 = vsel %vm6529, 0.0, %v6312
      %v6556 = vsel %vm6530, 0.0, %v6313
      %v6557 = vsel %vm6531, 0.0, %v6314
      %v6558 = vsel %vm6532, 0.0, %v6315
      %v6559 = vsel %vm6533, 0.0, %v6316
      %v6560 = vsel %vm6534, 0.0, %v6317
      %v6561 = vsel %vm6535, 0.0, %v6318
      %v6562 = vsel %vm6536, 0.0, %v6319
      %v6563 = vsel %vm6537, 0.0, %v6320
      %v6564 = vsel %vm6538, 0.0, %v6321
      %v6565 = vsel %vm6539, 0.0, %v6322
      %v6566 = vsel %vm6540, 0.0, %v6323
      %v6567 = vsel %vm6541, 0.0, %v6324
      %v6568 = vsel %vm6542, 0.0, %v6325
      %6569 = vst [vmem:[#allocation3] sm:$0xff] %v6543
      %6570 = vst [vmem:[#allocation3 + $0x8] sm:$0xff] %v6544
      %6571 = vst [vmem:[#allocation3 + $0x10] sm:$0xff] %v6545
      %6572 = vst [vmem:[#allocation3 + $0x18] sm:$0xff] %v6546
      %6573 = vst [vmem:[#allocation3 + $0x20] sm:$0xff] %v6547
      %6574 = vst [vmem:[#allocation3 + $0x28] sm:$0xff] %v6548
      %6575 = vst [vmem:[#allocation3 + $0x30] sm:$0xff] %v6549
      %6576 = vst [vmem:[#allocation3 + $0x38] sm:$0xff] %v6550
      %6577 = vst [vmem:[#allocation3 + $0x40] sm:$0xff] %v6551
      %6578 = vst [vmem:[#allocation3 + $0x48] sm:$0xff] %v6552
      %6579 = vst [vmem:[#allocation3 + $0x50] sm:$0xff] %v6553
      %6580 = vst [vmem:[#allocation3 + $0x58] sm:$0xff] %v6554
      %6581 = vst [vmem:[#allocation3 + $0x60] sm:$0xff] %v6555
      %6582 = vst [vmem:[#allocation3 + $0x68] sm:$0xff] %v6556
      %6583 = vst [vmem:[#allocation3 + $0x70] sm:$0xff] %v6557
      %6584 = vst [vmem:[#allocation3 + $0x78] sm:$0xff] %v6558
      %6585 = vst [vmem:[#allocation3 + $0x80] sm:$0xff] %v6559
      %6586 = vst [vmem:[#allocation3 + $0x88] sm:$0xff] %v6560
      %6587 = vst [vmem:[#allocation3 + $0x90] sm:$0xff] %v6561
      %6588 = vst [vmem:[#allocation3 + $0x98] sm:$0xff] %v6562
      %vm6589 = vcmask 261120
      %6590 = vst.msk [vmem:[#allocation3 + $0xa0] sm:$0xff] %vm6589, %v6563
      %6612 = vrot.lane.b32.xlu0 %v6545, 60
      %v6613 = vpop.permute.xlu0 %6612
      %6614 = vrot.lane.b32.xlu0 %v6546, 60
      %v6615 = vpop.permute.xlu0 %6614
      %6616 = vrot.lane.b32.xlu0 %v6547, 60
      %v6617 = vpop.permute.xlu0 %6616
      %6618 = vrot.lane.b32.xlu0 %v6548, 60
      %v6619 = vpop.permute.xlu0 %6618
      %6620 = vrot.lane.b32.xlu0 %v6549, 60
      %v6621 = vpop.permute.xlu0 %6620
      %6622 = vrot.lane.b32.xlu0 %v6550, 60
      %v6623 = vpop.permute.xlu0 %6622
      %6624 = vrot.lane.b32.xlu0 %v6551, 60
      %v6625 = vpop.permute.xlu0 %6624
      %6626 = vrot.lane.b32.xlu0 %v6552, 60
      %v6627 = vpop.permute.xlu0 %6626
      %6628 = vrot.lane.b32.xlu0 %v6553, 60
      %v6629 = vpop.permute.xlu0 %6628
      %6630 = vrot.lane.b32.xlu0 %v6554, 60
      %v6631 = vpop.permute.xlu0 %6630
      %6632 = vrot.lane.b32.xlu0 %v6555, 60
      %v6633 = vpop.permute.xlu0 %6632
      %6634 = vrot.lane.b32.xlu0 %v6556, 60
      %v6635 = vpop.permute.xlu0 %6634
      %6636 = vrot.lane.b32.xlu0 %v6557, 60
      %v6637 = vpop.permute.xlu0 %6636
      %6638 = vrot.lane.b32.xlu0 %v6558, 60
      %v6639 = vpop.permute.xlu0 %6638
      %6640 = vrot.lane.b32.xlu0 %v6559, 60
      %v6641 = vpop.permute.xlu0 %6640
      %6642 = vrot.lane.b32.xlu0 %v6560, 60
      %v6643 = vpop.permute.xlu0 %6642
      %6644 = vrot.lane.b32.xlu0 %v6561, 60
      %v6645 = vpop.permute.xlu0 %6644
      %6646 = vrot.lane.b32.xlu0 %v6562, 60
      %v6647 = vpop.permute.xlu0 %6646
      %6648 = vrot.lane.b32.xlu0 %v6563, 60
      %v6649 = vpop.permute.xlu0 %6648
      %6650 = vrot.lane.b32.xlu0 %v6564, 60
      %v6651 = vpop.permute.xlu0 %6650
      %6652 = vrot.lane.b32.xlu0 %v6565, 60
      %v6653 = vpop.permute.xlu0 %6652
      %v6654 = vsel %vm1892, %v6613, %v6615
      %v6655 = vsel %vm1892, %v6615, %v6617
      %v6656 = vsel %vm1892, %v6617, %v6619
      %v6657 = vsel %vm1892, %v6619, %v6621
      %v6658 = vsel %vm1892, %v6621, %v6623
      %v6659 = vsel %vm1892, %v6623, %v6625
      %v6660 = vsel %vm1892, %v6625, %v6627
      %v6661 = vsel %vm1892, %v6627, %v6629
      %v6662 = vsel %vm1892, %v6629, %v6631
      %v6663 = vsel %vm1892, %v6631, %v6633
      %v6664 = vsel %vm1892, %v6633, %v6635
      %v6665 = vsel %vm1892, %v6635, %v6637
      %v6666 = vsel %vm1892, %v6637, %v6639
      %v6667 = vsel %vm1892, %v6639, %v6641
      %v6668 = vsel %vm1892, %v6641, %v6643
      %v6669 = vsel %vm1892, %v6643, %v6645
      %v6670 = vsel %vm1892, %v6645, %v6647
      %v6671 = vsel %vm1892, %v6647, %v6649
      %v6672 = vsel %vm1892, %v6649, %v6651
      %v6673 = vsel %vm1892, %v6651, %v6653
      %6695 = vst [vmem:[#allocation3 + $0xa8] sm:$0xff] %v6654
      %6696 = vst [vmem:[#allocation3 + $0xb0] sm:$0xff] %v6655
      %6697 = vst [vmem:[#allocation3 + $0xb8] sm:$0xff] %v6656
      %6698 = vst [vmem:[#allocation3 + $0xc0] sm:$0xff] %v6657
      %6699 = vst [vmem:[#allocation3 + $0xc8] sm:$0xff] %v6658
      %6700 = vst [vmem:[#allocation3 + $0xd0] sm:$0xff] %v6659
      %6701 = vst [vmem:[#allocation3 + $0xd8] sm:$0xff] %v6660
      %6702 = vst [vmem:[#allocation3 + $0xe0] sm:$0xff] %v6661
      %6703 = vst [vmem:[#allocation3 + $0xe8] sm:$0xff] %v6662
      %6704 = vst [vmem:[#allocation3 + $0xf0] sm:$0xff] %v6663
      %6705 = vst [vmem:[#allocation3 + $0xf8] sm:$0xff] %v6664
      %6706 = vst [vmem:[#allocation3 + $0x100] sm:$0xff] %v6665
      %6707 = vst [vmem:[#allocation3 + $0x108] sm:$0xff] %v6666
      %6708 = vst [vmem:[#allocation3 + $0x110] sm:$0xff] %v6667
      %6709 = vst [vmem:[#allocation3 + $0x118] sm:$0xff] %v6668
      %6710 = vst [vmem:[#allocation3 + $0x120] sm:$0xff] %v6669
      %6711 = vst [vmem:[#allocation3 + $0x128] sm:$0xff] %v6670
      %6712 = vst [vmem:[#allocation3 + $0x130] sm:$0xff] %v6671
      %6713 = vst [vmem:[#allocation3 + $0x138] sm:$0xff] %v6672
      %6714 = vst [vmem:[#allocation3 + $0x140] sm:$0xff] %v6673
      %6715 = vst.msk [vmem:[#allocation3 + $0x148] sm:$0xff] %vm6589, %v6653
      %6719 = vrot.lane.b32.xlu0 %v6548, 120
      %v6720 = vpop.permute.xlu0 %6719
      %6721 = vrot.lane.b32.xlu0 %v6549, 120
      %v6722 = vpop.permute.xlu0 %6721
      %6723 = vrot.lane.b32.xlu0 %v6550, 120
      %v6724 = vpop.permute.xlu0 %6723
      %6725 = vrot.lane.b32.xlu0 %v6551, 120
      %v6726 = vpop.permute.xlu0 %6725
      %6727 = vrot.lane.b32.xlu0 %v6552, 120
      %v6728 = vpop.permute.xlu0 %6727
      %6729 = vrot.lane.b32.xlu0 %v6553, 120
      %v6730 = vpop.permute.xlu0 %6729
      %6731 = vrot.lane.b32.xlu0 %v6554, 120
      %v6732 = vpop.permute.xlu0 %6731
      %6733 = vrot.lane.b32.xlu0 %v6555, 120
      %v6734 = vpop.permute.xlu0 %6733
      %6735 = vrot.lane.b32.xlu0 %v6556, 120
      %v6736 = vpop.permute.xlu0 %6735
      %6737 = vrot.lane.b32.xlu0 %v6557, 120
      %v6738 = vpop.permute.xlu0 %6737
      %6739 = vrot.lane.b32.xlu0 %v6558, 120
      %v6740 = vpop.permute.xlu0 %6739
      %6741 = vrot.lane.b32.xlu0 %v6559, 120
      %v6742 = vpop.permute.xlu0 %6741
      %6743 = vrot.lane.b32.xlu0 %v6560, 120
      %v6744 = vpop.permute.xlu0 %6743
      %6745 = vrot.lane.b32.xlu0 %v6561, 120
      %v6746 = vpop.permute.xlu0 %6745
      %6747 = vrot.lane.b32.xlu0 %v6562, 120
      %v6748 = vpop.permute.xlu0 %6747
      %6749 = vrot.lane.b32.xlu0 %v6563, 120
      %v6750 = vpop.permute.xlu0 %6749
      %6751 = vrot.lane.b32.xlu0 %v6564, 120
      %v6752 = vpop.permute.xlu0 %6751
      %6753 = vrot.lane.b32.xlu0 %v6565, 120
      %v6754 = vpop.permute.xlu0 %6753
      %6755 = vrot.lane.b32.xlu0 %v6566, 120
      %v6756 = vpop.permute.xlu0 %6755
      %6757 = vrot.lane.b32.xlu0 %v6567, 120
      %v6758 = vpop.permute.xlu0 %6757
      %6759 = vrot.lane.b32.xlu0 %v6568, 120
      %v6760 = vpop.permute.xlu0 %6759
      %v6761 = vsel %vm3430, %v6720, %v6722
      %v6762 = vsel %vm3430, %v6722, %v6724
      %v6763 = vsel %vm3430, %v6724, %v6726
      %v6764 = vsel %vm3430, %v6726, %v6728
      %v6765 = vsel %vm3430, %v6728, %v6730
      %v6766 = vsel %vm3430, %v6730, %v6732
      %v6767 = vsel %vm3430, %v6732, %v6734
      %v6768 = vsel %vm3430, %v6734, %v6736
      %v6769 = vsel %vm3430, %v6736, %v6738
      %v6770 = vsel %vm3430, %v6738, %v6740
      %v6771 = vsel %vm3430, %v6740, %v6742
      %v6772 = vsel %vm3430, %v6742, %v6744
      %v6773 = vsel %vm3430, %v6744, %v6746
      %v6774 = vsel %vm3430, %v6746, %v6748
      %v6775 = vsel %vm3430, %v6748, %v6750
      %v6776 = vsel %vm3430, %v6750, %v6752
      %v6777 = vsel %vm3430, %v6752, %v6754
      %v6778 = vsel %vm3430, %v6754, %v6756
      %v6779 = vsel %vm3430, %v6756, %v6758
      %v6780 = vsel %vm3430, %v6758, %v6760
      %6802 = vst [vmem:[#allocation3 + $0x150] sm:$0xff] %v6761
      %6803 = vst [vmem:[#allocation3 + $0x158] sm:$0xff] %v6762
      %6804 = vst [vmem:[#allocation3 + $0x160] sm:$0xff] %v6763
      %6805 = vst [vmem:[#allocation3 + $0x168] sm:$0xff] %v6764
      %6806 = vst [vmem:[#allocation3 + $0x170] sm:$0xff] %v6765
      %6807 = vst [vmem:[#allocation3 + $0x178] sm:$0xff] %v6766
      %6808 = vst [vmem:[#allocation3 + $0x180] sm:$0xff] %v6767
      %6809 = vst [vmem:[#allocation3 + $0x188] sm:$0xff] %v6768
      %6810 = vst [vmem:[#allocation3 + $0x190] sm:$0xff] %v6769
      %6811 = vst [vmem:[#allocation3 + $0x198] sm:$0xff] %v6770
      %6812 = vst [vmem:[#allocation3 + $0x1a0] sm:$0xff] %v6771
      %6813 = vst [vmem:[#allocation3 + $0x1a8] sm:$0xff] %v6772
      %6814 = vst [vmem:[#allocation3 + $0x1b0] sm:$0xff] %v6773
      %6815 = vst [vmem:[#allocation3 + $0x1b8] sm:$0xff] %v6774
      %6816 = vst [vmem:[#allocation3 + $0x1c0] sm:$0xff] %v6775
      %6817 = vst [vmem:[#allocation3 + $0x1c8] sm:$0xff] %v6776
      %6818 = vst [vmem:[#allocation3 + $0x1d0] sm:$0xff] %v6777
      %6819 = vst [vmem:[#allocation3 + $0x1d8] sm:$0xff] %v6778
      %6820 = vst [vmem:[#allocation3 + $0x1e0] sm:$0xff] %v6779
      %6821 = vst [vmem:[#allocation3 + $0x1e8] sm:$0xff] %v6780
      %6822 = vst.msk [vmem:[#allocation3 + $0x1f0] sm:$0xff] %vm6589, %v6760
      %v6823 = vld [vmem:[%s5] sm:$0xff]
      %v6824 = vld [vmem:[#allocation3] sm:$0xff]
      %v6825 = vld [vmem:[#allocation3 + $0x8] sm:$0xff]
      %v6826 = vld [vmem:[#allocation3 + $0x10] sm:$0xff]
      %v6827 = vld [vmem:[#allocation3 + $0x18] sm:$0xff]
      %v6828 = vld [vmem:[#allocation3 + $0x20] sm:$0xff]
      %v6829 = vld [vmem:[#allocation3 + $0x28] sm:$0xff]
      %v6830 = vld [vmem:[#allocation3 + $0x30] sm:$0xff]
      %v6831 = vld [vmem:[#allocation3 + $0x38] sm:$0xff]
      %v6832 = vld [vmem:[#allocation3 + $0x40] sm:$0xff]
      %v6833 = vld [vmem:[#allocation3 + $0x48] sm:$0xff]
      %v6834 = vld [vmem:[#allocation3 + $0x50] sm:$0xff]
      %v6835 = vld [vmem:[#allocation3 + $0x58] sm:$0xff]
      %v6836 = vld [vmem:[#allocation3 + $0x60] sm:$0xff]
      %v6837 = vld [vmem:[#allocation3 + $0x68] sm:$0xff]
      %v6838 = vld [vmem:[#allocation3 + $0x70] sm:$0xff]
      %v6839 = vld [vmem:[#allocation3 + $0x78] sm:$0xff]
      %v6840 = vld [vmem:[#allocation3 + $0x80] sm:$0xff]
      %v6841 = vld [vmem:[#allocation3 + $0x88] sm:$0xff]
      %v6842 = vld [vmem:[#allocation3 + $0x90] sm:$0xff]
      %v6843 = vld [vmem:[#allocation3 + $0x98] sm:$0xff]
      %v6844 = vld [vmem:[#allocation3 + $0xa0] sm:$0xff]
      %v6845 = vld [vmem:[#allocation3 + $0xa8] sm:$0xff]
      %v6846 = vld [vmem:[#allocation3 + $0xb0] sm:$0xff]
      %v6847 = vld [vmem:[#allocation3 + $0xb8] sm:$0xff]
      %v6848 = vld [vmem:[#allocation3 + $0xc0] sm:$0xff]
      %v6849 = vld [vmem:[#allocation3 + $0xc8] sm:$0xff]
      %v6850 = vld [vmem:[#allocation3 + $0xd0] sm:$0xff]
      %v6851 = vld [vmem:[#allocation3 + $0xd8] sm:$0xff]
      %v6852 = vld [vmem:[#allocation3 + $0xe0] sm:$0xff]
      %v6853 = vld [vmem:[#allocation3 + $0xe8] sm:$0xff]
      %v6854 = vld [vmem:[#allocation3 + $0xf0] sm:$0xff]
      %v6855 = vld [vmem:[#allocation3 + $0xf8] sm:$0xff]
      %v6856 = vld [vmem:[#allocation3 + $0x100] sm:$0xff]
      %v6857 = vld [vmem:[#allocation3 + $0x108] sm:$0xff]
      %v6858 = vld [vmem:[#allocation3 + $0x110] sm:$0xff]
      %v6859 = vld [vmem:[#allocation3 + $0x118] sm:$0xff]
      %v6860 = vld [vmem:[#allocation3 + $0x120] sm:$0xff]
      %v6861 = vld [vmem:[#allocation3 + $0x128] sm:$0xff]
      %v6862 = vld [vmem:[#allocation3 + $0x130] sm:$0xff]
      %v6863 = vld [vmem:[#allocation3 + $0x138] sm:$0xff]
      %v6864 = vld [vmem:[#allocation3 + $0x140] sm:$0xff]
      %v6865 = vld [vmem:[#allocation3 + $0x148] sm:$0xff]
      %v6866 = vld [vmem:[#allocation3 + $0x150] sm:$0xff]
      %v6867 = vld [vmem:[#allocation3 + $0x158] sm:$0xff]
      %v6868 = vld [vmem:[#allocation3 + $0x160] sm:$0xff]
      %v6869 = vld [vmem:[#allocation3 + $0x168] sm:$0xff]
      %v6870 = vld [vmem:[#allocation3 + $0x170] sm:$0xff]
      %v6871 = vld [vmem:[#allocation3 + $0x178] sm:$0xff]
      %v6872 = vld [vmem:[#allocation3 + $0x180] sm:$0xff]
      %v6873 = vld [vmem:[#allocation3 + $0x188] sm:$0xff]
      %v6874 = vld [vmem:[#allocation3 + $0x190] sm:$0xff]
      %v6875 = vld [vmem:[#allocation3 + $0x198] sm:$0xff]
      %v6876 = vld [vmem:[#allocation3 + $0x1a0] sm:$0xff]
      %v6877 = vld [vmem:[#allocation3 + $0x1a8] sm:$0xff]
      %v6878 = vld [vmem:[#allocation3 + $0x1b0] sm:$0xff]
      %v6879 = vld [vmem:[#allocation3 + $0x1b8] sm:$0xff]
      %v6880 = vld [vmem:[#allocation3 + $0x1c0] sm:$0xff]
      %v6881 = vld [vmem:[#allocation3 + $0x1c8] sm:$0xff]
      %v6882 = vld [vmem:[#allocation3 + $0x1d0] sm:$0xff]
      %v6883 = vld [vmem:[#allocation3 + $0x1d8] sm:$0xff]
      %v6884 = vld [vmem:[#allocation3 + $0x1e0] sm:$0xff]
      %v6885 = vld [vmem:[#allocation3 + $0x1e8] sm:$0xff]
      %v6886 = vld [vmem:[#allocation3 + $0x1f0] sm:$0xff]
      %v6887 = vld [vmem:[%s6] sm:$0xff]
      %6889 = vset.pattern.permute.xlu0 0
      %6890 = vperm.xlu0 %6889, %v6887
      %v6891 = vpop.permute.xlu0 %6890
      %v6894 = vsel %vm2911, %v6823, 0
      %6896 = vmatprep.subr.mxu0 %v6825
      %6897 = vmatpush1.msra.mxu0 %v6824
      %6898 = vmatprep.subr.mxu0 %v6846
      %6899 = vmatpush1.msra.mxu0 %v6845
      %6900 = vmatprep.subr.mxu0 %v6867
      %6901 = vmatpush1.msra.mxu0 %v6866
      %6902 = vmatprep.subr.mxu0 0.0
      %6903 = vmatpush1.msra.mxu0 0.0
      %6904 = vmatprep.subr.mxu0 0.0
      %6905 = vmatpush1.msra.mxu0 0.0
      %6906 = vmatprep.subr.mxu0 0.0
      %6907 = vmatpush1.msra.mxu0 0.0
      %6908 = vmatprep.subr.mxu0 0.0
      %6909 = vmatpush1.msra.mxu0 0.0
      %6910 = vmatprep.subr.mxu0 0.0
      %6911 = vmatpush1.msra.mxu0 0.0
      %6912 = vmatprep.subr.mxu0 0.0
      %6913 = vmatpush1.msra.mxu0 0.0
      %6914 = vmatprep.subr.mxu0 0.0
      %6915 = vmatpush1.msra.mxu0 0.0
      %6916 = vmatprep.subr.mxu0 0.0
      %6917 = vmatpush1.msra.mxu0 0.0
      %6918 = vmatprep.subr.mxu0 0.0
      %6919 = vmatpush1.msra.mxu0 0.0
      %6920 = vmatprep.subr.mxu0 0.0
      %6921 = vmatpush1.msra.mxu0 0.0
      %6922 = vmatprep.subr.mxu0 0.0
      %6923 = vmatpush1.msra.mxu0 0.0
      %6924 = vmatprep.subr.mxu0 0.0
      %6925 = vmatpush1.msra.mxu0 0.0
      %6926 = vmatprep.subr.mxu0 0.0
      %6927 = vmatpush1.msra.mxu0 0.0
      %6928 = vmatprep.subr.mxu0 0.0
      %6929 = vmatpush1.msra.mxu0 0.0
      %6930 = vmatprep.subr.mxu0 0.0
      %6931 = vmatpush1.msra.mxu0 0.0
      %6932 = vmatprep.subr.mxu0 0.0
      %6933 = vmatpush1.msra.mxu0 0.0
      %6934 = vmatprep.subr.mxu0 0.0
      %6935 = vmatpush1.msra.mxu0 0.0
      %6936 = vmatprep.subr.mxu0 0.0
      %6937 = vmatpush1.msra.mxu0 0.0
      %6938 = vmatprep.subr.mxu0 0.0
      %6939 = vmatpush1.msra.mxu0 0.0
      %6940 = vmatprep.subr.mxu0 0.0
      %6941 = vmatpush1.msra.mxu0 0.0
      %6942 = vmatprep.subr.mxu0 0.0
      %6943 = vmatpush1.msra.mxu0 0.0
      %6944 = vmatprep.subr.mxu0 0.0
      %6945 = vmatpush1.msra.mxu0 0.0
      %6946 = vmatprep.subr.mxu0 0.0
      %6947 = vmatpush1.msra.mxu0 0.0
      %6948 = vmatprep.subr.mxu0 0.0
      %6949 = vmatpush1.msra.mxu0 0.0
      %6950 = vmatprep.subr.mxu0 0.0
      %6951 = vmatpush1.msra.mxu0 0.0
      %6952 = vmatprep.subr.mxu0 0.0
      %6953 = vmatpush1.msra.mxu0 0.0
      %6954 = vmatprep.subr.mxu0 0.0
      %6955 = vmatpush1.msra.mxu0 0.0
      %6956 = vmatprep.subr.mxu0 0.0
      %6957 = vmatpush1.msra.mxu0 0.0
      %6958 = vmatprep.subr.mxu0 0.0
      %6959 = vmatpush1.msra.mxu0 0.0
      %6960 = vmatprep.mubr.f32.mxu0 0.0
      %6961 = vmatmul.mubr.f32.gmra.mrb[0].mxu0 %v6894
      %v6962 = vpop.f32.mrb[0].mxu0
      %v6963 = vadd.f32 %v6891, %v6962
      %v6964 = vpop.f32.mrb[0].mxu0
      %v6965 = vadd.f32 %v6891, %v6964
      %6966 = vdwg.mxu0
      %6967 = vmatprep.subr.mxu0 %v6827
      %6968 = vmatpush1.msra.mxu0 %v6826
      %6969 = vmatprep.subr.mxu0 %v6848
      %6970 = vmatpush1.msra.mxu0 %v6847
      %6971 = vmatprep.subr.mxu0 %v6869
      %6972 = vmatpush1.msra.mxu0 %v6868
      %6973 = vmatprep.subr.mxu0 0.0
      %6974 = vmatpush1.msra.mxu0 0.0
      %6975 = vmatprep.subr.mxu0 0.0
      %6976 = vmatpush1.msra.mxu0 0.0
      %6977 = vmatprep.subr.mxu0 0.0
      %6978 = vmatpush1.msra.mxu0 0.0
      %6979 = vmatprep.subr.mxu0 0.0
      %6980 = vmatpush1.msra.mxu0 0.0
      %6981 = vmatprep.subr.mxu0 0.0
      %6982 = vmatpush1.msra.mxu0 0.0
      %6983 = vmatprep.subr.mxu0 0.0
      %6984 = vmatpush1.msra.mxu0 0.0
      %6985 = vmatprep.subr.mxu0 0.0
      %6986 = vmatpush1.msra.mxu0 0.0
      %6987 = vmatprep.subr.mxu0 0.0
      %6988 = vmatpush1.msra.mxu0 0.0
      %6989 = vmatprep.subr.mxu0 0.0
      %6990 = vmatpush1.msra.mxu0 0.0
      %6991 = vmatprep.subr.mxu0 0.0
      %6992 = vmatpush1.msra.mxu0 0.0
      %6993 = vmatprep.subr.mxu0 0.0
      %6994 = vmatpush1.msra.mxu0 0.0
      %6995 = vmatprep.subr.mxu0 0.0
      %6996 = vmatpush1.msra.mxu0 0.0
      %6997 = vmatprep.subr.mxu0 0.0
      %6998 = vmatpush1.msra.mxu0 0.0
      %6999 = vmatprep.subr.mxu0 0.0
      %7000 = vmatpush1.msra.mxu0 0.0
      %7001 = vmatprep.subr.mxu0 0.0
      %7002 = vmatpush1.msra.mxu0 0.0
      %7003 = vmatprep.subr.mxu0 0.0
      %7004 = vmatpush1.msra.mxu0 0.0
      %7005 = vmatprep.subr.mxu0 0.0
      %7006 = vmatpush1.msra.mxu0 0.0
      %7007 = vmatprep.subr.mxu0 0.0
      %7008 = vmatpush1.msra.mxu0 0.0
      %7009 = vmatprep.subr.mxu0 0.0
      %7010 = vmatpush1.msra.mxu0 0.0
      %7011 = vmatprep.subr.mxu0 0.0
      %7012 = vmatpush1.msra.mxu0 0.0
      %7013 = vmatprep.subr.mxu0 0.0
      %7014 = vmatpush1.msra.mxu0 0.0
      %7015 = vmatprep.subr.mxu0 0.0
      %7016 = vmatpush1.msra.mxu0 0.0
      %7017 = vmatprep.subr.mxu0 0.0
      %7018 = vmatpush1.msra.mxu0 0.0
      %7019 = vmatprep.subr.mxu0 0.0
      %7020 = vmatpush1.msra.mxu0 0.0
      %7021 = vmatprep.subr.mxu0 0.0
      %7022 = vmatpush1.msra.mxu0 0.0
      %7023 = vmatprep.subr.mxu0 0.0
      %7024 = vmatpush1.msra.mxu0 0.0
      %7025 = vmatprep.subr.mxu0 0.0
      %7026 = vmatpush1.msra.mxu0 0.0
      %7027 = vmatprep.subr.mxu0 0.0
      %7028 = vmatpush1.msra.mxu0 0.0
      %7029 = vmatprep.subr.mxu0 0.0
      %7030 = vmatpush1.msra.mxu0 0.0
      %7031 = vmatprep.mubr.f32.mxu0 0.0
      %7032 = vmatmul.mubr.f32.gmra.mrb[0].mxu0 %v6894
      %v7033 = vpop.f32.mrb[0].mxu0
      %v7034 = vadd.f32 %v6891, %v7033
      %v7035 = vpop.f32.mrb[0].mxu0
      %v7036 = vadd.f32 %v6891, %v7035
      %7037 = vdwg.mxu0
      %7038 = vmatprep.subr.mxu0 %v6829
      %7039 = vmatpush1.msra.mxu0 %v6828
      %7040 = vmatprep.subr.mxu0 %v6850
      %7041 = vmatpush1.msra.mxu0 %v6849
      %7042 = vmatprep.subr.mxu0 %v6871
      %7043 = vmatpush1.msra.mxu0 %v6870
      %7044 = vmatprep.subr.mxu0 0.0
      %7045 = vmatpush1.msra.mxu0 0.0
      %7046 = vmatprep.subr.mxu0 0.0
      %7047 = vmatpush1.msra.mxu0 0.0
      %7048 = vmatprep.subr.mxu0 0.0
      %7049 = vmatpush1.msra.mxu0 0.0
      %7050 = vmatprep.subr.mxu0 0.0
      %7051 = vmatpush1.msra.mxu0 0.0
      %7052 = vmatprep.subr.mxu0 0.0
      %7053 = vmatpush1.msra.mxu0 0.0
      %7054 = vmatprep.subr.mxu0 0.0
      %7055 = vmatpush1.msra.mxu0 0.0
      %7056 = vmatprep.subr.mxu0 0.0
      %7057 = vmatpush1.msra.mxu0 0.0
      %7058 = vmatprep.subr.mxu0 0.0
      %7059 = vmatpush1.msra.mxu0 0.0
      %7060 = vmatprep.subr.mxu0 0.0
      %7061 = vmatpush1.msra.mxu0 0.0
      %7062 = vmatprep.subr.mxu0 0.0
      %7063 = vmatpush1.msra.mxu0 0.0
      %7064 = vmatprep.subr.mxu0 0.0
      %7065 = vmatpush1.msra.mxu0 0.0
      %7066 = vmatprep.subr.mxu0 0.0
      %7067 = vmatpush1.msra.mxu0 0.0
      %7068 = vmatprep.subr.mxu0 0.0
      %7069 = vmatpush1.msra.mxu0 0.0
      %7070 = vmatprep.subr.mxu0 0.0
      %7071 = vmatpush1.msra.mxu0 0.0
      %7072 = vmatprep.subr.mxu0 0.0
      %7073 = vmatpush1.msra.mxu0 0.0
      %7074 = vmatprep.subr.mxu0 0.0
      %7075 = vmatpush1.msra.mxu0 0.0
      %7076 = vmatprep.subr.mxu0 0.0
      %7077 = vmatpush1.msra.mxu0 0.0
      %7078 = vmatprep.subr.mxu0 0.0
      %7079 = vmatpush1.msra.mxu0 0.0
      %7080 = vmatprep.subr.mxu0 0.0
      %7081 = vmatpush1.msra.mxu0 0.0
      %7082 = vmatprep.subr.mxu0 0.0
      %7083 = vmatpush1.msra.mxu0 0.0
      %7084 = vmatprep.subr.mxu0 0.0
      %7085 = vmatpush1.msra.mxu0 0.0
      %7086 = vmatprep.subr.mxu0 0.0
      %7087 = vmatpush1.msra.mxu0 0.0
      %7088 = vmatprep.subr.mxu0 0.0
      %7089 = vmatpush1.msra.mxu0 0.0
      %7090 = vmatprep.subr.mxu0 0.0
      %7091 = vmatpush1.msra.mxu0 0.0
      %7092 = vmatprep.subr.mxu0 0.0
      %7093 = vmatpush1.msra.mxu0 0.0
      %7094 = vmatprep.subr.mxu0 0.0
      %7095 = vmatpush1.msra.mxu0 0.0
      %7096 = vmatprep.subr.mxu0 0.0
      %7097 = vmatpush1.msra.mxu0 0.0
      %7098 = vmatprep.subr.mxu0 0.0
      %7099 = vmatpush1.msra.mxu0 0.0
      %7100 = vmatprep.subr.mxu0 0.0
      %7101 = vmatpush1.msra.mxu0 0.0
      %7102 = vmatprep.mubr.f32.mxu0 0.0
      %7103 = vmatmul.mubr.f32.gmra.mrb[0].mxu0 %v6894
      %v7104 = vpop.f32.mrb[0].mxu0
      %v7105 = vadd.f32 %v6891, %v7104
      %v7106 = vpop.f32.mrb[0].mxu0
      %v7107 = vadd.f32 %v6891, %v7106
      %7108 = vdwg.mxu0
      %7109 = vmatprep.subr.mxu0 %v6831
      %7110 = vmatpush1.msra.mxu0 %v6830
      %7111 = vmatprep.subr.mxu0 %v6852
      %7112 = vmatpush1.msra.mxu0 %v6851
      %7113 = vmatprep.subr.mxu0 %v6873
      %7114 = vmatpush1.msra.mxu0 %v6872
      %7115 = vmatprep.subr.mxu0 0.0
      %7116 = vmatpush1.msra.mxu0 0.0
      %7117 = vmatprep.subr.mxu0 0.0
      %7118 = vmatpush1.msra.mxu0 0.0
      %7119 = vmatprep.subr.mxu0 0.0
      %7120 = vmatpush1.msra.mxu0 0.0
      %7121 = vmatprep.subr.mxu0 0.0
      %7122 = vmatpush1.msra.mxu0 0.0
      %7123 = vmatprep.subr.mxu0 0.0
      %7124 = vmatpush1.msra.mxu0 0.0
      %7125 = vmatprep.subr.mxu0 0.0
      %7126 = vmatpush1.msra.mxu0 0.0
      %7127 = vmatprep.subr.mxu0 0.0
      %7128 = vmatpush1.msra.mxu0 0.0
      %7129 = vmatprep.subr.mxu0 0.0
      %7130 = vmatpush1.msra.mxu0 0.0
      %7131 = vmatprep.subr.mxu0 0.0
      %7132 = vmatpush1.msra.mxu0 0.0
      %7133 = vmatprep.subr.mxu0 0.0
      %7134 = vmatpush1.msra.mxu0 0.0
      %7135 = vmatprep.subr.mxu0 0.0
      %7136 = vmatpush1.msra.mxu0 0.0
      %7137 = vmatprep.subr.mxu0 0.0
      %7138 = vmatpush1.msra.mxu0 0.0
      %7139 = vmatprep.subr.mxu0 0.0
      %7140 = vmatpush1.msra.mxu0 0.0
      %7141 = vmatprep.subr.mxu0 0.0
      %7142 = vmatpush1.msra.mxu0 0.0
      %7143 = vmatprep.subr.mxu0 0.0
      %7144 = vmatpush1.msra.mxu0 0.0
      %7145 = vmatprep.subr.mxu0 0.0
      %7146 = vmatpush1.msra.mxu0 0.0
      %7147 = vmatprep.subr.mxu0 0.0
      %7148 = vmatpush1.msra.mxu0 0.0
      %7149 = vmatprep.subr.mxu0 0.0
      %7150 = vmatpush1.msra.mxu0 0.0
      %7151 = vmatprep.subr.mxu0 0.0
      %7152 = vmatpush1.msra.mxu0 0.0
      %7153 = vmatprep.subr.mxu0 0.0
      %7154 = vmatpush1.msra.mxu0 0.0
      %7155 = vmatprep.subr.mxu0 0.0
      %7156 = vmatpush1.msra.mxu0 0.0
      %7157 = vmatprep.subr.mxu0 0.0
      %7158 = vmatpush1.msra.mxu0 0.0
      %7159 = vmatprep.subr.mxu0 0.0
      %7160 = vmatpush1.msra.mxu0 0.0
      %7161 = vmatprep.subr.mxu0 0.0
      %7162 = vmatpush1.msra.mxu0 0.0
      %7163 = vmatprep.subr.mxu0 0.0
      %7164 = vmatpush1.msra.mxu0 0.0
      %7165 = vmatprep.subr.mxu0 0.0
      %7166 = vmatpush1.msra.mxu0 0.0
      %7167 = vmatprep.subr.mxu0 0.0
      %7168 = vmatpush1.msra.mxu0 0.0
      %7169 = vmatprep.subr.mxu0 0.0
      %7170 = vmatpush1.msra.mxu0 0.0
      %7171 = vmatprep.subr.mxu0 0.0
      %7172 = vmatpush1.msra.mxu0 0.0
      %7173 = vmatprep.mubr.f32.mxu0 0.0
      %7174 = vmatmul.mubr.f32.gmra.mrb[0].mxu0 %v6894
      %v7175 = vpop.f32.mrb[0].mxu0
      %v7176 = vadd.f32 %v6891, %v7175
      %v7177 = vpop.f32.mrb[0].mxu0
      %v7178 = vadd.f32 %v6891, %v7177
      %7179 = vdwg.mxu0
      %7180 = vmatprep.subr.mxu0 %v6833
      %7181 = vmatpush1.msra.mxu0 %v6832
      %7182 = vmatprep.subr.mxu0 %v6854
      %7183 = vmatpush1.msra.mxu0 %v6853
      %7184 = vmatprep.subr.mxu0 %v6875
      %7185 = vmatpush1.msra.mxu0 %v6874
      %7186 = vmatprep.subr.mxu0 0.0
      %7187 = vmatpush1.msra.mxu0 0.0
      %7188 = vmatprep.subr.mxu0 0.0
      %7189 = vmatpush1.msra.mxu0 0.0
      %7190 = vmatprep.subr.mxu0 0.0
      %7191 = vmatpush1.msra.mxu0 0.0
      %7192 = vmatprep.subr.mxu0 0.0
      %7193 = vmatpush1.msra.mxu0 0.0
      %7194 = vmatprep.subr.mxu0 0.0
      %7195 = vmatpush1.msra.mxu0 0.0
      %7196 = vmatprep.subr.mxu0 0.0
      %7197 = vmatpush1.msra.mxu0 0.0
      %7198 = vmatprep.subr.mxu0 0.0
      %7199 = vmatpush1.msra.mxu0 0.0
      %7200 = vmatprep.subr.mxu0 0.0
      %7201 = vmatpush1.msra.mxu0 0.0
      %7202 = vmatprep.subr.mxu0 0.0
      %7203 = vmatpush1.msra.mxu0 0.0
      %7204 = vmatprep.subr.mxu0 0.0
      %7205 = vmatpush1.msra.mxu0 0.0
      %7206 = vmatprep.subr.mxu0 0.0
      %7207 = vmatpush1.msra.mxu0 0.0
      %7208 = vmatprep.subr.mxu0 0.0
      %7209 = vmatpush1.msra.mxu0 0.0
      %7210 = vmatprep.subr.mxu0 0.0
      %7211 = vmatpush1.msra.mxu0 0.0
      %7212 = vmatprep.subr.mxu0 0.0
      %7213 = vmatpush1.msra.mxu0 0.0
      %7214 = vmatprep.subr.mxu0 0.0
      %7215 = vmatpush1.msra.mxu0 0.0
      %7216 = vmatprep.subr.mxu0 0.0
      %7217 = vmatpush1.msra.mxu0 0.0
      %7218 = vmatprep.subr.mxu0 0.0
      %7219 = vmatpush1.msra.mxu0 0.0
      %7220 = vmatprep.subr.mxu0 0.0
      %7221 = vmatpush1.msra.mxu0 0.0
      %7222 = vmatprep.subr.mxu0 0.0
      %7223 = vmatpush1.msra.mxu0 0.0
      %7224 = vmatprep.subr.mxu0 0.0
      %7225 = vmatpush1.msra.mxu0 0.0
      %7226 = vmatprep.subr.mxu0 0.0
      %7227 = vmatpush1.msra.mxu0 0.0
      %7228 = vmatprep.subr.mxu0 0.0
      %7229 = vmatpush1.msra.mxu0 0.0
      %7230 = vmatprep.subr.mxu0 0.0
      %7231 = vmatpush1.msra.mxu0 0.0
      %7232 = vmatprep.subr.mxu0 0.0
      %7233 = vmatpush1.msra.mxu0 0.0
      %7234 = vmatprep.subr.mxu0 0.0
      %7235 = vmatpush1.msra.mxu0 0.0
      %7236 = vmatprep.subr.mxu0 0.0
      %7237 = vmatpush1.msra.mxu0 0.0
      %7238 = vmatprep.subr.mxu0 0.0
      %7239 = vmatpush1.msra.mxu0 0.0
      %7240 = vmatprep.subr.mxu0 0.0
      %7241 = vmatpush1.msra.mxu0 0.0
      %7242 = vmatprep.subr.mxu0 0.0
      %7243 = vmatpush1.msra.mxu0 0.0
      %7244 = vmatprep.mubr.f32.mxu0 0.0
      %7245 = vmatmul.mubr.f32.gmra.mrb[0].mxu0 %v6894
      %v7246 = vpop.f32.mrb[0].mxu0
      %v7247 = vadd.f32 %v6891, %v7246
      %v7248 = vpop.f32.mrb[0].mxu0
      %v7249 = vadd.f32 %v6891, %v7248
      %7250 = vdwg.mxu0
      %7251 = vmatprep.subr.mxu0 %v6835
      %7252 = vmatpush1.msra.mxu0 %v6834
      %7253 = vmatprep.subr.mxu0 %v6856
      %7254 = vmatpush1.msra.mxu0 %v6855
      %7255 = vmatprep.subr.mxu0 %v6877
      %7256 = vmatpush1.msra.mxu0 %v6876
      %7257 = vmatprep.subr.mxu0 0.0
      %7258 = vmatpush1.msra.mxu0 0.0
      %7259 = vmatprep.subr.mxu0 0.0
      %7260 = vmatpush1.msra.mxu0 0.0
      %7261 = vmatprep.subr.mxu0 0.0
      %7262 = vmatpush1.msra.mxu0 0.0
      %7263 = vmatprep.subr.mxu0 0.0
      %7264 = vmatpush1.msra.mxu0 0.0
      %7265 = vmatprep.subr.mxu0 0.0
      %7266 = vmatpush1.msra.mxu0 0.0
      %7267 = vmatprep.subr.mxu0 0.0
      %7268 = vmatpush1.msra.mxu0 0.0
      %7269 = vmatprep.subr.mxu0 0.0
      %7270 = vmatpush1.msra.mxu0 0.0
      %7271 = vmatprep.subr.mxu0 0.0
      %7272 = vmatpush1.msra.mxu0 0.0
      %7273 = vmatprep.subr.mxu0 0.0
      %7274 = vmatpush1.msra.mxu0 0.0
      %7275 = vmatprep.subr.mxu0 0.0
      %7276 = vmatpush1.msra.mxu0 0.0
      %7277 = vmatprep.subr.mxu0 0.0
      %7278 = vmatpush1.msra.mxu0 0.0
      %7279 = vmatprep.subr.mxu0 0.0
      %7280 = vmatpush1.msra.mxu0 0.0
      %7281 = vmatprep.subr.mxu0 0.0
      %7282 = vmatpush1.msra.mxu0 0.0
      %7283 = vmatprep.subr.mxu0 0.0
      %7284 = vmatpush1.msra.mxu0 0.0
      %7285 = vmatprep.subr.mxu0 0.0
      %7286 = vmatpush1.msra.mxu0 0.0
      %7287 = vmatprep.subr.mxu0 0.0
      %7288 = vmatpush1.msra.mxu0 0.0
      %7289 = vmatprep.subr.mxu0 0.0
      %7290 = vmatpush1.msra.mxu0 0.0
      %7291 = vmatprep.subr.mxu0 0.0
      %7292 = vmatpush1.msra.mxu0 0.0
      %7293 = vmatprep.subr.mxu0 0.0
      %7294 = vmatpush1.msra.mxu0 0.0
      %7295 = vmatprep.subr.mxu0 0.0
      %7296 = vmatpush1.msra.mxu0 0.0
      %7297 = vmatprep.subr.mxu0 0.0
      %7298 = vmatpush1.msra.mxu0 0.0
      %7299 = vmatprep.subr.mxu0 0.0
      %7300 = vmatpush1.msra.mxu0 0.0
      %7301 = vmatprep.subr.mxu0 0.0
      %7302 = vmatpush1.msra.mxu0 0.0
      %7303 = vmatprep.subr.mxu0 0.0
      %7304 = vmatpush1.msra.mxu0 0.0
      %7305 = vmatprep.subr.mxu0 0.0
      %7306 = vmatpush1.msra.mxu0 0.0
      %7307 = vmatprep.subr.mxu0 0.0
      %7308 = vmatpush1.msra.mxu0 0.0
      %7309 = vmatprep.subr.mxu0 0.0
      %7310 = vmatpush1.msra.mxu0 0.0
      %7311 = vmatprep.subr.mxu0 0.0
      %7312 = vmatpush1.msra.mxu0 0.0
      %7313 = vmatprep.subr.mxu0 0.0
      %7314 = vmatpush1.msra.mxu0 0.0
      %7315 = vmatprep.mubr.f32.mxu0 0.0
      %7316 = vmatmul.mubr.f32.gmra.mrb[0].mxu0 %v6894
      %v7317 = vpop.f32.mrb[0].mxu0
      %v7318 = vadd.f32 %v6891, %v7317
      %v7319 = vpop.f32.mrb[0].mxu0
      %v7320 = vadd.f32 %v6891, %v7319
      %7321 = vdwg.mxu0
      %7322 = vmatprep.subr.mxu0 %v6837
      %7323 = vmatpush1.msra.mxu0 %v6836
      %7324 = vmatprep.subr.mxu0 %v6858
      %7325 = vmatpush1.msra.mxu0 %v6857
      %7326 = vmatprep.subr.mxu0 %v6879
      %7327 = vmatpush1.msra.mxu0 %v6878
      %7328 = vmatprep.subr.mxu0 0.0
      %7329 = vmatpush1.msra.mxu0 0.0
      %7330 = vmatprep.subr.mxu0 0.0
      %7331 = vmatpush1.msra.mxu0 0.0
      %7332 = vmatprep.subr.mxu0 0.0
      %7333 = vmatpush1.msra.mxu0 0.0
      %7334 = vmatprep.subr.mxu0 0.0
      %7335 = vmatpush1.msra.mxu0 0.0
      %7336 = vmatprep.subr.mxu0 0.0
      %7337 = vmatpush1.msra.mxu0 0.0
      %7338 = vmatprep.subr.mxu0 0.0
      %7339 = vmatpush1.msra.mxu0 0.0
      %7340 = vmatprep.subr.mxu0 0.0
      %7341 = vmatpush1.msra.mxu0 0.0
      %7342 = vmatprep.subr.mxu0 0.0
      %7343 = vmatpush1.msra.mxu0 0.0
      %7344 = vmatprep.subr.mxu0 0.0
      %7345 = vmatpush1.msra.mxu0 0.0
      %7346 = vmatprep.subr.mxu0 0.0
      %7347 = vmatpush1.msra.mxu0 0.0
      %7348 = vmatprep.subr.mxu0 0.0
      %7349 = vmatpush1.msra.mxu0 0.0
      %7350 = vmatprep.subr.mxu0 0.0
      %7351 = vmatpush1.msra.mxu0 0.0
      %7352 = vmatprep.subr.mxu0 0.0
      %7353 = vmatpush1.msra.mxu0 0.0
      %7354 = vmatprep.subr.mxu0 0.0
      %7355 = vmatpush1.msra.mxu0 0.0
      %7356 = vmatprep.subr.mxu0 0.0
      %7357 = vmatpush1.msra.mxu0 0.0
      %7358 = vmatprep.subr.mxu0 0.0
      %7359 = vmatpush1.msra.mxu0 0.0
      %7360 = vmatprep.subr.mxu0 0.0
      %7361 = vmatpush1.msra.mxu0 0.0
      %7362 = vmatprep.subr.mxu0 0.0
      %7363 = vmatpush1.msra.mxu0 0.0
      %7364 = vmatprep.subr.mxu0 0.0
      %7365 = vmatpush1.msra.mxu0 0.0
      %7366 = vmatprep.subr.mxu0 0.0
      %7367 = vmatpush1.msra.mxu0 0.0
      %7368 = vmatprep.subr.mxu0 0.0
      %7369 = vmatpush1.msra.mxu0 0.0
      %7370 = vmatprep.subr.mxu0 0.0
      %7371 = vmatpush1.msra.mxu0 0.0
      %7372 = vmatprep.subr.mxu0 0.0
      %7373 = vmatpush1.msra.mxu0 0.0
      %7374 = vmatprep.subr.mxu0 0.0
      %7375 = vmatpush1.msra.mxu0 0.0
      %7376 = vmatprep.subr.mxu0 0.0
      %7377 = vmatpush1.msra.mxu0 0.0
      %7378 = vmatprep.subr.mxu0 0.0
      %7379 = vmatpush1.msra.mxu0 0.0
      %7380 = vmatprep.subr.mxu0 0.0
      %7381 = vmatpush1.msra.mxu0 0.0
      %7382 = vmatprep.subr.mxu0 0.0
      %7383 = vmatpush1.msra.mxu0 0.0
      %7384 = vmatprep.subr.mxu0 0.0
      %7385 = vmatpush1.msra.mxu0 0.0
      %7386 = vmatprep.mubr.f32.mxu0 0.0
      %7387 = vmatmul.mubr.f32.gmra.mrb[0].mxu0 %v6894
      %v7388 = vpop.f32.mrb[0].mxu0
      %v7389 = vadd.f32 %v6891, %v7388
      %v7390 = vpop.f32.mrb[0].mxu0
      %v7391 = vadd.f32 %v6891, %v7390
      %7392 = vdwg.mxu0
      %7393 = vmatprep.subr.mxu0 %v6839
      %7394 = vmatpush1.msra.mxu0 %v6838
      %7395 = vmatprep.subr.mxu0 %v6860
      %7396 = vmatpush1.msra.mxu0 %v6859
      %7397 = vmatprep.subr.mxu0 %v6881
      %7398 = vmatpush1.msra.mxu0 %v6880
      %7399 = vmatprep.subr.mxu0 0.0
      %7400 = vmatpush1.msra.mxu0 0.0
      %7401 = vmatprep.subr.mxu0 0.0
      %7402 = vmatpush1.msra.mxu0 0.0
      %7403 = vmatprep.subr.mxu0 0.0
      %7404 = vmatpush1.msra.mxu0 0.0
      %7405 = vmatprep.subr.mxu0 0.0
      %7406 = vmatpush1.msra.mxu0 0.0
      %7407 = vmatprep.subr.mxu0 0.0
      %7408 = vmatpush1.msra.mxu0 0.0
      %7409 = vmatprep.subr.mxu0 0.0
      %7410 = vmatpush1.msra.mxu0 0.0
      %7411 = vmatprep.subr.mxu0 0.0
      %7412 = vmatpush1.msra.mxu0 0.0
      %7413 = vmatprep.subr.mxu0 0.0
      %7414 = vmatpush1.msra.mxu0 0.0
      %7415 = vmatprep.subr.mxu0 0.0
      %7416 = vmatpush1.msra.mxu0 0.0
      %7417 = vmatprep.subr.mxu0 0.0
      %7418 = vmatpush1.msra.mxu0 0.0
      %7419 = vmatprep.subr.mxu0 0.0
      %7420 = vmatpush1.msra.mxu0 0.0
      %7421 = vmatprep.subr.mxu0 0.0
      %7422 = vmatpush1.msra.mxu0 0.0
      %7423 = vmatprep.subr.mxu0 0.0
      %7424 = vmatpush1.msra.mxu0 0.0
      %7425 = vmatprep.subr.mxu0 0.0
      %7426 = vmatpush1.msra.mxu0 0.0
      %7427 = vmatprep.subr.mxu0 0.0
      %7428 = vmatpush1.msra.mxu0 0.0
      %7429 = vmatprep.subr.mxu0 0.0
      %7430 = vmatpush1.msra.mxu0 0.0
      %7431 = vmatprep.subr.mxu0 0.0
      %7432 = vmatpush1.msra.mxu0 0.0
      %7433 = vmatprep.subr.mxu0 0.0
      %7434 = vmatpush1.msra.mxu0 0.0
      %7435 = vmatprep.subr.mxu0 0.0
      %7436 = vmatpush1.msra.mxu0 0.0
      %7437 = vmatprep.subr.mxu0 0.0
      %7438 = vmatpush1.msra.mxu0 0.0
      %7439 = vmatprep.subr.mxu0 0.0
      %7440 = vmatpush1.msra.mxu0 0.0
      %7441 = vmatprep.subr.mxu0 0.0
      %7442 = vmatpush1.msra.mxu0 0.0
      %7443 = vmatprep.subr.mxu0 0.0
      %7444 = vmatpush1.msra.mxu0 0.0
      %7445 = vmatprep.subr.mxu0 0.0
      %7446 = vmatpush1.msra.mxu0 0.0
      %7447 = vmatprep.subr.mxu0 0.0
      %7448 = vmatpush1.msra.mxu0 0.0
      %7449 = vmatprep.subr.mxu0 0.0
      %7450 = vmatpush1.msra.mxu0 0.0
      %7451 = vmatprep.subr.mxu0 0.0
      %7452 = vmatpush1.msra.mxu0 0.0
      %7453 = vmatprep.subr.mxu0 0.0
      %7454 = vmatpush1.msra.mxu0 0.0
      %7455 = vmatprep.subr.mxu0 0.0
      %7456 = vmatpush1.msra.mxu0 0.0
      %7457 = vmatprep.mubr.f32.mxu0 0.0
      %7458 = vmatmul.mubr.f32.gmra.mrb[0].mxu0 %v6894
      %v7459 = vpop.f32.mrb[0].mxu0
      %v7460 = vadd.f32 %v6891, %v7459
      %v7461 = vpop.f32.mrb[0].mxu0
      %v7462 = vadd.f32 %v6891, %v7461
      %7463 = vdwg.mxu0
      %7464 = vmatprep.subr.mxu0 %v6841
      %7465 = vmatpush1.msra.mxu0 %v6840
      %7466 = vmatprep.subr.mxu0 %v6862
      %7467 = vmatpush1.msra.mxu0 %v6861
      %7468 = vmatprep.subr.mxu0 %v6883
      %7469 = vmatpush1.msra.mxu0 %v6882
      %7470 = vmatprep.subr.mxu0 0.0
      %7471 = vmatpush1.msra.mxu0 0.0
      %7472 = vmatprep.subr.mxu0 0.0
      %7473 = vmatpush1.msra.mxu0 0.0
      %7474 = vmatprep.subr.mxu0 0.0
      %7475 = vmatpush1.msra.mxu0 0.0
      %7476 = vmatprep.subr.mxu0 0.0
      %7477 = vmatpush1.msra.mxu0 0.0
      %7478 = vmatprep.subr.mxu0 0.0
      %7479 = vmatpush1.msra.mxu0 0.0
      %7480 = vmatprep.subr.mxu0 0.0
      %7481 = vmatpush1.msra.mxu0 0.0
      %7482 = vmatprep.subr.mxu0 0.0
      %7483 = vmatpush1.msra.mxu0 0.0
      %7484 = vmatprep.subr.mxu0 0.0
      %7485 = vmatpush1.msra.mxu0 0.0
      %7486 = vmatprep.subr.mxu0 0.0
      %7487 = vmatpush1.msra.mxu0 0.0
      %7488 = vmatprep.subr.mxu0 0.0
      %7489 = vmatpush1.msra.mxu0 0.0
      %7490 = vmatprep.subr.mxu0 0.0
      %7491 = vmatpush1.msra.mxu0 0.0
      %7492 = vmatprep.subr.mxu0 0.0
      %7493 = vmatpush1.msra.mxu0 0.0
      %7494 = vmatprep.subr.mxu0 0.0
      %7495 = vmatpush1.msra.mxu0 0.0
      %7496 = vmatprep.subr.mxu0 0.0
      %7497 = vmatpush1.msra.mxu0 0.0
      %7498 = vmatprep.subr.mxu0 0.0
      %7499 = vmatpush1.msra.mxu0 0.0
      %7500 = vmatprep.subr.mxu0 0.0
      %7501 = vmatpush1.msra.mxu0 0.0
      %7502 = vmatprep.subr.mxu0 0.0
      %7503 = vmatpush1.msra.mxu0 0.0
      %7504 = vmatprep.subr.mxu0 0.0
      %7505 = vmatpush1.msra.mxu0 0.0
      %7506 = vmatprep.subr.mxu0 0.0
      %7507 = vmatpush1.msra.mxu0 0.0
      %7508 = vmatprep.subr.mxu0 0.0
      %7509 = vmatpush1.msra.mxu0 0.0
      %7510 = vmatprep.subr.mxu0 0.0
      %7511 = vmatpush1.msra.mxu0 0.0
      %7512 = vmatprep.subr.mxu0 0.0
      %7513 = vmatpush1.msra.mxu0 0.0
      %7514 = vmatprep.subr.mxu0 0.0
      %7515 = vmatpush1.msra.mxu0 0.0
      %7516 = vmatprep.subr.mxu0 0.0
      %7517 = vmatpush1.msra.mxu0 0.0
      %7518 = vmatprep.subr.mxu0 0.0
      %7519 = vmatpush1.msra.mxu0 0.0
      %7520 = vmatprep.subr.mxu0 0.0
      %7521 = vmatpush1.msra.mxu0 0.0
      %7522 = vmatprep.subr.mxu0 0.0
      %7523 = vmatpush1.msra.mxu0 0.0
      %7524 = vmatprep.subr.mxu0 0.0
      %7525 = vmatpush1.msra.mxu0 0.0
      %7526 = vmatprep.subr.mxu0 0.0
      %7527 = vmatpush1.msra.mxu0 0.0
      %7528 = vmatprep.mubr.f32.mxu0 0.0
      %7529 = vmatmul.mubr.f32.gmra.mrb[0].mxu0 %v6894
      %v7530 = vpop.f32.mrb[0].mxu0
      %v7531 = vadd.f32 %v6891, %v7530
      %v7532 = vpop.f32.mrb[0].mxu0
      %v7533 = vadd.f32 %v6891, %v7532
      %7534 = vdwg.mxu0
      %7535 = vmatprep.subr.mxu0 %v6843
      %7536 = vmatpush1.msra.mxu0 %v6842
      %7537 = vmatprep.subr.mxu0 %v6864
      %7538 = vmatpush1.msra.mxu0 %v6863
      %7539 = vmatprep.subr.mxu0 %v6885
      %7540 = vmatpush1.msra.mxu0 %v6884
      %7541 = vmatprep.subr.mxu0 0.0
      %7542 = vmatpush1.msra.mxu0 0.0
      %7543 = vmatprep.subr.mxu0 0.0
      %7544 = vmatpush1.msra.mxu0 0.0
      %7545 = vmatprep.subr.mxu0 0.0
      %7546 = vmatpush1.msra.mxu0 0.0
      %7547 = vmatprep.subr.mxu0 0.0
      %7548 = vmatpush1.msra.mxu0 0.0
      %7549 = vmatprep.subr.mxu0 0.0
      %7550 = vmatpush1.msra.mxu0 0.0
      %7551 = vmatprep.subr.mxu0 0.0
      %7552 = vmatpush1.msra.mxu0 0.0
      %7553 = vmatprep.subr.mxu0 0.0
      %7554 = vmatpush1.msra.mxu0 0.0
      %7555 = vmatprep.subr.mxu0 0.0
      %7556 = vmatpush1.msra.mxu0 0.0
      %7557 = vmatprep.subr.mxu0 0.0
      %7558 = vmatpush1.msra.mxu0 0.0
      %7559 = vmatprep.subr.mxu0 0.0
      %7560 = vmatpush1.msra.mxu0 0.0
      %7561 = vmatprep.subr.mxu0 0.0
      %7562 = vmatpush1.msra.mxu0 0.0
      %7563 = vmatprep.subr.mxu0 0.0
      %7564 = vmatpush1.msra.mxu0 0.0
      %7565 = vmatprep.subr.mxu0 0.0
      %7566 = vmatpush1.msra.mxu0 0.0
      %7567 = vmatprep.subr.mxu0 0.0
      %7568 = vmatpush1.msra.mxu0 0.0
      %7569 = vmatprep.subr.mxu0 0.0
      %7570 = vmatpush1.msra.mxu0 0.0
      %7571 = vmatprep.subr.mxu0 0.0
      %7572 = vmatpush1.msra.mxu0 0.0
      %7573 = vmatprep.subr.mxu0 0.0
      %7574 = vmatpush1.msra.mxu0 0.0
      %7575 = vmatprep.subr.mxu0 0.0
      %7576 = vmatpush1.msra.mxu0 0.0
      %7577 = vmatprep.subr.mxu0 0.0
      %7578 = vmatpush1.msra.mxu0 0.0
      %7579 = vmatprep.subr.mxu0 0.0
      %7580 = vmatpush1.msra.mxu0 0.0
      %7581 = vmatprep.subr.mxu0 0.0
      %7582 = vmatpush1.msra.mxu0 0.0
      %7583 = vmatprep.subr.mxu0 0.0
      %7584 = vmatpush1.msra.mxu0 0.0
      %7585 = vmatprep.subr.mxu0 0.0
      %7586 = vmatpush1.msra.mxu0 0.0
      %7587 = vmatprep.subr.mxu0 0.0
      %7588 = vmatpush1.msra.mxu0 0.0
      %7589 = vmatprep.subr.mxu0 0.0
      %7590 = vmatpush1.msra.mxu0 0.0
      %7591 = vmatprep.subr.mxu0 0.0
      %7592 = vmatpush1.msra.mxu0 0.0
      %7593 = vmatprep.subr.mxu0 0.0
      %7594 = vmatpush1.msra.mxu0 0.0
      %7595 = vmatprep.subr.mxu0 0.0
      %7596 = vmatpush1.msra.mxu0 0.0
      %7597 = vmatprep.subr.mxu0 0.0
      %7598 = vmatpush1.msra.mxu0 0.0
      %7599 = vmatprep.mubr.f32.mxu0 0.0
      %7600 = vmatmul.mubr.f32.gmra.mrb[0].mxu0 %v6894
      %v7601 = vpop.f32.mrb[0].mxu0
      %v7602 = vadd.f32 %v6891, %v7601
      %v7603 = vpop.f32.mrb[0].mxu0
      %v7604 = vadd.f32 %v6891, %v7603
      %7605 = vdwg.mxu0
      %7606 = vmatprep.subr.mxu0 0.0
      %7607 = vmatpush1.msra.mxu0 %v6844
      %7608 = vmatprep.subr.mxu0 0.0
      %7609 = vmatpush1.msra.mxu0 %v6865
      %7610 = vmatprep.subr.mxu0 0.0
      %7611 = vmatpush1.msra.mxu0 %v6886
      %7612 = vmatprep.subr.mxu0 0.0
      %7613 = vmatpush1.msra.mxu0 0.0
      %7614 = vmatprep.subr.mxu0 0.0
      %7615 = vmatpush1.msra.mxu0 0.0
      %7616 = vmatprep.subr.mxu0 0.0
      %7617 = vmatpush1.msra.mxu0 0.0
      %7618 = vmatprep.subr.mxu0 0.0
      %7619 = vmatpush1.msra.mxu0 0.0
      %7620 = vmatprep.subr.mxu0 0.0
      %7621 = vmatpush1.msra.mxu0 0.0
      %7622 = vmatprep.subr.mxu0 0.0
      %7623 = vmatpush1.msra.mxu0 0.0
      %7624 = vmatprep.subr.mxu0 0.0
      %7625 = vmatpush1.msra.mxu0 0.0
      %7626 = vmatprep.subr.mxu0 0.0
      %7627 = vmatpush1.msra.mxu0 0.0
      %7628 = vmatprep.subr.mxu0 0.0
      %7629 = vmatpush1.msra.mxu0 0.0
      %7630 = vmatprep.subr.mxu0 0.0
      %7631 = vmatpush1.msra.mxu0 0.0
      %7632 = vmatprep.subr.mxu0 0.0
      %7633 = vmatpush1.msra.mxu0 0.0
      %7634 = vmatprep.subr.mxu0 0.0
      %7635 = vmatpush1.msra.mxu0 0.0
      %7636 = vmatprep.subr.mxu0 0.0
      %7637 = vmatpush1.msra.mxu0 0.0
      %7638 = vmatprep.subr.mxu0 0.0
      %7639 = vmatpush1.msra.mxu0 0.0
      %7640 = vmatprep.subr.mxu0 0.0
      %7641 = vmatpush1.msra.mxu0 0.0
      %7642 = vmatprep.subr.mxu0 0.0
      %7643 = vmatpush1.msra.mxu0 0.0
      %7644 = vmatprep.subr.mxu0 0.0
      %7645 = vmatpush1.msra.mxu0 0.0
      %7646 = vmatprep.subr.mxu0 0.0
      %7647 = vmatpush1.msra.mxu0 0.0
      %7648 = vmatprep.subr.mxu0 0.0
      %7649 = vmatpush1.msra.mxu0 0.0
      %7650 = vmatprep.subr.mxu0 0.0
      %7651 = vmatpush1.msra.mxu0 0.0
      %7652 = vmatprep.subr.mxu0 0.0
      %7653 = vmatpush1.msra.mxu0 0.0
      %7654 = vmatprep.subr.mxu0 0.0
      %7655 = vmatpush1.msra.mxu0 0.0
      %7656 = vmatprep.subr.mxu0 0.0
      %7657 = vmatpush1.msra.mxu0 0.0
      %7658 = vmatprep.subr.mxu0 0.0
      %7659 = vmatpush1.msra.mxu0 0.0
      %7660 = vmatprep.subr.mxu0 0.0
      %7661 = vmatpush1.msra.mxu0 0.0
      %7662 = vmatprep.subr.mxu0 0.0
      %7663 = vmatpush1.msra.mxu0 0.0
      %7664 = vmatprep.subr.mxu0 0.0
      %7665 = vmatpush1.msra.mxu0 0.0
      %7666 = vmatprep.subr.mxu0 0.0
      %7667 = vmatpush1.msra.mxu0 0.0
      %7668 = vmatprep.subr.mxu0 0.0
      %7669 = vmatpush1.msra.mxu0 0.0
      %7670 = vmatprep.mubr.f32.mxu0 0.0
      %7671 = vmatmul.mubr.f32.gmra.mrb[0].mxu0 %v6894
      %v7672 = vpop.f32.mrb[0].mxu0
      %v7673 = vadd.f32 %v6891, %v7672
      %v7674 = vpop.f32.mrb[0].mxu0
      %7675 = vdwg.mxu0
      %v7676 = vmax.f32 %v6963, 0.0
      %v7677 = vmax.f32 %v6965, 0.0
      %v7678 = vmax.f32 %v7034, 0.0
      %v7679 = vmax.f32 %v7036, 0.0
      %v7680 = vmax.f32 %v7105, 0.0
      %v7681 = vmax.f32 %v7107, 0.0
      %v7682 = vmax.f32 %v7176, 0.0
      %v7683 = vmax.f32 %v7178, 0.0
      %v7684 = vmax.f32 %v7247, 0.0
      %v7685 = vmax.f32 %v7249, 0.0
      %v7686 = vmax.f32 %v7318, 0.0
      %v7687 = vmax.f32 %v7320, 0.0
      %v7688 = vmax.f32 %v7389, 0.0
      %v7689 = vmax.f32 %v7391, 0.0
      %v7690 = vmax.f32 %v7460, 0.0
      %v7691 = vmax.f32 %v7462, 0.0
      %v7692 = vmax.f32 %v7531, 0.0
      %v7693 = vmax.f32 %v7533, 0.0
      %v7694 = vmax.f32 %v7602, 0.0
      %v7695 = vmax.f32 %v7604, 0.0
      %v7696 = vmax.f32 %v7673, 0.0
      %v7697 = vld [vmem:[%s7] sm:$0xff]
      %7699 = vset.pattern.permute.xlu0 0
      %7700 = vperm.xlu0 %7699, %v7697
      %v7701 = vpop.permute.xlu0 %7700
      %v7703 = vmul.f32 %v7676, %v7701
      %v7704 = vmul.f32 %v7677, %v7701
      %v7705 = vmul.f32 %v7678, %v7701
      %v7706 = vmul.f32 %v7679, %v7701
      %v7707 = vmul.f32 %v7680, %v7701
      %v7708 = vmul.f32 %v7681, %v7701
      %v7709 = vmul.f32 %v7682, %v7701
      %v7710 = vmul.f32 %v7683, %v7701
      %v7711 = vmul.f32 %v7684, %v7701
      %v7712 = vmul.f32 %v7685, %v7701
      %v7713 = vmul.f32 %v7686, %v7701
      %v7714 = vmul.f32 %v7687, %v7701
      %v7715 = vmul.f32 %v7688, %v7701
      %v7716 = vmul.f32 %v7689, %v7701
      %v7717 = vmul.f32 %v7690, %v7701
      %v7718 = vmul.f32 %v7691, %v7701
      %v7719 = vmul.f32 %v7692, %v7701
      %v7720 = vmul.f32 %v7693, %v7701
      %v7721 = vmul.f32 %v7694, %v7701
      %v7722 = vmul.f32 %v7695, %v7701
      %v7723 = vmul.f32 %v7696, %v7701
      %v7724 = vld [vmem:[%s8] sm:$0xff]
      %7726 = vset.pattern.permute.xlu0 0
      %7727 = vperm.xlu0 %7726, %v7724
      %v7728 = vpop.permute.xlu0 %7727
      %v7730 = vadd.f32 %v7703, %v7728
      %v7731 = vadd.f32 %v7704, %v7728
      %v7732 = vadd.f32 %v7705, %v7728
      %v7733 = vadd.f32 %v7706, %v7728
      %v7734 = vadd.f32 %v7707, %v7728
      %v7735 = vadd.f32 %v7708, %v7728
      %v7736 = vadd.f32 %v7709, %v7728
      %v7737 = vadd.f32 %v7710, %v7728
      %v7738 = vadd.f32 %v7711, %v7728
      %v7739 = vadd.f32 %v7712, %v7728
      %v7740 = vadd.f32 %v7713, %v7728
      %v7741 = vadd.f32 %v7714, %v7728
      %v7742 = vadd.f32 %v7715, %v7728
      %v7743 = vadd.f32 %v7716, %v7728
      %v7744 = vadd.f32 %v7717, %v7728
      %v7745 = vadd.f32 %v7718, %v7728
      %v7746 = vadd.f32 %v7719, %v7728
      %v7747 = vadd.f32 %v7720, %v7728
      %v7748 = vadd.f32 %v7721, %v7728
      %v7749 = vadd.f32 %v7722, %v7728
      %v7750 = vadd.f32 %v7723, %v7728
      %7772 = vrot.lane.b32.xlu0 %v7730, 68
      %v7773 = vpop.permute.xlu0 %7772
      %7774 = vrot.lane.b32.xlu0 %v7731, 68
      %v7775 = vpop.permute.xlu0 %7774
      %7776 = vrot.lane.b32.xlu0 %v7732, 68
      %v7777 = vpop.permute.xlu0 %7776
      %7778 = vrot.lane.b32.xlu0 %v7733, 68
      %v7779 = vpop.permute.xlu0 %7778
      %7780 = vrot.lane.b32.xlu0 %v7734, 68
      %v7781 = vpop.permute.xlu0 %7780
      %7782 = vrot.lane.b32.xlu0 %v7735, 68
      %v7783 = vpop.permute.xlu0 %7782
      %7784 = vrot.lane.b32.xlu0 %v7736, 68
      %v7785 = vpop.permute.xlu0 %7784
      %7786 = vrot.lane.b32.xlu0 %v7737, 68
      %v7787 = vpop.permute.xlu0 %7786
      %7788 = vrot.lane.b32.xlu0 %v7738, 68
      %v7789 = vpop.permute.xlu0 %7788
      %7790 = vrot.lane.b32.xlu0 %v7739, 68
      %v7791 = vpop.permute.xlu0 %7790
      %7792 = vrot.lane.b32.xlu0 %v7740, 68
      %v7793 = vpop.permute.xlu0 %7792
      %7794 = vrot.lane.b32.xlu0 %v7741, 68
      %v7795 = vpop.permute.xlu0 %7794
      %7796 = vrot.lane.b32.xlu0 %v7742, 68
      %v7797 = vpop.permute.xlu0 %7796
      %7798 = vrot.lane.b32.xlu0 %v7743, 68
      %v7799 = vpop.permute.xlu0 %7798
      %7800 = vrot.lane.b32.xlu0 %v7744, 68
      %v7801 = vpop.permute.xlu0 %7800
      %7802 = vrot.lane.b32.xlu0 %v7745, 68
      %v7803 = vpop.permute.xlu0 %7802
      %7804 = vrot.lane.b32.xlu0 %v7746, 68
      %v7805 = vpop.permute.xlu0 %7804
      %7806 = vrot.lane.b32.xlu0 %v7747, 68
      %v7807 = vpop.permute.xlu0 %7806
      %7808 = vrot.lane.b32.xlu0 %v7748, 68
      %v7809 = vpop.permute.xlu0 %7808
      %7810 = vrot.lane.b32.xlu0 %v7749, 68
      %v7811 = vpop.permute.xlu0 %7810
      %7812 = vrot.lane.b32.xlu0 %v7750, 68
      %v7813 = vpop.permute.xlu0 %7812
      %vm7814 = vcmask 556032
      %v7815 = vsel %vm7814, %v7773, %v7775
      %v7816 = vsel %vm7814, %v7775, %v7777
      %v7817 = vsel %vm7814, %v7777, %v7779
      %v7818 = vsel %vm7814, %v7779, %v7781
      %v7819 = vsel %vm7814, %v7781, %v7783
      %v7820 = vsel %vm7814, %v7783, %v7785
      %v7821 = vsel %vm7814, %v7785, %v7787
      %v7822 = vsel %vm7814, %v7787, %v7789
      %v7823 = vsel %vm7814, %v7789, %v7791
      %v7824 = vsel %vm7814, %v7791, %v7793
      %v7825 = vsel %vm7814, %v7793, %v7795
      %v7826 = vsel %vm7814, %v7795, %v7797
      %v7827 = vsel %vm7814, %v7797, %v7799
      %v7828 = vsel %vm7814, %v7799, %v7801
      %v7829 = vsel %vm7814, %v7801, %v7803
      %v7830 = vsel %vm7814, %v7803, %v7805
      %v7831 = vsel %vm7814, %v7805, %v7807
      %v7832 = vsel %vm7814, %v7807, %v7809
      %v7833 = vsel %vm7814, %v7809, %v7811
      %v7834 = vsel %vm7814, %v7811, %v7813
      %v7856 = vadd.f32 %v6545, %v7773
      %v7857 = vadd.f32 %v6546, %v7815
      %v7858 = vadd.f32 %v6547, %v7816
      %v7859 = vadd.f32 %v6548, %v7817
      %v7860 = vadd.f32 %v6549, %v7818
      %v7861 = vadd.f32 %v6550, %v7819
      %v7862 = vadd.f32 %v6551, %v7820
      %v7863 = vadd.f32 %v6552, %v7821
      %v7864 = vadd.f32 %v6553, %v7822
      %v7865 = vadd.f32 %v6554, %v7823
      %v7866 = vadd.f32 %v6555, %v7824
      %v7867 = vadd.f32 %v6556, %v7825
      %v7868 = vadd.f32 %v6557, %v7826
      %v7869 = vadd.f32 %v6558, %v7827
      %v7870 = vadd.f32 %v6559, %v7828
      %v7871 = vadd.f32 %v6560, %v7829
      %v7872 = vadd.f32 %v6561, %v7830
      %v7873 = vadd.f32 %v6562, %v7831
      %v7874 = vadd.f32 %v6563, %v7832
      %v7875 = vadd.f32 %v6564, %v7833
      %v7876 = vadd.f32 %v6565, %v7834
      %7898 = vrot.lane.b32.xlu0 %v7856, 60
      %v7899 = vpop.permute.xlu0 %7898
      %7900 = vrot.lane.b32.xlu0 %v7857, 60
      %v7901 = vpop.permute.xlu0 %7900
      %7902 = vrot.lane.b32.xlu0 %v7858, 60
      %v7903 = vpop.permute.xlu0 %7902
      %7904 = vrot.lane.b32.xlu0 %v7859, 60
      %v7905 = vpop.permute.xlu0 %7904
      %7906 = vrot.lane.b32.xlu0 %v7860, 60
      %v7907 = vpop.permute.xlu0 %7906
      %7908 = vrot.lane.b32.xlu0 %v7861, 60
      %v7909 = vpop.permute.xlu0 %7908
      %7910 = vrot.lane.b32.xlu0 %v7862, 60
      %v7911 = vpop.permute.xlu0 %7910
      %7912 = vrot.lane.b32.xlu0 %v7863, 60
      %v7913 = vpop.permute.xlu0 %7912
      %7914 = vrot.lane.b32.xlu0 %v7864, 60
      %v7915 = vpop.permute.xlu0 %7914
      %7916 = vrot.lane.b32.xlu0 %v7865, 60
      %v7917 = vpop.permute.xlu0 %7916
      %7918 = vrot.lane.b32.xlu0 %v7866, 60
      %v7919 = vpop.permute.xlu0 %7918
      %7920 = vrot.lane.b32.xlu0 %v7867, 60
      %v7921 = vpop.permute.xlu0 %7920
      %7922 = vrot.lane.b32.xlu0 %v7868, 60
      %v7923 = vpop.permute.xlu0 %7922
      %7924 = vrot.lane.b32.xlu0 %v7869, 60
      %v7925 = vpop.permute.xlu0 %7924
      %7926 = vrot.lane.b32.xlu0 %v7870, 60
      %v7927 = vpop.permute.xlu0 %7926
      %7928 = vrot.lane.b32.xlu0 %v7871, 60
      %v7929 = vpop.permute.xlu0 %7928
      %7930 = vrot.lane.b32.xlu0 %v7872, 60
      %v7931 = vpop.permute.xlu0 %7930
      %7932 = vrot.lane.b32.xlu0 %v7873, 60
      %v7933 = vpop.permute.xlu0 %7932
      %7934 = vrot.lane.b32.xlu0 %v7874, 60
      %v7935 = vpop.permute.xlu0 %7934
      %7936 = vrot.lane.b32.xlu0 %v7875, 60
      %v7937 = vpop.permute.xlu0 %7936
      %7938 = vrot.lane.b32.xlu0 %v7876, 60
      %v7939 = vpop.permute.xlu0 %7938
      %v7940 = vsel %vm1892, %v7899, %v7901
      %v7941 = vsel %vm1892, %v7901, %v7903
      %v7942 = vsel %vm1892, %v7903, %v7905
      %v7943 = vsel %vm1892, %v7905, %v7907
      %v7944 = vsel %vm1892, %v7907, %v7909
      %v7945 = vsel %vm1892, %v7909, %v7911
      %v7946 = vsel %vm1892, %v7911, %v7913
      %v7947 = vsel %vm1892, %v7913, %v7915
      %v7948 = vsel %vm1892, %v7915, %v7917
      %v7949 = vsel %vm1892, %v7917, %v7919
      %v7950 = vsel %vm1892, %v7919, %v7921
      %v7951 = vsel %vm1892, %v7921, %v7923
      %v7952 = vsel %vm1892, %v7923, %v7925
      %v7953 = vsel %vm1892, %v7925, %v7927
      %v7954 = vsel %vm1892, %v7927, %v7929
      %v7955 = vsel %vm1892, %v7929, %v7931
      %v7956 = vsel %vm1892, %v7931, %v7933
      %v7957 = vsel %vm1892, %v7933, %v7935
      %v7958 = vsel %vm1892, %v7935, %v7937
      %v7959 = vsel %vm1892, %v7937, %v7939
      %7981 = vst [vmem:[%s368] sm:$0xff] %v7940
      %7982 = vst [vmem:[%s368 + $0x8] sm:$0xff] %v7941
      %7983 = vst [vmem:[%s368 + $0x10] sm:$0xff] %v7942
      %7984 = vst [vmem:[%s368 + $0x18] sm:$0xff] %v7943
      %7985 = vst [vmem:[%s368 + $0x20] sm:$0xff] %v7944
      %7986 = vst [vmem:[%s368 + $0x28] sm:$0xff] %v7945
      %7987 = vst [vmem:[%s368 + $0x30] sm:$0xff] %v7946
      %7988 = vst [vmem:[%s368 + $0x38] sm:$0xff] %v7947
      %7989 = vst [vmem:[%s368 + $0x40] sm:$0xff] %v7948
      %7990 = vst [vmem:[%s368 + $0x48] sm:$0xff] %v7949
      %7991 = vst [vmem:[%s368 + $0x50] sm:$0xff] %v7950
      %7992 = vst [vmem:[%s368 + $0x58] sm:$0xff] %v7951
      %7993 = vst [vmem:[%s368 + $0x60] sm:$0xff] %v7952
      %7994 = vst [vmem:[%s368 + $0x68] sm:$0xff] %v7953
      %7995 = vst [vmem:[%s368 + $0x70] sm:$0xff] %v7954
      %7996 = vst [vmem:[%s368 + $0x78] sm:$0xff] %v7955
      %7997 = vst [vmem:[%s368 + $0x80] sm:$0xff] %v7956
      %7998 = vst [vmem:[%s368 + $0x88] sm:$0xff] %v7957
      %7999 = vst [vmem:[%s368 + $0x90] sm:$0xff] %v7958
      %8000 = vst [vmem:[%s368 + $0x98] sm:$0xff] %v7959
      %8001 = vst.msk [vmem:[%s368 + $0xa0] sm:$0xff] %vm6589, %v7939
      %p8002 = scmp.lt.s32.totalorder %s24, 1
      %s8003 = scalar_select %p8002, %s24, 1
      %p8004 = scmp.lt.s32.totalorder %s25, 1
      %s8005 = scalar_select %p8004, %s25, 1
      %s8006 = smul.addr %s8005, 21
      %s8007 = smul.addr %s8003, 42
      %s8008 = sadd.s32 %s8006, %s8007
      %s8009 = smul.addr %s8008, 8
      %s8010 = scalar_lea.vmem %s9, %s8009
      // Predicated region
      $region57: #{encode_layers_forward.1} parent=55 // pred_check
        %p8011 = pneg %p248
      $region58: #{encode_layers_forward.1} parent=55 // pred_check_branch
        %8013 = sbr.rel (%p8011) target = $region60
      $region59: #{encode_layers_forward.1} parent=55 // pred_region
        _
      $region60: #{encode_layers_forward.1} parent=55 // pred_fallthru
        _
    $region56: #{encode_layers_forward.1} parent=5 // pred_fallthru
      _
    %p8014 = scmp.le.s32.totalorder 2, %s15
    // Predicated region
    $region61: #{encode_layers_forward.1} parent=5 // pred_check
      %p8015 = pneg %p8014
    $region62: #{encode_layers_forward.1} parent=5 // pred_check_branch
      %8017 = sbr.rel (%p8015) target = $region64
    $region63: #{encode_layers_forward.1} parent=5 // pred_region
      %s8018 = ssub.s32 %s15, 2
      // Predicated region
      $region65: #{encode_layers_forward.1} parent=63 // pred_check
        %p8019 = pneg %p254
      $region66: #{encode_layers_forward.1} parent=63 // pred_check_branch
        %8021 = sbr.rel (%p8019) target = $region68
      $region67: #{encode_layers_forward.1} parent=63 // pred_region
        %p8022 = scmp.lt.s32.totalorder %s26, 1
        %s8023 = scalar_select %p8022, %s26, 1
        %p8024 = scmp.lt.s32.totalorder %s27, 1
        %s8025 = scalar_select %p8024, %s27, 1
        %s8026 = smul.addr %s8025, 21
        %s8027 = smul.addr %s8023, 42
        %s8028 = sadd.s32 %s8026, %s8027
        %s8029 = smul.addr %s8028, 8
        %s8030 = scalar_lea.vmem %s9, %s8029
      $region68: #{encode_layers_forward.1} parent=63 // pred_fallthru
        _
    $region64: #{encode_layers_forward.1} parent=5 // pred_fallthru
      _
  $region6: #{encode_layers_forward.1} parent=0 // loop_footer
    %s19 = sadd.s32 1, %s15
  $region7: #{encode_layers_forward.1} parent=0 // loop_footer_branch
    %14 = sbr.rel target = $region3
  $region8: #{encode_layers_forward.1} parent=0 // loop_exit
    _

</llo_original>
